<compile_context>
chip_gen: v5e
topology: v5e:2x2
jax: 0.10.0
libtpu: 0.0.40
codegen_flags: <defaults>
</compile_context>

<pallas_src>
import functools
import numpy as np
import jax
import jax.numpy as jnp
from jax import lax
from jax.experimental import pallas as pl
from jax.experimental.pallas import tpu as pltpu

EPS = 1e-5
_SUB = 16      # bf16 sublane packing for channel dims
_LANE = 128    # lane tile


def _round_up(x, m):
    return (x + m - 1) // m * m


def _make_kernel(offsets, tile, ty, tx, cin_p, cout_p):
    """offsets / sizes are static python ints (flat padded-coordinate shifts)."""

    def kernel(xh_ref, w1_ref, w2_ref, mask_ref, o_ref, xwin_ref, y_ref, sem):
        f32 = jnp.float32
        n = pl.program_id(0)
        t = pl.program_id(1)
        ts = pl.multiple_of(t * tile, _LANE)

        # Haloed x window for this spatial tile: xh[n, :, ts:ts+tx]  (HBM->VMEM).
        # NOTE: could be double-buffered across grid steps to hide DMA latency.
        cp = pltpu.make_async_copy(xh_ref.at[n, :, pl.ds(ts, tx)], xwin_ref, sem)
        cp.start()
        cp.wait()

        # ---- stage 1: conv3d as K^3 shift-and-accumulate MXU matmuls --------
        # (tap (a,b,c) is a constant lane shift; unaligned lane slices lower to
        #  shifted loads — acceptable; pltpu.roll trick only if this gets hot)
        acc = jnp.zeros((cout_p, ty), f32)
        for ti, off in enumerate(offsets):
            acc = acc + jnp.dot(w1_ref[ti], xwin_ref[:, off:off + ty],
                                preferred_element_type=f32)

        # ---- tv_norm over channels + relu, validity mask folded into scale --
        scale = lax.rsqrt(jnp.sum(acc * acc, axis=0, keepdims=True) + EPS)
        scale = scale * mask_ref[0]                       # (1, ty), 0/1 mask
        y_ref[...] = jnp.maximum(acc * scale, 0.0).astype(y_ref.dtype)

        # ---- stage 2: -conv_transpose3d (negation folded into w2) -----------
        out = jnp.zeros((cin_p, tile), f32)
        for ti, off in enumerate(offsets):
            out = out + jnp.dot(w2_ref[ti], y_ref[:, off:off + tile],
                                preferred_element_type=f32)
        o_ref[0] = out.astype(o_ref.dtype)

    return kernel


def double_sym_layer_3d(x_ncdhw, weight, kernel_size=3, tile_lanes=512):
    """Forward pass of DoubleSymLayer3D.

    x_ncdhw: (N, Cin, D, H, W)      PyTorch layout
    weight : (Cout, Cin, k, k, k)   Conv3d weight (bias=None)
    returns: (N, Cin, D, H, W)

    tile_lanes: flat output positions per grid step (multiple of 128); use
    8K-32K for large volumes, small values keep the demo exercising tiling.
    """
    K = kernel_size
    assert K % 2 == 1, "conv_transpose == flipped-conv identity needs odd kernel_size"
    p = K // 2
    N, Cin, D, H, W = x_ncdhw.shape
    Cout = weight.shape[0]

    Hp, Wp = H + 2 * p, W + 2 * p
    HWp = Hp * Wp
    Cin_p = _round_up(Cin, _SUB)
    Cout_p = _round_up(Cout, _SUB)

    NPLANE = D * HWp                                  # placed payload width
    NCMP = (D - 1) * HWp + (H - 1) * Wp + W           # flat positions covering outputs
    OCENTER = p * (HWp + Wp + 1)                      # flat offset of tap (p,p,p)
    OMAX = 2 * OCENTER                                # max tap offset

    TILE = _round_up(tile_lanes, _LANE)               # output lanes per grid step
    NT = pl.cdiv(NCMP, TILE)
    NCMP_PAD = NT * TILE
    TY = _round_up(TILE + OMAX, _LANE)                # haloed y window per tile
    TX = _round_up(TY + OMAX, _LANE)                  # haloed x window per tile
    WX = max((NT - 1) * TILE + TX, OMAX + NPLANE)     # zero-extended flat x width

    offsets = tuple(a * HWp + b * Wp + c
                    for a in range(K) for b in range(K) for c in range(K))

    # ---- host-side prep (cheap, x/weight sized, bf16) ------------------------
    # x: right-pad H,W by 2p, pad channels to 16, flatten spatial, then embed at
    # offset OMAX in a zero-extended HBM buffer so every tile's haloed window is
    # the plain contiguous slice xh[:, :, ts : ts+TX].
    xr = jnp.pad(x_ncdhw.astype(jnp.bfloat16),
                 ((0, 0), (0, Cin_p - Cin), (0, 0), (0, 2 * p), (0, 2 * p)))
    xr = xr.reshape(N, Cin_p, NPLANE)
    xh = jnp.pad(xr, ((0, 0), (0, 0), (OMAX, WX - OMAX - NPLANE)))

    wpad = jnp.pad(weight.astype(jnp.float32),
                   ((0, Cout_p - Cout), (0, Cin_p - Cin),
                    (0, 0), (0, 0), (0, 0)))           # (Cout_p, Cin_p, K,K,K)
    # stage 1 per-tap weights: w1[t] = W[:, :, a, b, c]            (Cout_p, Cin_p)
    w1 = jnp.transpose(wpad, (2, 3, 4, 0, 1)).reshape(K ** 3, Cout_p, Cin_p)
    w1 = w1.astype(jnp.bfloat16)
    # stage 2: conv_transpose == "same" correlation with the spatially flipped,
    # channel-swapped kernel; the final negation is folded in here.
    wflip = wpad[:, :, ::-1, ::-1, ::-1]
    w2 = (-jnp.transpose(wflip, (2, 3, 4, 1, 0))).reshape(K ** 3, Cin_p, Cout_p)
    w2 = w2.astype(jnp.bfloat16)

    # static per-tile validity mask over the haloed y window (tiny)
    mask_np = np.zeros((NT, 1, TY), np.float32)
    for t in range(NT):
        q = t * TILE - OCENTER + np.arange(TY)
        valid = ((q >= 0) & (q < NCMP)
                 & ((q % Wp) < W) & (((q // Wp) % Hp) < H))
        mask_np[t, 0] = valid.astype(np.float32)
    mask = jnp.asarray(mask_np)

    kernel = _make_kernel(offsets, TILE, TY, TX, Cin_p, Cout_p)

    # explicit VMEM budget: scratch windows + double-buffered blocks + f32 accs
    est = (Cin_p * TX * 2 + Cout_p * TY * 2                  # x / y windows (bf16)
           + 2 * 2 * (K ** 3) * Cin_p * Cout_p * 2           # w1, w2 (dbl-buffered)
           + 2 * TY * 4                                      # mask block
           + 2 * Cin_p * TILE * 4                            # output block
           + Cout_p * TY * 4 + Cin_p * TILE * 4)             # accumulators
    vmem_limit = int(min(100 * 2 ** 20, max(32 * 2 ** 20, 6 * est)))

    out_flat = pl.pallas_call(
        kernel,
        out_shape=jax.ShapeDtypeStruct((N, Cin_p, NCMP_PAD), jnp.float32),
        grid=(N, NT),
        in_specs=[
            pl.BlockSpec(memory_space=pl.ANY),                             # xh (HBM)
            pl.BlockSpec((K ** 3, Cout_p, Cin_p), lambda n, t: (0, 0, 0)),
            pl.BlockSpec((K ** 3, Cin_p, Cout_p), lambda n, t: (0, 0, 0)),
            pl.BlockSpec((1, 1, TY), lambda n, t: (t, 0, 0)),
        ],
        out_specs=pl.BlockSpec((1, Cin_p, TILE), lambda n, t: (n, 0, t)),
        scratch_shapes=[
            pltpu.VMEM((Cin_p, TX), jnp.bfloat16),    # haloed x window
            pltpu.VMEM((Cout_p, TY), jnp.bfloat16),   # haloed y window
            pltpu.SemaphoreType.DMA(()),
        ],
        compiler_params=pltpu.CompilerParams(
            dimension_semantics=("parallel", "parallel"),
            vmem_limit_bytes=vmem_limit),
    )(xh, w1, w2, mask)

    # extract valid (d, h, w) positions and drop channel padding
    of = out_flat[:, :Cin, :]
    if NCMP_PAD >= NPLANE:
        of = of[:, :, :NPLANE]
    else:
        of = jnp.pad(of, ((0, 0), (0, 0), (0, NPLANE - NCMP_PAD)))
    return of.reshape(N, Cin, D, Hp, Wp)[:, :, :, :H, :W]


# ------------------------------ reference (XLA) ------------------------------

def _reference(x, weight, ks):
    p = ks // 2
    dn = ('NCDHW', 'OIDHW', 'NCDHW')
    conv = lambda t: lax.conv_general_dilated(
        t, weight, (1, 1, 1), [(p, p)] * 3, dimension_numbers=dn)
    y = conv(x)
    sigma = jnp.sqrt(jnp.sum(y * y, axis=1, keepdims=True) + EPS)
    y = jnp.maximum(y / sigma, 0.0)
    # conv_transpose3d(y, W, padding=p) == VJP of the forward conv at cotangent y
    _, vjp_fn = jax.vjp(conv, x)
    return -vjp_fn(y)[0]


# ----------------------------------- main ------------------------------------

if __name__ == "__main__":
    key = jax.random.PRNGKey(0)
    kx, kw = jax.random.split(key)

    N, Cin, Cout = 2, 4, 8
    D = H = W = 8
    ks = 3

    x = jax.random.normal(kx, (N, Cin, D, H, W), jnp.float32)
    fan_in = Cin * ks ** 3
    weight = jax.random.normal(kw, (Cout, Cin, ks, ks, ks),
                               jnp.float32) / jnp.sqrt(fan_in)

    fwd = jax.jit(functools.partial(double_sym_layer_3d, kernel_size=ks))
    out = jax.block_until_ready(fwd(x, weight))

    # reference computed in f32 on the same bf16-quantized inputs the kernel
    # sees; remaining delta is the kernel's internal bf16 y cast (tiny).
    xq = x.astype(jnp.bfloat16).astype(jnp.float32)
    wq = weight.astype(jnp.bfloat16).astype(jnp.float32)
    ref = jax.block_until_ready(_reference(xq, wq, ks))

    assert out.shape == ref.shape == (N, Cin, D, H, W)
    np.testing.assert_allclose(np.asarray(out), np.asarray(ref),
                               rtol=2e-2, atol=2e-2)
    print("KERNEL_OK")
</pallas_src>

<mosaic_0001>
module attributes {stable_mosaic.version = 11 : i64} {
  func.func @kernel(%arg0: i32, %arg1: i32, %arg2: memref<2x16x1536xbf16, #tpu.memory_space<any>>, %arg3: memref<27x16x16xbf16, #tpu.memory_space<vmem>>, %arg4: memref<27x16x16xbf16, #tpu.memory_space<vmem>>, %arg5: memref<1x1x768xf32, #tpu.memory_space<vmem>>, %arg6: memref<1x16x512xf32, #tpu.memory_space<vmem>>, %arg7: memref<16x1024xbf16, #tpu.memory_space<vmem>>, %arg8: memref<16x768xbf16, #tpu.memory_space<vmem>>, %arg9: memref<!tpu.dma_semaphore, #tpu.memory_space<semaphore_mem>>) attributes {dimension_semantics = [#tpu.dimension_semantics<parallel>, #tpu.dimension_semantics<parallel>], iteration_bounds = array<i64: 2, 2>, scalar_prefetch = 0 : i64, scratch_operands = 3 : i64, tpu.core_type = #tpu.core_type<tc>, window_params = [{}, {pipeline_mode = #tpu.pipeline_mode<synchronous>, transform_indices = @transform_1, window_bounds = array<i64: 27, 16, 16>}, {pipeline_mode = #tpu.pipeline_mode<synchronous>, transform_indices = @transform_2, window_bounds = array<i64: 27, 16, 16>}, {transform_indices = @transform_3, window_bounds = array<i64: 1, 1, 768>}, {transform_indices = @transform_4, window_bounds = array<i64: 1, 16, 512>}]} {
    %c512_i32 = arith.constant 512 : i32
    %0 = arith.muli %arg1, %c512_i32 : i32
    %1 = tpu.assume_multiple %0, 128 : i32
    %c0_i32 = arith.constant 0 : i32
    %2 = tpu.memref_slice %arg2[%arg0, %c0_i32, %1] : memref<2x16x1536xbf16, #tpu.memory_space<any>> -> memref<1x16x1024xbf16, #tpu.memory_space<any>>
    %3 = tpu.memref_squeeze %2 : memref<1x16x1024xbf16, #tpu.memory_space<any>> -> memref<16x1024xbf16, #tpu.memory_space<any>>
    tpu.enqueue_dma source(%3 : memref<16x1024xbf16, #tpu.memory_space<any>>) target(%arg7 : memref<16x1024xbf16, #tpu.memory_space<vmem>>) target_semaphore(%arg9 : memref<!tpu.dma_semaphore, #tpu.memory_space<semaphore_mem>>)
    %c0_i32_0 = arith.constant 0 : i32
    %4 = tpu.memref_slice %arg2[%arg0, %c0_i32_0, %1] : memref<2x16x1536xbf16, #tpu.memory_space<any>> -> memref<1x16x1024xbf16, #tpu.memory_space<any>>
    %5 = tpu.memref_squeeze %4 : memref<1x16x1024xbf16, #tpu.memory_space<any>> -> memref<16x1024xbf16, #tpu.memory_space<any>>
    tpu.wait_dma2 semaphore(%arg9 : memref<!tpu.dma_semaphore, #tpu.memory_space<semaphore_mem>>) src(%5 : memref<16x1024xbf16, #tpu.memory_space<any>>) dst(%arg7 : memref<16x1024xbf16, #tpu.memory_space<vmem>>)
    %cst = arith.constant 0.000000e+00 : f32
    %6 = vector.broadcast %cst : f32 to vector<16x768xf32>
    %c0 = arith.constant 0 : index
    %c0_1 = arith.constant 0 : index
    %c0_2 = arith.constant 0 : index
    %7 = vector.load %arg3[%c0, %c0_1, %c0_2] : memref<27x16x16xbf16, #tpu.memory_space<vmem>>, vector<1x16x16xbf16>
    %8 = vector.shape_cast %7 : vector<1x16x16xbf16> to vector<16x16xbf16>
    %c0_3 = arith.constant 0 : index
    %c0_4 = arith.constant 0 : index
    %9 = vector.load %arg7[%c0_3, %c0_4] : memref<16x1024xbf16, #tpu.memory_space<vmem>>, vector<16x768xbf16>
    %cst_5 = arith.constant dense<0.000000e+00> : vector<16x768xf32>
    %10 = tpu.matmul %8, %9, %cst_5 {dimension_numbers = #tpu.dot_dimension_numbers<[1], [0], [0], [1], [0, 0, 1, 1], [], []>} : vector<16x16xbf16>, vector<16x768xbf16>, vector<16x768xf32> -> vector<16x768xf32>
    %11 = arith.addf %6, %10 : vector<16x768xf32>
    %c1 = arith.constant 1 : index
    %c0_6 = arith.constant 0 : index
    %c0_7 = arith.constant 0 : index
    %12 = vector.load %arg3[%c1, %c0_6, %c0_7] : memref<27x16x16xbf16, #tpu.memory_space<vmem>>, vector<1x16x16xbf16>
    %13 = vector.shape_cast %12 : vector<1x16x16xbf16> to vector<16x16xbf16>
    %c0_8 = arith.constant 0 : index
    %c1_9 = arith.constant 1 : index
    %14 = vector.load %arg7[%c0_8, %c1_9] : memref<16x1024xbf16, #tpu.memory_space<vmem>>, vector<16x768xbf16>
    %cst_10 = arith.constant dense<0.000000e+00> : vector<16x768xf32>
    %15 = tpu.matmul %13, %14, %cst_10 {dimension_numbers = #tpu.dot_dimension_numbers<[1], [0], [0], [1], [0, 0, 1, 1], [], []>} : vector<16x16xbf16>, vector<16x768xbf16>, vector<16x768xf32> -> vector<16x768xf32>
    %16 = arith.addf %11, %15 : vector<16x768xf32>
    %c2 = arith.constant 2 : index
    %c0_11 = arith.constant 0 : index
    %c0_12 = arith.constant 0 : index
    %17 = vector.load %arg3[%c2, %c0_11, %c0_12] : memref<27x16x16xbf16, #tpu.memory_space<vmem>>, vector<1x16x16xbf16>
    %18 = vector.shape_cast %17 : vector<1x16x16xbf16> to vector<16x16xbf16>
    %c0_13 = arith.constant 0 : index
    %c2_14 = arith.constant 2 : index
    %19 = vector.load %arg7[%c0_13, %c2_14] : memref<16x1024xbf16, #tpu.memory_space<vmem>>, vector<16x768xbf16>
    %cst_15 = arith.constant dense<0.000000e+00> : vector<16x768xf32>
    %20 = tpu.matmul %18, %19, %cst_15 {dimension_numbers = #tpu.dot_dimension_numbers<[1], [0], [0], [1], [0, 0, 1, 1], [], []>} : vector<16x16xbf16>, vector<16x768xbf16>, vector<16x768xf32> -> vector<16x768xf32>
    %21 = arith.addf %16, %20 : vector<16x768xf32>
    %c3 = arith.constant 3 : index
    %c0_16 = arith.constant 0 : index
    %c0_17 = arith.constant 0 : index
    %22 = vector.load %arg3[%c3, %c0_16, %c0_17] : memref<27x16x16xbf16, #tpu.memory_space<vmem>>, vector<1x16x16xbf16>
    %23 = vector.shape_cast %22 : vector<1x16x16xbf16> to vector<16x16xbf16>
    %c0_18 = arith.constant 0 : index
    %c10 = arith.constant 10 : index
    %24 = vector.load %arg7[%c0_18, %c10] : memref<16x1024xbf16, #tpu.memory_space<vmem>>, vector<16x768xbf16>
    %cst_19 = arith.constant dense<0.000000e+00> : vector<16x768xf32>
    %25 = tpu.matmul %23, %24, %cst_19 {dimension_numbers = #tpu.dot_dimension_numbers<[1], [0], [0], [1], [0, 0, 1, 1], [], []>} : vector<16x16xbf16>, vector<16x768xbf16>, vector<16x768xf32> -> vector<16x768xf32>
    %26 = arith.addf %21, %25 : vector<16x768xf32>
    %c4 = arith.constant 4 : index
    %c0_20 = arith.constant 0 : index
    %c0_21 = arith.constant 0 : index
    %27 = vector.load %arg3[%c4, %c0_20, %c0_21] : memref<27x16x16xbf16, #tpu.memory_space<vmem>>, vector<1x16x16xbf16>
    %28 = vector.shape_cast %27 : vector<1x16x16xbf16> to vector<16x16xbf16>
    %c0_22 = arith.constant 0 : index
    %c11 = arith.constant 11 : index
    %29 = vector.load %arg7[%c0_22, %c11] : memref<16x1024xbf16, #tpu.memory_space<vmem>>, vector<16x768xbf16>
    %cst_23 = arith.constant dense<0.000000e+00> : vector<16x768xf32>
    %30 = tpu.matmul %28, %29, %cst_23 {dimension_numbers = #tpu.dot_dimension_numbers<[1], [0], [0], [1], [0, 0, 1, 1], [], []>} : vector<16x16xbf16>, vector<16x768xbf16>, vector<16x768xf32> -> vector<16x768xf32>
    %31 = arith.addf %26, %30 : vector<16x768xf32>
    %c5 = arith.constant 5 : index
    %c0_24 = arith.constant 0 : index
    %c0_25 = arith.constant 0 : index
    %32 = vector.load %arg3[%c5, %c0_24, %c0_25] : memref<27x16x16xbf16, #tpu.memory_space<vmem>>, vector<1x16x16xbf16>
    %33 = vector.shape_cast %32 : vector<1x16x16xbf16> to vector<16x16xbf16>
    %c0_26 = arith.constant 0 : index
    %c12 = arith.constant 12 : index
    %34 = vector.load %arg7[%c0_26, %c12] : memref<16x1024xbf16, #tpu.memory_space<vmem>>, vector<16x768xbf16>
    %cst_27 = arith.constant dense<0.000000e+00> : vector<16x768xf32>
    %35 = tpu.matmul %33, %34, %cst_27 {dimension_numbers = #tpu.dot_dimension_numbers<[1], [0], [0], [1], [0, 0, 1, 1], [], []>} : vector<16x16xbf16>, vector<16x768xbf16>, vector<16x768xf32> -> vector<16x768xf32>
    %36 = arith.addf %31, %35 : vector<16x768xf32>
    %c6 = arith.constant 6 : index
    %c0_28 = arith.constant 0 : index
    %c0_29 = arith.constant 0 : index
    %37 = vector.load %arg3[%c6, %c0_28, %c0_29] : memref<27x16x16xbf16, #tpu.memory_space<vmem>>, vector<1x16x16xbf16>
    %38 = vector.shape_cast %37 : vector<1x16x16xbf16> to vector<16x16xbf16>
    %c0_30 = arith.constant 0 : index
    %c20 = arith.constant 20 : index
    %39 = vector.load %arg7[%c0_30, %c20] : memref<16x1024xbf16, #tpu.memory_space<vmem>>, vector<16x768xbf16>
    %cst_31 = arith.constant dense<0.000000e+00> : vector<16x768xf32>
    %40 = tpu.matmul %38, %39, %cst_31 {dimension_numbers = #tpu.dot_dimension_numbers<[1], [0], [0], [1], [0, 0, 1, 1], [], []>} : vector<16x16xbf16>, vector<16x768xbf16>, vector<16x768xf32> -> vector<16x768xf32>
    %41 = arith.addf %36, %40 : vector<16x768xf32>
    %c7 = arith.constant 7 : index
    %c0_32 = arith.constant 0 : index
    %c0_33 = arith.constant 0 : index
    %42 = vector.load %arg3[%c7, %c0_32, %c0_33] : memref<27x16x16xbf16, #tpu.memory_space<vmem>>, vector<1x16x16xbf16>
    %43 = vector.shape_cast %42 : vector<1x16x16xbf16> to vector<16x16xbf16>
    %c0_34 = arith.constant 0 : index
    %c21 = arith.constant 21 : index
    %44 = vector.load %arg7[%c0_34, %c21] : memref<16x1024xbf16, #tpu.memory_space<vmem>>, vector<16x768xbf16>
    %cst_35 = arith.constant dense<0.000000e+00> : vector<16x768xf32>
    %45 = tpu.matmul %43, %44, %cst_35 {dimension_numbers = #tpu.dot_dimension_numbers<[1], [0], [0], [1], [0, 0, 1, 1], [], []>} : vector<16x16xbf16>, vector<16x768xbf16>, vector<16x768xf32> -> vector<16x768xf32>
    %46 = arith.addf %41, %45 : vector<16x768xf32>
    %c8 = arith.constant 8 : index
    %c0_36 = arith.constant 0 : index
    %c0_37 = arith.constant 0 : index
    %47 = vector.load %arg3[%c8, %c0_36, %c0_37] : memref<27x16x16xbf16, #tpu.memory_space<vmem>>, vector<1x16x16xbf16>
    %48 = vector.shape_cast %47 : vector<1x16x16xbf16> to vector<16x16xbf16>
    %c0_38 = arith.constant 0 : index
    %c22 = arith.constant 22 : index
    %49 = vector.load %arg7[%c0_38, %c22] : memref<16x1024xbf16, #tpu.memory_space<vmem>>, vector<16x768xbf16>
    %cst_39 = arith.constant dense<0.000000e+00> : vector<16x768xf32>
    %50 = tpu.matmul %48, %49, %cst_39 {dimension_numbers = #tpu.dot_dimension_numbers<[1], [0], [0], [1], [0, 0, 1, 1], [], []>} : vector<16x16xbf16>, vector<16x768xbf16>, vector<16x768xf32> -> vector<16x768xf32>
    %51 = arith.addf %46, %50 : vector<16x768xf32>
    %c9 = arith.constant 9 : index
    %c0_40 = arith.constant 0 : index
    %c0_41 = arith.constant 0 : index
    %52 = vector.load %arg3[%c9, %c0_40, %c0_41] : memref<27x16x16xbf16, #tpu.memory_space<vmem>>, vector<1x16x16xbf16>
    %53 = vector.shape_cast %52 : vector<1x16x16xbf16> to vector<16x16xbf16>
    %c0_42 = arith.constant 0 : index
    %c100 = arith.constant 100 : index
    %54 = vector.load %arg7[%c0_42, %c100] : memref<16x1024xbf16, #tpu.memory_space<vmem>>, vector<16x768xbf16>
    %cst_43 = arith.constant dense<0.000000e+00> : vector<16x768xf32>
    %55 = tpu.matmul %53, %54, %cst_43 {dimension_numbers = #tpu.dot_dimension_numbers<[1], [0], [0], [1], [0, 0, 1, 1], [], []>} : vector<16x16xbf16>, vector<16x768xbf16>, vector<16x768xf32> -> vector<16x768xf32>
    %56 = arith.addf %51, %55 : vector<16x768xf32>
    %c10_44 = arith.constant 10 : index
    %c0_45 = arith.constant 0 : index
    %c0_46 = arith.constant 0 : index
    %57 = vector.load %arg3[%c10_44, %c0_45, %c0_46] : memref<27x16x16xbf16, #tpu.memory_space<vmem>>, vector<1x16x16xbf16>
    %58 = vector.shape_cast %57 : vector<1x16x16xbf16> to vector<16x16xbf16>
    %c0_47 = arith.constant 0 : index
    %c101 = arith.constant 101 : index
    %59 = vector.load %arg7[%c0_47, %c101] : memref<16x1024xbf16, #tpu.memory_space<vmem>>, vector<16x768xbf16>
    %cst_48 = arith.constant dense<0.000000e+00> : vector<16x768xf32>
    %60 = tpu.matmul %58, %59, %cst_48 {dimension_numbers = #tpu.dot_dimension_numbers<[1], [0], [0], [1], [0, 0, 1, 1], [], []>} : vector<16x16xbf16>, vector<16x768xbf16>, vector<16x768xf32> -> vector<16x768xf32>
    %61 = arith.addf %56, %60 : vector<16x768xf32>
    %c11_49 = arith.constant 11 : index
    %c0_50 = arith.constant 0 : index
    %c0_51 = arith.constant 0 : index
    %62 = vector.load %arg3[%c11_49, %c0_50, %c0_51] : memref<27x16x16xbf16, #tpu.memory_space<vmem>>, vector<1x16x16xbf16>
    %63 = vector.shape_cast %62 : vector<1x16x16xbf16> to vector<16x16xbf16>
    %c0_52 = arith.constant 0 : index
    %c102 = arith.constant 102 : index
    %64 = vector.load %arg7[%c0_52, %c102] : memref<16x1024xbf16, #tpu.memory_space<vmem>>, vector<16x768xbf16>
    %cst_53 = arith.constant dense<0.000000e+00> : vector<16x768xf32>
    %65 = tpu.matmul %63, %64, %cst_53 {dimension_numbers = #tpu.dot_dimension_numbers<[1], [0], [0], [1], [0, 0, 1, 1], [], []>} : vector<16x16xbf16>, vector<16x768xbf16>, vector<16x768xf32> -> vector<16x768xf32>
    %66 = arith.addf %61, %65 : vector<16x768xf32>
    %c12_54 = arith.constant 12 : index
    %c0_55 = arith.constant 0 : index
    %c0_56 = arith.constant 0 : index
    %67 = vector.load %arg3[%c12_54, %c0_55, %c0_56] : memref<27x16x16xbf16, #tpu.memory_space<vmem>>, vector<1x16x16xbf16>
    %68 = vector.shape_cast %67 : vector<1x16x16xbf16> to vector<16x16xbf16>
    %c0_57 = arith.constant 0 : index
    %c110 = arith.constant 110 : index
    %69 = vector.load %arg7[%c0_57, %c110] : memref<16x1024xbf16, #tpu.memory_space<vmem>>, vector<16x768xbf16>
    %cst_58 = arith.constant dense<0.000000e+00> : vector<16x768xf32>
    %70 = tpu.matmul %68, %69, %cst_58 {dimension_numbers = #tpu.dot_dimension_numbers<[1], [0], [0], [1], [0, 0, 1, 1], [], []>} : vector<16x16xbf16>, vector<16x768xbf16>, vector<16x768xf32> -> vector<16x768xf32>
    %71 = arith.addf %66, %70 : vector<16x768xf32>
    %c13 = arith.constant 13 : index
    %c0_59 = arith.constant 0 : index
    %c0_60 = arith.constant 0 : index
    %72 = vector.load %arg3[%c13, %c0_59, %c0_60] : memref<27x16x16xbf16, #tpu.memory_space<vmem>>, vector<1x16x16xbf16>
    %73 = vector.shape_cast %72 : vector<1x16x16xbf16> to vector<16x16xbf16>
    %c0_61 = arith.constant 0 : index
    %c111 = arith.constant 111 : index
    %74 = vector.load %arg7[%c0_61, %c111] : memref<16x1024xbf16, #tpu.memory_space<vmem>>, vector<16x768xbf16>
    %cst_62 = arith.constant dense<0.000000e+00> : vector<16x768xf32>
    %75 = tpu.matmul %73, %74, %cst_62 {dimension_numbers = #tpu.dot_dimension_numbers<[1], [0], [0], [1], [0, 0, 1, 1], [], []>} : vector<16x16xbf16>, vector<16x768xbf16>, vector<16x768xf32> -> vector<16x768xf32>
    %76 = arith.addf %71, %75 : vector<16x768xf32>
    %c14 = arith.constant 14 : index
    %c0_63 = arith.constant 0 : index
    %c0_64 = arith.constant 0 : index
    %77 = vector.load %arg3[%c14, %c0_63, %c0_64] : memref<27x16x16xbf16, #tpu.memory_space<vmem>>, vector<1x16x16xbf16>
    %78 = vector.shape_cast %77 : vector<1x16x16xbf16> to vector<16x16xbf16>
    %c0_65 = arith.constant 0 : index
    %c112 = arith.constant 112 : index
    %79 = vector.load %arg7[%c0_65, %c112] : memref<16x1024xbf16, #tpu.memory_space<vmem>>, vector<16x768xbf16>
    %cst_66 = arith.constant dense<0.000000e+00> : vector<16x768xf32>
    %80 = tpu.matmul %78, %79, %cst_66 {dimension_numbers = #tpu.dot_dimension_numbers<[1], [0], [0], [1], [0, 0, 1, 1], [], []>} : vector<16x16xbf16>, vector<16x768xbf16>, vector<16x768xf32> -> vector<16x768xf32>
    %81 = arith.addf %76, %80 : vector<16x768xf32>
    %c15 = arith.constant 15 : index
    %c0_67 = arith.constant 0 : index
    %c0_68 = arith.constant 0 : index
    %82 = vector.load %arg3[%c15, %c0_67, %c0_68] : memref<27x16x16xbf16, #tpu.memory_space<vmem>>, vector<1x16x16xbf16>
    %83 = vector.shape_cast %82 : vector<1x16x16xbf16> to vector<16x16xbf16>
    %c0_69 = arith.constant 0 : index
    %c120 = arith.constant 120 : index
    %84 = vector.load %arg7[%c0_69, %c120] : memref<16x1024xbf16, #tpu.memory_space<vmem>>, vector<16x768xbf16>
    %cst_70 = arith.constant dense<0.000000e+00> : vector<16x768xf32>
    %85 = tpu.matmul %83, %84, %cst_70 {dimension_numbers = #tpu.dot_dimension_numbers<[1], [0], [0], [1], [0, 0, 1, 1], [], []>} : vector<16x16xbf16>, vector<16x768xbf16>, vector<16x768xf32> -> vector<16x768xf32>
    %86 = arith.addf %81, %85 : vector<16x768xf32>
    %c16 = arith.constant 16 : index
    %c0_71 = arith.constant 0 : index
    %c0_72 = arith.constant 0 : index
    %87 = vector.load %arg3[%c16, %c0_71, %c0_72] : memref<27x16x16xbf16, #tpu.memory_space<vmem>>, vector<1x16x16xbf16>
    %88 = vector.shape_cast %87 : vector<1x16x16xbf16> to vector<16x16xbf16>
    %c0_73 = arith.constant 0 : index
    %c121 = arith.constant 121 : index
    %89 = vector.load %arg7[%c0_73, %c121] : memref<16x1024xbf16, #tpu.memory_space<vmem>>, vector<16x768xbf16>
    %cst_74 = arith.constant dense<0.000000e+00> : vector<16x768xf32>
    %90 = tpu.matmul %88, %89, %cst_74 {dimension_numbers = #tpu.dot_dimension_numbers<[1], [0], [0], [1], [0, 0, 1, 1], [], []>} : vector<16x16xbf16>, vector<16x768xbf16>, vector<16x768xf32> -> vector<16x768xf32>
    %91 = arith.addf %86, %90 : vector<16x768xf32>
    %c17 = arith.constant 17 : index
    %c0_75 = arith.constant 0 : index
    %c0_76 = arith.constant 0 : index
    %92 = vector.load %arg3[%c17, %c0_75, %c0_76] : memref<27x16x16xbf16, #tpu.memory_space<vmem>>, vector<1x16x16xbf16>
    %93 = vector.shape_cast %92 : vector<1x16x16xbf16> to vector<16x16xbf16>
    %c0_77 = arith.constant 0 : index
    %c122 = arith.constant 122 : index
    %94 = vector.load %arg7[%c0_77, %c122] : memref<16x1024xbf16, #tpu.memory_space<vmem>>, vector<16x768xbf16>
    %cst_78 = arith.constant dense<0.000000e+00> : vector<16x768xf32>
    %95 = tpu.matmul %93, %94, %cst_78 {dimension_numbers = #tpu.dot_dimension_numbers<[1], [0], [0], [1], [0, 0, 1, 1], [], []>} : vector<16x16xbf16>, vector<16x768xbf16>, vector<16x768xf32> -> vector<16x768xf32>
    %96 = arith.addf %91, %95 : vector<16x768xf32>
    %c18 = arith.constant 18 : index
    %c0_79 = arith.constant 0 : index
    %c0_80 = arith.constant 0 : index
    %97 = vector.load %arg3[%c18, %c0_79, %c0_80] : memref<27x16x16xbf16, #tpu.memory_space<vmem>>, vector<1x16x16xbf16>
    %98 = vector.shape_cast %97 : vector<1x16x16xbf16> to vector<16x16xbf16>
    %c0_81 = arith.constant 0 : index
    %c200 = arith.constant 200 : index
    %99 = vector.load %arg7[%c0_81, %c200] : memref<16x1024xbf16, #tpu.memory_space<vmem>>, vector<16x768xbf16>
    %cst_82 = arith.constant dense<0.000000e+00> : vector<16x768xf32>
    %100 = tpu.matmul %98, %99, %cst_82 {dimension_numbers = #tpu.dot_dimension_numbers<[1], [0], [0], [1], [0, 0, 1, 1], [], []>} : vector<16x16xbf16>, vector<16x768xbf16>, vector<16x768xf32> -> vector<16x768xf32>
    %101 = arith.addf %96, %100 : vector<16x768xf32>
    %c19 = arith.constant 19 : index
    %c0_83 = arith.constant 0 : index
    %c0_84 = arith.constant 0 : index
    %102 = vector.load %arg3[%c19, %c0_83, %c0_84] : memref<27x16x16xbf16, #tpu.memory_space<vmem>>, vector<1x16x16xbf16>
    %103 = vector.shape_cast %102 : vector<1x16x16xbf16> to vector<16x16xbf16>
    %c0_85 = arith.constant 0 : index
    %c201 = arith.constant 201 : index
    %104 = vector.load %arg7[%c0_85, %c201] : memref<16x1024xbf16, #tpu.memory_space<vmem>>, vector<16x768xbf16>
    %cst_86 = arith.constant dense<0.000000e+00> : vector<16x768xf32>
    %105 = tpu.matmul %103, %104, %cst_86 {dimension_numbers = #tpu.dot_dimension_numbers<[1], [0], [0], [1], [0, 0, 1, 1], [], []>} : vector<16x16xbf16>, vector<16x768xbf16>, vector<16x768xf32> -> vector<16x768xf32>
    %106 = arith.addf %101, %105 : vector<16x768xf32>
    %c20_87 = arith.constant 20 : index
    %c0_88 = arith.constant 0 : index
    %c0_89 = arith.constant 0 : index
    %107 = vector.load %arg3[%c20_87, %c0_88, %c0_89] : memref<27x16x16xbf16, #tpu.memory_space<vmem>>, vector<1x16x16xbf16>
    %108 = vector.shape_cast %107 : vector<1x16x16xbf16> to vector<16x16xbf16>
    %c0_90 = arith.constant 0 : index
    %c202 = arith.constant 202 : index
    %109 = vector.load %arg7[%c0_90, %c202] : memref<16x1024xbf16, #tpu.memory_space<vmem>>, vector<16x768xbf16>
    %cst_91 = arith.constant dense<0.000000e+00> : vector<16x768xf32>
    %110 = tpu.matmul %108, %109, %cst_91 {dimension_numbers = #tpu.dot_dimension_numbers<[1], [0], [0], [1], [0, 0, 1, 1], [], []>} : vector<16x16xbf16>, vector<16x768xbf16>, vector<16x768xf32> -> vector<16x768xf32>
    %111 = arith.addf %106, %110 : vector<16x768xf32>
    %c21_92 = arith.constant 21 : index
    %c0_93 = arith.constant 0 : index
    %c0_94 = arith.constant 0 : index
    %112 = vector.load %arg3[%c21_92, %c0_93, %c0_94] : memref<27x16x16xbf16, #tpu.memory_space<vmem>>, vector<1x16x16xbf16>
    %113 = vector.shape_cast %112 : vector<1x16x16xbf16> to vector<16x16xbf16>
    %c0_95 = arith.constant 0 : index
    %c210 = arith.constant 210 : index
    %114 = vector.load %arg7[%c0_95, %c210] : memref<16x1024xbf16, #tpu.memory_space<vmem>>, vector<16x768xbf16>
    %cst_96 = arith.constant dense<0.000000e+00> : vector<16x768xf32>
    %115 = tpu.matmul %113, %114, %cst_96 {dimension_numbers = #tpu.dot_dimension_numbers<[1], [0], [0], [1], [0, 0, 1, 1], [], []>} : vector<16x16xbf16>, vector<16x768xbf16>, vector<16x768xf32> -> vector<16x768xf32>
    %116 = arith.addf %111, %115 : vector<16x768xf32>
    %c22_97 = arith.constant 22 : index
    %c0_98 = arith.constant 0 : index
    %c0_99 = arith.constant 0 : index
    %117 = vector.load %arg3[%c22_97, %c0_98, %c0_99] : memref<27x16x16xbf16, #tpu.memory_space<vmem>>, vector<1x16x16xbf16>
    %118 = vector.shape_cast %117 : vector<1x16x16xbf16> to vector<16x16xbf16>
    %c0_100 = arith.constant 0 : index
    %c211 = arith.constant 211 : index
    %119 = vector.load %arg7[%c0_100, %c211] : memref<16x1024xbf16, #tpu.memory_space<vmem>>, vector<16x768xbf16>
    %cst_101 = arith.constant dense<0.000000e+00> : vector<16x768xf32>
    %120 = tpu.matmul %118, %119, %cst_101 {dimension_numbers = #tpu.dot_dimension_numbers<[1], [0], [0], [1], [0, 0, 1, 1], [], []>} : vector<16x16xbf16>, vector<16x768xbf16>, vector<16x768xf32> -> vector<16x768xf32>
    %121 = arith.addf %116, %120 : vector<16x768xf32>
    %c23 = arith.constant 23 : index
    %c0_102 = arith.constant 0 : index
    %c0_103 = arith.constant 0 : index
    %122 = vector.load %arg3[%c23, %c0_102, %c0_103] : memref<27x16x16xbf16, #tpu.memory_space<vmem>>, vector<1x16x16xbf16>
    %123 = vector.shape_cast %122 : vector<1x16x16xbf16> to vector<16x16xbf16>
    %c0_104 = arith.constant 0 : index
    %c212 = arith.constant 212 : index
    %124 = vector.load %arg7[%c0_104, %c212] : memref<16x1024xbf16, #tpu.memory_space<vmem>>, vector<16x768xbf16>
    %cst_105 = arith.constant dense<0.000000e+00> : vector<16x768xf32>
    %125 = tpu.matmul %123, %124, %cst_105 {dimension_numbers = #tpu.dot_dimension_numbers<[1], [0], [0], [1], [0, 0, 1, 1], [], []>} : vector<16x16xbf16>, vector<16x768xbf16>, vector<16x768xf32> -> vector<16x768xf32>
    %126 = arith.addf %121, %125 : vector<16x768xf32>
    %c24 = arith.constant 24 : index
    %c0_106 = arith.constant 0 : index
    %c0_107 = arith.constant 0 : index
    %127 = vector.load %arg3[%c24, %c0_106, %c0_107] : memref<27x16x16xbf16, #tpu.memory_space<vmem>>, vector<1x16x16xbf16>
    %128 = vector.shape_cast %127 : vector<1x16x16xbf16> to vector<16x16xbf16>
    %c0_108 = arith.constant 0 : index
    %c220 = arith.constant 220 : index
    %129 = vector.load %arg7[%c0_108, %c220] : memref<16x1024xbf16, #tpu.memory_space<vmem>>, vector<16x768xbf16>
    %cst_109 = arith.constant dense<0.000000e+00> : vector<16x768xf32>
    %130 = tpu.matmul %128, %129, %cst_109 {dimension_numbers = #tpu.dot_dimension_numbers<[1], [0], [0], [1], [0, 0, 1, 1], [], []>} : vector<16x16xbf16>, vector<16x768xbf16>, vector<16x768xf32> -> vector<16x768xf32>
    %131 = arith.addf %126, %130 : vector<16x768xf32>
    %c25 = arith.constant 25 : index
    %c0_110 = arith.constant 0 : index
    %c0_111 = arith.constant 0 : index
    %132 = vector.load %arg3[%c25, %c0_110, %c0_111] : memref<27x16x16xbf16, #tpu.memory_space<vmem>>, vector<1x16x16xbf16>
    %133 = vector.shape_cast %132 : vector<1x16x16xbf16> to vector<16x16xbf16>
    %c0_112 = arith.constant 0 : index
    %c221 = arith.constant 221 : index
    %134 = vector.load %arg7[%c0_112, %c221] : memref<16x1024xbf16, #tpu.memory_space<vmem>>, vector<16x768xbf16>
    %cst_113 = arith.constant dense<0.000000e+00> : vector<16x768xf32>
    %135 = tpu.matmul %133, %134, %cst_113 {dimension_numbers = #tpu.dot_dimension_numbers<[1], [0], [0], [1], [0, 0, 1, 1], [], []>} : vector<16x16xbf16>, vector<16x768xbf16>, vector<16x768xf32> -> vector<16x768xf32>
    %136 = arith.addf %131, %135 : vector<16x768xf32>
    %c26 = arith.constant 26 : index
    %c0_114 = arith.constant 0 : index
    %c0_115 = arith.constant 0 : index
    %137 = vector.load %arg3[%c26, %c0_114, %c0_115] : memref<27x16x16xbf16, #tpu.memory_space<vmem>>, vector<1x16x16xbf16>
    %138 = vector.shape_cast %137 : vector<1x16x16xbf16> to vector<16x16xbf16>
    %c0_116 = arith.constant 0 : index
    %c222 = arith.constant 222 : index
    %139 = vector.load %arg7[%c0_116, %c222] : memref<16x1024xbf16, #tpu.memory_space<vmem>>, vector<16x768xbf16>
    %cst_117 = arith.constant dense<0.000000e+00> : vector<16x768xf32>
    %140 = tpu.matmul %138, %139, %cst_117 {dimension_numbers = #tpu.dot_dimension_numbers<[1], [0], [0], [1], [0, 0, 1, 1], [], []>} : vector<16x16xbf16>, vector<16x768xbf16>, vector<16x768xf32> -> vector<16x768xf32>
    %141 = arith.addf %136, %140 : vector<16x768xf32>
    %142 = arith.mulf %141, %141 : vector<16x768xf32>
    %cst_118 = arith.constant dense<0.000000e+00> : vector<768xf32>
    %143 = vector.multi_reduction <add>, %142, %cst_118 [0] : vector<16x768xf32> to vector<768xf32>
    %144 = vector.shape_cast %143 : vector<768xf32> to vector<1x768xf32>
    %cst_119 = arith.constant 9.99999974E-6 : f32
    %145 = vector.broadcast %cst_119 : f32 to vector<1x768xf32>
    %146 = arith.addf %144, %145 : vector<1x768xf32>
    %147 = math.rsqrt %146 : vector<1x768xf32>
    %c0_120 = arith.constant 0 : index
    %c0_121 = arith.constant 0 : index
    %c0_122 = arith.constant 0 : index
    %148 = vector.load %arg5[%c0_120, %c0_121, %c0_122] : memref<1x1x768xf32, #tpu.memory_space<vmem>>, vector<1x1x768xf32>
    %149 = vector.shape_cast %148 : vector<1x1x768xf32> to vector<1x768xf32>
    %150 = arith.mulf %147, %149 : vector<1x768xf32>
    %151 = vector.broadcast %150 : vector<1x768xf32> to vector<16x768xf32>
    %152 = arith.mulf %141, %151 : vector<16x768xf32>
    %cst_123 = arith.constant 0.000000e+00 : f32
    %153 = vector.broadcast %cst_123 : f32 to vector<16x768xf32>
    %154 = arith.maximumf %152, %153 : vector<16x768xf32>
    %155 = arith.truncf %154 : vector<16x768xf32> to vector<16x768xbf16>
    %c0_124 = arith.constant 0 : index
    %c0_125 = arith.constant 0 : index
    %156 = vector.load %arg8[%c0_124, %c0_125] : memref<16x768xbf16, #tpu.memory_space<vmem>>, vector<16x768xbf16>
    tpu.vector_store %arg8[%c0_124, %c0_125], %155 {strides = array<i32>} : memref<16x768xbf16, #tpu.memory_space<vmem>>, vector<16x768xbf16>,
    %cst_126 = arith.constant 0.000000e+00 : f32
    %157 = vector.broadcast %cst_126 : f32 to vector<16x512xf32>
    %c0_127 = arith.constant 0 : index
    %c0_128 = arith.constant 0 : index
    %c0_129 = arith.constant 0 : index
    %158 = vector.load %arg4[%c0_127, %c0_128, %c0_129] : memref<27x16x16xbf16, #tpu.memory_space<vmem>>, vector<1x16x16xbf16>
    %159 = vector.shape_cast %158 : vector<1x16x16xbf16> to vector<16x16xbf16>
    %c0_130 = arith.constant 0 : index
    %c0_131 = arith.constant 0 : index
    %160 = vector.load %arg8[%c0_130, %c0_131] : memref<16x768xbf16, #tpu.memory_space<vmem>>, vector<16x512xbf16>
    %cst_132 = arith.constant dense<0.000000e+00> : vector<16x512xf32>
    %161 = tpu.matmul %159, %160, %cst_132 {dimension_numbers = #tpu.dot_dimension_numbers<[1], [0], [0], [1], [0, 0, 1, 1], [], []>} : vector<16x16xbf16>, vector<16x512xbf16>, vector<16x512xf32> -> vector<16x512xf32>
    %162 = arith.addf %157, %161 : vector<16x512xf32>
    %c1_133 = arith.constant 1 : index
    %c0_134 = arith.constant 0 : index
    %c0_135 = arith.constant 0 : index
    %163 = vector.load %arg4[%c1_133, %c0_134, %c0_135] : memref<27x16x16xbf16, #tpu.memory_space<vmem>>, vector<1x16x16xbf16>
    %164 = vector.shape_cast %163 : vector<1x16x16xbf16> to vector<16x16xbf16>
    %c0_136 = arith.constant 0 : index
    %c1_137 = arith.constant 1 : index
    %165 = vector.load %arg8[%c0_136, %c1_137] : memref<16x768xbf16, #tpu.memory_space<vmem>>, vector<16x512xbf16>
    %cst_138 = arith.constant dense<0.000000e+00> : vector<16x512xf32>
    %166 = tpu.matmul %164, %165, %cst_138 {dimension_numbers = #tpu.dot_dimension_numbers<[1], [0], [0], [1], [0, 0, 1, 1], [], []>} : vector<16x16xbf16>, vector<16x512xbf16>, vector<16x512xf32> -> vector<16x512xf32>
    %167 = arith.addf %162, %166 : vector<16x512xf32>
    %c2_139 = arith.constant 2 : index
    %c0_140 = arith.constant 0 : index
    %c0_141 = arith.constant 0 : index
    %168 = vector.load %arg4[%c2_139, %c0_140, %c0_141] : memref<27x16x16xbf16, #tpu.memory_space<vmem>>, vector<1x16x16xbf16>
    %169 = vector.shape_cast %168 : vector<1x16x16xbf16> to vector<16x16xbf16>
    %c0_142 = arith.constant 0 : index
    %c2_143 = arith.constant 2 : index
    %170 = vector.load %arg8[%c0_142, %c2_143] : memref<16x768xbf16, #tpu.memory_space<vmem>>, vector<16x512xbf16>
    %cst_144 = arith.constant dense<0.000000e+00> : vector<16x512xf32>
    %171 = tpu.matmul %169, %170, %cst_144 {dimension_numbers = #tpu.dot_dimension_numbers<[1], [0], [0], [1], [0, 0, 1, 1], [], []>} : vector<16x16xbf16>, vector<16x512xbf16>, vector<16x512xf32> -> vector<16x512xf32>
    %172 = arith.addf %167, %171 : vector<16x512xf32>
    %c3_145 = arith.constant 3 : index
    %c0_146 = arith.constant 0 : index
    %c0_147 = arith.constant 0 : index
    %173 = vector.load %arg4[%c3_145, %c0_146, %c0_147] : memref<27x16x16xbf16, #tpu.memory_space<vmem>>, vector<1x16x16xbf16>
    %174 = vector.shape_cast %173 : vector<1x16x16xbf16> to vector<16x16xbf16>
    %c0_148 = arith.constant 0 : index
    %c10_149 = arith.constant 10 : index
    %175 = vector.load %arg8[%c0_148, %c10_149] : memref<16x768xbf16, #tpu.memory_space<vmem>>, vector<16x512xbf16>
    %cst_150 = arith.constant dense<0.000000e+00> : vector<16x512xf32>
    %176 = tpu.matmul %174, %175, %cst_150 {dimension_numbers = #tpu.dot_dimension_numbers<[1], [0], [0], [1], [0, 0, 1, 1], [], []>} : vector<16x16xbf16>, vector<16x512xbf16>, vector<16x512xf32> -> vector<16x512xf32>
    %177 = arith.addf %172, %176 : vector<16x512xf32>
    %c4_151 = arith.constant 4 : index
    %c0_152 = arith.constant 0 : index
    %c0_153 = arith.constant 0 : index
    %178 = vector.load %arg4[%c4_151, %c0_152, %c0_153] : memref<27x16x16xbf16, #tpu.memory_space<vmem>>, vector<1x16x16xbf16>
    %179 = vector.shape_cast %178 : vector<1x16x16xbf16> to vector<16x16xbf16>
    %c0_154 = arith.constant 0 : index
    %c11_155 = arith.constant 11 : index
    %180 = vector.load %arg8[%c0_154, %c11_155] : memref<16x768xbf16, #tpu.memory_space<vmem>>, vector<16x512xbf16>
    %cst_156 = arith.constant dense<0.000000e+00> : vector<16x512xf32>
    %181 = tpu.matmul %179, %180, %cst_156 {dimension_numbers = #tpu.dot_dimension_numbers<[1], [0], [0], [1], [0, 0, 1, 1], [], []>} : vector<16x16xbf16>, vector<16x512xbf16>, vector<16x512xf32> -> vector<16x512xf32>
    %182 = arith.addf %177, %181 : vector<16x512xf32>
    %c5_157 = arith.constant 5 : index
    %c0_158 = arith.constant 0 : index
    %c0_159 = arith.constant 0 : index
    %183 = vector.load %arg4[%c5_157, %c0_158, %c0_159] : memref<27x16x16xbf16, #tpu.memory_space<vmem>>, vector<1x16x16xbf16>
    %184 = vector.shape_cast %183 : vector<1x16x16xbf16> to vector<16x16xbf16>
    %c0_160 = arith.constant 0 : index
    %c12_161 = arith.constant 12 : index
    %185 = vector.load %arg8[%c0_160, %c12_161] : memref<16x768xbf16, #tpu.memory_space<vmem>>, vector<16x512xbf16>
    %cst_162 = arith.constant dense<0.000000e+00> : vector<16x512xf32>
    %186 = tpu.matmul %184, %185, %cst_162 {dimension_numbers = #tpu.dot_dimension_numbers<[1], [0], [0], [1], [0, 0, 1, 1], [], []>} : vector<16x16xbf16>, vector<16x512xbf16>, vector<16x512xf32> -> vector<16x512xf32>
    %187 = arith.addf %182, %186 : vector<16x512xf32>
    %c6_163 = arith.constant 6 : index
    %c0_164 = arith.constant 0 : index
    %c0_165 = arith.constant 0 : index
    %188 = vector.load %arg4[%c6_163, %c0_164, %c0_165] : memref<27x16x16xbf16, #tpu.memory_space<vmem>>, vector<1x16x16xbf16>
    %189 = vector.shape_cast %188 : vector<1x16x16xbf16> to vector<16x16xbf16>
    %c0_166 = arith.constant 0 : index
    %c20_167 = arith.constant 20 : index
    %190 = vector.load %arg8[%c0_166, %c20_167] : memref<16x768xbf16, #tpu.memory_space<vmem>>, vector<16x512xbf16>
    %cst_168 = arith.constant dense<0.000000e+00> : vector<16x512xf32>
    %191 = tpu.matmul %189, %190, %cst_168 {dimension_numbers = #tpu.dot_dimension_numbers<[1], [0], [0], [1], [0, 0, 1, 1], [], []>} : vector<16x16xbf16>, vector<16x512xbf16>, vector<16x512xf32> -> vector<16x512xf32>
    %192 = arith.addf %187, %191 : vector<16x512xf32>
    %c7_169 = arith.constant 7 : index
    %c0_170 = arith.constant 0 : index
    %c0_171 = arith.constant 0 : index
    %193 = vector.load %arg4[%c7_169, %c0_170, %c0_171] : memref<27x16x16xbf16, #tpu.memory_space<vmem>>, vector<1x16x16xbf16>
    %194 = vector.shape_cast %193 : vector<1x16x16xbf16> to vector<16x16xbf16>
    %c0_172 = arith.constant 0 : index
    %c21_173 = arith.constant 21 : index
    %195 = vector.load %arg8[%c0_172, %c21_173] : memref<16x768xbf16, #tpu.memory_space<vmem>>, vector<16x512xbf16>
    %cst_174 = arith.constant dense<0.000000e+00> : vector<16x512xf32>
    %196 = tpu.matmul %194, %195, %cst_174 {dimension_numbers = #tpu.dot_dimension_numbers<[1], [0], [0], [1], [0, 0, 1, 1], [], []>} : vector<16x16xbf16>, vector<16x512xbf16>, vector<16x512xf32> -> vector<16x512xf32>
    %197 = arith.addf %192, %196 : vector<16x512xf32>
    %c8_175 = arith.constant 8 : index
    %c0_176 = arith.constant 0 : index
    %c0_177 = arith.constant 0 : index
    %198 = vector.load %arg4[%c8_175, %c0_176, %c0_177] : memref<27x16x16xbf16, #tpu.memory_space<vmem>>, vector<1x16x16xbf16>
    %199 = vector.shape_cast %198 : vector<1x16x16xbf16> to vector<16x16xbf16>
    %c0_178 = arith.constant 0 : index
    %c22_179 = arith.constant 22 : index
    %200 = vector.load %arg8[%c0_178, %c22_179] : memref<16x768xbf16, #tpu.memory_space<vmem>>, vector<16x512xbf16>
    %cst_180 = arith.constant dense<0.000000e+00> : vector<16x512xf32>
    %201 = tpu.matmul %199, %200, %cst_180 {dimension_numbers = #tpu.dot_dimension_numbers<[1], [0], [0], [1], [0, 0, 1, 1], [], []>} : vector<16x16xbf16>, vector<16x512xbf16>, vector<16x512xf32> -> vector<16x512xf32>
    %202 = arith.addf %197, %201 : vector<16x512xf32>
    %c9_181 = arith.constant 9 : index
    %c0_182 = arith.constant 0 : index
    %c0_183 = arith.constant 0 : index
    %203 = vector.load %arg4[%c9_181, %c0_182, %c0_183] : memref<27x16x16xbf16, #tpu.memory_space<vmem>>, vector<1x16x16xbf16>
    %204 = vector.shape_cast %203 : vector<1x16x16xbf16> to vector<16x16xbf16>
    %c0_184 = arith.constant 0 : index
    %c100_185 = arith.constant 100 : index
    %205 = vector.load %arg8[%c0_184, %c100_185] : memref<16x768xbf16, #tpu.memory_space<vmem>>, vector<16x512xbf16>
    %cst_186 = arith.constant dense<0.000000e+00> : vector<16x512xf32>
    %206 = tpu.matmul %204, %205, %cst_186 {dimension_numbers = #tpu.dot_dimension_numbers<[1], [0], [0], [1], [0, 0, 1, 1], [], []>} : vector<16x16xbf16>, vector<16x512xbf16>, vector<16x512xf32> -> vector<16x512xf32>
    %207 = arith.addf %202, %206 : vector<16x512xf32>
    %c10_187 = arith.constant 10 : index
    %c0_188 = arith.constant 0 : index
    %c0_189 = arith.constant 0 : index
    %208 = vector.load %arg4[%c10_187, %c0_188, %c0_189] : memref<27x16x16xbf16, #tpu.memory_space<vmem>>, vector<1x16x16xbf16>
    %209 = vector.shape_cast %208 : vector<1x16x16xbf16> to vector<16x16xbf16>
    %c0_190 = arith.constant 0 : index
    %c101_191 = arith.constant 101 : index
    %210 = vector.load %arg8[%c0_190, %c101_191] : memref<16x768xbf16, #tpu.memory_space<vmem>>, vector<16x512xbf16>
    %cst_192 = arith.constant dense<0.000000e+00> : vector<16x512xf32>
    %211 = tpu.matmul %209, %210, %cst_192 {dimension_numbers = #tpu.dot_dimension_numbers<[1], [0], [0], [1], [0, 0, 1, 1], [], []>} : vector<16x16xbf16>, vector<16x512xbf16>, vector<16x512xf32> -> vector<16x512xf32>
    %212 = arith.addf %207, %211 : vector<16x512xf32>
    %c11_193 = arith.constant 11 : index
    %c0_194 = arith.constant 0 : index
    %c0_195 = arith.constant 0 : index
    %213 = vector.load %arg4[%c11_193, %c0_194, %c0_195] : memref<27x16x16xbf16, #tpu.memory_space<vmem>>, vector<1x16x16xbf16>
    %214 = vector.shape_cast %213 : vector<1x16x16xbf16> to vector<16x16xbf16>
    %c0_196 = arith.constant 0 : index
    %c102_197 = arith.constant 102 : index
    %215 = vector.load %arg8[%c0_196, %c102_197] : memref<16x768xbf16, #tpu.memory_space<vmem>>, vector<16x512xbf16>
    %cst_198 = arith.constant dense<0.000000e+00> : vector<16x512xf32>
    %216 = tpu.matmul %214, %215, %cst_198 {dimension_numbers = #tpu.dot_dimension_numbers<[1], [0], [0], [1], [0, 0, 1, 1], [], []>} : vector<16x16xbf16>, vector<16x512xbf16>, vector<16x512xf32> -> vector<16x512xf32>
    %217 = arith.addf %212, %216 : vector<16x512xf32>
    %c12_199 = arith.constant 12 : index
    %c0_200 = arith.constant 0 : index
    %c0_201 = arith.constant 0 : index
    %218 = vector.load %arg4[%c12_199, %c0_200, %c0_201] : memref<27x16x16xbf16, #tpu.memory_space<vmem>>, vector<1x16x16xbf16>
    %219 = vector.shape_cast %218 : vector<1x16x16xbf16> to vector<16x16xbf16>
    %c0_202 = arith.constant 0 : index
    %c110_203 = arith.constant 110 : index
    %220 = vector.load %arg8[%c0_202, %c110_203] : memref<16x768xbf16, #tpu.memory_space<vmem>>, vector<16x512xbf16>
    %cst_204 = arith.constant dense<0.000000e+00> : vector<16x512xf32>
    %221 = tpu.matmul %219, %220, %cst_204 {dimension_numbers = #tpu.dot_dimension_numbers<[1], [0], [0], [1], [0, 0, 1, 1], [], []>} : vector<16x16xbf16>, vector<16x512xbf16>, vector<16x512xf32> -> vector<16x512xf32>
    %222 = arith.addf %217, %221 : vector<16x512xf32>
    %c13_205 = arith.constant 13 : index
    %c0_206 = arith.constant 0 : index
    %c0_207 = arith.constant 0 : index
    %223 = vector.load %arg4[%c13_205, %c0_206, %c0_207] : memref<27x16x16xbf16, #tpu.memory_space<vmem>>, vector<1x16x16xbf16>
    %224 = vector.shape_cast %223 : vector<1x16x16xbf16> to vector<16x16xbf16>
    %c0_208 = arith.constant 0 : index
    %c111_209 = arith.constant 111 : index
    %225 = vector.load %arg8[%c0_208, %c111_209] : memref<16x768xbf16, #tpu.memory_space<vmem>>, vector<16x512xbf16>
    %cst_210 = arith.constant dense<0.000000e+00> : vector<16x512xf32>
    %226 = tpu.matmul %224, %225, %cst_210 {dimension_numbers = #tpu.dot_dimension_numbers<[1], [0], [0], [1], [0, 0, 1, 1], [], []>} : vector<16x16xbf16>, vector<16x512xbf16>, vector<16x512xf32> -> vector<16x512xf32>
    %227 = arith.addf %222, %226 : vector<16x512xf32>
    %c14_211 = arith.constant 14 : index
    %c0_212 = arith.constant 0 : index
    %c0_213 = arith.constant 0 : index
    %228 = vector.load %arg4[%c14_211, %c0_212, %c0_213] : memref<27x16x16xbf16, #tpu.memory_space<vmem>>, vector<1x16x16xbf16>
    %229 = vector.shape_cast %228 : vector<1x16x16xbf16> to vector<16x16xbf16>
    %c0_214 = arith.constant 0 : index
    %c112_215 = arith.constant 112 : index
    %230 = vector.load %arg8[%c0_214, %c112_215] : memref<16x768xbf16, #tpu.memory_space<vmem>>, vector<16x512xbf16>
    %cst_216 = arith.constant dense<0.000000e+00> : vector<16x512xf32>
    %231 = tpu.matmul %229, %230, %cst_216 {dimension_numbers = #tpu.dot_dimension_numbers<[1], [0], [0], [1], [0, 0, 1, 1], [], []>} : vector<16x16xbf16>, vector<16x512xbf16>, vector<16x512xf32> -> vector<16x512xf32>
    %232 = arith.addf %227, %231 : vector<16x512xf32>
    %c15_217 = arith.constant 15 : index
    %c0_218 = arith.constant 0 : index
    %c0_219 = arith.constant 0 : index
    %233 = vector.load %arg4[%c15_217, %c0_218, %c0_219] : memref<27x16x16xbf16, #tpu.memory_space<vmem>>, vector<1x16x16xbf16>
    %234 = vector.shape_cast %233 : vector<1x16x16xbf16> to vector<16x16xbf16>
    %c0_220 = arith.constant 0 : index
    %c120_221 = arith.constant 120 : index
    %235 = vector.load %arg8[%c0_220, %c120_221] : memref<16x768xbf16, #tpu.memory_space<vmem>>, vector<16x512xbf16>
    %cst_222 = arith.constant dense<0.000000e+00> : vector<16x512xf32>
    %236 = tpu.matmul %234, %235, %cst_222 {dimension_numbers = #tpu.dot_dimension_numbers<[1], [0], [0], [1], [0, 0, 1, 1], [], []>} : vector<16x16xbf16>, vector<16x512xbf16>, vector<16x512xf32> -> vector<16x512xf32>
    %237 = arith.addf %232, %236 : vector<16x512xf32>
    %c16_223 = arith.constant 16 : index
    %c0_224 = arith.constant 0 : index
    %c0_225 = arith.constant 0 : index
    %238 = vector.load %arg4[%c16_223, %c0_224, %c0_225] : memref<27x16x16xbf16, #tpu.memory_space<vmem>>, vector<1x16x16xbf16>
    %239 = vector.shape_cast %238 : vector<1x16x16xbf16> to vector<16x16xbf16>
    %c0_226 = arith.constant 0 : index
    %c121_227 = arith.constant 121 : index
    %240 = vector.load %arg8[%c0_226, %c121_227] : memref<16x768xbf16, #tpu.memory_space<vmem>>, vector<16x512xbf16>
    %cst_228 = arith.constant dense<0.000000e+00> : vector<16x512xf32>
    %241 = tpu.matmul %239, %240, %cst_228 {dimension_numbers = #tpu.dot_dimension_numbers<[1], [0], [0], [1], [0, 0, 1, 1], [], []>} : vector<16x16xbf16>, vector<16x512xbf16>, vector<16x512xf32> -> vector<16x512xf32>
    %242 = arith.addf %237, %241 : vector<16x512xf32>
    %c17_229 = arith.constant 17 : index
    %c0_230 = arith.constant 0 : index
    %c0_231 = arith.constant 0 : index
    %243 = vector.load %arg4[%c17_229, %c0_230, %c0_231] : memref<27x16x16xbf16, #tpu.memory_space<vmem>>, vector<1x16x16xbf16>
    %244 = vector.shape_cast %243 : vector<1x16x16xbf16> to vector<16x16xbf16>
    %c0_232 = arith.constant 0 : index
    %c122_233 = arith.constant 122 : index
    %245 = vector.load %arg8[%c0_232, %c122_233] : memref<16x768xbf16, #tpu.memory_space<vmem>>, vector<16x512xbf16>
    %cst_234 = arith.constant dense<0.000000e+00> : vector<16x512xf32>
    %246 = tpu.matmul %244, %245, %cst_234 {dimension_numbers = #tpu.dot_dimension_numbers<[1], [0], [0], [1], [0, 0, 1, 1], [], []>} : vector<16x16xbf16>, vector<16x512xbf16>, vector<16x512xf32> -> vector<16x512xf32>
    %247 = arith.addf %242, %246 : vector<16x512xf32>
    %c18_235 = arith.constant 18 : index
    %c0_236 = arith.constant 0 : index
    %c0_237 = arith.constant 0 : index
    %248 = vector.load %arg4[%c18_235, %c0_236, %c0_237] : memref<27x16x16xbf16, #tpu.memory_space<vmem>>, vector<1x16x16xbf16>
    %249 = vector.shape_cast %248 : vector<1x16x16xbf16> to vector<16x16xbf16>
    %c0_238 = arith.constant 0 : index
    %c200_239 = arith.constant 200 : index
    %250 = vector.load %arg8[%c0_238, %c200_239] : memref<16x768xbf16, #tpu.memory_space<vmem>>, vector<16x512xbf16>
    %cst_240 = arith.constant dense<0.000000e+00> : vector<16x512xf32>
    %251 = tpu.matmul %249, %250, %cst_240 {dimension_numbers = #tpu.dot_dimension_numbers<[1], [0], [0], [1], [0, 0, 1, 1], [], []>} : vector<16x16xbf16>, vector<16x512xbf16>, vector<16x512xf32> -> vector<16x512xf32>
    %252 = arith.addf %247, %251 : vector<16x512xf32>
    %c19_241 = arith.constant 19 : index
    %c0_242 = arith.constant 0 : index
    %c0_243 = arith.constant 0 : index
    %253 = vector.load %arg4[%c19_241, %c0_242, %c0_243] : memref<27x16x16xbf16, #tpu.memory_space<vmem>>, vector<1x16x16xbf16>
    %254 = vector.shape_cast %253 : vector<1x16x16xbf16> to vector<16x16xbf16>
    %c0_244 = arith.constant 0 : index
    %c201_245 = arith.constant 201 : index
    %255 = vector.load %arg8[%c0_244, %c201_245] : memref<16x768xbf16, #tpu.memory_space<vmem>>, vector<16x512xbf16>
    %cst_246 = arith.constant dense<0.000000e+00> : vector<16x512xf32>
    %256 = tpu.matmul %254, %255, %cst_246 {dimension_numbers = #tpu.dot_dimension_numbers<[1], [0], [0], [1], [0, 0, 1, 1], [], []>} : vector<16x16xbf16>, vector<16x512xbf16>, vector<16x512xf32> -> vector<16x512xf32>
    %257 = arith.addf %252, %256 : vector<16x512xf32>
    %c20_247 = arith.constant 20 : index
    %c0_248 = arith.constant 0 : index
    %c0_249 = arith.constant 0 : index
    %258 = vector.load %arg4[%c20_247, %c0_248, %c0_249] : memref<27x16x16xbf16, #tpu.memory_space<vmem>>, vector<1x16x16xbf16>
    %259 = vector.shape_cast %258 : vector<1x16x16xbf16> to vector<16x16xbf16>
    %c0_250 = arith.constant 0 : index
    %c202_251 = arith.constant 202 : index
    %260 = vector.load %arg8[%c0_250, %c202_251] : memref<16x768xbf16, #tpu.memory_space<vmem>>, vector<16x512xbf16>
    %cst_252 = arith.constant dense<0.000000e+00> : vector<16x512xf32>
    %261 = tpu.matmul %259, %260, %cst_252 {dimension_numbers = #tpu.dot_dimension_numbers<[1], [0], [0], [1], [0, 0, 1, 1], [], []>} : vector<16x16xbf16>, vector<16x512xbf16>, vector<16x512xf32> -> vector<16x512xf32>
    %262 = arith.addf %257, %261 : vector<16x512xf32>
    %c21_253 = arith.constant 21 : index
    %c0_254 = arith.constant 0 : index
    %c0_255 = arith.constant 0 : index
    %263 = vector.load %arg4[%c21_253, %c0_254, %c0_255] : memref<27x16x16xbf16, #tpu.memory_space<vmem>>, vector<1x16x16xbf16>
    %264 = vector.shape_cast %263 : vector<1x16x16xbf16> to vector<16x16xbf16>
    %c0_256 = arith.constant 0 : index
    %c210_257 = arith.constant 210 : index
    %265 = vector.load %arg8[%c0_256, %c210_257] : memref<16x768xbf16, #tpu.memory_space<vmem>>, vector<16x512xbf16>
    %cst_258 = arith.constant dense<0.000000e+00> : vector<16x512xf32>
    %266 = tpu.matmul %264, %265, %cst_258 {dimension_numbers = #tpu.dot_dimension_numbers<[1], [0], [0], [1], [0, 0, 1, 1], [], []>} : vector<16x16xbf16>, vector<16x512xbf16>, vector<16x512xf32> -> vector<16x512xf32>
    %267 = arith.addf %262, %266 : vector<16x512xf32>
    %c22_259 = arith.constant 22 : index
    %c0_260 = arith.constant 0 : index
    %c0_261 = arith.constant 0 : index
    %268 = vector.load %arg4[%c22_259, %c0_260, %c0_261] : memref<27x16x16xbf16, #tpu.memory_space<vmem>>, vector<1x16x16xbf16>
    %269 = vector.shape_cast %268 : vector<1x16x16xbf16> to vector<16x16xbf16>
    %c0_262 = arith.constant 0 : index
    %c211_263 = arith.constant 211 : index
    %270 = vector.load %arg8[%c0_262, %c211_263] : memref<16x768xbf16, #tpu.memory_space<vmem>>, vector<16x512xbf16>
    %cst_264 = arith.constant dense<0.000000e+00> : vector<16x512xf32>
    %271 = tpu.matmul %269, %270, %cst_264 {dimension_numbers = #tpu.dot_dimension_numbers<[1], [0], [0], [1], [0, 0, 1, 1], [], []>} : vector<16x16xbf16>, vector<16x512xbf16>, vector<16x512xf32> -> vector<16x512xf32>
    %272 = arith.addf %267, %271 : vector<16x512xf32>
    %c23_265 = arith.constant 23 : index
    %c0_266 = arith.constant 0 : index
    %c0_267 = arith.constant 0 : index
    %273 = vector.load %arg4[%c23_265, %c0_266, %c0_267] : memref<27x16x16xbf16, #tpu.memory_space<vmem>>, vector<1x16x16xbf16>
    %274 = vector.shape_cast %273 : vector<1x16x16xbf16> to vector<16x16xbf16>
    %c0_268 = arith.constant 0 : index
    %c212_269 = arith.constant 212 : index
    %275 = vector.load %arg8[%c0_268, %c212_269] : memref<16x768xbf16, #tpu.memory_space<vmem>>, vector<16x512xbf16>
    %cst_270 = arith.constant dense<0.000000e+00> : vector<16x512xf32>
    %276 = tpu.matmul %274, %275, %cst_270 {dimension_numbers = #tpu.dot_dimension_numbers<[1], [0], [0], [1], [0, 0, 1, 1], [], []>} : vector<16x16xbf16>, vector<16x512xbf16>, vector<16x512xf32> -> vector<16x512xf32>
    %277 = arith.addf %272, %276 : vector<16x512xf32>
    %c24_271 = arith.constant 24 : index
    %c0_272 = arith.constant 0 : index
    %c0_273 = arith.constant 0 : index
    %278 = vector.load %arg4[%c24_271, %c0_272, %c0_273] : memref<27x16x16xbf16, #tpu.memory_space<vmem>>, vector<1x16x16xbf16>
    %279 = vector.shape_cast %278 : vector<1x16x16xbf16> to vector<16x16xbf16>
    %c0_274 = arith.constant 0 : index
    %c220_275 = arith.constant 220 : index
    %280 = vector.load %arg8[%c0_274, %c220_275] : memref<16x768xbf16, #tpu.memory_space<vmem>>, vector<16x512xbf16>
    %cst_276 = arith.constant dense<0.000000e+00> : vector<16x512xf32>
    %281 = tpu.matmul %279, %280, %cst_276 {dimension_numbers = #tpu.dot_dimension_numbers<[1], [0], [0], [1], [0, 0, 1, 1], [], []>} : vector<16x16xbf16>, vector<16x512xbf16>, vector<16x512xf32> -> vector<16x512xf32>
    %282 = arith.addf %277, %281 : vector<16x512xf32>
    %c25_277 = arith.constant 25 : index
    %c0_278 = arith.constant 0 : index
    %c0_279 = arith.constant 0 : index
    %283 = vector.load %arg4[%c25_277, %c0_278, %c0_279] : memref<27x16x16xbf16, #tpu.memory_space<vmem>>, vector<1x16x16xbf16>
    %284 = vector.shape_cast %283 : vector<1x16x16xbf16> to vector<16x16xbf16>
    %c0_280 = arith.constant 0 : index
    %c221_281 = arith.constant 221 : index
    %285 = vector.load %arg8[%c0_280, %c221_281] : memref<16x768xbf16, #tpu.memory_space<vmem>>, vector<16x512xbf16>
    %cst_282 = arith.constant dense<0.000000e+00> : vector<16x512xf32>
    %286 = tpu.matmul %284, %285, %cst_282 {dimension_numbers = #tpu.dot_dimension_numbers<[1], [0], [0], [1], [0, 0, 1, 1], [], []>} : vector<16x16xbf16>, vector<16x512xbf16>, vector<16x512xf32> -> vector<16x512xf32>
    %287 = arith.addf %282, %286 : vector<16x512xf32>
    %c26_283 = arith.constant 26 : index
    %c0_284 = arith.constant 0 : index
    %c0_285 = arith.constant 0 : index
    %288 = vector.load %arg4[%c26_283, %c0_284, %c0_285] : memref<27x16x16xbf16, #tpu.memory_space<vmem>>, vector<1x16x16xbf16>
    %289 = vector.shape_cast %288 : vector<1x16x16xbf16> to vector<16x16xbf16>
    %c0_286 = arith.constant 0 : index
    %c222_287 = arith.constant 222 : index
    %290 = vector.load %arg8[%c0_286, %c222_287] : memref<16x768xbf16, #tpu.memory_space<vmem>>, vector<16x512xbf16>
    %cst_288 = arith.constant dense<0.000000e+00> : vector<16x512xf32>
    %291 = tpu.matmul %289, %290, %cst_288 {dimension_numbers = #tpu.dot_dimension_numbers<[1], [0], [0], [1], [0, 0, 1, 1], [], []>} : vector<16x16xbf16>, vector<16x512xbf16>, vector<16x512xf32> -> vector<16x512xf32>
    %292 = arith.addf %287, %291 : vector<16x512xf32>
    %c0_289 = arith.constant 0 : index
    %c0_290 = arith.constant 0 : index
    %c0_291 = arith.constant 0 : index
    %293 = vector.load %arg6[%c0_289, %c0_290, %c0_291] : memref<1x16x512xf32, #tpu.memory_space<vmem>>, vector<1x16x512xf32>
    %294 = vector.shape_cast %293 : vector<1x16x512xf32> to vector<16x512xf32>
    %295 = vector.shape_cast %292 : vector<16x512xf32> to vector<1x16x512xf32>
    tpu.vector_store %arg6[%c0_289, %c0_290, %c0_291], %295 {strides = array<i32>} : memref<1x16x512xf32, #tpu.memory_space<vmem>>, vector<1x16x512xf32>,
    return
  }
  func.func @transform_1(%arg0: i32, %arg1: i32) -> (i32, i32, i32) {
    %c0_i32 = arith.constant 0 : i32
    %c0_i32_0 = arith.constant 0 : i32
    %c0_i32_1 = arith.constant 0 : i32
    %c0_i32_2 = arith.constant 0 : i32
    return %c0_i32, %c0_i32_0, %c0_i32_1 : i32, i32, i32
  }
  func.func @transform_2(%arg0: i32, %arg1: i32) -> (i32, i32, i32) {
    %c0_i32 = arith.constant 0 : i32
    %c0_i32_0 = arith.constant 0 : i32
    %c0_i32_1 = arith.constant 0 : i32
    %c0_i32_2 = arith.constant 0 : i32
    return %c0_i32, %c0_i32_0, %c0_i32_1 : i32, i32, i32
  }
  func.func @transform_3(%arg0: i32, %arg1: i32) -> (i32, i32, i32) {
    %c0_i32 = arith.constant 0 : i32
    %c0_i32_0 = arith.constant 0 : i32
    %c0_i32_1 = arith.constant 0 : i32
    return %arg1, %c0_i32, %c0_i32_0 : i32, i32, i32
  }
  func.func @transform_4(%arg0: i32, %arg1: i32) -> (i32, i32, i32) {
    %c0_i32 = arith.constant 0 : i32
    %c0_i32_0 = arith.constant 0 : i32
    return %arg0, %c0_i32, %arg1 : i32, i32, i32
  }
}

</mosaic_0001>

<llo_original>
// kernel: double_sym_layer_3d.1
$region0: #{double_sym_layer_3d.1}
  #allocation0 [shape = 'u32[]', space=smem, size = 0x4, offset = 0x4, fixed_abs, tag = 'smem constant byte address 0x4 - core index']
  #allocation1 [shape = 'u32[72,128]{1,0:T(1,128)}', space=vmem, size = 0x9000, scoped, tag = 'internal scratch']
  #allocation2 [shape = 'bf16[16,1024]{1,0:T(8,128)(2,1)}', space=vmem, size = 0x8000, scoped, tag = 'scratch operand']
  #allocation3 [shape = 'bf16[16,768]{1,0:T(8,128)(2,1)}', space=vmem, size = 0x6000, scoped, tag = 'scratch operand']
  #allocation4 [shape = 's32[1]{0}', space=sflag, size = 0x4, scoped, tag = 'scratch operand']
  #allocation6 [shape = 's32[]', space=sflag, size = 0x4, offset = 0, fixed_abs, tag = 'sflag constant byte address 0x0 - dummy sync flag']
  %s0 = inlined_call_operand.vmem [shape: bf16[2,16,1536], index: 0, kind: input, shape index: {}]
  %s1 = inlined_call_operand.vmem [shape: bf16[27,16,16], index: 1, kind: input, shape index: {}]
  %s2 = inlined_call_operand.vmem [shape: bf16[27,16,16], index: 2, kind: input, shape index: {}]
  %s3 = inlined_call_operand.vmem [shape: f32[2,1,768], index: 3, kind: input, shape index: {}]
  %s4 = inlined_call_operand.vmem [shape: f32[2,16,1024], index: 4, kind: output, shape index: {}]
  %s5 = sld [smem:[#allocation0]]
  $region83: #{double_sym_layer_3d.1} parent=0
    _
  %s7 = ssub.s32 1, %s5
  %s8 = scalar_select 0, %s7, %s5
  $region1: #{double_sym_layer_3d.1} parent=0
    #allocation5 [shape = 'u8[65536]{0}', space=vmem, size = 0x10000, scoped, tag = 'output window, operand 0']
    loop: start=0, step=1, limit=6
    $region2: #{double_sym_layer_3d.1} parent=1 // loop_pre_header
      _
    $region3: #{double_sym_layer_3d.1} parent=1 // loop_header
      %s10 = sphi 0, %s14
      %p11 = scmp.ge.s32.totalorder %s10, 6
      %s17 = sphi 0, %s29
      %s18 = sphi 0, %s25
      %s19 = sphi 0, %s17
      %s20 = sphi 0, %s18
      %s21 = sphi 0, %s19
      %s22 = sphi 0, %s20
      %s30 = sphi 0, %s30
      %s32 = sphi 0, %s30
      %s33 = sphi 0, %s32
      %s47 = sphi 0, %s33
      %s51 = sphi 0, %s51
      %s53 = sphi 0, %s51
      %s54 = sphi 0, %s53
      %s68 = sphi 0, %s54
      %s74 = sphi 0, %s76
      %s77 = sphi 0, %s74
      %s78 = sphi 0, %s77
      %s94 = sphi 0, %s78
      %s102 = sphi 0, %s104
      %s105 = sphi 0, %s102
      %s106 = sphi 0, %s105
      %s122 = sphi 0, %s106
    $region4: #{double_sym_layer_3d.1} parent=1 // loop_header_branch
      %13 = sbr.rel (%p11) target = $region8
    $region5: #{double_sym_layer_3d.1} parent=1 // loop_body
      %s15 = ssub.s32 %s10, 1
      %s16 = ssub.s32 %s10, 2
      %s23 = sadd.s32 1, %s18
      %p24 = scmp.ge.s32.totalorder %s23, 2
      %s25 = scalar_select %p24, 0, %s23
      %s26 = sadd.s32 1, %s17
      %s27 = scalar_select %p24, %s26, %s17
      %p28 = scmp.ge.s32.totalorder %s27, 2
      %s29 = scalar_select %p28, 0, %s27
      %s31 = sadd.s32 %s30, 1
      %p34 = scmp.eq.s32.totalorder %s10, 3
      %p35 = scmp.ne.s32.totalorder %s30, %s32
      %p36 = scmp.eq.s32.totalorder %s10, 0
      %p37 = por %p35, %p36
      %p38 = scmp.ne.s32.totalorder %s30, %s32
      %p39 = scmp.eq.s32.totalorder %s15, 3
      %p40 = por %p38, %p39
      %p41 = scmp.ne.s32.totalorder %s32, %s33
      %p42 = scmp.eq.s32.totalorder %s15, 0
      %p43 = por %p41, %p42
      %p44 = scmp.ne.s32.totalorder %s32, %s33
      %p45 = scmp.eq.s32.totalorder %s16, 3
      %p46 = por %p44, %p45
      %p48 = scmp.ne.s32.totalorder %s33, %s47
      %p49 = scmp.eq.s32.totalorder %s16, 0
      %p50 = por %p48, %p49
      %s52 = sadd.s32 %s51, 1
      %p55 = scmp.eq.s32.totalorder %s10, 3
      %p56 = scmp.ne.s32.totalorder %s51, %s53
      %p57 = scmp.eq.s32.totalorder %s10, 0
      %p58 = por %p56, %p57
      %p59 = scmp.ne.s32.totalorder %s51, %s53
      %p60 = scmp.eq.s32.totalorder %s15, 3
      %p61 = por %p59, %p60
      %p62 = scmp.ne.s32.totalorder %s53, %s54
      %p63 = scmp.eq.s32.totalorder %s15, 0
      %p64 = por %p62, %p63
      %p65 = scmp.ne.s32.totalorder %s53, %s54
      %p66 = scmp.eq.s32.totalorder %s16, 3
      %p67 = por %p65, %p66
      %p69 = scmp.ne.s32.totalorder %s54, %s68
      %p70 = scmp.eq.s32.totalorder %s16, 0
      %p71 = por %p69, %p70
      %s72 = ssub.s32 %s18, %s25
      %p73 = scmp.eq.s32.totalorder %s72, 0
      %s75 = sadd.s32 %s74, 1
      %s76 = scalar_select %p73, %s74, %s75
      %p79 = pneg %p73
      %p80 = scmp.eq.s32.totalorder %s10, 3
      %p81 = por %p79, %p80
      %p82 = scmp.ne.s32.totalorder %s74, %s77
      %p83 = scmp.eq.s32.totalorder %s10, 0
      %p84 = por %p82, %p83
      %p85 = scmp.ne.s32.totalorder %s74, %s77
      %p86 = scmp.eq.s32.totalorder %s15, 3
      %p87 = por %p85, %p86
      %p88 = scmp.ne.s32.totalorder %s77, %s78
      %p89 = scmp.eq.s32.totalorder %s15, 0
      %p90 = por %p88, %p89
      %p91 = scmp.ne.s32.totalorder %s77, %s78
      %p92 = scmp.eq.s32.totalorder %s16, 3
      %p93 = por %p91, %p92
      %p95 = scmp.ne.s32.totalorder %s78, %s94
      %p96 = scmp.eq.s32.totalorder %s16, 0
      %p97 = por %p95, %p96
      %s98 = ssub.s32 %s17, %s29
      %s99 = ssub.s32 %s18, %s25
      %s100 = sor.u32 %s98, %s99
      %p101 = scmp.eq.s32.totalorder %s100, 0
      %s103 = sadd.s32 %s102, 1
      %s104 = scalar_select %p101, %s102, %s103
      %p107 = pneg %p101
      %p108 = scmp.eq.s32.totalorder %s10, 3
      %p109 = por %p107, %p108
      %p110 = scmp.ne.s32.totalorder %s102, %s105
      %p111 = scmp.eq.s32.totalorder %s10, 0
      %p112 = por %p110, %p111
      %p113 = scmp.ne.s32.totalorder %s102, %s105
      %p114 = scmp.eq.s32.totalorder %s15, 3
      %p115 = por %p113, %p114
      %p116 = scmp.ne.s32.totalorder %s105, %s106
      %p117 = scmp.eq.s32.totalorder %s15, 0
      %p118 = por %p116, %p117
      %p119 = scmp.ne.s32.totalorder %s105, %s106
      %p120 = scmp.eq.s32.totalorder %s16, 3
      %p121 = por %p119, %p120
      %p123 = scmp.ne.s32.totalorder %s106, %s122
      %p124 = scmp.eq.s32.totalorder %s16, 0
      %p125 = por %p123, %p124
      %p126 = scmp.le.s32.totalorder 1, %s10
      %p127 = scmp.lt.s32.totalorder %s10, 5
      %p128 = pnand %p126, %p127
      %p129 = pneg %p128
      // Predicated region
      $region9: #{double_sym_layer_3d.1} parent=5 // pred_check
        _
      $region10: #{double_sym_layer_3d.1} parent=5 // pred_check_branch
        %131 = sbr.rel (%p128) target = $region12
      $region11: #{double_sym_layer_3d.1} parent=5 // pred_region
        %s132 = ssub.s32 %s10, 1
        // Predicated region
        $region13: #{double_sym_layer_3d.1} parent=11 // pred_check
          %p133 = pneg %p43
        $region14: #{double_sym_layer_3d.1} parent=11 // pred_check_branch
          %135 = sbr.rel (%p133) target = $region16
        $region15: #{double_sym_layer_3d.1} parent=11 // pred_region
          _
        $region16: #{double_sym_layer_3d.1} parent=11 // pred_fallthru
          _
        // Predicated region
        $region17: #{double_sym_layer_3d.1} parent=11 // pred_check
          %p136 = pneg %p64
        $region18: #{double_sym_layer_3d.1} parent=11 // pred_check_branch
          %138 = sbr.rel (%p136) target = $region20
        $region19: #{double_sym_layer_3d.1} parent=11 // pred_region
          _
        $region20: #{double_sym_layer_3d.1} parent=11 // pred_fallthru
          _
      $region12: #{double_sym_layer_3d.1} parent=5 // pred_fallthru
        _
      %p139 = scmp.lt.s32.totalorder %s10, 4
      // Predicated region
      $region21: #{double_sym_layer_3d.1} parent=5 // pred_check
        %p140 = pneg %p139
      $region22: #{double_sym_layer_3d.1} parent=5 // pred_check_branch
        %142 = sbr.rel (%p140) target = $region24
      $region23: #{double_sym_layer_3d.1} parent=5 // pred_region
        // Predicated region
        $region25: #{double_sym_layer_3d.1} parent=23 // pred_check
          %p143 = pneg %p84
        $region26: #{double_sym_layer_3d.1} parent=23 // pred_check_branch
          %145 = sbr.rel (%p143) target = $region28
        $region27: #{double_sym_layer_3d.1} parent=23 // pred_region
          %p146 = scmp.lt.s32.totalorder %s18, 1
          %s147 = scalar_select %p146, %s18, 1
          %s148 = smul.addr %s147, 6
          %s149 = scalar_lea.vmem %s3, %s148
        $region28: #{double_sym_layer_3d.1} parent=23 // pred_fallthru
          _
      $region24: #{double_sym_layer_3d.1} parent=5 // pred_fallthru
        _
      %p150 = scmp.le.s32.totalorder 1, %s10
      %p151 = scmp.lt.s32.totalorder %s10, 5
      %p152 = pnand %p150, %p151
      %p153 = pneg %p152
      // Predicated region
      $region29: #{double_sym_layer_3d.1} parent=5 // pred_check
        _
      $region30: #{double_sym_layer_3d.1} parent=5 // pred_check_branch
        %155 = sbr.rel (%p152) target = $region32
      $region31: #{double_sym_layer_3d.1} parent=5 // pred_region
        %s156 = ssub.s32 %s10, 1
        %p157 = pneg %p43
        %p158 = pneg %p40
        %p159 = pneg %p64
        %p160 = pneg %p61
        %p161 = scmp.lt.s32.totalorder %s20, 1
        %s162 = scalar_select %p161, %s20, 1
        %s163 = smul.addr %s162, 6
        %s164 = scalar_lea.vmem %s3, %s163
        %p165 = pneg %p90
        %p166 = pneg %p87
        %p167 = pneg %p118
        %p168 = pneg %p115
        %s169 = sand.u32 %s105, 1
        %s170 = sand.u32 %s105, 1
        %s171 = smul.addr %s170, 64
        %s172 = scalar_lea.vmem [#allocation5], %s171
        %p173 = scmp.lt.s32.totalorder %s20, 1
        %s174 = scalar_select %p173, %s20, 1
        %s175 = smul.addr %s174, 6
        %s176 = scalar_lea.vmem %s3, %s175
        %s177 = smul.u32 4, %s20
        %s179 = smul.u32 %s20, 512
        %s180 = sshra.s32 %s179, 7
        %s181 = sand.u32 %s179, 127
        %s182 = smul.u32 %s19, 24
        %s183 = sadd.s32 %s180, %s182
        %s184 = smul.addr %s183, 4
        %s185 = scalar_lea.vmem %s0, %s184
        // Predicated region
        $region33: #{double_sym_layer_3d.1} parent=31 // pred_check
          _
        $region34: #{double_sym_layer_3d.1} parent=31 // pred_check_branch
          %187 = sbr.rel (0) target = $region36
        $region35: #{double_sym_layer_3d.1} parent=31 // pred_region
          loop: start=0, step=1, limit=1
          $region37: #{double_sym_layer_3d.1} parent=35 // loop_pre_header
            _
          $region38: #{double_sym_layer_3d.1} parent=35 // loop_header
            %s189 = sphi 0, %s193
            %p190 = scmp.ge.s32.totalorder %s189, 1
            %s194 = sphi %s185, %s185
            %s195 = sphi [#allocation2], [#allocation2]
          $region39: #{double_sym_layer_3d.1} parent=35 // loop_header_branch
            %192 = sbr.rel (%p190) target = $region43
          $region40: #{double_sym_layer_3d.1} parent=35 // loop_body
            %v196 = vld [vmem:[%s194] sm:$0xff]
            %197 = vst [vmem:[%s195] sm:$0xff] %v196
            %v198 = vld [vmem:[%s194 + $0x8] sm:$0xff]
            %199 = vst [vmem:[%s195 + $0x8] sm:$0xff] %v198
            %v200 = vld [vmem:[%s194 + $0x10] sm:$0xff]
            %201 = vst [vmem:[%s195 + $0x10] sm:$0xff] %v200
            %v202 = vld [vmem:[%s194 + $0x18] sm:$0xff]
            %203 = vst [vmem:[%s195 + $0x18] sm:$0xff] %v202
            %v204 = vld [vmem:[%s194 + $0x30] sm:$0xff]
            %205 = vst [vmem:[%s195 + $0x20] sm:$0xff] %v204
            %v206 = vld [vmem:[%s194 + $0x38] sm:$0xff]
            %207 = vst [vmem:[%s195 + $0x28] sm:$0xff] %v206
            %v208 = vld [vmem:[%s194 + $0x40] sm:$0xff]
            %209 = vst [vmem:[%s195 + $0x30] sm:$0xff] %v208
            %v210 = vld [vmem:[%s194 + $0x48] sm:$0xff]
            %211 = vst [vmem:[%s195 + $0x38] sm:$0xff] %v210
          $region41: #{double_sym_layer_3d.1} parent=35 // loop_footer
            %s193 = sadd.s32 1, %s189
          $region42: #{double_sym_layer_3d.1} parent=35 // loop_footer_branch
            %188 = sbr.rel target = $region38
          $region43: #{double_sym_layer_3d.1} parent=35 // loop_exit
            _
        $region36: #{double_sym_layer_3d.1} parent=31 // pred_fallthru
          _
        // Predicated region
        $region44: #{double_sym_layer_3d.1} parent=31 // pred_check
          _
        $region45: #{double_sym_layer_3d.1} parent=31 // pred_check_branch
          %213 = sbr.rel target = $region47
        $region46: #{double_sym_layer_3d.1} parent=31 // pred_region
          _
        $region47: #{double_sym_layer_3d.1} parent=31 // pred_fallthru
          _
        // Predicated region
        $region48: #{double_sym_layer_3d.1} parent=31 // pred_check
          _
        $region49: #{double_sym_layer_3d.1} parent=31 // pred_check_branch
          %216 = sbr.rel (0) target = $region51
        $region50: #{double_sym_layer_3d.1} parent=31 // pred_region
          %217 = vsyncadd [#allocation4], 1024
        $region51: #{double_sym_layer_3d.1} parent=31 // pred_fallthru
          _
        %s218 = smul.u32 4, 2
        %s219 = smul.u32 %s218, 8
        %s220 = sshll.u32 %s219, 4
        %221 = dma.done [#allocation4], %s220
        %v222 = vld [vmem:[%s1] sm:$0xf]
        %v223 = vld [vmem:[%s1 + $0x4] sm:$0xf]
        %v224 = vld [vmem:[#allocation2] sm:$0xff]
        %v225 = vld [vmem:[#allocation2 + $0x8] sm:$0xff]
        %v226 = vld [vmem:[#allocation2 + $0x10] sm:$0xff]
        %v227 = vld [vmem:[#allocation2 + $0x20] sm:$0xff]
        %v228 = vld [vmem:[#allocation2 + $0x28] sm:$0xff]
        %v229 = vld [vmem:[#allocation2 + $0x30] sm:$0xff]
        %s230 = scalar_lea.vmem %s1, 8
        %v231 = vld [vmem:[%s230] sm:$0xf]
        %v232 = vld [vmem:[%s230 + $0x4] sm:$0xf]
        %v233 = vld [vmem:[#allocation2 + $0x18] sm:$0xf]
        %v234 = vld [vmem:[#allocation2 + $0x38] sm:$0xf]
        %v237 = vunpack.c.l.b16 %v231
        %v238 = vunpack.c.l.b16 %v232
        %v239 = vpack.c.b16 %v238, %v237
        %v248 = vunpack.c.l.b16 %v224
        %v249 = vunpack.c.h.b16 %v224
        %v250 = vunpack.c.l.b16 %v225
        %v251 = vunpack.c.h.b16 %v225
        %v252 = vunpack.c.l.b16 %v226
        %v253 = vunpack.c.h.b16 %v226
        %v254 = vunpack.c.l.b16 %v233
        %v255 = vunpack.c.l.b16 %v227
        %v256 = vunpack.c.h.b16 %v227
        %v257 = vunpack.c.l.b16 %v228
        %v258 = vunpack.c.h.b16 %v228
        %v259 = vunpack.c.l.b16 %v229
        %v260 = vunpack.c.h.b16 %v229
        %v261 = vunpack.c.l.b16 %v234
        %v262 = vpack.c.b16 %v255, %v248
        %v263 = vpack.c.b16 %v256, %v249
        %v264 = vpack.c.b16 %v257, %v250
        %v265 = vpack.c.b16 %v258, %v251
        %v266 = vpack.c.b16 %v259, %v252
        %v267 = vpack.c.b16 %v260, %v253
        %v268 = vpack.c.b16 %v261, %v254
        %269 = vrot.lane.b32.xlu0 %v262, 127
        %v270 = vpop.permute.xlu0 %269
        %271 = vrot.lane.b32.xlu0 %v263, 127
        %v272 = vpop.permute.xlu0 %271
        %273 = vrot.lane.b32.xlu0 %v264, 127
        %v274 = vpop.permute.xlu0 %273
        %275 = vrot.lane.b32.xlu0 %v265, 127
        %v276 = vpop.permute.xlu0 %275
        %277 = vrot.lane.b32.xlu0 %v266, 127
        %v278 = vpop.permute.xlu0 %277
        %279 = vrot.lane.b32.xlu0 %v267, 127
        %v280 = vpop.permute.xlu0 %279
        %281 = vrot.lane.b32.xlu0 %v268, 127
        %v282 = vpop.permute.xlu0 %281
        %vm283 = vcmask 1039360
        %v284 = vsel %vm283, %v270, %v272
        %v285 = vsel %vm283, %v272, %v274
        %v286 = vsel %vm283, %v274, %v276
        %v287 = vsel %vm283, %v276, %v278
        %v288 = vsel %vm283, %v278, %v280
        %v289 = vsel %vm283, %v280, %v282
        %vm296 = vcmask 130048
        %v298 = vsel %vm296, %v239, 0
        %300 = vmatpush.bf16.msra.mxu0 0
        %301 = vmatpush.bf16.msra.mxu0 0
        %302 = vmatpush.bf16.msra.mxu0 0
        %303 = vmatpush.bf16.msra.mxu0 0
        %304 = vmatpush.bf16.msra.mxu0 0
        %305 = vmatpush.bf16.msra.mxu0 0
        %306 = vmatpush.bf16.msra.mxu0 0
        %307 = vmatpush.bf16.msra.mxu0 %v284
        %308 = vmatmul.bf16.gmra.mxu0 %v298
        %v309 = vpop.f32.mrf.mxu0
        %v310 = vadd.f32 0.0, %v309
        %v311 = vpop.f32.mrf.mxu0
        %v312 = vadd.f32 0.0, %v311
        %313 = vdwg.mxu0
        %314 = vmatpush.bf16.msra.mxu0 0
        %315 = vmatpush.bf16.msra.mxu0 0
        %316 = vmatpush.bf16.msra.mxu0 0
        %317 = vmatpush.bf16.msra.mxu0 0
        %318 = vmatpush.bf16.msra.mxu0 0
        %319 = vmatpush.bf16.msra.mxu0 0
        %320 = vmatpush.bf16.msra.mxu0 0
        %321 = vmatpush.bf16.msra.mxu0 %v285
        %322 = vmatmul.bf16.gmra.mxu0 %v298
        %v323 = vpop.f32.mrf.mxu0
        %v324 = vadd.f32 0.0, %v323
        %v325 = vpop.f32.mrf.mxu0
        %v326 = vadd.f32 0.0, %v325
        %327 = vdwg.mxu0
        %328 = vmatpush.bf16.msra.mxu0 0
        %329 = vmatpush.bf16.msra.mxu0 0
        %330 = vmatpush.bf16.msra.mxu0 0
        %331 = vmatpush.bf16.msra.mxu0 0
        %332 = vmatpush.bf16.msra.mxu0 0
        %333 = vmatpush.bf16.msra.mxu0 0
        %334 = vmatpush.bf16.msra.mxu0 0
        %335 = vmatpush.bf16.msra.mxu0 %v286
        %336 = vmatmul.bf16.gmra.mxu0 %v298
        %v337 = vpop.f32.mrf.mxu0
        %v338 = vadd.f32 0.0, %v337
        %v339 = vpop.f32.mrf.mxu0
        %v340 = vadd.f32 0.0, %v339
        %341 = vdwg.mxu0
        %342 = vmatpush.bf16.msra.mxu0 0
        %343 = vmatpush.bf16.msra.mxu0 0
        %344 = vmatpush.bf16.msra.mxu0 0
        %345 = vmatpush.bf16.msra.mxu0 0
        %346 = vmatpush.bf16.msra.mxu0 0
        %347 = vmatpush.bf16.msra.mxu0 0
        %348 = vmatpush.bf16.msra.mxu0 0
        %349 = vmatpush.bf16.msra.mxu0 %v287
        %350 = vmatmul.bf16.gmra.mxu0 %v298
        %v351 = vpop.f32.mrf.mxu0
        %v352 = vadd.f32 0.0, %v351
        %v353 = vpop.f32.mrf.mxu0
        %v354 = vadd.f32 0.0, %v353
        %355 = vdwg.mxu0
        %356 = vmatpush.bf16.msra.mxu0 0
        %357 = vmatpush.bf16.msra.mxu0 0
        %358 = vmatpush.bf16.msra.mxu0 0
        %359 = vmatpush.bf16.msra.mxu0 0
        %360 = vmatpush.bf16.msra.mxu0 0
        %361 = vmatpush.bf16.msra.mxu0 0
        %362 = vmatpush.bf16.msra.mxu0 0
        %363 = vmatpush.bf16.msra.mxu0 %v288
        %364 = vmatmul.bf16.gmra.mxu0 %v298
        %v365 = vpop.f32.mrf.mxu0
        %v366 = vadd.f32 0.0, %v365
        %v367 = vpop.f32.mrf.mxu0
        %v368 = vadd.f32 0.0, %v367
        %369 = vdwg.mxu0
        %370 = vmatpush.bf16.msra.mxu0 0
        %371 = vmatpush.bf16.msra.mxu0 0
        %372 = vmatpush.bf16.msra.mxu0 0
        %373 = vmatpush.bf16.msra.mxu0 0
        %374 = vmatpush.bf16.msra.mxu0 0
        %375 = vmatpush.bf16.msra.mxu0 0
        %376 = vmatpush.bf16.msra.mxu0 0
        %377 = vmatpush.bf16.msra.mxu0 %v289
        %378 = vmatmul.bf16.gmra.mxu0 %v298
        %v379 = vpop.f32.mrf.mxu0
        %v380 = vadd.f32 0.0, %v379
        %v381 = vpop.f32.mrf.mxu0
        %v382 = vadd.f32 0.0, %v381
        %383 = vdwg.mxu0
        %v386 = vunpack.c.l.b16 %v222
        %v387 = vunpack.c.l.b16 %v223
        %v388 = vpack.c.b16 %v387, %v386
        %v396 = vsel %vm296, %v388, 0
        %398 = vmatpush.bf16.msra.mxu0 0
        %399 = vmatpush.bf16.msra.mxu0 0
        %400 = vmatpush.bf16.msra.mxu0 0
        %401 = vmatpush.bf16.msra.mxu0 0
        %402 = vmatpush.bf16.msra.mxu0 0
        %403 = vmatpush.bf16.msra.mxu0 0
        %404 = vmatpush.bf16.msra.mxu0 0
        %405 = vmatpush.bf16.msra.mxu0 %v262
        %406 = vmatmul.bf16.gmra.mxu0 %v396
        %v407 = vpop.f32.mrf.mxu0
        %v408 = vadd.f32 %v310, %v407
        %v409 = vpop.f32.mrf.mxu0
        %v410 = vadd.f32 %v312, %v409
        %411 = vdwg.mxu0
        %412 = vmatpush.bf16.msra.mxu0 0
        %413 = vmatpush.bf16.msra.mxu0 0
        %414 = vmatpush.bf16.msra.mxu0 0
        %415 = vmatpush.bf16.msra.mxu0 0
        %416 = vmatpush.bf16.msra.mxu0 0
        %417 = vmatpush.bf16.msra.mxu0 0
        %418 = vmatpush.bf16.msra.mxu0 0
        %419 = vmatpush.bf16.msra.mxu0 %v263
        %420 = vmatmul.bf16.gmra.mxu0 %v396
        %v421 = vpop.f32.mrf.mxu0
        %v422 = vadd.f32 %v324, %v421
        %v423 = vpop.f32.mrf.mxu0
        %v424 = vadd.f32 %v326, %v423
        %425 = vdwg.mxu0
        %426 = vmatpush.bf16.msra.mxu0 0
        %427 = vmatpush.bf16.msra.mxu0 0
        %428 = vmatpush.bf16.msra.mxu0 0
        %429 = vmatpush.bf16.msra.mxu0 0
        %430 = vmatpush.bf16.msra.mxu0 0
        %431 = vmatpush.bf16.msra.mxu0 0
        %432 = vmatpush.bf16.msra.mxu0 0
        %433 = vmatpush.bf16.msra.mxu0 %v264
        %434 = vmatmul.bf16.gmra.mxu0 %v396
        %v435 = vpop.f32.mrf.mxu0
        %v436 = vadd.f32 %v338, %v435
        %v437 = vpop.f32.mrf.mxu0
        %v438 = vadd.f32 %v340, %v437
        %439 = vdwg.mxu0
        %440 = vmatpush.bf16.msra.mxu0 0
        %441 = vmatpush.bf16.msra.mxu0 0
        %442 = vmatpush.bf16.msra.mxu0 0
        %443 = vmatpush.bf16.msra.mxu0 0
        %444 = vmatpush.bf16.msra.mxu0 0
        %445 = vmatpush.bf16.msra.mxu0 0
        %446 = vmatpush.bf16.msra.mxu0 0
        %447 = vmatpush.bf16.msra.mxu0 %v265
        %448 = vmatmul.bf16.gmra.mxu0 %v396
        %v449 = vpop.f32.mrf.mxu0
        %v450 = vadd.f32 %v352, %v449
        %v451 = vpop.f32.mrf.mxu0
        %v452 = vadd.f32 %v354, %v451
        %453 = vdwg.mxu0
        %454 = vmatpush.bf16.msra.mxu0 0
        %455 = vmatpush.bf16.msra.mxu0 0
        %456 = vmatpush.bf16.msra.mxu0 0
        %457 = vmatpush.bf16.msra.mxu0 0
        %458 = vmatpush.bf16.msra.mxu0 0
        %459 = vmatpush.bf16.msra.mxu0 0
        %460 = vmatpush.bf16.msra.mxu0 0
        %461 = vmatpush.bf16.msra.mxu0 %v266
        %462 = vmatmul.bf16.gmra.mxu0 %v396
        %v463 = vpop.f32.mrf.mxu0
        %v464 = vadd.f32 %v366, %v463
        %v465 = vpop.f32.mrf.mxu0
        %v466 = vadd.f32 %v368, %v465
        %467 = vdwg.mxu0
        %468 = vmatpush.bf16.msra.mxu0 0
        %469 = vmatpush.bf16.msra.mxu0 0
        %470 = vmatpush.bf16.msra.mxu0 0
        %471 = vmatpush.bf16.msra.mxu0 0
        %472 = vmatpush.bf16.msra.mxu0 0
        %473 = vmatpush.bf16.msra.mxu0 0
        %474 = vmatpush.bf16.msra.mxu0 0
        %475 = vmatpush.bf16.msra.mxu0 %v267
        %476 = vmatmul.bf16.gmra.mxu0 %v396
        %v477 = vpop.f32.mrf.mxu0
        %v478 = vadd.f32 %v380, %v477
        %v479 = vpop.f32.mrf.mxu0
        %v480 = vadd.f32 %v382, %v479
        %481 = vdwg.mxu0
        %s482 = scalar_lea.vmem %s1, 16
        %v483 = vld [vmem:[%s482] sm:$0xf]
        %v484 = vld [vmem:[%s482 + $0x4] sm:$0xf]
        %v487 = vunpack.c.l.b16 %v483
        %v488 = vunpack.c.l.b16 %v484
        %v489 = vpack.c.b16 %v488, %v487
        %490 = vrot.lane.b32.xlu0 %v262, 126
        %v491 = vpop.permute.xlu0 %490
        %492 = vrot.lane.b32.xlu0 %v263, 126
        %v493 = vpop.permute.xlu0 %492
        %494 = vrot.lane.b32.xlu0 %v264, 126
        %v495 = vpop.permute.xlu0 %494
        %496 = vrot.lane.b32.xlu0 %v265, 126
        %v497 = vpop.permute.xlu0 %496
        %498 = vrot.lane.b32.xlu0 %v266, 126
        %v499 = vpop.permute.xlu0 %498
        %500 = vrot.lane.b32.xlu0 %v267, 126
        %v501 = vpop.permute.xlu0 %500
        %502 = vrot.lane.b32.xlu0 %v268, 126
        %v503 = vpop.permute.xlu0 %502
        %vm504 = vcmask 1031168
        %v505 = vsel %vm504, %v491, %v493
        %v506 = vsel %vm504, %v493, %v495
        %v507 = vsel %vm504, %v495, %v497
        %v508 = vsel %vm504, %v497, %v499
        %v509 = vsel %vm504, %v499, %v501
        %v510 = vsel %vm504, %v501, %v503
        %v518 = vsel %vm296, %v489, 0
        %520 = vmatpush.bf16.msra.mxu0 0
        %521 = vmatpush.bf16.msra.mxu0 0
        %522 = vmatpush.bf16.msra.mxu0 0
        %523 = vmatpush.bf16.msra.mxu0 0
        %524 = vmatpush.bf16.msra.mxu0 0
        %525 = vmatpush.bf16.msra.mxu0 0
        %526 = vmatpush.bf16.msra.mxu0 0
        %527 = vmatpush.bf16.msra.mxu0 %v505
        %528 = vmatmul.bf16.gmra.mxu0 %v518
        %v529 = vpop.f32.mrf.mxu0
        %v530 = vadd.f32 0.0, %v529
        %v531 = vpop.f32.mrf.mxu0
        %v532 = vadd.f32 0.0, %v531
        %533 = vdwg.mxu0
        %534 = vmatpush.bf16.msra.mxu0 0
        %535 = vmatpush.bf16.msra.mxu0 0
        %536 = vmatpush.bf16.msra.mxu0 0
        %537 = vmatpush.bf16.msra.mxu0 0
        %538 = vmatpush.bf16.msra.mxu0 0
        %539 = vmatpush.bf16.msra.mxu0 0
        %540 = vmatpush.bf16.msra.mxu0 0
        %541 = vmatpush.bf16.msra.mxu0 %v506
        %542 = vmatmul.bf16.gmra.mxu0 %v518
        %v543 = vpop.f32.mrf.mxu0
        %v544 = vadd.f32 0.0, %v543
        %v545 = vpop.f32.mrf.mxu0
        %v546 = vadd.f32 0.0, %v545
        %547 = vdwg.mxu0
        %548 = vmatpush.bf16.msra.mxu0 0
        %549 = vmatpush.bf16.msra.mxu0 0
        %550 = vmatpush.bf16.msra.mxu0 0
        %551 = vmatpush.bf16.msra.mxu0 0
        %552 = vmatpush.bf16.msra.mxu0 0
        %553 = vmatpush.bf16.msra.mxu0 0
        %554 = vmatpush.bf16.msra.mxu0 0
        %555 = vmatpush.bf16.msra.mxu0 %v507
        %556 = vmatmul.bf16.gmra.mxu0 %v518
        %v557 = vpop.f32.mrf.mxu0
        %v558 = vadd.f32 0.0, %v557
        %v559 = vpop.f32.mrf.mxu0
        %v560 = vadd.f32 0.0, %v559
        %561 = vdwg.mxu0
        %562 = vmatpush.bf16.msra.mxu0 0
        %563 = vmatpush.bf16.msra.mxu0 0
        %564 = vmatpush.bf16.msra.mxu0 0
        %565 = vmatpush.bf16.msra.mxu0 0
        %566 = vmatpush.bf16.msra.mxu0 0
        %567 = vmatpush.bf16.msra.mxu0 0
        %568 = vmatpush.bf16.msra.mxu0 0
        %569 = vmatpush.bf16.msra.mxu0 %v508
        %570 = vmatmul.bf16.gmra.mxu0 %v518
        %v571 = vpop.f32.mrf.mxu0
        %v572 = vadd.f32 0.0, %v571
        %v573 = vpop.f32.mrf.mxu0
        %v574 = vadd.f32 0.0, %v573
        %575 = vdwg.mxu0
        %576 = vmatpush.bf16.msra.mxu0 0
        %577 = vmatpush.bf16.msra.mxu0 0
        %578 = vmatpush.bf16.msra.mxu0 0
        %579 = vmatpush.bf16.msra.mxu0 0
        %580 = vmatpush.bf16.msra.mxu0 0
        %581 = vmatpush.bf16.msra.mxu0 0
        %582 = vmatpush.bf16.msra.mxu0 0
        %583 = vmatpush.bf16.msra.mxu0 %v509
        %584 = vmatmul.bf16.gmra.mxu0 %v518
        %v585 = vpop.f32.mrf.mxu0
        %v586 = vadd.f32 0.0, %v585
        %v587 = vpop.f32.mrf.mxu0
        %v588 = vadd.f32 0.0, %v587
        %589 = vdwg.mxu0
        %590 = vmatpush.bf16.msra.mxu0 0
        %591 = vmatpush.bf16.msra.mxu0 0
        %592 = vmatpush.bf16.msra.mxu0 0
        %593 = vmatpush.bf16.msra.mxu0 0
        %594 = vmatpush.bf16.msra.mxu0 0
        %595 = vmatpush.bf16.msra.mxu0 0
        %596 = vmatpush.bf16.msra.mxu0 0
        %597 = vmatpush.bf16.msra.mxu0 %v510
        %598 = vmatmul.bf16.gmra.mxu0 %v518
        %v599 = vpop.f32.mrf.mxu0
        %v600 = vadd.f32 0.0, %v599
        %v601 = vpop.f32.mrf.mxu0
        %v602 = vadd.f32 0.0, %v601
        %603 = vdwg.mxu0
        %v604 = vadd.f32 %v408, %v530
        %v605 = vadd.f32 %v422, %v544
        %v606 = vadd.f32 %v436, %v558
        %v607 = vadd.f32 %v450, %v572
        %v608 = vadd.f32 %v464, %v586
        %v609 = vadd.f32 %v478, %v600
        %v610 = vadd.f32 %v410, %v532
        %v611 = vadd.f32 %v424, %v546
        %v612 = vadd.f32 %v438, %v560
        %v613 = vadd.f32 %v452, %v574
        %v614 = vadd.f32 %v466, %v588
        %v615 = vadd.f32 %v480, %v602
        %s616 = scalar_lea.vmem %s1, 24
        %v617 = vld [vmem:[%s616] sm:$0xf]
        %v618 = vld [vmem:[%s616 + $0x4] sm:$0xf]
        %v621 = vunpack.c.l.b16 %v617
        %v622 = vunpack.c.l.b16 %v618
        %v623 = vpack.c.b16 %v622, %v621
        %624 = vrot.lane.b32.xlu0 %v262, 118
        %v625 = vpop.permute.xlu0 %624
        %626 = vrot.lane.b32.xlu0 %v263, 118
        %v627 = vpop.permute.xlu0 %626
        %628 = vrot.lane.b32.xlu0 %v264, 118
        %v629 = vpop.permute.xlu0 %628
        %630 = vrot.lane.b32.xlu0 %v265, 118
        %v631 = vpop.permute.xlu0 %630
        %632 = vrot.lane.b32.xlu0 %v266, 118
        %v633 = vpop.permute.xlu0 %632
        %634 = vrot.lane.b32.xlu0 %v267, 118
        %v635 = vpop.permute.xlu0 %634
        %636 = vrot.lane.b32.xlu0 %v268, 118
        %v637 = vpop.permute.xlu0 %636
        %vm638 = vcmask 965632
        %v639 = vsel %vm638, %v625, %v627
        %v640 = vsel %vm638, %v627, %v629
        %v641 = vsel %vm638, %v629, %v631
        %v642 = vsel %vm638, %v631, %v633
        %v643 = vsel %vm638, %v633, %v635
        %v644 = vsel %vm638, %v635, %v637
        %v652 = vsel %vm296, %v623, 0
        %654 = vmatpush.bf16.msra.mxu0 0
        %655 = vmatpush.bf16.msra.mxu0 0
        %656 = vmatpush.bf16.msra.mxu0 0
        %657 = vmatpush.bf16.msra.mxu0 0
        %658 = vmatpush.bf16.msra.mxu0 0
        %659 = vmatpush.bf16.msra.mxu0 0
        %660 = vmatpush.bf16.msra.mxu0 0
        %661 = vmatpush.bf16.msra.mxu0 %v639
        %662 = vmatmul.bf16.gmra.mxu0 %v652
        %v663 = vpop.f32.mrf.mxu0
        %v664 = vadd.f32 0.0, %v663
        %v665 = vpop.f32.mrf.mxu0
        %v666 = vadd.f32 0.0, %v665
        %667 = vdwg.mxu0
        %668 = vmatpush.bf16.msra.mxu0 0
        %669 = vmatpush.bf16.msra.mxu0 0
        %670 = vmatpush.bf16.msra.mxu0 0
        %671 = vmatpush.bf16.msra.mxu0 0
        %672 = vmatpush.bf16.msra.mxu0 0
        %673 = vmatpush.bf16.msra.mxu0 0
        %674 = vmatpush.bf16.msra.mxu0 0
        %675 = vmatpush.bf16.msra.mxu0 %v640
        %676 = vmatmul.bf16.gmra.mxu0 %v652
        %v677 = vpop.f32.mrf.mxu0
        %v678 = vadd.f32 0.0, %v677
        %v679 = vpop.f32.mrf.mxu0
        %v680 = vadd.f32 0.0, %v679
        %681 = vdwg.mxu0
        %682 = vmatpush.bf16.msra.mxu0 0
        %683 = vmatpush.bf16.msra.mxu0 0
        %684 = vmatpush.bf16.msra.mxu0 0
        %685 = vmatpush.bf16.msra.mxu0 0
        %686 = vmatpush.bf16.msra.mxu0 0
        %687 = vmatpush.bf16.msra.mxu0 0
        %688 = vmatpush.bf16.msra.mxu0 0
        %689 = vmatpush.bf16.msra.mxu0 %v641
        %690 = vmatmul.bf16.gmra.mxu0 %v652
        %v691 = vpop.f32.mrf.mxu0
        %v692 = vadd.f32 0.0, %v691
        %v693 = vpop.f32.mrf.mxu0
        %v694 = vadd.f32 0.0, %v693
        %695 = vdwg.mxu0
        %696 = vmatpush.bf16.msra.mxu0 0
        %697 = vmatpush.bf16.msra.mxu0 0
        %698 = vmatpush.bf16.msra.mxu0 0
        %699 = vmatpush.bf16.msra.mxu0 0
        %700 = vmatpush.bf16.msra.mxu0 0
        %701 = vmatpush.bf16.msra.mxu0 0
        %702 = vmatpush.bf16.msra.mxu0 0
        %703 = vmatpush.bf16.msra.mxu0 %v642
        %704 = vmatmul.bf16.gmra.mxu0 %v652
        %v705 = vpop.f32.mrf.mxu0
        %v706 = vadd.f32 0.0, %v705
        %v707 = vpop.f32.mrf.mxu0
        %v708 = vadd.f32 0.0, %v707
        %709 = vdwg.mxu0
        %710 = vmatpush.bf16.msra.mxu0 0
        %711 = vmatpush.bf16.msra.mxu0 0
        %712 = vmatpush.bf16.msra.mxu0 0
        %713 = vmatpush.bf16.msra.mxu0 0
        %714 = vmatpush.bf16.msra.mxu0 0
        %715 = vmatpush.bf16.msra.mxu0 0
        %716 = vmatpush.bf16.msra.mxu0 0
        %717 = vmatpush.bf16.msra.mxu0 %v643
        %718 = vmatmul.bf16.gmra.mxu0 %v652
        %v719 = vpop.f32.mrf.mxu0
        %v720 = vadd.f32 0.0, %v719
        %v721 = vpop.f32.mrf.mxu0
        %v722 = vadd.f32 0.0, %v721
        %723 = vdwg.mxu0
        %724 = vmatpush.bf16.msra.mxu0 0
        %725 = vmatpush.bf16.msra.mxu0 0
        %726 = vmatpush.bf16.msra.mxu0 0
        %727 = vmatpush.bf16.msra.mxu0 0
        %728 = vmatpush.bf16.msra.mxu0 0
        %729 = vmatpush.bf16.msra.mxu0 0
        %730 = vmatpush.bf16.msra.mxu0 0
        %731 = vmatpush.bf16.msra.mxu0 %v644
        %732 = vmatmul.bf16.gmra.mxu0 %v652
        %v733 = vpop.f32.mrf.mxu0
        %v734 = vadd.f32 0.0, %v733
        %v735 = vpop.f32.mrf.mxu0
        %v736 = vadd.f32 0.0, %v735
        %737 = vdwg.mxu0
        %v738 = vadd.f32 %v604, %v664
        %v739 = vadd.f32 %v605, %v678
        %v740 = vadd.f32 %v606, %v692
        %v741 = vadd.f32 %v607, %v706
        %v742 = vadd.f32 %v608, %v720
        %v743 = vadd.f32 %v609, %v734
        %v744 = vadd.f32 %v610, %v666
        %v745 = vadd.f32 %v611, %v680
        %v746 = vadd.f32 %v612, %v694
        %v747 = vadd.f32 %v613, %v708
        %v748 = vadd.f32 %v614, %v722
        %v749 = vadd.f32 %v615, %v736
        %s750 = scalar_lea.vmem %s1, 32
        %v751 = vld [vmem:[%s750] sm:$0xf]
        %v752 = vld [vmem:[%s750 + $0x4] sm:$0xf]
        %v755 = vunpack.c.l.b16 %v751
        %v756 = vunpack.c.l.b16 %v752
        %v757 = vpack.c.b16 %v756, %v755
        %758 = vrot.lane.b32.xlu0 %v262, 117
        %v759 = vpop.permute.xlu0 %758
        %760 = vrot.lane.b32.xlu0 %v263, 117
        %v761 = vpop.permute.xlu0 %760
        %762 = vrot.lane.b32.xlu0 %v264, 117
        %v763 = vpop.permute.xlu0 %762
        %764 = vrot.lane.b32.xlu0 %v265, 117
        %v765 = vpop.permute.xlu0 %764
        %766 = vrot.lane.b32.xlu0 %v266, 117
        %v767 = vpop.permute.xlu0 %766
        %768 = vrot.lane.b32.xlu0 %v267, 117
        %v769 = vpop.permute.xlu0 %768
        %770 = vrot.lane.b32.xlu0 %v268, 117
        %v771 = vpop.permute.xlu0 %770
        %vm772 = vcmask 957440
        %v773 = vsel %vm772, %v759, %v761
        %v774 = vsel %vm772, %v761, %v763
        %v775 = vsel %vm772, %v763, %v765
        %v776 = vsel %vm772, %v765, %v767
        %v777 = vsel %vm772, %v767, %v769
        %v778 = vsel %vm772, %v769, %v771
        %v786 = vsel %vm296, %v757, 0
        %788 = vmatpush.bf16.msra.mxu0 0
        %789 = vmatpush.bf16.msra.mxu0 0
        %790 = vmatpush.bf16.msra.mxu0 0
        %791 = vmatpush.bf16.msra.mxu0 0
        %792 = vmatpush.bf16.msra.mxu0 0
        %793 = vmatpush.bf16.msra.mxu0 0
        %794 = vmatpush.bf16.msra.mxu0 0
        %795 = vmatpush.bf16.msra.mxu0 %v773
        %796 = vmatmul.bf16.gmra.mxu0 %v786
        %v797 = vpop.f32.mrf.mxu0
        %v798 = vadd.f32 0.0, %v797
        %v799 = vpop.f32.mrf.mxu0
        %v800 = vadd.f32 0.0, %v799
        %801 = vdwg.mxu0
        %802 = vmatpush.bf16.msra.mxu0 0
        %803 = vmatpush.bf16.msra.mxu0 0
        %804 = vmatpush.bf16.msra.mxu0 0
        %805 = vmatpush.bf16.msra.mxu0 0
        %806 = vmatpush.bf16.msra.mxu0 0
        %807 = vmatpush.bf16.msra.mxu0 0
        %808 = vmatpush.bf16.msra.mxu0 0
        %809 = vmatpush.bf16.msra.mxu0 %v774
        %810 = vmatmul.bf16.gmra.mxu0 %v786
        %v811 = vpop.f32.mrf.mxu0
        %v812 = vadd.f32 0.0, %v811
        %v813 = vpop.f32.mrf.mxu0
        %v814 = vadd.f32 0.0, %v813
        %815 = vdwg.mxu0
        %816 = vmatpush.bf16.msra.mxu0 0
        %817 = vmatpush.bf16.msra.mxu0 0
        %818 = vmatpush.bf16.msra.mxu0 0
        %819 = vmatpush.bf16.msra.mxu0 0
        %820 = vmatpush.bf16.msra.mxu0 0
        %821 = vmatpush.bf16.msra.mxu0 0
        %822 = vmatpush.bf16.msra.mxu0 0
        %823 = vmatpush.bf16.msra.mxu0 %v775
        %824 = vmatmul.bf16.gmra.mxu0 %v786
        %v825 = vpop.f32.mrf.mxu0
        %v826 = vadd.f32 0.0, %v825
        %v827 = vpop.f32.mrf.mxu0
        %v828 = vadd.f32 0.0, %v827
        %829 = vdwg.mxu0
        %830 = vmatpush.bf16.msra.mxu0 0
        %831 = vmatpush.bf16.msra.mxu0 0
        %832 = vmatpush.bf16.msra.mxu0 0
        %833 = vmatpush.bf16.msra.mxu0 0
        %834 = vmatpush.bf16.msra.mxu0 0
        %835 = vmatpush.bf16.msra.mxu0 0
        %836 = vmatpush.bf16.msra.mxu0 0
        %837 = vmatpush.bf16.msra.mxu0 %v776
        %838 = vmatmul.bf16.gmra.mxu0 %v786
        %v839 = vpop.f32.mrf.mxu0
        %v840 = vadd.f32 0.0, %v839
        %v841 = vpop.f32.mrf.mxu0
        %v842 = vadd.f32 0.0, %v841
        %843 = vdwg.mxu0
        %844 = vmatpush.bf16.msra.mxu0 0
        %845 = vmatpush.bf16.msra.mxu0 0
        %846 = vmatpush.bf16.msra.mxu0 0
        %847 = vmatpush.bf16.msra.mxu0 0
        %848 = vmatpush.bf16.msra.mxu0 0
        %849 = vmatpush.bf16.msra.mxu0 0
        %850 = vmatpush.bf16.msra.mxu0 0
        %851 = vmatpush.bf16.msra.mxu0 %v777
        %852 = vmatmul.bf16.gmra.mxu0 %v786
        %v853 = vpop.f32.mrf.mxu0
        %v854 = vadd.f32 0.0, %v853
        %v855 = vpop.f32.mrf.mxu0
        %v856 = vadd.f32 0.0, %v855
        %857 = vdwg.mxu0
        %858 = vmatpush.bf16.msra.mxu0 0
        %859 = vmatpush.bf16.msra.mxu0 0
        %860 = vmatpush.bf16.msra.mxu0 0
        %861 = vmatpush.bf16.msra.mxu0 0
        %862 = vmatpush.bf16.msra.mxu0 0
        %863 = vmatpush.bf16.msra.mxu0 0
        %864 = vmatpush.bf16.msra.mxu0 0
        %865 = vmatpush.bf16.msra.mxu0 %v778
        %866 = vmatmul.bf16.gmra.mxu0 %v786
        %v867 = vpop.f32.mrf.mxu0
        %v868 = vadd.f32 0.0, %v867
        %v869 = vpop.f32.mrf.mxu0
        %v870 = vadd.f32 0.0, %v869
        %871 = vdwg.mxu0
        %v872 = vadd.f32 %v738, %v798
        %v873 = vadd.f32 %v739, %v812
        %v874 = vadd.f32 %v740, %v826
        %v875 = vadd.f32 %v741, %v840
        %v876 = vadd.f32 %v742, %v854
        %v877 = vadd.f32 %v743, %v868
        %v878 = vadd.f32 %v744, %v800
        %v879 = vadd.f32 %v745, %v814
        %v880 = vadd.f32 %v746, %v828
        %v881 = vadd.f32 %v747, %v842
        %v882 = vadd.f32 %v748, %v856
        %v883 = vadd.f32 %v749, %v870
        %s884 = scalar_lea.vmem %s1, 40
        %v885 = vld [vmem:[%s884] sm:$0xf]
        %v886 = vld [vmem:[%s884 + $0x4] sm:$0xf]
        %v889 = vunpack.c.l.b16 %v885
        %v890 = vunpack.c.l.b16 %v886
        %v891 = vpack.c.b16 %v890, %v889
        %892 = vrot.lane.b32.xlu0 %v262, 116
        %v893 = vpop.permute.xlu0 %892
        %894 = vrot.lane.b32.xlu0 %v263, 116
        %v895 = vpop.permute.xlu0 %894
        %896 = vrot.lane.b32.xlu0 %v264, 116
        %v897 = vpop.permute.xlu0 %896
        %898 = vrot.lane.b32.xlu0 %v265, 116
        %v899 = vpop.permute.xlu0 %898
        %900 = vrot.lane.b32.xlu0 %v266, 116
        %v901 = vpop.permute.xlu0 %900
        %902 = vrot.lane.b32.xlu0 %v267, 116
        %v903 = vpop.permute.xlu0 %902
        %904 = vrot.lane.b32.xlu0 %v268, 116
        %v905 = vpop.permute.xlu0 %904
        %vm906 = vcmask 949248
        %v907 = vsel %vm906, %v893, %v895
        %v908 = vsel %vm906, %v895, %v897
        %v909 = vsel %vm906, %v897, %v899
        %v910 = vsel %vm906, %v899, %v901
        %v911 = vsel %vm906, %v901, %v903
        %v912 = vsel %vm906, %v903, %v905
        %v920 = vsel %vm296, %v891, 0
        %922 = vmatpush.bf16.msra.mxu0 0
        %923 = vmatpush.bf16.msra.mxu0 0
        %924 = vmatpush.bf16.msra.mxu0 0
        %925 = vmatpush.bf16.msra.mxu0 0
        %926 = vmatpush.bf16.msra.mxu0 0
        %927 = vmatpush.bf16.msra.mxu0 0
        %928 = vmatpush.bf16.msra.mxu0 0
        %929 = vmatpush.bf16.msra.mxu0 %v907
        %930 = vmatmul.bf16.gmra.mxu0 %v920
        %v931 = vpop.f32.mrf.mxu0
        %v932 = vadd.f32 0.0, %v931
        %v933 = vpop.f32.mrf.mxu0
        %v934 = vadd.f32 0.0, %v933
        %935 = vdwg.mxu0
        %936 = vmatpush.bf16.msra.mxu0 0
        %937 = vmatpush.bf16.msra.mxu0 0
        %938 = vmatpush.bf16.msra.mxu0 0
        %939 = vmatpush.bf16.msra.mxu0 0
        %940 = vmatpush.bf16.msra.mxu0 0
        %941 = vmatpush.bf16.msra.mxu0 0
        %942 = vmatpush.bf16.msra.mxu0 0
        %943 = vmatpush.bf16.msra.mxu0 %v908
        %944 = vmatmul.bf16.gmra.mxu0 %v920
        %v945 = vpop.f32.mrf.mxu0
        %v946 = vadd.f32 0.0, %v945
        %v947 = vpop.f32.mrf.mxu0
        %v948 = vadd.f32 0.0, %v947
        %949 = vdwg.mxu0
        %950 = vmatpush.bf16.msra.mxu0 0
        %951 = vmatpush.bf16.msra.mxu0 0
        %952 = vmatpush.bf16.msra.mxu0 0
        %953 = vmatpush.bf16.msra.mxu0 0
        %954 = vmatpush.bf16.msra.mxu0 0
        %955 = vmatpush.bf16.msra.mxu0 0
        %956 = vmatpush.bf16.msra.mxu0 0
        %957 = vmatpush.bf16.msra.mxu0 %v909
        %958 = vmatmul.bf16.gmra.mxu0 %v920
        %v959 = vpop.f32.mrf.mxu0
        %v960 = vadd.f32 0.0, %v959
        %v961 = vpop.f32.mrf.mxu0
        %v962 = vadd.f32 0.0, %v961
        %963 = vdwg.mxu0
        %964 = vmatpush.bf16.msra.mxu0 0
        %965 = vmatpush.bf16.msra.mxu0 0
        %966 = vmatpush.bf16.msra.mxu0 0
        %967 = vmatpush.bf16.msra.mxu0 0
        %968 = vmatpush.bf16.msra.mxu0 0
        %969 = vmatpush.bf16.msra.mxu0 0
        %970 = vmatpush.bf16.msra.mxu0 0
        %971 = vmatpush.bf16.msra.mxu0 %v910
        %972 = vmatmul.bf16.gmra.mxu0 %v920
        %v973 = vpop.f32.mrf.mxu0
        %v974 = vadd.f32 0.0, %v973
        %v975 = vpop.f32.mrf.mxu0
        %v976 = vadd.f32 0.0, %v975
        %977 = vdwg.mxu0
        %978 = vmatpush.bf16.msra.mxu0 0
        %979 = vmatpush.bf16.msra.mxu0 0
        %980 = vmatpush.bf16.msra.mxu0 0
        %981 = vmatpush.bf16.msra.mxu0 0
        %982 = vmatpush.bf16.msra.mxu0 0
        %983 = vmatpush.bf16.msra.mxu0 0
        %984 = vmatpush.bf16.msra.mxu0 0
        %985 = vmatpush.bf16.msra.mxu0 %v911
        %986 = vmatmul.bf16.gmra.mxu0 %v920
        %v987 = vpop.f32.mrf.mxu0
        %v988 = vadd.f32 0.0, %v987
        %v989 = vpop.f32.mrf.mxu0
        %v990 = vadd.f32 0.0, %v989
        %991 = vdwg.mxu0
        %992 = vmatpush.bf16.msra.mxu0 0
        %993 = vmatpush.bf16.msra.mxu0 0
        %994 = vmatpush.bf16.msra.mxu0 0
        %995 = vmatpush.bf16.msra.mxu0 0
        %996 = vmatpush.bf16.msra.mxu0 0
        %997 = vmatpush.bf16.msra.mxu0 0
        %998 = vmatpush.bf16.msra.mxu0 0
        %999 = vmatpush.bf16.msra.mxu0 %v912
        %1000 = vmatmul.bf16.gmra.mxu0 %v920
        %v1001 = vpop.f32.mrf.mxu0
        %v1002 = vadd.f32 0.0, %v1001
        %v1003 = vpop.f32.mrf.mxu0
        %v1004 = vadd.f32 0.0, %v1003
        %1005 = vdwg.mxu0
        %v1006 = vadd.f32 %v872, %v932
        %v1007 = vadd.f32 %v873, %v946
        %v1008 = vadd.f32 %v874, %v960
        %v1009 = vadd.f32 %v875, %v974
        %v1010 = vadd.f32 %v876, %v988
        %v1011 = vadd.f32 %v877, %v1002
        %v1012 = vadd.f32 %v878, %v934
        %v1013 = vadd.f32 %v879, %v948
        %v1014 = vadd.f32 %v880, %v962
        %v1015 = vadd.f32 %v881, %v976
        %v1016 = vadd.f32 %v882, %v990
        %v1017 = vadd.f32 %v883, %v1004
        %s1018 = scalar_lea.vmem %s1, 48
        %v1019 = vld [vmem:[%s1018] sm:$0xf]
        %v1020 = vld [vmem:[%s1018 + $0x4] sm:$0xf]
        %v1023 = vunpack.c.l.b16 %v1019
        %v1024 = vunpack.c.l.b16 %v1020
        %v1025 = vpack.c.b16 %v1024, %v1023
        %1026 = vrot.lane.b32.xlu0 %v262, 108
        %v1027 = vpop.permute.xlu0 %1026
        %1028 = vrot.lane.b32.xlu0 %v263, 108
        %v1029 = vpop.permute.xlu0 %1028
        %1030 = vrot.lane.b32.xlu0 %v264, 108
        %v1031 = vpop.permute.xlu0 %1030
        %1032 = vrot.lane.b32.xlu0 %v265, 108
        %v1033 = vpop.permute.xlu0 %1032
        %1034 = vrot.lane.b32.xlu0 %v266, 108
        %v1035 = vpop.permute.xlu0 %1034
        %1036 = vrot.lane.b32.xlu0 %v267, 108
        %v1037 = vpop.permute.xlu0 %1036
        %1038 = vrot.lane.b32.xlu0 %v268, 108
        %v1039 = vpop.permute.xlu0 %1038
        %vm1040 = vcmask 883712
        %v1041 = vsel %vm1040, %v1027, %v1029
        %v1042 = vsel %vm1040, %v1029, %v1031
        %v1043 = vsel %vm1040, %v1031, %v1033
        %v1044 = vsel %vm1040, %v1033, %v1035
        %v1045 = vsel %vm1040, %v1035, %v1037
        %v1046 = vsel %vm1040, %v1037, %v1039
        %v1054 = vsel %vm296, %v1025, 0
        %1056 = vmatpush.bf16.msra.mxu0 0
        %1057 = vmatpush.bf16.msra.mxu0 0
        %1058 = vmatpush.bf16.msra.mxu0 0
        %1059 = vmatpush.bf16.msra.mxu0 0
        %1060 = vmatpush.bf16.msra.mxu0 0
        %1061 = vmatpush.bf16.msra.mxu0 0
        %1062 = vmatpush.bf16.msra.mxu0 0
        %1063 = vmatpush.bf16.msra.mxu0 %v1041
        %1064 = vmatmul.bf16.gmra.mxu0 %v1054
        %v1065 = vpop.f32.mrf.mxu0
        %v1066 = vadd.f32 0.0, %v1065
        %v1067 = vpop.f32.mrf.mxu0
        %v1068 = vadd.f32 0.0, %v1067
        %1069 = vdwg.mxu0
        %1070 = vmatpush.bf16.msra.mxu0 0
        %1071 = vmatpush.bf16.msra.mxu0 0
        %1072 = vmatpush.bf16.msra.mxu0 0
        %1073 = vmatpush.bf16.msra.mxu0 0
        %1074 = vmatpush.bf16.msra.mxu0 0
        %1075 = vmatpush.bf16.msra.mxu0 0
        %1076 = vmatpush.bf16.msra.mxu0 0
        %1077 = vmatpush.bf16.msra.mxu0 %v1042
        %1078 = vmatmul.bf16.gmra.mxu0 %v1054
        %v1079 = vpop.f32.mrf.mxu0
        %v1080 = vadd.f32 0.0, %v1079
        %v1081 = vpop.f32.mrf.mxu0
        %v1082 = vadd.f32 0.0, %v1081
        %1083 = vdwg.mxu0
        %1084 = vmatpush.bf16.msra.mxu0 0
        %1085 = vmatpush.bf16.msra.mxu0 0
        %1086 = vmatpush.bf16.msra.mxu0 0
        %1087 = vmatpush.bf16.msra.mxu0 0
        %1088 = vmatpush.bf16.msra.mxu0 0
        %1089 = vmatpush.bf16.msra.mxu0 0
        %1090 = vmatpush.bf16.msra.mxu0 0
        %1091 = vmatpush.bf16.msra.mxu0 %v1043
        %1092 = vmatmul.bf16.gmra.mxu0 %v1054
        %v1093 = vpop.f32.mrf.mxu0
        %v1094 = vadd.f32 0.0, %v1093
        %v1095 = vpop.f32.mrf.mxu0
        %v1096 = vadd.f32 0.0, %v1095
        %1097 = vdwg.mxu0
        %1098 = vmatpush.bf16.msra.mxu0 0
        %1099 = vmatpush.bf16.msra.mxu0 0
        %1100 = vmatpush.bf16.msra.mxu0 0
        %1101 = vmatpush.bf16.msra.mxu0 0
        %1102 = vmatpush.bf16.msra.mxu0 0
        %1103 = vmatpush.bf16.msra.mxu0 0
        %1104 = vmatpush.bf16.msra.mxu0 0
        %1105 = vmatpush.bf16.msra.mxu0 %v1044
        %1106 = vmatmul.bf16.gmra.mxu0 %v1054
        %v1107 = vpop.f32.mrf.mxu0
        %v1108 = vadd.f32 0.0, %v1107
        %v1109 = vpop.f32.mrf.mxu0
        %v1110 = vadd.f32 0.0, %v1109
        %1111 = vdwg.mxu0
        %1112 = vmatpush.bf16.msra.mxu0 0
        %1113 = vmatpush.bf16.msra.mxu0 0
        %1114 = vmatpush.bf16.msra.mxu0 0
        %1115 = vmatpush.bf16.msra.mxu0 0
        %1116 = vmatpush.bf16.msra.mxu0 0
        %1117 = vmatpush.bf16.msra.mxu0 0
        %1118 = vmatpush.bf16.msra.mxu0 0
        %1119 = vmatpush.bf16.msra.mxu0 %v1045
        %1120 = vmatmul.bf16.gmra.mxu0 %v1054
        %v1121 = vpop.f32.mrf.mxu0
        %v1122 = vadd.f32 0.0, %v1121
        %v1123 = vpop.f32.mrf.mxu0
        %v1124 = vadd.f32 0.0, %v1123
        %1125 = vdwg.mxu0
        %1126 = vmatpush.bf16.msra.mxu0 0
        %1127 = vmatpush.bf16.msra.mxu0 0
        %1128 = vmatpush.bf16.msra.mxu0 0
        %1129 = vmatpush.bf16.msra.mxu0 0
        %1130 = vmatpush.bf16.msra.mxu0 0
        %1131 = vmatpush.bf16.msra.mxu0 0
        %1132 = vmatpush.bf16.msra.mxu0 0
        %1133 = vmatpush.bf16.msra.mxu0 %v1046
        %1134 = vmatmul.bf16.gmra.mxu0 %v1054
        %v1135 = vpop.f32.mrf.mxu0
        %v1136 = vadd.f32 0.0, %v1135
        %v1137 = vpop.f32.mrf.mxu0
        %v1138 = vadd.f32 0.0, %v1137
        %1139 = vdwg.mxu0
        %v1140 = vadd.f32 %v1006, %v1066
        %v1141 = vadd.f32 %v1007, %v1080
        %v1142 = vadd.f32 %v1008, %v1094
        %v1143 = vadd.f32 %v1009, %v1108
        %v1144 = vadd.f32 %v1010, %v1122
        %v1145 = vadd.f32 %v1011, %v1136
        %v1146 = vadd.f32 %v1012, %v1068
        %v1147 = vadd.f32 %v1013, %v1082
        %v1148 = vadd.f32 %v1014, %v1096
        %v1149 = vadd.f32 %v1015, %v1110
        %v1150 = vadd.f32 %v1016, %v1124
        %v1151 = vadd.f32 %v1017, %v1138
        %s1152 = scalar_lea.vmem %s1, 56
        %v1153 = vld [vmem:[%s1152] sm:$0xf]
        %v1154 = vld [vmem:[%s1152 + $0x4] sm:$0xf]
        %v1157 = vunpack.c.l.b16 %v1153
        %v1158 = vunpack.c.l.b16 %v1154
        %v1159 = vpack.c.b16 %v1158, %v1157
        %1160 = vrot.lane.b32.xlu0 %v262, 107
        %v1161 = vpop.permute.xlu0 %1160
        %1162 = vrot.lane.b32.xlu0 %v263, 107
        %v1163 = vpop.permute.xlu0 %1162
        %1164 = vrot.lane.b32.xlu0 %v264, 107
        %v1165 = vpop.permute.xlu0 %1164
        %1166 = vrot.lane.b32.xlu0 %v265, 107
        %v1167 = vpop.permute.xlu0 %1166
        %1168 = vrot.lane.b32.xlu0 %v266, 107
        %v1169 = vpop.permute.xlu0 %1168
        %1170 = vrot.lane.b32.xlu0 %v267, 107
        %v1171 = vpop.permute.xlu0 %1170
        %1172 = vrot.lane.b32.xlu0 %v268, 107
        %v1173 = vpop.permute.xlu0 %1172
        %vm1174 = vcmask 875520
        %v1175 = vsel %vm1174, %v1161, %v1163
        %v1176 = vsel %vm1174, %v1163, %v1165
        %v1177 = vsel %vm1174, %v1165, %v1167
        %v1178 = vsel %vm1174, %v1167, %v1169
        %v1179 = vsel %vm1174, %v1169, %v1171
        %v1180 = vsel %vm1174, %v1171, %v1173
        %v1188 = vsel %vm296, %v1159, 0
        %1190 = vmatpush.bf16.msra.mxu0 0
        %1191 = vmatpush.bf16.msra.mxu0 0
        %1192 = vmatpush.bf16.msra.mxu0 0
        %1193 = vmatpush.bf16.msra.mxu0 0
        %1194 = vmatpush.bf16.msra.mxu0 0
        %1195 = vmatpush.bf16.msra.mxu0 0
        %1196 = vmatpush.bf16.msra.mxu0 0
        %1197 = vmatpush.bf16.msra.mxu0 %v1175
        %1198 = vmatmul.bf16.gmra.mxu0 %v1188
        %v1199 = vpop.f32.mrf.mxu0
        %v1200 = vadd.f32 0.0, %v1199
        %v1201 = vpop.f32.mrf.mxu0
        %v1202 = vadd.f32 0.0, %v1201
        %1203 = vdwg.mxu0
        %1204 = vmatpush.bf16.msra.mxu0 0
        %1205 = vmatpush.bf16.msra.mxu0 0
        %1206 = vmatpush.bf16.msra.mxu0 0
        %1207 = vmatpush.bf16.msra.mxu0 0
        %1208 = vmatpush.bf16.msra.mxu0 0
        %1209 = vmatpush.bf16.msra.mxu0 0
        %1210 = vmatpush.bf16.msra.mxu0 0
        %1211 = vmatpush.bf16.msra.mxu0 %v1176
        %1212 = vmatmul.bf16.gmra.mxu0 %v1188
        %v1213 = vpop.f32.mrf.mxu0
        %v1214 = vadd.f32 0.0, %v1213
        %v1215 = vpop.f32.mrf.mxu0
        %v1216 = vadd.f32 0.0, %v1215
        %1217 = vdwg.mxu0
        %1218 = vmatpush.bf16.msra.mxu0 0
        %1219 = vmatpush.bf16.msra.mxu0 0
        %1220 = vmatpush.bf16.msra.mxu0 0
        %1221 = vmatpush.bf16.msra.mxu0 0
        %1222 = vmatpush.bf16.msra.mxu0 0
        %1223 = vmatpush.bf16.msra.mxu0 0
        %1224 = vmatpush.bf16.msra.mxu0 0
        %1225 = vmatpush.bf16.msra.mxu0 %v1177
        %1226 = vmatmul.bf16.gmra.mxu0 %v1188
        %v1227 = vpop.f32.mrf.mxu0
        %v1228 = vadd.f32 0.0, %v1227
        %v1229 = vpop.f32.mrf.mxu0
        %v1230 = vadd.f32 0.0, %v1229
        %1231 = vdwg.mxu0
        %1232 = vmatpush.bf16.msra.mxu0 0
        %1233 = vmatpush.bf16.msra.mxu0 0
        %1234 = vmatpush.bf16.msra.mxu0 0
        %1235 = vmatpush.bf16.msra.mxu0 0
        %1236 = vmatpush.bf16.msra.mxu0 0
        %1237 = vmatpush.bf16.msra.mxu0 0
        %1238 = vmatpush.bf16.msra.mxu0 0
        %1239 = vmatpush.bf16.msra.mxu0 %v1178
        %1240 = vmatmul.bf16.gmra.mxu0 %v1188
        %v1241 = vpop.f32.mrf.mxu0
        %v1242 = vadd.f32 0.0, %v1241
        %v1243 = vpop.f32.mrf.mxu0
        %v1244 = vadd.f32 0.0, %v1243
        %1245 = vdwg.mxu0
        %1246 = vmatpush.bf16.msra.mxu0 0
        %1247 = vmatpush.bf16.msra.mxu0 0
        %1248 = vmatpush.bf16.msra.mxu0 0
        %1249 = vmatpush.bf16.msra.mxu0 0
        %1250 = vmatpush.bf16.msra.mxu0 0
        %1251 = vmatpush.bf16.msra.mxu0 0
        %1252 = vmatpush.bf16.msra.mxu0 0
        %1253 = vmatpush.bf16.msra.mxu0 %v1179
        %1254 = vmatmul.bf16.gmra.mxu0 %v1188
        %v1255 = vpop.f32.mrf.mxu0
        %v1256 = vadd.f32 0.0, %v1255
        %v1257 = vpop.f32.mrf.mxu0
        %v1258 = vadd.f32 0.0, %v1257
        %1259 = vdwg.mxu0
        %1260 = vmatpush.bf16.msra.mxu0 0
        %1261 = vmatpush.bf16.msra.mxu0 0
        %1262 = vmatpush.bf16.msra.mxu0 0
        %1263 = vmatpush.bf16.msra.mxu0 0
        %1264 = vmatpush.bf16.msra.mxu0 0
        %1265 = vmatpush.bf16.msra.mxu0 0
        %1266 = vmatpush.bf16.msra.mxu0 0
        %1267 = vmatpush.bf16.msra.mxu0 %v1180
        %1268 = vmatmul.bf16.gmra.mxu0 %v1188
        %v1269 = vpop.f32.mrf.mxu0
        %v1270 = vadd.f32 0.0, %v1269
        %v1271 = vpop.f32.mrf.mxu0
        %v1272 = vadd.f32 0.0, %v1271
        %1273 = vdwg.mxu0
        %v1274 = vadd.f32 %v1140, %v1200
        %v1275 = vadd.f32 %v1141, %v1214
        %v1276 = vadd.f32 %v1142, %v1228
        %v1277 = vadd.f32 %v1143, %v1242
        %v1278 = vadd.f32 %v1144, %v1256
        %v1279 = vadd.f32 %v1145, %v1270
        %v1280 = vadd.f32 %v1146, %v1202
        %v1281 = vadd.f32 %v1147, %v1216
        %v1282 = vadd.f32 %v1148, %v1230
        %v1283 = vadd.f32 %v1149, %v1244
        %v1284 = vadd.f32 %v1150, %v1258
        %v1285 = vadd.f32 %v1151, %v1272
        %s1286 = scalar_lea.vmem %s1, 64
        %v1287 = vld [vmem:[%s1286] sm:$0xf]
        %v1288 = vld [vmem:[%s1286 + $0x4] sm:$0xf]
        %v1291 = vunpack.c.l.b16 %v1287
        %v1292 = vunpack.c.l.b16 %v1288
        %v1293 = vpack.c.b16 %v1292, %v1291
        %1294 = vrot.lane.b32.xlu0 %v262, 106
        %v1295 = vpop.permute.xlu0 %1294
        %1296 = vrot.lane.b32.xlu0 %v263, 106
        %v1297 = vpop.permute.xlu0 %1296
        %1298 = vrot.lane.b32.xlu0 %v264, 106
        %v1299 = vpop.permute.xlu0 %1298
        %1300 = vrot.lane.b32.xlu0 %v265, 106
        %v1301 = vpop.permute.xlu0 %1300
        %1302 = vrot.lane.b32.xlu0 %v266, 106
        %v1303 = vpop.permute.xlu0 %1302
        %1304 = vrot.lane.b32.xlu0 %v267, 106
        %v1305 = vpop.permute.xlu0 %1304
        %1306 = vrot.lane.b32.xlu0 %v268, 106
        %v1307 = vpop.permute.xlu0 %1306
        %vm1308 = vcmask 867328
        %v1309 = vsel %vm1308, %v1295, %v1297
        %v1310 = vsel %vm1308, %v1297, %v1299
        %v1311 = vsel %vm1308, %v1299, %v1301
        %v1312 = vsel %vm1308, %v1301, %v1303
        %v1313 = vsel %vm1308, %v1303, %v1305
        %v1314 = vsel %vm1308, %v1305, %v1307
        %v1322 = vsel %vm296, %v1293, 0
        %1324 = vmatpush.bf16.msra.mxu0 0
        %1325 = vmatpush.bf16.msra.mxu0 0
        %1326 = vmatpush.bf16.msra.mxu0 0
        %1327 = vmatpush.bf16.msra.mxu0 0
        %1328 = vmatpush.bf16.msra.mxu0 0
        %1329 = vmatpush.bf16.msra.mxu0 0
        %1330 = vmatpush.bf16.msra.mxu0 0
        %1331 = vmatpush.bf16.msra.mxu0 %v1309
        %1332 = vmatmul.bf16.gmra.mxu0 %v1322
        %v1333 = vpop.f32.mrf.mxu0
        %v1334 = vadd.f32 0.0, %v1333
        %v1335 = vpop.f32.mrf.mxu0
        %v1336 = vadd.f32 0.0, %v1335
        %1337 = vdwg.mxu0
        %1338 = vmatpush.bf16.msra.mxu0 0
        %1339 = vmatpush.bf16.msra.mxu0 0
        %1340 = vmatpush.bf16.msra.mxu0 0
        %1341 = vmatpush.bf16.msra.mxu0 0
        %1342 = vmatpush.bf16.msra.mxu0 0
        %1343 = vmatpush.bf16.msra.mxu0 0
        %1344 = vmatpush.bf16.msra.mxu0 0
        %1345 = vmatpush.bf16.msra.mxu0 %v1310
        %1346 = vmatmul.bf16.gmra.mxu0 %v1322
        %v1347 = vpop.f32.mrf.mxu0
        %v1348 = vadd.f32 0.0, %v1347
        %v1349 = vpop.f32.mrf.mxu0
        %v1350 = vadd.f32 0.0, %v1349
        %1351 = vdwg.mxu0
        %1352 = vmatpush.bf16.msra.mxu0 0
        %1353 = vmatpush.bf16.msra.mxu0 0
        %1354 = vmatpush.bf16.msra.mxu0 0
        %1355 = vmatpush.bf16.msra.mxu0 0
        %1356 = vmatpush.bf16.msra.mxu0 0
        %1357 = vmatpush.bf16.msra.mxu0 0
        %1358 = vmatpush.bf16.msra.mxu0 0
        %1359 = vmatpush.bf16.msra.mxu0 %v1311
        %1360 = vmatmul.bf16.gmra.mxu0 %v1322
        %v1361 = vpop.f32.mrf.mxu0
        %v1362 = vadd.f32 0.0, %v1361
        %v1363 = vpop.f32.mrf.mxu0
        %v1364 = vadd.f32 0.0, %v1363
        %1365 = vdwg.mxu0
        %1366 = vmatpush.bf16.msra.mxu0 0
        %1367 = vmatpush.bf16.msra.mxu0 0
        %1368 = vmatpush.bf16.msra.mxu0 0
        %1369 = vmatpush.bf16.msra.mxu0 0
        %1370 = vmatpush.bf16.msra.mxu0 0
        %1371 = vmatpush.bf16.msra.mxu0 0
        %1372 = vmatpush.bf16.msra.mxu0 0
        %1373 = vmatpush.bf16.msra.mxu0 %v1312
        %1374 = vmatmul.bf16.gmra.mxu0 %v1322
        %v1375 = vpop.f32.mrf.mxu0
        %v1376 = vadd.f32 0.0, %v1375
        %v1377 = vpop.f32.mrf.mxu0
        %v1378 = vadd.f32 0.0, %v1377
        %1379 = vdwg.mxu0
        %1380 = vmatpush.bf16.msra.mxu0 0
        %1381 = vmatpush.bf16.msra.mxu0 0
        %1382 = vmatpush.bf16.msra.mxu0 0
        %1383 = vmatpush.bf16.msra.mxu0 0
        %1384 = vmatpush.bf16.msra.mxu0 0
        %1385 = vmatpush.bf16.msra.mxu0 0
        %1386 = vmatpush.bf16.msra.mxu0 0
        %1387 = vmatpush.bf16.msra.mxu0 %v1313
        %1388 = vmatmul.bf16.gmra.mxu0 %v1322
        %v1389 = vpop.f32.mrf.mxu0
        %v1390 = vadd.f32 0.0, %v1389
        %v1391 = vpop.f32.mrf.mxu0
        %v1392 = vadd.f32 0.0, %v1391
        %1393 = vdwg.mxu0
        %1394 = vmatpush.bf16.msra.mxu0 0
        %1395 = vmatpush.bf16.msra.mxu0 0
        %1396 = vmatpush.bf16.msra.mxu0 0
        %1397 = vmatpush.bf16.msra.mxu0 0
        %1398 = vmatpush.bf16.msra.mxu0 0
        %1399 = vmatpush.bf16.msra.mxu0 0
        %1400 = vmatpush.bf16.msra.mxu0 0
        %1401 = vmatpush.bf16.msra.mxu0 %v1314
        %1402 = vmatmul.bf16.gmra.mxu0 %v1322
        %v1403 = vpop.f32.mrf.mxu0
        %v1404 = vadd.f32 0.0, %v1403
        %v1405 = vpop.f32.mrf.mxu0
        %v1406 = vadd.f32 0.0, %v1405
        %1407 = vdwg.mxu0
        %v1408 = vadd.f32 %v1274, %v1334
        %v1409 = vadd.f32 %v1275, %v1348
        %v1410 = vadd.f32 %v1276, %v1362
        %v1411 = vadd.f32 %v1277, %v1376
        %v1412 = vadd.f32 %v1278, %v1390
        %v1413 = vadd.f32 %v1279, %v1404
        %v1414 = vadd.f32 %v1280, %v1336
        %v1415 = vadd.f32 %v1281, %v1350
        %v1416 = vadd.f32 %v1282, %v1364
        %v1417 = vadd.f32 %v1283, %v1378
        %v1418 = vadd.f32 %v1284, %v1392
        %v1419 = vadd.f32 %v1285, %v1406
        %s1420 = scalar_lea.vmem %s1, 72
        %v1421 = vld [vmem:[%s1420] sm:$0xf]
        %v1422 = vld [vmem:[%s1420 + $0x4] sm:$0xf]
        %v1425 = vunpack.c.l.b16 %v1421
        %v1426 = vunpack.c.l.b16 %v1422
        %v1427 = vpack.c.b16 %v1426, %v1425
        %1428 = vrot.lane.b32.xlu0 %v262, 28
        %v1429 = vpop.permute.xlu0 %1428
        %1430 = vrot.lane.b32.xlu0 %v263, 28
        %v1431 = vpop.permute.xlu0 %1430
        %1432 = vrot.lane.b32.xlu0 %v264, 28
        %v1433 = vpop.permute.xlu0 %1432
        %1434 = vrot.lane.b32.xlu0 %v265, 28
        %v1435 = vpop.permute.xlu0 %1434
        %1436 = vrot.lane.b32.xlu0 %v266, 28
        %v1437 = vpop.permute.xlu0 %1436
        %1438 = vrot.lane.b32.xlu0 %v267, 28
        %v1439 = vpop.permute.xlu0 %1438
        %1440 = vrot.lane.b32.xlu0 %v268, 28
        %v1441 = vpop.permute.xlu0 %1440
        %vm1442 = vcmask 228352
        %v1443 = vsel %vm1442, %v1429, %v1431
        %v1444 = vsel %vm1442, %v1431, %v1433
        %v1445 = vsel %vm1442, %v1433, %v1435
        %v1446 = vsel %vm1442, %v1435, %v1437
        %v1447 = vsel %vm1442, %v1437, %v1439
        %v1448 = vsel %vm1442, %v1439, %v1441
        %v1456 = vsel %vm296, %v1427, 0
        %1458 = vmatpush.bf16.msra.mxu0 0
        %1459 = vmatpush.bf16.msra.mxu0 0
        %1460 = vmatpush.bf16.msra.mxu0 0
        %1461 = vmatpush.bf16.msra.mxu0 0
        %1462 = vmatpush.bf16.msra.mxu0 0
        %1463 = vmatpush.bf16.msra.mxu0 0
        %1464 = vmatpush.bf16.msra.mxu0 0
        %1465 = vmatpush.bf16.msra.mxu0 %v1443
        %1466 = vmatmul.bf16.gmra.mxu0 %v1456
        %v1467 = vpop.f32.mrf.mxu0
        %v1468 = vadd.f32 0.0, %v1467
        %v1469 = vpop.f32.mrf.mxu0
        %v1470 = vadd.f32 0.0, %v1469
        %1471 = vdwg.mxu0
        %1472 = vmatpush.bf16.msra.mxu0 0
        %1473 = vmatpush.bf16.msra.mxu0 0
        %1474 = vmatpush.bf16.msra.mxu0 0
        %1475 = vmatpush.bf16.msra.mxu0 0
        %1476 = vmatpush.bf16.msra.mxu0 0
        %1477 = vmatpush.bf16.msra.mxu0 0
        %1478 = vmatpush.bf16.msra.mxu0 0
        %1479 = vmatpush.bf16.msra.mxu0 %v1444
        %1480 = vmatmul.bf16.gmra.mxu0 %v1456
        %v1481 = vpop.f32.mrf.mxu0
        %v1482 = vadd.f32 0.0, %v1481
        %v1483 = vpop.f32.mrf.mxu0
        %v1484 = vadd.f32 0.0, %v1483
        %1485 = vdwg.mxu0
        %1486 = vmatpush.bf16.msra.mxu0 0
        %1487 = vmatpush.bf16.msra.mxu0 0
        %1488 = vmatpush.bf16.msra.mxu0 0
        %1489 = vmatpush.bf16.msra.mxu0 0
        %1490 = vmatpush.bf16.msra.mxu0 0
        %1491 = vmatpush.bf16.msra.mxu0 0
        %1492 = vmatpush.bf16.msra.mxu0 0
        %1493 = vmatpush.bf16.msra.mxu0 %v1445
        %1494 = vmatmul.bf16.gmra.mxu0 %v1456
        %v1495 = vpop.f32.mrf.mxu0
        %v1496 = vadd.f32 0.0, %v1495
        %v1497 = vpop.f32.mrf.mxu0
        %v1498 = vadd.f32 0.0, %v1497
        %1499 = vdwg.mxu0
        %1500 = vmatpush.bf16.msra.mxu0 0
        %1501 = vmatpush.bf16.msra.mxu0 0
        %1502 = vmatpush.bf16.msra.mxu0 0
        %1503 = vmatpush.bf16.msra.mxu0 0
        %1504 = vmatpush.bf16.msra.mxu0 0
        %1505 = vmatpush.bf16.msra.mxu0 0
        %1506 = vmatpush.bf16.msra.mxu0 0
        %1507 = vmatpush.bf16.msra.mxu0 %v1446
        %1508 = vmatmul.bf16.gmra.mxu0 %v1456
        %v1509 = vpop.f32.mrf.mxu0
        %v1510 = vadd.f32 0.0, %v1509
        %v1511 = vpop.f32.mrf.mxu0
        %v1512 = vadd.f32 0.0, %v1511
        %1513 = vdwg.mxu0
        %1514 = vmatpush.bf16.msra.mxu0 0
        %1515 = vmatpush.bf16.msra.mxu0 0
        %1516 = vmatpush.bf16.msra.mxu0 0
        %1517 = vmatpush.bf16.msra.mxu0 0
        %1518 = vmatpush.bf16.msra.mxu0 0
        %1519 = vmatpush.bf16.msra.mxu0 0
        %1520 = vmatpush.bf16.msra.mxu0 0
        %1521 = vmatpush.bf16.msra.mxu0 %v1447
        %1522 = vmatmul.bf16.gmra.mxu0 %v1456
        %v1523 = vpop.f32.mrf.mxu0
        %v1524 = vadd.f32 0.0, %v1523
        %v1525 = vpop.f32.mrf.mxu0
        %v1526 = vadd.f32 0.0, %v1525
        %1527 = vdwg.mxu0
        %1528 = vmatpush.bf16.msra.mxu0 0
        %1529 = vmatpush.bf16.msra.mxu0 0
        %1530 = vmatpush.bf16.msra.mxu0 0
        %1531 = vmatpush.bf16.msra.mxu0 0
        %1532 = vmatpush.bf16.msra.mxu0 0
        %1533 = vmatpush.bf16.msra.mxu0 0
        %1534 = vmatpush.bf16.msra.mxu0 0
        %1535 = vmatpush.bf16.msra.mxu0 %v1448
        %1536 = vmatmul.bf16.gmra.mxu0 %v1456
        %v1537 = vpop.f32.mrf.mxu0
        %v1538 = vadd.f32 0.0, %v1537
        %v1539 = vpop.f32.mrf.mxu0
        %v1540 = vadd.f32 0.0, %v1539
        %1541 = vdwg.mxu0
        %v1542 = vadd.f32 %v1408, %v1468
        %v1543 = vadd.f32 %v1409, %v1482
        %v1544 = vadd.f32 %v1410, %v1496
        %v1545 = vadd.f32 %v1411, %v1510
        %v1546 = vadd.f32 %v1412, %v1524
        %v1547 = vadd.f32 %v1413, %v1538
        %v1548 = vadd.f32 %v1414, %v1470
        %v1549 = vadd.f32 %v1415, %v1484
        %v1550 = vadd.f32 %v1416, %v1498
        %v1551 = vadd.f32 %v1417, %v1512
        %v1552 = vadd.f32 %v1418, %v1526
        %v1553 = vadd.f32 %v1419, %v1540
        %s1554 = scalar_lea.vmem %s1, 80
        %v1555 = vld [vmem:[%s1554] sm:$0xf]
        %v1556 = vld [vmem:[%s1554 + $0x4] sm:$0xf]
        %v1559 = vunpack.c.l.b16 %v1555
        %v1560 = vunpack.c.l.b16 %v1556
        %v1561 = vpack.c.b16 %v1560, %v1559
        %1562 = vrot.lane.b32.xlu0 %v262, 27
        %v1563 = vpop.permute.xlu0 %1562
        %1564 = vrot.lane.b32.xlu0 %v263, 27
        %v1565 = vpop.permute.xlu0 %1564
        %1566 = vrot.lane.b32.xlu0 %v264, 27
        %v1567 = vpop.permute.xlu0 %1566
        %1568 = vrot.lane.b32.xlu0 %v265, 27
        %v1569 = vpop.permute.xlu0 %1568
        %1570 = vrot.lane.b32.xlu0 %v266, 27
        %v1571 = vpop.permute.xlu0 %1570
        %1572 = vrot.lane.b32.xlu0 %v267, 27
        %v1573 = vpop.permute.xlu0 %1572
        %1574 = vrot.lane.b32.xlu0 %v268, 27
        %v1575 = vpop.permute.xlu0 %1574
        %vm1576 = vcmask 220160
        %v1577 = vsel %vm1576, %v1563, %v1565
        %v1578 = vsel %vm1576, %v1565, %v1567
        %v1579 = vsel %vm1576, %v1567, %v1569
        %v1580 = vsel %vm1576, %v1569, %v1571
        %v1581 = vsel %vm1576, %v1571, %v1573
        %v1582 = vsel %vm1576, %v1573, %v1575
        %v1590 = vsel %vm296, %v1561, 0
        %1592 = vmatpush.bf16.msra.mxu0 0
        %1593 = vmatpush.bf16.msra.mxu0 0
        %1594 = vmatpush.bf16.msra.mxu0 0
        %1595 = vmatpush.bf16.msra.mxu0 0
        %1596 = vmatpush.bf16.msra.mxu0 0
        %1597 = vmatpush.bf16.msra.mxu0 0
        %1598 = vmatpush.bf16.msra.mxu0 0
        %1599 = vmatpush.bf16.msra.mxu0 %v1577
        %1600 = vmatmul.bf16.gmra.mxu0 %v1590
        %v1601 = vpop.f32.mrf.mxu0
        %v1602 = vadd.f32 0.0, %v1601
        %v1603 = vpop.f32.mrf.mxu0
        %v1604 = vadd.f32 0.0, %v1603
        %1605 = vdwg.mxu0
        %1606 = vmatpush.bf16.msra.mxu0 0
        %1607 = vmatpush.bf16.msra.mxu0 0
        %1608 = vmatpush.bf16.msra.mxu0 0
        %1609 = vmatpush.bf16.msra.mxu0 0
        %1610 = vmatpush.bf16.msra.mxu0 0
        %1611 = vmatpush.bf16.msra.mxu0 0
        %1612 = vmatpush.bf16.msra.mxu0 0
        %1613 = vmatpush.bf16.msra.mxu0 %v1578
        %1614 = vmatmul.bf16.gmra.mxu0 %v1590
        %v1615 = vpop.f32.mrf.mxu0
        %v1616 = vadd.f32 0.0, %v1615
        %v1617 = vpop.f32.mrf.mxu0
        %v1618 = vadd.f32 0.0, %v1617
        %1619 = vdwg.mxu0
        %1620 = vmatpush.bf16.msra.mxu0 0
        %1621 = vmatpush.bf16.msra.mxu0 0
        %1622 = vmatpush.bf16.msra.mxu0 0
        %1623 = vmatpush.bf16.msra.mxu0 0
        %1624 = vmatpush.bf16.msra.mxu0 0
        %1625 = vmatpush.bf16.msra.mxu0 0
        %1626 = vmatpush.bf16.msra.mxu0 0
        %1627 = vmatpush.bf16.msra.mxu0 %v1579
        %1628 = vmatmul.bf16.gmra.mxu0 %v1590
        %v1629 = vpop.f32.mrf.mxu0
        %v1630 = vadd.f32 0.0, %v1629
        %v1631 = vpop.f32.mrf.mxu0
        %v1632 = vadd.f32 0.0, %v1631
        %1633 = vdwg.mxu0
        %1634 = vmatpush.bf16.msra.mxu0 0
        %1635 = vmatpush.bf16.msra.mxu0 0
        %1636 = vmatpush.bf16.msra.mxu0 0
        %1637 = vmatpush.bf16.msra.mxu0 0
        %1638 = vmatpush.bf16.msra.mxu0 0
        %1639 = vmatpush.bf16.msra.mxu0 0
        %1640 = vmatpush.bf16.msra.mxu0 0
        %1641 = vmatpush.bf16.msra.mxu0 %v1580
        %1642 = vmatmul.bf16.gmra.mxu0 %v1590
        %v1643 = vpop.f32.mrf.mxu0
        %v1644 = vadd.f32 0.0, %v1643
        %v1645 = vpop.f32.mrf.mxu0
        %v1646 = vadd.f32 0.0, %v1645
        %1647 = vdwg.mxu0
        %1648 = vmatpush.bf16.msra.mxu0 0
        %1649 = vmatpush.bf16.msra.mxu0 0
        %1650 = vmatpush.bf16.msra.mxu0 0
        %1651 = vmatpush.bf16.msra.mxu0 0
        %1652 = vmatpush.bf16.msra.mxu0 0
        %1653 = vmatpush.bf16.msra.mxu0 0
        %1654 = vmatpush.bf16.msra.mxu0 0
        %1655 = vmatpush.bf16.msra.mxu0 %v1581
        %1656 = vmatmul.bf16.gmra.mxu0 %v1590
        %v1657 = vpop.f32.mrf.mxu0
        %v1658 = vadd.f32 0.0, %v1657
        %v1659 = vpop.f32.mrf.mxu0
        %v1660 = vadd.f32 0.0, %v1659
        %1661 = vdwg.mxu0
        %1662 = vmatpush.bf16.msra.mxu0 0
        %1663 = vmatpush.bf16.msra.mxu0 0
        %1664 = vmatpush.bf16.msra.mxu0 0
        %1665 = vmatpush.bf16.msra.mxu0 0
        %1666 = vmatpush.bf16.msra.mxu0 0
        %1667 = vmatpush.bf16.msra.mxu0 0
        %1668 = vmatpush.bf16.msra.mxu0 0
        %1669 = vmatpush.bf16.msra.mxu0 %v1582
        %1670 = vmatmul.bf16.gmra.mxu0 %v1590
        %v1671 = vpop.f32.mrf.mxu0
        %v1672 = vadd.f32 0.0, %v1671
        %v1673 = vpop.f32.mrf.mxu0
        %v1674 = vadd.f32 0.0, %v1673
        %1675 = vdwg.mxu0
        %v1676 = vadd.f32 %v1542, %v1602
        %v1677 = vadd.f32 %v1543, %v1616
        %v1678 = vadd.f32 %v1544, %v1630
        %v1679 = vadd.f32 %v1545, %v1644
        %v1680 = vadd.f32 %v1546, %v1658
        %v1681 = vadd.f32 %v1547, %v1672
        %v1682 = vadd.f32 %v1548, %v1604
        %v1683 = vadd.f32 %v1549, %v1618
        %v1684 = vadd.f32 %v1550, %v1632
        %v1685 = vadd.f32 %v1551, %v1646
        %v1686 = vadd.f32 %v1552, %v1660
        %v1687 = vadd.f32 %v1553, %v1674
        %s1688 = scalar_lea.vmem %s1, 88
        %v1689 = vld [vmem:[%s1688] sm:$0xf]
        %v1690 = vld [vmem:[%s1688 + $0x4] sm:$0xf]
        %v1693 = vunpack.c.l.b16 %v1689
        %v1694 = vunpack.c.l.b16 %v1690
        %v1695 = vpack.c.b16 %v1694, %v1693
        %1696 = vrot.lane.b32.xlu0 %v262, 26
        %v1697 = vpop.permute.xlu0 %1696
        %1698 = vrot.lane.b32.xlu0 %v263, 26
        %v1699 = vpop.permute.xlu0 %1698
        %1700 = vrot.lane.b32.xlu0 %v264, 26
        %v1701 = vpop.permute.xlu0 %1700
        %1702 = vrot.lane.b32.xlu0 %v265, 26
        %v1703 = vpop.permute.xlu0 %1702
        %1704 = vrot.lane.b32.xlu0 %v266, 26
        %v1705 = vpop.permute.xlu0 %1704
        %1706 = vrot.lane.b32.xlu0 %v267, 26
        %v1707 = vpop.permute.xlu0 %1706
        %1708 = vrot.lane.b32.xlu0 %v268, 26
        %v1709 = vpop.permute.xlu0 %1708
        %vm1710 = vcmask 211968
        %v1711 = vsel %vm1710, %v1697, %v1699
        %v1712 = vsel %vm1710, %v1699, %v1701
        %v1713 = vsel %vm1710, %v1701, %v1703
        %v1714 = vsel %vm1710, %v1703, %v1705
        %v1715 = vsel %vm1710, %v1705, %v1707
        %v1716 = vsel %vm1710, %v1707, %v1709
        %v1724 = vsel %vm296, %v1695, 0
        %1726 = vmatpush.bf16.msra.mxu0 0
        %1727 = vmatpush.bf16.msra.mxu0 0
        %1728 = vmatpush.bf16.msra.mxu0 0
        %1729 = vmatpush.bf16.msra.mxu0 0
        %1730 = vmatpush.bf16.msra.mxu0 0
        %1731 = vmatpush.bf16.msra.mxu0 0
        %1732 = vmatpush.bf16.msra.mxu0 0
        %1733 = vmatpush.bf16.msra.mxu0 %v1711
        %1734 = vmatmul.bf16.gmra.mxu0 %v1724
        %v1735 = vpop.f32.mrf.mxu0
        %v1736 = vadd.f32 0.0, %v1735
        %v1737 = vpop.f32.mrf.mxu0
        %v1738 = vadd.f32 0.0, %v1737
        %1739 = vdwg.mxu0
        %1740 = vmatpush.bf16.msra.mxu0 0
        %1741 = vmatpush.bf16.msra.mxu0 0
        %1742 = vmatpush.bf16.msra.mxu0 0
        %1743 = vmatpush.bf16.msra.mxu0 0
        %1744 = vmatpush.bf16.msra.mxu0 0
        %1745 = vmatpush.bf16.msra.mxu0 0
        %1746 = vmatpush.bf16.msra.mxu0 0
        %1747 = vmatpush.bf16.msra.mxu0 %v1712
        %1748 = vmatmul.bf16.gmra.mxu0 %v1724
        %v1749 = vpop.f32.mrf.mxu0
        %v1750 = vadd.f32 0.0, %v1749
        %v1751 = vpop.f32.mrf.mxu0
        %v1752 = vadd.f32 0.0, %v1751
        %1753 = vdwg.mxu0
        %1754 = vmatpush.bf16.msra.mxu0 0
        %1755 = vmatpush.bf16.msra.mxu0 0
        %1756 = vmatpush.bf16.msra.mxu0 0
        %1757 = vmatpush.bf16.msra.mxu0 0
        %1758 = vmatpush.bf16.msra.mxu0 0
        %1759 = vmatpush.bf16.msra.mxu0 0
        %1760 = vmatpush.bf16.msra.mxu0 0
        %1761 = vmatpush.bf16.msra.mxu0 %v1713
        %1762 = vmatmul.bf16.gmra.mxu0 %v1724
        %v1763 = vpop.f32.mrf.mxu0
        %v1764 = vadd.f32 0.0, %v1763
        %v1765 = vpop.f32.mrf.mxu0
        %v1766 = vadd.f32 0.0, %v1765
        %1767 = vdwg.mxu0
        %1768 = vmatpush.bf16.msra.mxu0 0
        %1769 = vmatpush.bf16.msra.mxu0 0
        %1770 = vmatpush.bf16.msra.mxu0 0
        %1771 = vmatpush.bf16.msra.mxu0 0
        %1772 = vmatpush.bf16.msra.mxu0 0
        %1773 = vmatpush.bf16.msra.mxu0 0
        %1774 = vmatpush.bf16.msra.mxu0 0
        %1775 = vmatpush.bf16.msra.mxu0 %v1714
        %1776 = vmatmul.bf16.gmra.mxu0 %v1724
        %v1777 = vpop.f32.mrf.mxu0
        %v1778 = vadd.f32 0.0, %v1777
        %v1779 = vpop.f32.mrf.mxu0
        %v1780 = vadd.f32 0.0, %v1779
        %1781 = vdwg.mxu0
        %1782 = vmatpush.bf16.msra.mxu0 0
        %1783 = vmatpush.bf16.msra.mxu0 0
        %1784 = vmatpush.bf16.msra.mxu0 0
        %1785 = vmatpush.bf16.msra.mxu0 0
        %1786 = vmatpush.bf16.msra.mxu0 0
        %1787 = vmatpush.bf16.msra.mxu0 0
        %1788 = vmatpush.bf16.msra.mxu0 0
        %1789 = vmatpush.bf16.msra.mxu0 %v1715
        %1790 = vmatmul.bf16.gmra.mxu0 %v1724
        %v1791 = vpop.f32.mrf.mxu0
        %v1792 = vadd.f32 0.0, %v1791
        %v1793 = vpop.f32.mrf.mxu0
        %v1794 = vadd.f32 0.0, %v1793
        %1795 = vdwg.mxu0
        %1796 = vmatpush.bf16.msra.mxu0 0
        %1797 = vmatpush.bf16.msra.mxu0 0
        %1798 = vmatpush.bf16.msra.mxu0 0
        %1799 = vmatpush.bf16.msra.mxu0 0
        %1800 = vmatpush.bf16.msra.mxu0 0
        %1801 = vmatpush.bf16.msra.mxu0 0
        %1802 = vmatpush.bf16.msra.mxu0 0
        %1803 = vmatpush.bf16.msra.mxu0 %v1716
        %1804 = vmatmul.bf16.gmra.mxu0 %v1724
        %v1805 = vpop.f32.mrf.mxu0
        %v1806 = vadd.f32 0.0, %v1805
        %v1807 = vpop.f32.mrf.mxu0
        %v1808 = vadd.f32 0.0, %v1807
        %1809 = vdwg.mxu0
        %v1810 = vadd.f32 %v1676, %v1736
        %v1811 = vadd.f32 %v1677, %v1750
        %v1812 = vadd.f32 %v1678, %v1764
        %v1813 = vadd.f32 %v1679, %v1778
        %v1814 = vadd.f32 %v1680, %v1792
        %v1815 = vadd.f32 %v1681, %v1806
        %v1816 = vadd.f32 %v1682, %v1738
        %v1817 = vadd.f32 %v1683, %v1752
        %v1818 = vadd.f32 %v1684, %v1766
        %v1819 = vadd.f32 %v1685, %v1780
        %v1820 = vadd.f32 %v1686, %v1794
        %v1821 = vadd.f32 %v1687, %v1808
        %s1822 = scalar_lea.vmem %s1, 96
        %v1823 = vld [vmem:[%s1822] sm:$0xf]
        %v1824 = vld [vmem:[%s1822 + $0x4] sm:$0xf]
        %v1827 = vunpack.c.l.b16 %v1823
        %v1828 = vunpack.c.l.b16 %v1824
        %v1829 = vpack.c.b16 %v1828, %v1827
        %1830 = vrot.lane.b32.xlu0 %v262, 18
        %v1831 = vpop.permute.xlu0 %1830
        %1832 = vrot.lane.b32.xlu0 %v263, 18
        %v1833 = vpop.permute.xlu0 %1832
        %1834 = vrot.lane.b32.xlu0 %v264, 18
        %v1835 = vpop.permute.xlu0 %1834
        %1836 = vrot.lane.b32.xlu0 %v265, 18
        %v1837 = vpop.permute.xlu0 %1836
        %1838 = vrot.lane.b32.xlu0 %v266, 18
        %v1839 = vpop.permute.xlu0 %1838
        %1840 = vrot.lane.b32.xlu0 %v267, 18
        %v1841 = vpop.permute.xlu0 %1840
        %1842 = vrot.lane.b32.xlu0 %v268, 18
        %v1843 = vpop.permute.xlu0 %1842
        %vm1844 = vcmask 146432
        %v1845 = vsel %vm1844, %v1831, %v1833
        %v1846 = vsel %vm1844, %v1833, %v1835
        %v1847 = vsel %vm1844, %v1835, %v1837
        %v1848 = vsel %vm1844, %v1837, %v1839
        %v1849 = vsel %vm1844, %v1839, %v1841
        %v1850 = vsel %vm1844, %v1841, %v1843
        %v1858 = vsel %vm296, %v1829, 0
        %1860 = vmatpush.bf16.msra.mxu0 0
        %1861 = vmatpush.bf16.msra.mxu0 0
        %1862 = vmatpush.bf16.msra.mxu0 0
        %1863 = vmatpush.bf16.msra.mxu0 0
        %1864 = vmatpush.bf16.msra.mxu0 0
        %1865 = vmatpush.bf16.msra.mxu0 0
        %1866 = vmatpush.bf16.msra.mxu0 0
        %1867 = vmatpush.bf16.msra.mxu0 %v1845
        %1868 = vmatmul.bf16.gmra.mxu0 %v1858
        %v1869 = vpop.f32.mrf.mxu0
        %v1870 = vadd.f32 0.0, %v1869
        %v1871 = vpop.f32.mrf.mxu0
        %v1872 = vadd.f32 0.0, %v1871
        %1873 = vdwg.mxu0
        %1874 = vmatpush.bf16.msra.mxu0 0
        %1875 = vmatpush.bf16.msra.mxu0 0
        %1876 = vmatpush.bf16.msra.mxu0 0
        %1877 = vmatpush.bf16.msra.mxu0 0
        %1878 = vmatpush.bf16.msra.mxu0 0
        %1879 = vmatpush.bf16.msra.mxu0 0
        %1880 = vmatpush.bf16.msra.mxu0 0
        %1881 = vmatpush.bf16.msra.mxu0 %v1846
        %1882 = vmatmul.bf16.gmra.mxu0 %v1858
        %v1883 = vpop.f32.mrf.mxu0
        %v1884 = vadd.f32 0.0, %v1883
        %v1885 = vpop.f32.mrf.mxu0
        %v1886 = vadd.f32 0.0, %v1885
        %1887 = vdwg.mxu0
        %1888 = vmatpush.bf16.msra.mxu0 0
        %1889 = vmatpush.bf16.msra.mxu0 0
        %1890 = vmatpush.bf16.msra.mxu0 0
        %1891 = vmatpush.bf16.msra.mxu0 0
        %1892 = vmatpush.bf16.msra.mxu0 0
        %1893 = vmatpush.bf16.msra.mxu0 0
        %1894 = vmatpush.bf16.msra.mxu0 0
        %1895 = vmatpush.bf16.msra.mxu0 %v1847
        %1896 = vmatmul.bf16.gmra.mxu0 %v1858
        %v1897 = vpop.f32.mrf.mxu0
        %v1898 = vadd.f32 0.0, %v1897
        %v1899 = vpop.f32.mrf.mxu0
        %v1900 = vadd.f32 0.0, %v1899
        %1901 = vdwg.mxu0
        %1902 = vmatpush.bf16.msra.mxu0 0
        %1903 = vmatpush.bf16.msra.mxu0 0
        %1904 = vmatpush.bf16.msra.mxu0 0
        %1905 = vmatpush.bf16.msra.mxu0 0
        %1906 = vmatpush.bf16.msra.mxu0 0
        %1907 = vmatpush.bf16.msra.mxu0 0
        %1908 = vmatpush.bf16.msra.mxu0 0
        %1909 = vmatpush.bf16.msra.mxu0 %v1848
        %1910 = vmatmul.bf16.gmra.mxu0 %v1858
        %v1911 = vpop.f32.mrf.mxu0
        %v1912 = vadd.f32 0.0, %v1911
        %v1913 = vpop.f32.mrf.mxu0
        %v1914 = vadd.f32 0.0, %v1913
        %1915 = vdwg.mxu0
        %1916 = vmatpush.bf16.msra.mxu0 0
        %1917 = vmatpush.bf16.msra.mxu0 0
        %1918 = vmatpush.bf16.msra.mxu0 0
        %1919 = vmatpush.bf16.msra.mxu0 0
        %1920 = vmatpush.bf16.msra.mxu0 0
        %1921 = vmatpush.bf16.msra.mxu0 0
        %1922 = vmatpush.bf16.msra.mxu0 0
        %1923 = vmatpush.bf16.msra.mxu0 %v1849
        %1924 = vmatmul.bf16.gmra.mxu0 %v1858
        %v1925 = vpop.f32.mrf.mxu0
        %v1926 = vadd.f32 0.0, %v1925
        %v1927 = vpop.f32.mrf.mxu0
        %v1928 = vadd.f32 0.0, %v1927
        %1929 = vdwg.mxu0
        %1930 = vmatpush.bf16.msra.mxu0 0
        %1931 = vmatpush.bf16.msra.mxu0 0
        %1932 = vmatpush.bf16.msra.mxu0 0
        %1933 = vmatpush.bf16.msra.mxu0 0
        %1934 = vmatpush.bf16.msra.mxu0 0
        %1935 = vmatpush.bf16.msra.mxu0 0
        %1936 = vmatpush.bf16.msra.mxu0 0
        %1937 = vmatpush.bf16.msra.mxu0 %v1850
        %1938 = vmatmul.bf16.gmra.mxu0 %v1858
        %v1939 = vpop.f32.mrf.mxu0
        %v1940 = vadd.f32 0.0, %v1939
        %v1941 = vpop.f32.mrf.mxu0
        %v1942 = vadd.f32 0.0, %v1941
        %1943 = vdwg.mxu0
        %v1944 = vadd.f32 %v1810, %v1870
        %v1945 = vadd.f32 %v1811, %v1884
        %v1946 = vadd.f32 %v1812, %v1898
        %v1947 = vadd.f32 %v1813, %v1912
        %v1948 = vadd.f32 %v1814, %v1926
        %v1949 = vadd.f32 %v1815, %v1940
        %v1950 = vadd.f32 %v1816, %v1872
        %v1951 = vadd.f32 %v1817, %v1886
        %v1952 = vadd.f32 %v1818, %v1900
        %v1953 = vadd.f32 %v1819, %v1914
        %v1954 = vadd.f32 %v1820, %v1928
        %v1955 = vadd.f32 %v1821, %v1942
        %s1956 = scalar_lea.vmem %s1, 104
        %v1957 = vld [vmem:[%s1956] sm:$0xf]
        %v1958 = vld [vmem:[%s1956 + $0x4] sm:$0xf]
        %v1961 = vunpack.c.l.b16 %v1957
        %v1962 = vunpack.c.l.b16 %v1958
        %v1963 = vpack.c.b16 %v1962, %v1961
        %1964 = vrot.lane.b32.xlu0 %v262, 17
        %v1965 = vpop.permute.xlu0 %1964
        %1966 = vrot.lane.b32.xlu0 %v263, 17
        %v1967 = vpop.permute.xlu0 %1966
        %1968 = vrot.lane.b32.xlu0 %v264, 17
        %v1969 = vpop.permute.xlu0 %1968
        %1970 = vrot.lane.b32.xlu0 %v265, 17
        %v1971 = vpop.permute.xlu0 %1970
        %1972 = vrot.lane.b32.xlu0 %v266, 17
        %v1973 = vpop.permute.xlu0 %1972
        %1974 = vrot.lane.b32.xlu0 %v267, 17
        %v1975 = vpop.permute.xlu0 %1974
        %1976 = vrot.lane.b32.xlu0 %v268, 17
        %v1977 = vpop.permute.xlu0 %1976
        %vm1978 = vcmask 138240
        %v1979 = vsel %vm1978, %v1965, %v1967
        %v1980 = vsel %vm1978, %v1967, %v1969
        %v1981 = vsel %vm1978, %v1969, %v1971
        %v1982 = vsel %vm1978, %v1971, %v1973
        %v1983 = vsel %vm1978, %v1973, %v1975
        %v1984 = vsel %vm1978, %v1975, %v1977
        %v1992 = vsel %vm296, %v1963, 0
        %1994 = vmatpush.bf16.msra.mxu0 0
        %1995 = vmatpush.bf16.msra.mxu0 0
        %1996 = vmatpush.bf16.msra.mxu0 0
        %1997 = vmatpush.bf16.msra.mxu0 0
        %1998 = vmatpush.bf16.msra.mxu0 0
        %1999 = vmatpush.bf16.msra.mxu0 0
        %2000 = vmatpush.bf16.msra.mxu0 0
        %2001 = vmatpush.bf16.msra.mxu0 %v1979
        %2002 = vmatmul.bf16.gmra.mxu0 %v1992
        %v2003 = vpop.f32.mrf.mxu0
        %v2004 = vadd.f32 0.0, %v2003
        %v2005 = vpop.f32.mrf.mxu0
        %v2006 = vadd.f32 0.0, %v2005
        %2007 = vdwg.mxu0
        %2008 = vmatpush.bf16.msra.mxu0 0
        %2009 = vmatpush.bf16.msra.mxu0 0
        %2010 = vmatpush.bf16.msra.mxu0 0
        %2011 = vmatpush.bf16.msra.mxu0 0
        %2012 = vmatpush.bf16.msra.mxu0 0
        %2013 = vmatpush.bf16.msra.mxu0 0
        %2014 = vmatpush.bf16.msra.mxu0 0
        %2015 = vmatpush.bf16.msra.mxu0 %v1980
        %2016 = vmatmul.bf16.gmra.mxu0 %v1992
        %v2017 = vpop.f32.mrf.mxu0
        %v2018 = vadd.f32 0.0, %v2017
        %v2019 = vpop.f32.mrf.mxu0
        %v2020 = vadd.f32 0.0, %v2019
        %2021 = vdwg.mxu0
        %2022 = vmatpush.bf16.msra.mxu0 0
        %2023 = vmatpush.bf16.msra.mxu0 0
        %2024 = vmatpush.bf16.msra.mxu0 0
        %2025 = vmatpush.bf16.msra.mxu0 0
        %2026 = vmatpush.bf16.msra.mxu0 0
        %2027 = vmatpush.bf16.msra.mxu0 0
        %2028 = vmatpush.bf16.msra.mxu0 0
        %2029 = vmatpush.bf16.msra.mxu0 %v1981
        %2030 = vmatmul.bf16.gmra.mxu0 %v1992
        %v2031 = vpop.f32.mrf.mxu0
        %v2032 = vadd.f32 0.0, %v2031
        %v2033 = vpop.f32.mrf.mxu0
        %v2034 = vadd.f32 0.0, %v2033
        %2035 = vdwg.mxu0
        %2036 = vmatpush.bf16.msra.mxu0 0
        %2037 = vmatpush.bf16.msra.mxu0 0
        %2038 = vmatpush.bf16.msra.mxu0 0
        %2039 = vmatpush.bf16.msra.mxu0 0
        %2040 = vmatpush.bf16.msra.mxu0 0
        %2041 = vmatpush.bf16.msra.mxu0 0
        %2042 = vmatpush.bf16.msra.mxu0 0
        %2043 = vmatpush.bf16.msra.mxu0 %v1982
        %2044 = vmatmul.bf16.gmra.mxu0 %v1992
        %v2045 = vpop.f32.mrf.mxu0
        %v2046 = vadd.f32 0.0, %v2045
        %v2047 = vpop.f32.mrf.mxu0
        %v2048 = vadd.f32 0.0, %v2047
        %2049 = vdwg.mxu0
        %2050 = vmatpush.bf16.msra.mxu0 0
        %2051 = vmatpush.bf16.msra.mxu0 0
        %2052 = vmatpush.bf16.msra.mxu0 0
        %2053 = vmatpush.bf16.msra.mxu0 0
        %2054 = vmatpush.bf16.msra.mxu0 0
        %2055 = vmatpush.bf16.msra.mxu0 0
        %2056 = vmatpush.bf16.msra.mxu0 0
        %2057 = vmatpush.bf16.msra.mxu0 %v1983
        %2058 = vmatmul.bf16.gmra.mxu0 %v1992
        %v2059 = vpop.f32.mrf.mxu0
        %v2060 = vadd.f32 0.0, %v2059
        %v2061 = vpop.f32.mrf.mxu0
        %v2062 = vadd.f32 0.0, %v2061
        %2063 = vdwg.mxu0
        %2064 = vmatpush.bf16.msra.mxu0 0
        %2065 = vmatpush.bf16.msra.mxu0 0
        %2066 = vmatpush.bf16.msra.mxu0 0
        %2067 = vmatpush.bf16.msra.mxu0 0
        %2068 = vmatpush.bf16.msra.mxu0 0
        %2069 = vmatpush.bf16.msra.mxu0 0
        %2070 = vmatpush.bf16.msra.mxu0 0
        %2071 = vmatpush.bf16.msra.mxu0 %v1984
        %2072 = vmatmul.bf16.gmra.mxu0 %v1992
        %v2073 = vpop.f32.mrf.mxu0
        %v2074 = vadd.f32 0.0, %v2073
        %v2075 = vpop.f32.mrf.mxu0
        %v2076 = vadd.f32 0.0, %v2075
        %2077 = vdwg.mxu0
        %v2078 = vadd.f32 %v1944, %v2004
        %v2079 = vadd.f32 %v1945, %v2018
        %v2080 = vadd.f32 %v1946, %v2032
        %v2081 = vadd.f32 %v1947, %v2046
        %v2082 = vadd.f32 %v1948, %v2060
        %v2083 = vadd.f32 %v1949, %v2074
        %v2084 = vadd.f32 %v1950, %v2006
        %v2085 = vadd.f32 %v1951, %v2020
        %v2086 = vadd.f32 %v1952, %v2034
        %v2087 = vadd.f32 %v1953, %v2048
        %v2088 = vadd.f32 %v1954, %v2062
        %v2089 = vadd.f32 %v1955, %v2076
        %s2090 = scalar_lea.vmem %s1, 112
        %v2091 = vld [vmem:[%s2090] sm:$0xf]
        %v2092 = vld [vmem:[%s2090 + $0x4] sm:$0xf]
        %v2095 = vunpack.c.l.b16 %v2091
        %v2096 = vunpack.c.l.b16 %v2092
        %v2097 = vpack.c.b16 %v2096, %v2095
        %2098 = vrot.lane.b32.xlu0 %v262, 16
        %v2099 = vpop.permute.xlu0 %2098
        %2100 = vrot.lane.b32.xlu0 %v263, 16
        %v2101 = vpop.permute.xlu0 %2100
        %2102 = vrot.lane.b32.xlu0 %v264, 16
        %v2103 = vpop.permute.xlu0 %2102
        %2104 = vrot.lane.b32.xlu0 %v265, 16
        %v2105 = vpop.permute.xlu0 %2104
        %2106 = vrot.lane.b32.xlu0 %v266, 16
        %v2107 = vpop.permute.xlu0 %2106
        %2108 = vrot.lane.b32.xlu0 %v267, 16
        %v2109 = vpop.permute.xlu0 %2108
        %2110 = vrot.lane.b32.xlu0 %v268, 16
        %v2111 = vpop.permute.xlu0 %2110
        %vm2112 = vcmask 130048
        %v2113 = vsel %vm2112, %v2099, %v2101
        %v2114 = vsel %vm2112, %v2101, %v2103
        %v2115 = vsel %vm2112, %v2103, %v2105
        %v2116 = vsel %vm2112, %v2105, %v2107
        %v2117 = vsel %vm2112, %v2107, %v2109
        %v2118 = vsel %vm2112, %v2109, %v2111
        %v2126 = vsel %vm296, %v2097, 0
        %2128 = vmatpush.bf16.msra.mxu0 0
        %2129 = vmatpush.bf16.msra.mxu0 0
        %2130 = vmatpush.bf16.msra.mxu0 0
        %2131 = vmatpush.bf16.msra.mxu0 0
        %2132 = vmatpush.bf16.msra.mxu0 0
        %2133 = vmatpush.bf16.msra.mxu0 0
        %2134 = vmatpush.bf16.msra.mxu0 0
        %2135 = vmatpush.bf16.msra.mxu0 %v2113
        %2136 = vmatmul.bf16.gmra.mxu0 %v2126
        %v2137 = vpop.f32.mrf.mxu0
        %v2138 = vadd.f32 0.0, %v2137
        %v2139 = vpop.f32.mrf.mxu0
        %v2140 = vadd.f32 0.0, %v2139
        %2141 = vdwg.mxu0
        %2142 = vmatpush.bf16.msra.mxu0 0
        %2143 = vmatpush.bf16.msra.mxu0 0
        %2144 = vmatpush.bf16.msra.mxu0 0
        %2145 = vmatpush.bf16.msra.mxu0 0
        %2146 = vmatpush.bf16.msra.mxu0 0
        %2147 = vmatpush.bf16.msra.mxu0 0
        %2148 = vmatpush.bf16.msra.mxu0 0
        %2149 = vmatpush.bf16.msra.mxu0 %v2114
        %2150 = vmatmul.bf16.gmra.mxu0 %v2126
        %v2151 = vpop.f32.mrf.mxu0
        %v2152 = vadd.f32 0.0, %v2151
        %v2153 = vpop.f32.mrf.mxu0
        %v2154 = vadd.f32 0.0, %v2153
        %2155 = vdwg.mxu0
        %2156 = vmatpush.bf16.msra.mxu0 0
        %2157 = vmatpush.bf16.msra.mxu0 0
        %2158 = vmatpush.bf16.msra.mxu0 0
        %2159 = vmatpush.bf16.msra.mxu0 0
        %2160 = vmatpush.bf16.msra.mxu0 0
        %2161 = vmatpush.bf16.msra.mxu0 0
        %2162 = vmatpush.bf16.msra.mxu0 0
        %2163 = vmatpush.bf16.msra.mxu0 %v2115
        %2164 = vmatmul.bf16.gmra.mxu0 %v2126
        %v2165 = vpop.f32.mrf.mxu0
        %v2166 = vadd.f32 0.0, %v2165
        %v2167 = vpop.f32.mrf.mxu0
        %v2168 = vadd.f32 0.0, %v2167
        %2169 = vdwg.mxu0
        %2170 = vmatpush.bf16.msra.mxu0 0
        %2171 = vmatpush.bf16.msra.mxu0 0
        %2172 = vmatpush.bf16.msra.mxu0 0
        %2173 = vmatpush.bf16.msra.mxu0 0
        %2174 = vmatpush.bf16.msra.mxu0 0
        %2175 = vmatpush.bf16.msra.mxu0 0
        %2176 = vmatpush.bf16.msra.mxu0 0
        %2177 = vmatpush.bf16.msra.mxu0 %v2116
        %2178 = vmatmul.bf16.gmra.mxu0 %v2126
        %v2179 = vpop.f32.mrf.mxu0
        %v2180 = vadd.f32 0.0, %v2179
        %v2181 = vpop.f32.mrf.mxu0
        %v2182 = vadd.f32 0.0, %v2181
        %2183 = vdwg.mxu0
        %2184 = vmatpush.bf16.msra.mxu0 0
        %2185 = vmatpush.bf16.msra.mxu0 0
        %2186 = vmatpush.bf16.msra.mxu0 0
        %2187 = vmatpush.bf16.msra.mxu0 0
        %2188 = vmatpush.bf16.msra.mxu0 0
        %2189 = vmatpush.bf16.msra.mxu0 0
        %2190 = vmatpush.bf16.msra.mxu0 0
        %2191 = vmatpush.bf16.msra.mxu0 %v2117
        %2192 = vmatmul.bf16.gmra.mxu0 %v2126
        %v2193 = vpop.f32.mrf.mxu0
        %v2194 = vadd.f32 0.0, %v2193
        %v2195 = vpop.f32.mrf.mxu0
        %v2196 = vadd.f32 0.0, %v2195
        %2197 = vdwg.mxu0
        %2198 = vmatpush.bf16.msra.mxu0 0
        %2199 = vmatpush.bf16.msra.mxu0 0
        %2200 = vmatpush.bf16.msra.mxu0 0
        %2201 = vmatpush.bf16.msra.mxu0 0
        %2202 = vmatpush.bf16.msra.mxu0 0
        %2203 = vmatpush.bf16.msra.mxu0 0
        %2204 = vmatpush.bf16.msra.mxu0 0
        %2205 = vmatpush.bf16.msra.mxu0 %v2118
        %2206 = vmatmul.bf16.gmra.mxu0 %v2126
        %v2207 = vpop.f32.mrf.mxu0
        %v2208 = vadd.f32 0.0, %v2207
        %v2209 = vpop.f32.mrf.mxu0
        %v2210 = vadd.f32 0.0, %v2209
        %2211 = vdwg.mxu0
        %v2212 = vadd.f32 %v2078, %v2138
        %v2213 = vadd.f32 %v2079, %v2152
        %v2214 = vadd.f32 %v2080, %v2166
        %v2215 = vadd.f32 %v2081, %v2180
        %v2216 = vadd.f32 %v2082, %v2194
        %v2217 = vadd.f32 %v2083, %v2208
        %v2218 = vadd.f32 %v2084, %v2140
        %v2219 = vadd.f32 %v2085, %v2154
        %v2220 = vadd.f32 %v2086, %v2168
        %v2221 = vadd.f32 %v2087, %v2182
        %v2222 = vadd.f32 %v2088, %v2196
        %v2223 = vadd.f32 %v2089, %v2210
        %s2224 = scalar_lea.vmem %s1, 120
        %v2225 = vld [vmem:[%s2224] sm:$0xf]
        %v2226 = vld [vmem:[%s2224 + $0x4] sm:$0xf]
        %v2229 = vunpack.c.l.b16 %v2225
        %v2230 = vunpack.c.l.b16 %v2226
        %v2231 = vpack.c.b16 %v2230, %v2229
        %2232 = vrot.lane.b32.xlu0 %v262, 8
        %v2233 = vpop.permute.xlu0 %2232
        %2234 = vrot.lane.b32.xlu0 %v263, 8
        %v2235 = vpop.permute.xlu0 %2234
        %2236 = vrot.lane.b32.xlu0 %v264, 8
        %v2237 = vpop.permute.xlu0 %2236
        %2238 = vrot.lane.b32.xlu0 %v265, 8
        %v2239 = vpop.permute.xlu0 %2238
        %2240 = vrot.lane.b32.xlu0 %v266, 8
        %v2241 = vpop.permute.xlu0 %2240
        %2242 = vrot.lane.b32.xlu0 %v267, 8
        %v2243 = vpop.permute.xlu0 %2242
        %2244 = vrot.lane.b32.xlu0 %v268, 8
        %v2245 = vpop.permute.xlu0 %2244
        %vm2246 = vcmask 64512
        %v2247 = vsel %vm2246, %v2233, %v2235
        %v2248 = vsel %vm2246, %v2235, %v2237
        %v2249 = vsel %vm2246, %v2237, %v2239
        %v2250 = vsel %vm2246, %v2239, %v2241
        %v2251 = vsel %vm2246, %v2241, %v2243
        %v2252 = vsel %vm2246, %v2243, %v2245
        %v2260 = vsel %vm296, %v2231, 0
        %2262 = vmatpush.bf16.msra.mxu0 0
        %2263 = vmatpush.bf16.msra.mxu0 0
        %2264 = vmatpush.bf16.msra.mxu0 0
        %2265 = vmatpush.bf16.msra.mxu0 0
        %2266 = vmatpush.bf16.msra.mxu0 0
        %2267 = vmatpush.bf16.msra.mxu0 0
        %2268 = vmatpush.bf16.msra.mxu0 0
        %2269 = vmatpush.bf16.msra.mxu0 %v2247
        %2270 = vmatmul.bf16.gmra.mxu0 %v2260
        %v2271 = vpop.f32.mrf.mxu0
        %v2272 = vadd.f32 0.0, %v2271
        %v2273 = vpop.f32.mrf.mxu0
        %v2274 = vadd.f32 0.0, %v2273
        %2275 = vdwg.mxu0
        %2276 = vmatpush.bf16.msra.mxu0 0
        %2277 = vmatpush.bf16.msra.mxu0 0
        %2278 = vmatpush.bf16.msra.mxu0 0
        %2279 = vmatpush.bf16.msra.mxu0 0
        %2280 = vmatpush.bf16.msra.mxu0 0
        %2281 = vmatpush.bf16.msra.mxu0 0
        %2282 = vmatpush.bf16.msra.mxu0 0
        %2283 = vmatpush.bf16.msra.mxu0 %v2248
        %2284 = vmatmul.bf16.gmra.mxu0 %v2260
        %v2285 = vpop.f32.mrf.mxu0
        %v2286 = vadd.f32 0.0, %v2285
        %v2287 = vpop.f32.mrf.mxu0
        %v2288 = vadd.f32 0.0, %v2287
        %2289 = vdwg.mxu0
        %2290 = vmatpush.bf16.msra.mxu0 0
        %2291 = vmatpush.bf16.msra.mxu0 0
        %2292 = vmatpush.bf16.msra.mxu0 0
        %2293 = vmatpush.bf16.msra.mxu0 0
        %2294 = vmatpush.bf16.msra.mxu0 0
        %2295 = vmatpush.bf16.msra.mxu0 0
        %2296 = vmatpush.bf16.msra.mxu0 0
        %2297 = vmatpush.bf16.msra.mxu0 %v2249
        %2298 = vmatmul.bf16.gmra.mxu0 %v2260
        %v2299 = vpop.f32.mrf.mxu0
        %v2300 = vadd.f32 0.0, %v2299
        %v2301 = vpop.f32.mrf.mxu0
        %v2302 = vadd.f32 0.0, %v2301
        %2303 = vdwg.mxu0
        %2304 = vmatpush.bf16.msra.mxu0 0
        %2305 = vmatpush.bf16.msra.mxu0 0
        %2306 = vmatpush.bf16.msra.mxu0 0
        %2307 = vmatpush.bf16.msra.mxu0 0
        %2308 = vmatpush.bf16.msra.mxu0 0
        %2309 = vmatpush.bf16.msra.mxu0 0
        %2310 = vmatpush.bf16.msra.mxu0 0
        %2311 = vmatpush.bf16.msra.mxu0 %v2250
        %2312 = vmatmul.bf16.gmra.mxu0 %v2260
        %v2313 = vpop.f32.mrf.mxu0
        %v2314 = vadd.f32 0.0, %v2313
        %v2315 = vpop.f32.mrf.mxu0
        %v2316 = vadd.f32 0.0, %v2315
        %2317 = vdwg.mxu0
        %2318 = vmatpush.bf16.msra.mxu0 0
        %2319 = vmatpush.bf16.msra.mxu0 0
        %2320 = vmatpush.bf16.msra.mxu0 0
        %2321 = vmatpush.bf16.msra.mxu0 0
        %2322 = vmatpush.bf16.msra.mxu0 0
        %2323 = vmatpush.bf16.msra.mxu0 0
        %2324 = vmatpush.bf16.msra.mxu0 0
        %2325 = vmatpush.bf16.msra.mxu0 %v2251
        %2326 = vmatmul.bf16.gmra.mxu0 %v2260
        %v2327 = vpop.f32.mrf.mxu0
        %v2328 = vadd.f32 0.0, %v2327
        %v2329 = vpop.f32.mrf.mxu0
        %v2330 = vadd.f32 0.0, %v2329
        %2331 = vdwg.mxu0
        %2332 = vmatpush.bf16.msra.mxu0 0
        %2333 = vmatpush.bf16.msra.mxu0 0
        %2334 = vmatpush.bf16.msra.mxu0 0
        %2335 = vmatpush.bf16.msra.mxu0 0
        %2336 = vmatpush.bf16.msra.mxu0 0
        %2337 = vmatpush.bf16.msra.mxu0 0
        %2338 = vmatpush.bf16.msra.mxu0 0
        %2339 = vmatpush.bf16.msra.mxu0 %v2252
        %2340 = vmatmul.bf16.gmra.mxu0 %v2260
        %v2341 = vpop.f32.mrf.mxu0
        %v2342 = vadd.f32 0.0, %v2341
        %v2343 = vpop.f32.mrf.mxu0
        %v2344 = vadd.f32 0.0, %v2343
        %2345 = vdwg.mxu0
        %v2346 = vadd.f32 %v2212, %v2272
        %v2347 = vadd.f32 %v2213, %v2286
        %v2348 = vadd.f32 %v2214, %v2300
        %v2349 = vadd.f32 %v2215, %v2314
        %v2350 = vadd.f32 %v2216, %v2328
        %v2351 = vadd.f32 %v2217, %v2342
        %v2352 = vadd.f32 %v2218, %v2274
        %v2353 = vadd.f32 %v2219, %v2288
        %v2354 = vadd.f32 %v2220, %v2302
        %v2355 = vadd.f32 %v2221, %v2316
        %v2356 = vadd.f32 %v2222, %v2330
        %v2357 = vadd.f32 %v2223, %v2344
        %s2358 = scalar_lea.vmem %s1, 128
        %v2359 = vld [vmem:[%s2358] sm:$0xf]
        %v2360 = vld [vmem:[%s2358 + $0x4] sm:$0xf]
        %v2363 = vunpack.c.l.b16 %v2359
        %v2364 = vunpack.c.l.b16 %v2360
        %v2365 = vpack.c.b16 %v2364, %v2363
        %2366 = vrot.lane.b32.xlu0 %v262, 7
        %v2367 = vpop.permute.xlu0 %2366
        %2368 = vrot.lane.b32.xlu0 %v263, 7
        %v2369 = vpop.permute.xlu0 %2368
        %2370 = vrot.lane.b32.xlu0 %v264, 7
        %v2371 = vpop.permute.xlu0 %2370
        %2372 = vrot.lane.b32.xlu0 %v265, 7
        %v2373 = vpop.permute.xlu0 %2372
        %2374 = vrot.lane.b32.xlu0 %v266, 7
        %v2375 = vpop.permute.xlu0 %2374
        %2376 = vrot.lane.b32.xlu0 %v267, 7
        %v2377 = vpop.permute.xlu0 %2376
        %2378 = vrot.lane.b32.xlu0 %v268, 7
        %v2379 = vpop.permute.xlu0 %2378
        %vm2380 = vcmask 56320
        %v2381 = vsel %vm2380, %v2367, %v2369
        %v2382 = vsel %vm2380, %v2369, %v2371
        %v2383 = vsel %vm2380, %v2371, %v2373
        %v2384 = vsel %vm2380, %v2373, %v2375
        %v2385 = vsel %vm2380, %v2375, %v2377
        %v2386 = vsel %vm2380, %v2377, %v2379
        %v2394 = vsel %vm296, %v2365, 0
        %2396 = vmatpush.bf16.msra.mxu0 0
        %2397 = vmatpush.bf16.msra.mxu0 0
        %2398 = vmatpush.bf16.msra.mxu0 0
        %2399 = vmatpush.bf16.msra.mxu0 0
        %2400 = vmatpush.bf16.msra.mxu0 0
        %2401 = vmatpush.bf16.msra.mxu0 0
        %2402 = vmatpush.bf16.msra.mxu0 0
        %2403 = vmatpush.bf16.msra.mxu0 %v2381
        %2404 = vmatmul.bf16.gmra.mxu0 %v2394
        %v2405 = vpop.f32.mrf.mxu0
        %v2406 = vadd.f32 0.0, %v2405
        %v2407 = vpop.f32.mrf.mxu0
        %v2408 = vadd.f32 0.0, %v2407
        %2409 = vdwg.mxu0
        %2410 = vmatpush.bf16.msra.mxu0 0
        %2411 = vmatpush.bf16.msra.mxu0 0
        %2412 = vmatpush.bf16.msra.mxu0 0
        %2413 = vmatpush.bf16.msra.mxu0 0
        %2414 = vmatpush.bf16.msra.mxu0 0
        %2415 = vmatpush.bf16.msra.mxu0 0
        %2416 = vmatpush.bf16.msra.mxu0 0
        %2417 = vmatpush.bf16.msra.mxu0 %v2382
        %2418 = vmatmul.bf16.gmra.mxu0 %v2394
        %v2419 = vpop.f32.mrf.mxu0
        %v2420 = vadd.f32 0.0, %v2419
        %v2421 = vpop.f32.mrf.mxu0
        %v2422 = vadd.f32 0.0, %v2421
        %2423 = vdwg.mxu0
        %2424 = vmatpush.bf16.msra.mxu0 0
        %2425 = vmatpush.bf16.msra.mxu0 0
        %2426 = vmatpush.bf16.msra.mxu0 0
        %2427 = vmatpush.bf16.msra.mxu0 0
        %2428 = vmatpush.bf16.msra.mxu0 0
        %2429 = vmatpush.bf16.msra.mxu0 0
        %2430 = vmatpush.bf16.msra.mxu0 0
        %2431 = vmatpush.bf16.msra.mxu0 %v2383
        %2432 = vmatmul.bf16.gmra.mxu0 %v2394
        %v2433 = vpop.f32.mrf.mxu0
        %v2434 = vadd.f32 0.0, %v2433
        %v2435 = vpop.f32.mrf.mxu0
        %v2436 = vadd.f32 0.0, %v2435
        %2437 = vdwg.mxu0
        %2438 = vmatpush.bf16.msra.mxu0 0
        %2439 = vmatpush.bf16.msra.mxu0 0
        %2440 = vmatpush.bf16.msra.mxu0 0
        %2441 = vmatpush.bf16.msra.mxu0 0
        %2442 = vmatpush.bf16.msra.mxu0 0
        %2443 = vmatpush.bf16.msra.mxu0 0
        %2444 = vmatpush.bf16.msra.mxu0 0
        %2445 = vmatpush.bf16.msra.mxu0 %v2384
        %2446 = vmatmul.bf16.gmra.mxu0 %v2394
        %v2447 = vpop.f32.mrf.mxu0
        %v2448 = vadd.f32 0.0, %v2447
        %v2449 = vpop.f32.mrf.mxu0
        %v2450 = vadd.f32 0.0, %v2449
        %2451 = vdwg.mxu0
        %2452 = vmatpush.bf16.msra.mxu0 0
        %2453 = vmatpush.bf16.msra.mxu0 0
        %2454 = vmatpush.bf16.msra.mxu0 0
        %2455 = vmatpush.bf16.msra.mxu0 0
        %2456 = vmatpush.bf16.msra.mxu0 0
        %2457 = vmatpush.bf16.msra.mxu0 0
        %2458 = vmatpush.bf16.msra.mxu0 0
        %2459 = vmatpush.bf16.msra.mxu0 %v2385
        %2460 = vmatmul.bf16.gmra.mxu0 %v2394
        %v2461 = vpop.f32.mrf.mxu0
        %v2462 = vadd.f32 0.0, %v2461
        %v2463 = vpop.f32.mrf.mxu0
        %v2464 = vadd.f32 0.0, %v2463
        %2465 = vdwg.mxu0
        %2466 = vmatpush.bf16.msra.mxu0 0
        %2467 = vmatpush.bf16.msra.mxu0 0
        %2468 = vmatpush.bf16.msra.mxu0 0
        %2469 = vmatpush.bf16.msra.mxu0 0
        %2470 = vmatpush.bf16.msra.mxu0 0
        %2471 = vmatpush.bf16.msra.mxu0 0
        %2472 = vmatpush.bf16.msra.mxu0 0
        %2473 = vmatpush.bf16.msra.mxu0 %v2386
        %2474 = vmatmul.bf16.gmra.mxu0 %v2394
        %v2475 = vpop.f32.mrf.mxu0
        %v2476 = vadd.f32 0.0, %v2475
        %v2477 = vpop.f32.mrf.mxu0
        %v2478 = vadd.f32 0.0, %v2477
        %2479 = vdwg.mxu0
        %v2480 = vadd.f32 %v2346, %v2406
        %v2481 = vadd.f32 %v2347, %v2420
        %v2482 = vadd.f32 %v2348, %v2434
        %v2483 = vadd.f32 %v2349, %v2448
        %v2484 = vadd.f32 %v2350, %v2462
        %v2485 = vadd.f32 %v2351, %v2476
        %v2486 = vadd.f32 %v2352, %v2408
        %v2487 = vadd.f32 %v2353, %v2422
        %v2488 = vadd.f32 %v2354, %v2436
        %v2489 = vadd.f32 %v2355, %v2450
        %v2490 = vadd.f32 %v2356, %v2464
        %v2491 = vadd.f32 %v2357, %v2478
        %s2492 = scalar_lea.vmem %s1, 136
        %v2493 = vld [vmem:[%s2492] sm:$0xf]
        %v2494 = vld [vmem:[%s2492 + $0x4] sm:$0xf]
        %v2497 = vunpack.c.l.b16 %v2493
        %v2498 = vunpack.c.l.b16 %v2494
        %v2499 = vpack.c.b16 %v2498, %v2497
        %2500 = vrot.lane.b32.xlu0 %v262, 6
        %v2501 = vpop.permute.xlu0 %2500
        %2502 = vrot.lane.b32.xlu0 %v263, 6
        %v2503 = vpop.permute.xlu0 %2502
        %2504 = vrot.lane.b32.xlu0 %v264, 6
        %v2505 = vpop.permute.xlu0 %2504
        %2506 = vrot.lane.b32.xlu0 %v265, 6
        %v2507 = vpop.permute.xlu0 %2506
        %2508 = vrot.lane.b32.xlu0 %v266, 6
        %v2509 = vpop.permute.xlu0 %2508
        %2510 = vrot.lane.b32.xlu0 %v267, 6
        %v2511 = vpop.permute.xlu0 %2510
        %2512 = vrot.lane.b32.xlu0 %v268, 6
        %v2513 = vpop.permute.xlu0 %2512
        %vm2514 = vcmask 48128
        %v2515 = vsel %vm2514, %v2501, %v2503
        %v2516 = vsel %vm2514, %v2503, %v2505
        %v2517 = vsel %vm2514, %v2505, %v2507
        %v2518 = vsel %vm2514, %v2507, %v2509
        %v2519 = vsel %vm2514, %v2509, %v2511
        %v2520 = vsel %vm2514, %v2511, %v2513
        %v2528 = vsel %vm296, %v2499, 0
        %2530 = vmatpush.bf16.msra.mxu0 0
        %2531 = vmatpush.bf16.msra.mxu0 0
        %2532 = vmatpush.bf16.msra.mxu0 0
        %2533 = vmatpush.bf16.msra.mxu0 0
        %2534 = vmatpush.bf16.msra.mxu0 0
        %2535 = vmatpush.bf16.msra.mxu0 0
        %2536 = vmatpush.bf16.msra.mxu0 0
        %2537 = vmatpush.bf16.msra.mxu0 %v2515
        %2538 = vmatmul.bf16.gmra.mxu0 %v2528
        %v2539 = vpop.f32.mrf.mxu0
        %v2540 = vadd.f32 0.0, %v2539
        %v2541 = vpop.f32.mrf.mxu0
        %v2542 = vadd.f32 0.0, %v2541
        %2543 = vdwg.mxu0
        %2544 = vmatpush.bf16.msra.mxu0 0
        %2545 = vmatpush.bf16.msra.mxu0 0
        %2546 = vmatpush.bf16.msra.mxu0 0
        %2547 = vmatpush.bf16.msra.mxu0 0
        %2548 = vmatpush.bf16.msra.mxu0 0
        %2549 = vmatpush.bf16.msra.mxu0 0
        %2550 = vmatpush.bf16.msra.mxu0 0
        %2551 = vmatpush.bf16.msra.mxu0 %v2516
        %2552 = vmatmul.bf16.gmra.mxu0 %v2528
        %v2553 = vpop.f32.mrf.mxu0
        %v2554 = vadd.f32 0.0, %v2553
        %v2555 = vpop.f32.mrf.mxu0
        %v2556 = vadd.f32 0.0, %v2555
        %2557 = vdwg.mxu0
        %2558 = vmatpush.bf16.msra.mxu0 0
        %2559 = vmatpush.bf16.msra.mxu0 0
        %2560 = vmatpush.bf16.msra.mxu0 0
        %2561 = vmatpush.bf16.msra.mxu0 0
        %2562 = vmatpush.bf16.msra.mxu0 0
        %2563 = vmatpush.bf16.msra.mxu0 0
        %2564 = vmatpush.bf16.msra.mxu0 0
        %2565 = vmatpush.bf16.msra.mxu0 %v2517
        %2566 = vmatmul.bf16.gmra.mxu0 %v2528
        %v2567 = vpop.f32.mrf.mxu0
        %v2568 = vadd.f32 0.0, %v2567
        %v2569 = vpop.f32.mrf.mxu0
        %v2570 = vadd.f32 0.0, %v2569
        %2571 = vdwg.mxu0
        %2572 = vmatpush.bf16.msra.mxu0 0
        %2573 = vmatpush.bf16.msra.mxu0 0
        %2574 = vmatpush.bf16.msra.mxu0 0
        %2575 = vmatpush.bf16.msra.mxu0 0
        %2576 = vmatpush.bf16.msra.mxu0 0
        %2577 = vmatpush.bf16.msra.mxu0 0
        %2578 = vmatpush.bf16.msra.mxu0 0
        %2579 = vmatpush.bf16.msra.mxu0 %v2518
        %2580 = vmatmul.bf16.gmra.mxu0 %v2528
        %v2581 = vpop.f32.mrf.mxu0
        %v2582 = vadd.f32 0.0, %v2581
        %v2583 = vpop.f32.mrf.mxu0
        %v2584 = vadd.f32 0.0, %v2583
        %2585 = vdwg.mxu0
        %2586 = vmatpush.bf16.msra.mxu0 0
        %2587 = vmatpush.bf16.msra.mxu0 0
        %2588 = vmatpush.bf16.msra.mxu0 0
        %2589 = vmatpush.bf16.msra.mxu0 0
        %2590 = vmatpush.bf16.msra.mxu0 0
        %2591 = vmatpush.bf16.msra.mxu0 0
        %2592 = vmatpush.bf16.msra.mxu0 0
        %2593 = vmatpush.bf16.msra.mxu0 %v2519
        %2594 = vmatmul.bf16.gmra.mxu0 %v2528
        %v2595 = vpop.f32.mrf.mxu0
        %v2596 = vadd.f32 0.0, %v2595
        %v2597 = vpop.f32.mrf.mxu0
        %v2598 = vadd.f32 0.0, %v2597
        %2599 = vdwg.mxu0
        %2600 = vmatpush.bf16.msra.mxu0 0
        %2601 = vmatpush.bf16.msra.mxu0 0
        %2602 = vmatpush.bf16.msra.mxu0 0
        %2603 = vmatpush.bf16.msra.mxu0 0
        %2604 = vmatpush.bf16.msra.mxu0 0
        %2605 = vmatpush.bf16.msra.mxu0 0
        %2606 = vmatpush.bf16.msra.mxu0 0
        %2607 = vmatpush.bf16.msra.mxu0 %v2520
        %2608 = vmatmul.bf16.gmra.mxu0 %v2528
        %v2609 = vpop.f32.mrf.mxu0
        %v2610 = vadd.f32 0.0, %v2609
        %v2611 = vpop.f32.mrf.mxu0
        %v2612 = vadd.f32 0.0, %v2611
        %2613 = vdwg.mxu0
        %v2614 = vadd.f32 %v2480, %v2540
        %v2615 = vadd.f32 %v2481, %v2554
        %v2616 = vadd.f32 %v2482, %v2568
        %v2617 = vadd.f32 %v2483, %v2582
        %v2618 = vadd.f32 %v2484, %v2596
        %v2619 = vadd.f32 %v2485, %v2610
        %v2620 = vadd.f32 %v2486, %v2542
        %v2621 = vadd.f32 %v2487, %v2556
        %v2622 = vadd.f32 %v2488, %v2570
        %v2623 = vadd.f32 %v2489, %v2584
        %v2624 = vadd.f32 %v2490, %v2598
        %v2625 = vadd.f32 %v2491, %v2612
        %s2626 = scalar_lea.vmem %s1, 144
        %v2627 = vld [vmem:[%s2626] sm:$0xf]
        %v2628 = vld [vmem:[%s2626 + $0x4] sm:$0xf]
        %v2629 = vld [vmem:[#allocation2 + $0x4] sm:$0xff]
        %v2630 = vld [vmem:[#allocation2 + $0xc] sm:$0xff]
        %v2631 = vld [vmem:[#allocation2 + $0x14] sm:$0xff]
        %v2632 = vld [vmem:[#allocation2 + $0x1c] sm:$0xf]
        %v2633 = vld [vmem:[#allocation2 + $0x24] sm:$0xff]
        %v2634 = vld [vmem:[#allocation2 + $0x2c] sm:$0xff]
        %v2635 = vld [vmem:[#allocation2 + $0x34] sm:$0xff]
        %v2636 = vld [vmem:[#allocation2 + $0x3c] sm:$0xf]
        %v2639 = vunpack.c.l.b16 %v2627
        %v2640 = vunpack.c.l.b16 %v2628
        %v2641 = vpack.c.b16 %v2640, %v2639
        %v2650 = vunpack.c.l.b16 %v2629
        %v2651 = vunpack.c.h.b16 %v2629
        %v2652 = vunpack.c.l.b16 %v2630
        %v2653 = vunpack.c.h.b16 %v2630
        %v2654 = vunpack.c.l.b16 %v2631
        %v2655 = vunpack.c.h.b16 %v2631
        %v2656 = vunpack.c.l.b16 %v2632
        %v2657 = vunpack.c.l.b16 %v2633
        %v2658 = vunpack.c.h.b16 %v2633
        %v2659 = vunpack.c.l.b16 %v2634
        %v2660 = vunpack.c.h.b16 %v2634
        %v2661 = vunpack.c.l.b16 %v2635
        %v2662 = vunpack.c.h.b16 %v2635
        %v2663 = vunpack.c.l.b16 %v2636
        %v2664 = vpack.c.b16 %v2657, %v2650
        %v2665 = vpack.c.b16 %v2658, %v2651
        %v2666 = vpack.c.b16 %v2659, %v2652
        %v2667 = vpack.c.b16 %v2660, %v2653
        %v2668 = vpack.c.b16 %v2661, %v2654
        %v2669 = vpack.c.b16 %v2662, %v2655
        %v2670 = vpack.c.b16 %v2663, %v2656
        %2671 = vrot.lane.b32.xlu0 %v2664, 56
        %v2672 = vpop.permute.xlu0 %2671
        %2673 = vrot.lane.b32.xlu0 %v2665, 56
        %v2674 = vpop.permute.xlu0 %2673
        %2675 = vrot.lane.b32.xlu0 %v2666, 56
        %v2676 = vpop.permute.xlu0 %2675
        %2677 = vrot.lane.b32.xlu0 %v2667, 56
        %v2678 = vpop.permute.xlu0 %2677
        %2679 = vrot.lane.b32.xlu0 %v2668, 56
        %v2680 = vpop.permute.xlu0 %2679
        %2681 = vrot.lane.b32.xlu0 %v2669, 56
        %v2682 = vpop.permute.xlu0 %2681
        %2683 = vrot.lane.b32.xlu0 %v2670, 56
        %v2684 = vpop.permute.xlu0 %2683
        %vm2685 = vcmask 457728
        %v2686 = vsel %vm2685, %v2672, %v2674
        %v2687 = vsel %vm2685, %v2674, %v2676
        %v2688 = vsel %vm2685, %v2676, %v2678
        %v2689 = vsel %vm2685, %v2678, %v2680
        %v2690 = vsel %vm2685, %v2680, %v2682
        %v2691 = vsel %vm2685, %v2682, %v2684
        %v2699 = vsel %vm296, %v2641, 0
        %2701 = vmatpush.bf16.msra.mxu0 0
        %2702 = vmatpush.bf16.msra.mxu0 0
        %2703 = vmatpush.bf16.msra.mxu0 0
        %2704 = vmatpush.bf16.msra.mxu0 0
        %2705 = vmatpush.bf16.msra.mxu0 0
        %2706 = vmatpush.bf16.msra.mxu0 0
        %2707 = vmatpush.bf16.msra.mxu0 0
        %2708 = vmatpush.bf16.msra.mxu0 %v2686
        %2709 = vmatmul.bf16.gmra.mxu0 %v2699
        %v2710 = vpop.f32.mrf.mxu0
        %v2711 = vadd.f32 0.0, %v2710
        %v2712 = vpop.f32.mrf.mxu0
        %v2713 = vadd.f32 0.0, %v2712
        %2714 = vdwg.mxu0
        %2715 = vmatpush.bf16.msra.mxu0 0
        %2716 = vmatpush.bf16.msra.mxu0 0
        %2717 = vmatpush.bf16.msra.mxu0 0
        %2718 = vmatpush.bf16.msra.mxu0 0
        %2719 = vmatpush.bf16.msra.mxu0 0
        %2720 = vmatpush.bf16.msra.mxu0 0
        %2721 = vmatpush.bf16.msra.mxu0 0
        %2722 = vmatpush.bf16.msra.mxu0 %v2687
        %2723 = vmatmul.bf16.gmra.mxu0 %v2699
        %v2724 = vpop.f32.mrf.mxu0
        %v2725 = vadd.f32 0.0, %v2724
        %v2726 = vpop.f32.mrf.mxu0
        %v2727 = vadd.f32 0.0, %v2726
        %2728 = vdwg.mxu0
        %2729 = vmatpush.bf16.msra.mxu0 0
        %2730 = vmatpush.bf16.msra.mxu0 0
        %2731 = vmatpush.bf16.msra.mxu0 0
        %2732 = vmatpush.bf16.msra.mxu0 0
        %2733 = vmatpush.bf16.msra.mxu0 0
        %2734 = vmatpush.bf16.msra.mxu0 0
        %2735 = vmatpush.bf16.msra.mxu0 0
        %2736 = vmatpush.bf16.msra.mxu0 %v2688
        %2737 = vmatmul.bf16.gmra.mxu0 %v2699
        %v2738 = vpop.f32.mrf.mxu0
        %v2739 = vadd.f32 0.0, %v2738
        %v2740 = vpop.f32.mrf.mxu0
        %v2741 = vadd.f32 0.0, %v2740
        %2742 = vdwg.mxu0
        %2743 = vmatpush.bf16.msra.mxu0 0
        %2744 = vmatpush.bf16.msra.mxu0 0
        %2745 = vmatpush.bf16.msra.mxu0 0
        %2746 = vmatpush.bf16.msra.mxu0 0
        %2747 = vmatpush.bf16.msra.mxu0 0
        %2748 = vmatpush.bf16.msra.mxu0 0
        %2749 = vmatpush.bf16.msra.mxu0 0
        %2750 = vmatpush.bf16.msra.mxu0 %v2689
        %2751 = vmatmul.bf16.gmra.mxu0 %v2699
        %v2752 = vpop.f32.mrf.mxu0
        %v2753 = vadd.f32 0.0, %v2752
        %v2754 = vpop.f32.mrf.mxu0
        %v2755 = vadd.f32 0.0, %v2754
        %2756 = vdwg.mxu0
        %2757 = vmatpush.bf16.msra.mxu0 0
        %2758 = vmatpush.bf16.msra.mxu0 0
        %2759 = vmatpush.bf16.msra.mxu0 0
        %2760 = vmatpush.bf16.msra.mxu0 0
        %2761 = vmatpush.bf16.msra.mxu0 0
        %2762 = vmatpush.bf16.msra.mxu0 0
        %2763 = vmatpush.bf16.msra.mxu0 0
        %2764 = vmatpush.bf16.msra.mxu0 %v2690
        %2765 = vmatmul.bf16.gmra.mxu0 %v2699
        %v2766 = vpop.f32.mrf.mxu0
        %v2767 = vadd.f32 0.0, %v2766
        %v2768 = vpop.f32.mrf.mxu0
        %v2769 = vadd.f32 0.0, %v2768
        %2770 = vdwg.mxu0
        %2771 = vmatpush.bf16.msra.mxu0 0
        %2772 = vmatpush.bf16.msra.mxu0 0
        %2773 = vmatpush.bf16.msra.mxu0 0
        %2774 = vmatpush.bf16.msra.mxu0 0
        %2775 = vmatpush.bf16.msra.mxu0 0
        %2776 = vmatpush.bf16.msra.mxu0 0
        %2777 = vmatpush.bf16.msra.mxu0 0
        %2778 = vmatpush.bf16.msra.mxu0 %v2691
        %2779 = vmatmul.bf16.gmra.mxu0 %v2699
        %v2780 = vpop.f32.mrf.mxu0
        %v2781 = vadd.f32 0.0, %v2780
        %v2782 = vpop.f32.mrf.mxu0
        %v2783 = vadd.f32 0.0, %v2782
        %2784 = vdwg.mxu0
        %v2785 = vadd.f32 %v2614, %v2711
        %v2786 = vadd.f32 %v2615, %v2725
        %v2787 = vadd.f32 %v2616, %v2739
        %v2788 = vadd.f32 %v2617, %v2753
        %v2789 = vadd.f32 %v2618, %v2767
        %v2790 = vadd.f32 %v2619, %v2781
        %v2791 = vadd.f32 %v2620, %v2713
        %v2792 = vadd.f32 %v2621, %v2727
        %v2793 = vadd.f32 %v2622, %v2741
        %v2794 = vadd.f32 %v2623, %v2755
        %v2795 = vadd.f32 %v2624, %v2769
        %v2796 = vadd.f32 %v2625, %v2783
        %s2797 = scalar_lea.vmem %s1, 152
        %v2798 = vld [vmem:[%s2797] sm:$0xf]
        %v2799 = vld [vmem:[%s2797 + $0x4] sm:$0xf]
        %v2802 = vunpack.c.l.b16 %v2798
        %v2803 = vunpack.c.l.b16 %v2799
        %v2804 = vpack.c.b16 %v2803, %v2802
        %2805 = vrot.lane.b32.xlu0 %v2664, 55
        %v2806 = vpop.permute.xlu0 %2805
        %2807 = vrot.lane.b32.xlu0 %v2665, 55
        %v2808 = vpop.permute.xlu0 %2807
        %2809 = vrot.lane.b32.xlu0 %v2666, 55
        %v2810 = vpop.permute.xlu0 %2809
        %2811 = vrot.lane.b32.xlu0 %v2667, 55
        %v2812 = vpop.permute.xlu0 %2811
        %2813 = vrot.lane.b32.xlu0 %v2668, 55
        %v2814 = vpop.permute.xlu0 %2813
        %2815 = vrot.lane.b32.xlu0 %v2669, 55
        %v2816 = vpop.permute.xlu0 %2815
        %2817 = vrot.lane.b32.xlu0 %v2670, 55
        %v2818 = vpop.permute.xlu0 %2817
        %vm2819 = vcmask 449536
        %v2820 = vsel %vm2819, %v2806, %v2808
        %v2821 = vsel %vm2819, %v2808, %v2810
        %v2822 = vsel %vm2819, %v2810, %v2812
        %v2823 = vsel %vm2819, %v2812, %v2814
        %v2824 = vsel %vm2819, %v2814, %v2816
        %v2825 = vsel %vm2819, %v2816, %v2818
        %v2833 = vsel %vm296, %v2804, 0
        %2835 = vmatpush.bf16.msra.mxu0 0
        %2836 = vmatpush.bf16.msra.mxu0 0
        %2837 = vmatpush.bf16.msra.mxu0 0
        %2838 = vmatpush.bf16.msra.mxu0 0
        %2839 = vmatpush.bf16.msra.mxu0 0
        %2840 = vmatpush.bf16.msra.mxu0 0
        %2841 = vmatpush.bf16.msra.mxu0 0
        %2842 = vmatpush.bf16.msra.mxu0 %v2820
        %2843 = vmatmul.bf16.gmra.mxu0 %v2833
        %v2844 = vpop.f32.mrf.mxu0
        %v2845 = vadd.f32 0.0, %v2844
        %v2846 = vpop.f32.mrf.mxu0
        %v2847 = vadd.f32 0.0, %v2846
        %2848 = vdwg.mxu0
        %2849 = vmatpush.bf16.msra.mxu0 0
        %2850 = vmatpush.bf16.msra.mxu0 0
        %2851 = vmatpush.bf16.msra.mxu0 0
        %2852 = vmatpush.bf16.msra.mxu0 0
        %2853 = vmatpush.bf16.msra.mxu0 0
        %2854 = vmatpush.bf16.msra.mxu0 0
        %2855 = vmatpush.bf16.msra.mxu0 0
        %2856 = vmatpush.bf16.msra.mxu0 %v2821
        %2857 = vmatmul.bf16.gmra.mxu0 %v2833
        %v2858 = vpop.f32.mrf.mxu0
        %v2859 = vadd.f32 0.0, %v2858
        %v2860 = vpop.f32.mrf.mxu0
        %v2861 = vadd.f32 0.0, %v2860
        %2862 = vdwg.mxu0
        %2863 = vmatpush.bf16.msra.mxu0 0
        %2864 = vmatpush.bf16.msra.mxu0 0
        %2865 = vmatpush.bf16.msra.mxu0 0
        %2866 = vmatpush.bf16.msra.mxu0 0
        %2867 = vmatpush.bf16.msra.mxu0 0
        %2868 = vmatpush.bf16.msra.mxu0 0
        %2869 = vmatpush.bf16.msra.mxu0 0
        %2870 = vmatpush.bf16.msra.mxu0 %v2822
        %2871 = vmatmul.bf16.gmra.mxu0 %v2833
        %v2872 = vpop.f32.mrf.mxu0
        %v2873 = vadd.f32 0.0, %v2872
        %v2874 = vpop.f32.mrf.mxu0
        %v2875 = vadd.f32 0.0, %v2874
        %2876 = vdwg.mxu0
        %2877 = vmatpush.bf16.msra.mxu0 0
        %2878 = vmatpush.bf16.msra.mxu0 0
        %2879 = vmatpush.bf16.msra.mxu0 0
        %2880 = vmatpush.bf16.msra.mxu0 0
        %2881 = vmatpush.bf16.msra.mxu0 0
        %2882 = vmatpush.bf16.msra.mxu0 0
        %2883 = vmatpush.bf16.msra.mxu0 0
        %2884 = vmatpush.bf16.msra.mxu0 %v2823
        %2885 = vmatmul.bf16.gmra.mxu0 %v2833
        %v2886 = vpop.f32.mrf.mxu0
        %v2887 = vadd.f32 0.0, %v2886
        %v2888 = vpop.f32.mrf.mxu0
        %v2889 = vadd.f32 0.0, %v2888
        %2890 = vdwg.mxu0
        %2891 = vmatpush.bf16.msra.mxu0 0
        %2892 = vmatpush.bf16.msra.mxu0 0
        %2893 = vmatpush.bf16.msra.mxu0 0
        %2894 = vmatpush.bf16.msra.mxu0 0
        %2895 = vmatpush.bf16.msra.mxu0 0
        %2896 = vmatpush.bf16.msra.mxu0 0
        %2897 = vmatpush.bf16.msra.mxu0 0
        %2898 = vmatpush.bf16.msra.mxu0 %v2824
        %2899 = vmatmul.bf16.gmra.mxu0 %v2833
        %v2900 = vpop.f32.mrf.mxu0
        %v2901 = vadd.f32 0.0, %v2900
        %v2902 = vpop.f32.mrf.mxu0
        %v2903 = vadd.f32 0.0, %v2902
        %2904 = vdwg.mxu0
        %2905 = vmatpush.bf16.msra.mxu0 0
        %2906 = vmatpush.bf16.msra.mxu0 0
        %2907 = vmatpush.bf16.msra.mxu0 0
        %2908 = vmatpush.bf16.msra.mxu0 0
        %2909 = vmatpush.bf16.msra.mxu0 0
        %2910 = vmatpush.bf16.msra.mxu0 0
        %2911 = vmatpush.bf16.msra.mxu0 0
        %2912 = vmatpush.bf16.msra.mxu0 %v2825
        %2913 = vmatmul.bf16.gmra.mxu0 %v2833
        %v2914 = vpop.f32.mrf.mxu0
        %v2915 = vadd.f32 0.0, %v2914
        %v2916 = vpop.f32.mrf.mxu0
        %v2917 = vadd.f32 0.0, %v2916
        %2918 = vdwg.mxu0
        %v2919 = vadd.f32 %v2785, %v2845
        %v2920 = vadd.f32 %v2786, %v2859
        %v2921 = vadd.f32 %v2787, %v2873
        %v2922 = vadd.f32 %v2788, %v2887
        %v2923 = vadd.f32 %v2789, %v2901
        %v2924 = vadd.f32 %v2790, %v2915
        %v2925 = vadd.f32 %v2791, %v2847
        %v2926 = vadd.f32 %v2792, %v2861
        %v2927 = vadd.f32 %v2793, %v2875
        %v2928 = vadd.f32 %v2794, %v2889
        %v2929 = vadd.f32 %v2795, %v2903
        %v2930 = vadd.f32 %v2796, %v2917
        %s2931 = scalar_lea.vmem %s1, 160
        %v2932 = vld [vmem:[%s2931] sm:$0xf]
        %v2933 = vld [vmem:[%s2931 + $0x4] sm:$0xf]
        %v2936 = vunpack.c.l.b16 %v2932
        %v2937 = vunpack.c.l.b16 %v2933
        %v2938 = vpack.c.b16 %v2937, %v2936
        %2939 = vrot.lane.b32.xlu0 %v2664, 54
        %v2940 = vpop.permute.xlu0 %2939
        %2941 = vrot.lane.b32.xlu0 %v2665, 54
        %v2942 = vpop.permute.xlu0 %2941
        %2943 = vrot.lane.b32.xlu0 %v2666, 54
        %v2944 = vpop.permute.xlu0 %2943
        %2945 = vrot.lane.b32.xlu0 %v2667, 54
        %v2946 = vpop.permute.xlu0 %2945
        %2947 = vrot.lane.b32.xlu0 %v2668, 54
        %v2948 = vpop.permute.xlu0 %2947
        %2949 = vrot.lane.b32.xlu0 %v2669, 54
        %v2950 = vpop.permute.xlu0 %2949
        %2951 = vrot.lane.b32.xlu0 %v2670, 54
        %v2952 = vpop.permute.xlu0 %2951
        %vm2953 = vcmask 441344
        %v2954 = vsel %vm2953, %v2940, %v2942
        %v2955 = vsel %vm2953, %v2942, %v2944
        %v2956 = vsel %vm2953, %v2944, %v2946
        %v2957 = vsel %vm2953, %v2946, %v2948
        %v2958 = vsel %vm2953, %v2948, %v2950
        %v2959 = vsel %vm2953, %v2950, %v2952
        %v2967 = vsel %vm296, %v2938, 0
        %2969 = vmatpush.bf16.msra.mxu0 0
        %2970 = vmatpush.bf16.msra.mxu0 0
        %2971 = vmatpush.bf16.msra.mxu0 0
        %2972 = vmatpush.bf16.msra.mxu0 0
        %2973 = vmatpush.bf16.msra.mxu0 0
        %2974 = vmatpush.bf16.msra.mxu0 0
        %2975 = vmatpush.bf16.msra.mxu0 0
        %2976 = vmatpush.bf16.msra.mxu0 %v2954
        %2977 = vmatmul.bf16.gmra.mxu0 %v2967
        %v2978 = vpop.f32.mrf.mxu0
        %v2979 = vadd.f32 0.0, %v2978
        %v2980 = vpop.f32.mrf.mxu0
        %v2981 = vadd.f32 0.0, %v2980
        %2982 = vdwg.mxu0
        %2983 = vmatpush.bf16.msra.mxu0 0
        %2984 = vmatpush.bf16.msra.mxu0 0
        %2985 = vmatpush.bf16.msra.mxu0 0
        %2986 = vmatpush.bf16.msra.mxu0 0
        %2987 = vmatpush.bf16.msra.mxu0 0
        %2988 = vmatpush.bf16.msra.mxu0 0
        %2989 = vmatpush.bf16.msra.mxu0 0
        %2990 = vmatpush.bf16.msra.mxu0 %v2955
        %2991 = vmatmul.bf16.gmra.mxu0 %v2967
        %v2992 = vpop.f32.mrf.mxu0
        %v2993 = vadd.f32 0.0, %v2992
        %v2994 = vpop.f32.mrf.mxu0
        %v2995 = vadd.f32 0.0, %v2994
        %2996 = vdwg.mxu0
        %2997 = vmatpush.bf16.msra.mxu0 0
        %2998 = vmatpush.bf16.msra.mxu0 0
        %2999 = vmatpush.bf16.msra.mxu0 0
        %3000 = vmatpush.bf16.msra.mxu0 0
        %3001 = vmatpush.bf16.msra.mxu0 0
        %3002 = vmatpush.bf16.msra.mxu0 0
        %3003 = vmatpush.bf16.msra.mxu0 0
        %3004 = vmatpush.bf16.msra.mxu0 %v2956
        %3005 = vmatmul.bf16.gmra.mxu0 %v2967
        %v3006 = vpop.f32.mrf.mxu0
        %v3007 = vadd.f32 0.0, %v3006
        %v3008 = vpop.f32.mrf.mxu0
        %v3009 = vadd.f32 0.0, %v3008
        %3010 = vdwg.mxu0
        %3011 = vmatpush.bf16.msra.mxu0 0
        %3012 = vmatpush.bf16.msra.mxu0 0
        %3013 = vmatpush.bf16.msra.mxu0 0
        %3014 = vmatpush.bf16.msra.mxu0 0
        %3015 = vmatpush.bf16.msra.mxu0 0
        %3016 = vmatpush.bf16.msra.mxu0 0
        %3017 = vmatpush.bf16.msra.mxu0 0
        %3018 = vmatpush.bf16.msra.mxu0 %v2957
        %3019 = vmatmul.bf16.gmra.mxu0 %v2967
        %v3020 = vpop.f32.mrf.mxu0
        %v3021 = vadd.f32 0.0, %v3020
        %v3022 = vpop.f32.mrf.mxu0
        %v3023 = vadd.f32 0.0, %v3022
        %3024 = vdwg.mxu0
        %3025 = vmatpush.bf16.msra.mxu0 0
        %3026 = vmatpush.bf16.msra.mxu0 0
        %3027 = vmatpush.bf16.msra.mxu0 0
        %3028 = vmatpush.bf16.msra.mxu0 0
        %3029 = vmatpush.bf16.msra.mxu0 0
        %3030 = vmatpush.bf16.msra.mxu0 0
        %3031 = vmatpush.bf16.msra.mxu0 0
        %3032 = vmatpush.bf16.msra.mxu0 %v2958
        %3033 = vmatmul.bf16.gmra.mxu0 %v2967
        %v3034 = vpop.f32.mrf.mxu0
        %v3035 = vadd.f32 0.0, %v3034
        %v3036 = vpop.f32.mrf.mxu0
        %v3037 = vadd.f32 0.0, %v3036
        %3038 = vdwg.mxu0
        %3039 = vmatpush.bf16.msra.mxu0 0
        %3040 = vmatpush.bf16.msra.mxu0 0
        %3041 = vmatpush.bf16.msra.mxu0 0
        %3042 = vmatpush.bf16.msra.mxu0 0
        %3043 = vmatpush.bf16.msra.mxu0 0
        %3044 = vmatpush.bf16.msra.mxu0 0
        %3045 = vmatpush.bf16.msra.mxu0 0
        %3046 = vmatpush.bf16.msra.mxu0 %v2959
        %3047 = vmatmul.bf16.gmra.mxu0 %v2967
        %v3048 = vpop.f32.mrf.mxu0
        %v3049 = vadd.f32 0.0, %v3048
        %v3050 = vpop.f32.mrf.mxu0
        %v3051 = vadd.f32 0.0, %v3050
        %3052 = vdwg.mxu0
        %v3053 = vadd.f32 %v2919, %v2979
        %v3054 = vadd.f32 %v2920, %v2993
        %v3055 = vadd.f32 %v2921, %v3007
        %v3056 = vadd.f32 %v2922, %v3021
        %v3057 = vadd.f32 %v2923, %v3035
        %v3058 = vadd.f32 %v2924, %v3049
        %v3059 = vadd.f32 %v2925, %v2981
        %v3060 = vadd.f32 %v2926, %v2995
        %v3061 = vadd.f32 %v2927, %v3009
        %v3062 = vadd.f32 %v2928, %v3023
        %v3063 = vadd.f32 %v2929, %v3037
        %v3064 = vadd.f32 %v2930, %v3051
        %s3065 = scalar_lea.vmem %s1, 168
        %v3066 = vld [vmem:[%s3065] sm:$0xf]
        %v3067 = vld [vmem:[%s3065 + $0x4] sm:$0xf]
        %v3070 = vunpack.c.l.b16 %v3066
        %v3071 = vunpack.c.l.b16 %v3067
        %v3072 = vpack.c.b16 %v3071, %v3070
        %3073 = vrot.lane.b32.xlu0 %v2664, 46
        %v3074 = vpop.permute.xlu0 %3073
        %3075 = vrot.lane.b32.xlu0 %v2665, 46
        %v3076 = vpop.permute.xlu0 %3075
        %3077 = vrot.lane.b32.xlu0 %v2666, 46
        %v3078 = vpop.permute.xlu0 %3077
        %3079 = vrot.lane.b32.xlu0 %v2667, 46
        %v3080 = vpop.permute.xlu0 %3079
        %3081 = vrot.lane.b32.xlu0 %v2668, 46
        %v3082 = vpop.permute.xlu0 %3081
        %3083 = vrot.lane.b32.xlu0 %v2669, 46
        %v3084 = vpop.permute.xlu0 %3083
        %3085 = vrot.lane.b32.xlu0 %v2670, 46
        %v3086 = vpop.permute.xlu0 %3085
        %vm3087 = vcmask 375808
        %v3088 = vsel %vm3087, %v3074, %v3076
        %v3089 = vsel %vm3087, %v3076, %v3078
        %v3090 = vsel %vm3087, %v3078, %v3080
        %v3091 = vsel %vm3087, %v3080, %v3082
        %v3092 = vsel %vm3087, %v3082, %v3084
        %v3093 = vsel %vm3087, %v3084, %v3086
        %v3101 = vsel %vm296, %v3072, 0
        %3103 = vmatpush.bf16.msra.mxu0 0
        %3104 = vmatpush.bf16.msra.mxu0 0
        %3105 = vmatpush.bf16.msra.mxu0 0
        %3106 = vmatpush.bf16.msra.mxu0 0
        %3107 = vmatpush.bf16.msra.mxu0 0
        %3108 = vmatpush.bf16.msra.mxu0 0
        %3109 = vmatpush.bf16.msra.mxu0 0
        %3110 = vmatpush.bf16.msra.mxu0 %v3088
        %3111 = vmatmul.bf16.gmra.mxu0 %v3101
        %v3112 = vpop.f32.mrf.mxu0
        %v3113 = vadd.f32 0.0, %v3112
        %v3114 = vpop.f32.mrf.mxu0
        %v3115 = vadd.f32 0.0, %v3114
        %3116 = vdwg.mxu0
        %3117 = vmatpush.bf16.msra.mxu0 0
        %3118 = vmatpush.bf16.msra.mxu0 0
        %3119 = vmatpush.bf16.msra.mxu0 0
        %3120 = vmatpush.bf16.msra.mxu0 0
        %3121 = vmatpush.bf16.msra.mxu0 0
        %3122 = vmatpush.bf16.msra.mxu0 0
        %3123 = vmatpush.bf16.msra.mxu0 0
        %3124 = vmatpush.bf16.msra.mxu0 %v3089
        %3125 = vmatmul.bf16.gmra.mxu0 %v3101
        %v3126 = vpop.f32.mrf.mxu0
        %v3127 = vadd.f32 0.0, %v3126
        %v3128 = vpop.f32.mrf.mxu0
        %v3129 = vadd.f32 0.0, %v3128
        %3130 = vdwg.mxu0
        %3131 = vmatpush.bf16.msra.mxu0 0
        %3132 = vmatpush.bf16.msra.mxu0 0
        %3133 = vmatpush.bf16.msra.mxu0 0
        %3134 = vmatpush.bf16.msra.mxu0 0
        %3135 = vmatpush.bf16.msra.mxu0 0
        %3136 = vmatpush.bf16.msra.mxu0 0
        %3137 = vmatpush.bf16.msra.mxu0 0
        %3138 = vmatpush.bf16.msra.mxu0 %v3090
        %3139 = vmatmul.bf16.gmra.mxu0 %v3101
        %v3140 = vpop.f32.mrf.mxu0
        %v3141 = vadd.f32 0.0, %v3140
        %v3142 = vpop.f32.mrf.mxu0
        %v3143 = vadd.f32 0.0, %v3142
        %3144 = vdwg.mxu0
        %3145 = vmatpush.bf16.msra.mxu0 0
        %3146 = vmatpush.bf16.msra.mxu0 0
        %3147 = vmatpush.bf16.msra.mxu0 0
        %3148 = vmatpush.bf16.msra.mxu0 0
        %3149 = vmatpush.bf16.msra.mxu0 0
        %3150 = vmatpush.bf16.msra.mxu0 0
        %3151 = vmatpush.bf16.msra.mxu0 0
        %3152 = vmatpush.bf16.msra.mxu0 %v3091
        %3153 = vmatmul.bf16.gmra.mxu0 %v3101
        %v3154 = vpop.f32.mrf.mxu0
        %v3155 = vadd.f32 0.0, %v3154
        %v3156 = vpop.f32.mrf.mxu0
        %v3157 = vadd.f32 0.0, %v3156
        %3158 = vdwg.mxu0
        %3159 = vmatpush.bf16.msra.mxu0 0
        %3160 = vmatpush.bf16.msra.mxu0 0
        %3161 = vmatpush.bf16.msra.mxu0 0
        %3162 = vmatpush.bf16.msra.mxu0 0
        %3163 = vmatpush.bf16.msra.mxu0 0
        %3164 = vmatpush.bf16.msra.mxu0 0
        %3165 = vmatpush.bf16.msra.mxu0 0
        %3166 = vmatpush.bf16.msra.mxu0 %v3092
        %3167 = vmatmul.bf16.gmra.mxu0 %v3101
        %v3168 = vpop.f32.mrf.mxu0
        %v3169 = vadd.f32 0.0, %v3168
        %v3170 = vpop.f32.mrf.mxu0
        %v3171 = vadd.f32 0.0, %v3170
        %3172 = vdwg.mxu0
        %3173 = vmatpush.bf16.msra.mxu0 0
        %3174 = vmatpush.bf16.msra.mxu0 0
        %3175 = vmatpush.bf16.msra.mxu0 0
        %3176 = vmatpush.bf16.msra.mxu0 0
        %3177 = vmatpush.bf16.msra.mxu0 0
        %3178 = vmatpush.bf16.msra.mxu0 0
        %3179 = vmatpush.bf16.msra.mxu0 0
        %3180 = vmatpush.bf16.msra.mxu0 %v3093
        %3181 = vmatmul.bf16.gmra.mxu0 %v3101
        %v3182 = vpop.f32.mrf.mxu0
        %v3183 = vadd.f32 0.0, %v3182
        %v3184 = vpop.f32.mrf.mxu0
        %v3185 = vadd.f32 0.0, %v3184
        %3186 = vdwg.mxu0
        %v3187 = vadd.f32 %v3053, %v3113
        %v3188 = vadd.f32 %v3054, %v3127
        %v3189 = vadd.f32 %v3055, %v3141
        %v3190 = vadd.f32 %v3056, %v3155
        %v3191 = vadd.f32 %v3057, %v3169
        %v3192 = vadd.f32 %v3058, %v3183
        %v3193 = vadd.f32 %v3059, %v3115
        %v3194 = vadd.f32 %v3060, %v3129
        %v3195 = vadd.f32 %v3061, %v3143
        %v3196 = vadd.f32 %v3062, %v3157
        %v3197 = vadd.f32 %v3063, %v3171
        %v3198 = vadd.f32 %v3064, %v3185
        %s3199 = scalar_lea.vmem %s1, 176
        %v3200 = vld [vmem:[%s3199] sm:$0xf]
        %v3201 = vld [vmem:[%s3199 + $0x4] sm:$0xf]
        %v3204 = vunpack.c.l.b16 %v3200
        %v3205 = vunpack.c.l.b16 %v3201
        %v3206 = vpack.c.b16 %v3205, %v3204
        %3207 = vrot.lane.b32.xlu0 %v2664, 45
        %v3208 = vpop.permute.xlu0 %3207
        %3209 = vrot.lane.b32.xlu0 %v2665, 45
        %v3210 = vpop.permute.xlu0 %3209
        %3211 = vrot.lane.b32.xlu0 %v2666, 45
        %v3212 = vpop.permute.xlu0 %3211
        %3213 = vrot.lane.b32.xlu0 %v2667, 45
        %v3214 = vpop.permute.xlu0 %3213
        %3215 = vrot.lane.b32.xlu0 %v2668, 45
        %v3216 = vpop.permute.xlu0 %3215
        %3217 = vrot.lane.b32.xlu0 %v2669, 45
        %v3218 = vpop.permute.xlu0 %3217
        %3219 = vrot.lane.b32.xlu0 %v2670, 45
        %v3220 = vpop.permute.xlu0 %3219
        %vm3221 = vcmask 367616
        %v3222 = vsel %vm3221, %v3208, %v3210
        %v3223 = vsel %vm3221, %v3210, %v3212
        %v3224 = vsel %vm3221, %v3212, %v3214
        %v3225 = vsel %vm3221, %v3214, %v3216
        %v3226 = vsel %vm3221, %v3216, %v3218
        %v3227 = vsel %vm3221, %v3218, %v3220
        %v3235 = vsel %vm296, %v3206, 0
        %3237 = vmatpush.bf16.msra.mxu0 0
        %3238 = vmatpush.bf16.msra.mxu0 0
        %3239 = vmatpush.bf16.msra.mxu0 0
        %3240 = vmatpush.bf16.msra.mxu0 0
        %3241 = vmatpush.bf16.msra.mxu0 0
        %3242 = vmatpush.bf16.msra.mxu0 0
        %3243 = vmatpush.bf16.msra.mxu0 0
        %3244 = vmatpush.bf16.msra.mxu0 %v3222
        %3245 = vmatmul.bf16.gmra.mxu0 %v3235
        %v3246 = vpop.f32.mrf.mxu0
        %v3247 = vadd.f32 0.0, %v3246
        %v3248 = vpop.f32.mrf.mxu0
        %v3249 = vadd.f32 0.0, %v3248
        %3250 = vdwg.mxu0
        %3251 = vmatpush.bf16.msra.mxu0 0
        %3252 = vmatpush.bf16.msra.mxu0 0
        %3253 = vmatpush.bf16.msra.mxu0 0
        %3254 = vmatpush.bf16.msra.mxu0 0
        %3255 = vmatpush.bf16.msra.mxu0 0
        %3256 = vmatpush.bf16.msra.mxu0 0
        %3257 = vmatpush.bf16.msra.mxu0 0
        %3258 = vmatpush.bf16.msra.mxu0 %v3223
        %3259 = vmatmul.bf16.gmra.mxu0 %v3235
        %v3260 = vpop.f32.mrf.mxu0
        %v3261 = vadd.f32 0.0, %v3260
        %v3262 = vpop.f32.mrf.mxu0
        %v3263 = vadd.f32 0.0, %v3262
        %3264 = vdwg.mxu0
        %3265 = vmatpush.bf16.msra.mxu0 0
        %3266 = vmatpush.bf16.msra.mxu0 0
        %3267 = vmatpush.bf16.msra.mxu0 0
        %3268 = vmatpush.bf16.msra.mxu0 0
        %3269 = vmatpush.bf16.msra.mxu0 0
        %3270 = vmatpush.bf16.msra.mxu0 0
        %3271 = vmatpush.bf16.msra.mxu0 0
        %3272 = vmatpush.bf16.msra.mxu0 %v3224
        %3273 = vmatmul.bf16.gmra.mxu0 %v3235
        %v3274 = vpop.f32.mrf.mxu0
        %v3275 = vadd.f32 0.0, %v3274
        %v3276 = vpop.f32.mrf.mxu0
        %v3277 = vadd.f32 0.0, %v3276
        %3278 = vdwg.mxu0
        %3279 = vmatpush.bf16.msra.mxu0 0
        %3280 = vmatpush.bf16.msra.mxu0 0
        %3281 = vmatpush.bf16.msra.mxu0 0
        %3282 = vmatpush.bf16.msra.mxu0 0
        %3283 = vmatpush.bf16.msra.mxu0 0
        %3284 = vmatpush.bf16.msra.mxu0 0
        %3285 = vmatpush.bf16.msra.mxu0 0
        %3286 = vmatpush.bf16.msra.mxu0 %v3225
        %3287 = vmatmul.bf16.gmra.mxu0 %v3235
        %v3288 = vpop.f32.mrf.mxu0
        %v3289 = vadd.f32 0.0, %v3288
        %v3290 = vpop.f32.mrf.mxu0
        %v3291 = vadd.f32 0.0, %v3290
        %3292 = vdwg.mxu0
        %3293 = vmatpush.bf16.msra.mxu0 0
        %3294 = vmatpush.bf16.msra.mxu0 0
        %3295 = vmatpush.bf16.msra.mxu0 0
        %3296 = vmatpush.bf16.msra.mxu0 0
        %3297 = vmatpush.bf16.msra.mxu0 0
        %3298 = vmatpush.bf16.msra.mxu0 0
        %3299 = vmatpush.bf16.msra.mxu0 0
        %3300 = vmatpush.bf16.msra.mxu0 %v3226
        %3301 = vmatmul.bf16.gmra.mxu0 %v3235
        %v3302 = vpop.f32.mrf.mxu0
        %v3303 = vadd.f32 0.0, %v3302
        %v3304 = vpop.f32.mrf.mxu0
        %v3305 = vadd.f32 0.0, %v3304
        %3306 = vdwg.mxu0
        %3307 = vmatpush.bf16.msra.mxu0 0
        %3308 = vmatpush.bf16.msra.mxu0 0
        %3309 = vmatpush.bf16.msra.mxu0 0
        %3310 = vmatpush.bf16.msra.mxu0 0
        %3311 = vmatpush.bf16.msra.mxu0 0
        %3312 = vmatpush.bf16.msra.mxu0 0
        %3313 = vmatpush.bf16.msra.mxu0 0
        %3314 = vmatpush.bf16.msra.mxu0 %v3227
        %3315 = vmatmul.bf16.gmra.mxu0 %v3235
        %v3316 = vpop.f32.mrf.mxu0
        %v3317 = vadd.f32 0.0, %v3316
        %v3318 = vpop.f32.mrf.mxu0
        %v3319 = vadd.f32 0.0, %v3318
        %3320 = vdwg.mxu0
        %v3321 = vadd.f32 %v3187, %v3247
        %v3322 = vadd.f32 %v3188, %v3261
        %v3323 = vadd.f32 %v3189, %v3275
        %v3324 = vadd.f32 %v3190, %v3289
        %v3325 = vadd.f32 %v3191, %v3303
        %v3326 = vadd.f32 %v3192, %v3317
        %v3327 = vadd.f32 %v3193, %v3249
        %v3328 = vadd.f32 %v3194, %v3263
        %v3329 = vadd.f32 %v3195, %v3277
        %v3330 = vadd.f32 %v3196, %v3291
        %v3331 = vadd.f32 %v3197, %v3305
        %v3332 = vadd.f32 %v3198, %v3319
        %s3333 = scalar_lea.vmem %s1, 184
        %v3334 = vld [vmem:[%s3333] sm:$0xf]
        %v3335 = vld [vmem:[%s3333 + $0x4] sm:$0xf]
        %v3338 = vunpack.c.l.b16 %v3334
        %v3339 = vunpack.c.l.b16 %v3335
        %v3340 = vpack.c.b16 %v3339, %v3338
        %3341 = vrot.lane.b32.xlu0 %v2664, 44
        %v3342 = vpop.permute.xlu0 %3341
        %3343 = vrot.lane.b32.xlu0 %v2665, 44
        %v3344 = vpop.permute.xlu0 %3343
        %3345 = vrot.lane.b32.xlu0 %v2666, 44
        %v3346 = vpop.permute.xlu0 %3345
        %3347 = vrot.lane.b32.xlu0 %v2667, 44
        %v3348 = vpop.permute.xlu0 %3347
        %3349 = vrot.lane.b32.xlu0 %v2668, 44
        %v3350 = vpop.permute.xlu0 %3349
        %3351 = vrot.lane.b32.xlu0 %v2669, 44
        %v3352 = vpop.permute.xlu0 %3351
        %3353 = vrot.lane.b32.xlu0 %v2670, 44
        %v3354 = vpop.permute.xlu0 %3353
        %vm3355 = vcmask 359424
        %v3356 = vsel %vm3355, %v3342, %v3344
        %v3357 = vsel %vm3355, %v3344, %v3346
        %v3358 = vsel %vm3355, %v3346, %v3348
        %v3359 = vsel %vm3355, %v3348, %v3350
        %v3360 = vsel %vm3355, %v3350, %v3352
        %v3361 = vsel %vm3355, %v3352, %v3354
        %v3369 = vsel %vm296, %v3340, 0
        %3371 = vmatpush.bf16.msra.mxu0 0
        %3372 = vmatpush.bf16.msra.mxu0 0
        %3373 = vmatpush.bf16.msra.mxu0 0
        %3374 = vmatpush.bf16.msra.mxu0 0
        %3375 = vmatpush.bf16.msra.mxu0 0
        %3376 = vmatpush.bf16.msra.mxu0 0
        %3377 = vmatpush.bf16.msra.mxu0 0
        %3378 = vmatpush.bf16.msra.mxu0 %v3356
        %3379 = vmatmul.bf16.gmra.mxu0 %v3369
        %v3380 = vpop.f32.mrf.mxu0
        %v3381 = vadd.f32 0.0, %v3380
        %v3382 = vpop.f32.mrf.mxu0
        %v3383 = vadd.f32 0.0, %v3382
        %3384 = vdwg.mxu0
        %3385 = vmatpush.bf16.msra.mxu0 0
        %3386 = vmatpush.bf16.msra.mxu0 0
        %3387 = vmatpush.bf16.msra.mxu0 0
        %3388 = vmatpush.bf16.msra.mxu0 0
        %3389 = vmatpush.bf16.msra.mxu0 0
        %3390 = vmatpush.bf16.msra.mxu0 0
        %3391 = vmatpush.bf16.msra.mxu0 0
        %3392 = vmatpush.bf16.msra.mxu0 %v3357
        %3393 = vmatmul.bf16.gmra.mxu0 %v3369
        %v3394 = vpop.f32.mrf.mxu0
        %v3395 = vadd.f32 0.0, %v3394
        %v3396 = vpop.f32.mrf.mxu0
        %v3397 = vadd.f32 0.0, %v3396
        %3398 = vdwg.mxu0
        %3399 = vmatpush.bf16.msra.mxu0 0
        %3400 = vmatpush.bf16.msra.mxu0 0
        %3401 = vmatpush.bf16.msra.mxu0 0
        %3402 = vmatpush.bf16.msra.mxu0 0
        %3403 = vmatpush.bf16.msra.mxu0 0
        %3404 = vmatpush.bf16.msra.mxu0 0
        %3405 = vmatpush.bf16.msra.mxu0 0
        %3406 = vmatpush.bf16.msra.mxu0 %v3358
        %3407 = vmatmul.bf16.gmra.mxu0 %v3369
        %v3408 = vpop.f32.mrf.mxu0
        %v3409 = vadd.f32 0.0, %v3408
        %v3410 = vpop.f32.mrf.mxu0
        %v3411 = vadd.f32 0.0, %v3410
        %3412 = vdwg.mxu0
        %3413 = vmatpush.bf16.msra.mxu0 0
        %3414 = vmatpush.bf16.msra.mxu0 0
        %3415 = vmatpush.bf16.msra.mxu0 0
        %3416 = vmatpush.bf16.msra.mxu0 0
        %3417 = vmatpush.bf16.msra.mxu0 0
        %3418 = vmatpush.bf16.msra.mxu0 0
        %3419 = vmatpush.bf16.msra.mxu0 0
        %3420 = vmatpush.bf16.msra.mxu0 %v3359
        %3421 = vmatmul.bf16.gmra.mxu0 %v3369
        %v3422 = vpop.f32.mrf.mxu0
        %v3423 = vadd.f32 0.0, %v3422
        %v3424 = vpop.f32.mrf.mxu0
        %v3425 = vadd.f32 0.0, %v3424
        %3426 = vdwg.mxu0
        %3427 = vmatpush.bf16.msra.mxu0 0
        %3428 = vmatpush.bf16.msra.mxu0 0
        %3429 = vmatpush.bf16.msra.mxu0 0
        %3430 = vmatpush.bf16.msra.mxu0 0
        %3431 = vmatpush.bf16.msra.mxu0 0
        %3432 = vmatpush.bf16.msra.mxu0 0
        %3433 = vmatpush.bf16.msra.mxu0 0
        %3434 = vmatpush.bf16.msra.mxu0 %v3360
        %3435 = vmatmul.bf16.gmra.mxu0 %v3369
        %v3436 = vpop.f32.mrf.mxu0
        %v3437 = vadd.f32 0.0, %v3436
        %v3438 = vpop.f32.mrf.mxu0
        %v3439 = vadd.f32 0.0, %v3438
        %3440 = vdwg.mxu0
        %3441 = vmatpush.bf16.msra.mxu0 0
        %3442 = vmatpush.bf16.msra.mxu0 0
        %3443 = vmatpush.bf16.msra.mxu0 0
        %3444 = vmatpush.bf16.msra.mxu0 0
        %3445 = vmatpush.bf16.msra.mxu0 0
        %3446 = vmatpush.bf16.msra.mxu0 0
        %3447 = vmatpush.bf16.msra.mxu0 0
        %3448 = vmatpush.bf16.msra.mxu0 %v3361
        %3449 = vmatmul.bf16.gmra.mxu0 %v3369
        %v3450 = vpop.f32.mrf.mxu0
        %v3451 = vadd.f32 0.0, %v3450
        %v3452 = vpop.f32.mrf.mxu0
        %v3453 = vadd.f32 0.0, %v3452
        %3454 = vdwg.mxu0
        %v3455 = vadd.f32 %v3321, %v3381
        %v3456 = vadd.f32 %v3322, %v3395
        %v3457 = vadd.f32 %v3323, %v3409
        %v3458 = vadd.f32 %v3324, %v3423
        %v3459 = vadd.f32 %v3325, %v3437
        %v3460 = vadd.f32 %v3326, %v3451
        %v3461 = vadd.f32 %v3327, %v3383
        %v3462 = vadd.f32 %v3328, %v3397
        %v3463 = vadd.f32 %v3329, %v3411
        %v3464 = vadd.f32 %v3330, %v3425
        %v3465 = vadd.f32 %v3331, %v3439
        %v3466 = vadd.f32 %v3332, %v3453
        %s3467 = scalar_lea.vmem %s1, 192
        %v3468 = vld [vmem:[%s3467] sm:$0xf]
        %v3469 = vld [vmem:[%s3467 + $0x4] sm:$0xf]
        %v3472 = vunpack.c.l.b16 %v3468
        %v3473 = vunpack.c.l.b16 %v3469
        %v3474 = vpack.c.b16 %v3473, %v3472
        %3475 = vrot.lane.b32.xlu0 %v2664, 36
        %v3476 = vpop.permute.xlu0 %3475
        %3477 = vrot.lane.b32.xlu0 %v2665, 36
        %v3478 = vpop.permute.xlu0 %3477
        %3479 = vrot.lane.b32.xlu0 %v2666, 36
        %v3480 = vpop.permute.xlu0 %3479
        %3481 = vrot.lane.b32.xlu0 %v2667, 36
        %v3482 = vpop.permute.xlu0 %3481
        %3483 = vrot.lane.b32.xlu0 %v2668, 36
        %v3484 = vpop.permute.xlu0 %3483
        %3485 = vrot.lane.b32.xlu0 %v2669, 36
        %v3486 = vpop.permute.xlu0 %3485
        %3487 = vrot.lane.b32.xlu0 %v2670, 36
        %v3488 = vpop.permute.xlu0 %3487
        %vm3489 = vcmask 293888
        %v3490 = vsel %vm3489, %v3476, %v3478
        %v3491 = vsel %vm3489, %v3478, %v3480
        %v3492 = vsel %vm3489, %v3480, %v3482
        %v3493 = vsel %vm3489, %v3482, %v3484
        %v3494 = vsel %vm3489, %v3484, %v3486
        %v3495 = vsel %vm3489, %v3486, %v3488
        %v3503 = vsel %vm296, %v3474, 0
        %3505 = vmatpush.bf16.msra.mxu0 0
        %3506 = vmatpush.bf16.msra.mxu0 0
        %3507 = vmatpush.bf16.msra.mxu0 0
        %3508 = vmatpush.bf16.msra.mxu0 0
        %3509 = vmatpush.bf16.msra.mxu0 0
        %3510 = vmatpush.bf16.msra.mxu0 0
        %3511 = vmatpush.bf16.msra.mxu0 0
        %3512 = vmatpush.bf16.msra.mxu0 %v3490
        %3513 = vmatmul.bf16.gmra.mxu0 %v3503
        %v3514 = vpop.f32.mrf.mxu0
        %v3515 = vadd.f32 0.0, %v3514
        %v3516 = vpop.f32.mrf.mxu0
        %v3517 = vadd.f32 0.0, %v3516
        %3518 = vdwg.mxu0
        %3519 = vmatpush.bf16.msra.mxu0 0
        %3520 = vmatpush.bf16.msra.mxu0 0
        %3521 = vmatpush.bf16.msra.mxu0 0
        %3522 = vmatpush.bf16.msra.mxu0 0
        %3523 = vmatpush.bf16.msra.mxu0 0
        %3524 = vmatpush.bf16.msra.mxu0 0
        %3525 = vmatpush.bf16.msra.mxu0 0
        %3526 = vmatpush.bf16.msra.mxu0 %v3491
        %3527 = vmatmul.bf16.gmra.mxu0 %v3503
        %v3528 = vpop.f32.mrf.mxu0
        %v3529 = vadd.f32 0.0, %v3528
        %v3530 = vpop.f32.mrf.mxu0
        %v3531 = vadd.f32 0.0, %v3530
        %3532 = vdwg.mxu0
        %3533 = vmatpush.bf16.msra.mxu0 0
        %3534 = vmatpush.bf16.msra.mxu0 0
        %3535 = vmatpush.bf16.msra.mxu0 0
        %3536 = vmatpush.bf16.msra.mxu0 0
        %3537 = vmatpush.bf16.msra.mxu0 0
        %3538 = vmatpush.bf16.msra.mxu0 0
        %3539 = vmatpush.bf16.msra.mxu0 0
        %3540 = vmatpush.bf16.msra.mxu0 %v3492
        %3541 = vmatmul.bf16.gmra.mxu0 %v3503
        %v3542 = vpop.f32.mrf.mxu0
        %v3543 = vadd.f32 0.0, %v3542
        %v3544 = vpop.f32.mrf.mxu0
        %v3545 = vadd.f32 0.0, %v3544
        %3546 = vdwg.mxu0
        %3547 = vmatpush.bf16.msra.mxu0 0
        %3548 = vmatpush.bf16.msra.mxu0 0
        %3549 = vmatpush.bf16.msra.mxu0 0
        %3550 = vmatpush.bf16.msra.mxu0 0
        %3551 = vmatpush.bf16.msra.mxu0 0
        %3552 = vmatpush.bf16.msra.mxu0 0
        %3553 = vmatpush.bf16.msra.mxu0 0
        %3554 = vmatpush.bf16.msra.mxu0 %v3493
        %3555 = vmatmul.bf16.gmra.mxu0 %v3503
        %v3556 = vpop.f32.mrf.mxu0
        %v3557 = vadd.f32 0.0, %v3556
        %v3558 = vpop.f32.mrf.mxu0
        %v3559 = vadd.f32 0.0, %v3558
        %3560 = vdwg.mxu0
        %3561 = vmatpush.bf16.msra.mxu0 0
        %3562 = vmatpush.bf16.msra.mxu0 0
        %3563 = vmatpush.bf16.msra.mxu0 0
        %3564 = vmatpush.bf16.msra.mxu0 0
        %3565 = vmatpush.bf16.msra.mxu0 0
        %3566 = vmatpush.bf16.msra.mxu0 0
        %3567 = vmatpush.bf16.msra.mxu0 0
        %3568 = vmatpush.bf16.msra.mxu0 %v3494
        %3569 = vmatmul.bf16.gmra.mxu0 %v3503
        %v3570 = vpop.f32.mrf.mxu0
        %v3571 = vadd.f32 0.0, %v3570
        %v3572 = vpop.f32.mrf.mxu0
        %v3573 = vadd.f32 0.0, %v3572
        %3574 = vdwg.mxu0
        %3575 = vmatpush.bf16.msra.mxu0 0
        %3576 = vmatpush.bf16.msra.mxu0 0
        %3577 = vmatpush.bf16.msra.mxu0 0
        %3578 = vmatpush.bf16.msra.mxu0 0
        %3579 = vmatpush.bf16.msra.mxu0 0
        %3580 = vmatpush.bf16.msra.mxu0 0
        %3581 = vmatpush.bf16.msra.mxu0 0
        %3582 = vmatpush.bf16.msra.mxu0 %v3495
        %3583 = vmatmul.bf16.gmra.mxu0 %v3503
        %v3584 = vpop.f32.mrf.mxu0
        %v3585 = vadd.f32 0.0, %v3584
        %v3586 = vpop.f32.mrf.mxu0
        %v3587 = vadd.f32 0.0, %v3586
        %3588 = vdwg.mxu0
        %v3589 = vadd.f32 %v3455, %v3515
        %v3590 = vadd.f32 %v3456, %v3529
        %v3591 = vadd.f32 %v3457, %v3543
        %v3592 = vadd.f32 %v3458, %v3557
        %v3593 = vadd.f32 %v3459, %v3571
        %v3594 = vadd.f32 %v3460, %v3585
        %v3595 = vadd.f32 %v3461, %v3517
        %v3596 = vadd.f32 %v3462, %v3531
        %v3597 = vadd.f32 %v3463, %v3545
        %v3598 = vadd.f32 %v3464, %v3559
        %v3599 = vadd.f32 %v3465, %v3573
        %v3600 = vadd.f32 %v3466, %v3587
        %s3601 = scalar_lea.vmem %s1, 200
        %v3602 = vld [vmem:[%s3601] sm:$0xf]
        %v3603 = vld [vmem:[%s3601 + $0x4] sm:$0xf]
        %v3606 = vunpack.c.l.b16 %v3602
        %v3607 = vunpack.c.l.b16 %v3603
        %v3608 = vpack.c.b16 %v3607, %v3606
        %3609 = vrot.lane.b32.xlu0 %v2664, 35
        %v3610 = vpop.permute.xlu0 %3609
        %3611 = vrot.lane.b32.xlu0 %v2665, 35
        %v3612 = vpop.permute.xlu0 %3611
        %3613 = vrot.lane.b32.xlu0 %v2666, 35
        %v3614 = vpop.permute.xlu0 %3613
        %3615 = vrot.lane.b32.xlu0 %v2667, 35
        %v3616 = vpop.permute.xlu0 %3615
        %3617 = vrot.lane.b32.xlu0 %v2668, 35
        %v3618 = vpop.permute.xlu0 %3617
        %3619 = vrot.lane.b32.xlu0 %v2669, 35
        %v3620 = vpop.permute.xlu0 %3619
        %3621 = vrot.lane.b32.xlu0 %v2670, 35
        %v3622 = vpop.permute.xlu0 %3621
        %vm3623 = vcmask 285696
        %v3624 = vsel %vm3623, %v3610, %v3612
        %v3625 = vsel %vm3623, %v3612, %v3614
        %v3626 = vsel %vm3623, %v3614, %v3616
        %v3627 = vsel %vm3623, %v3616, %v3618
        %v3628 = vsel %vm3623, %v3618, %v3620
        %v3629 = vsel %vm3623, %v3620, %v3622
        %v3637 = vsel %vm296, %v3608, 0
        %3639 = vmatpush.bf16.msra.mxu0 0
        %3640 = vmatpush.bf16.msra.mxu0 0
        %3641 = vmatpush.bf16.msra.mxu0 0
        %3642 = vmatpush.bf16.msra.mxu0 0
        %3643 = vmatpush.bf16.msra.mxu0 0
        %3644 = vmatpush.bf16.msra.mxu0 0
        %3645 = vmatpush.bf16.msra.mxu0 0
        %3646 = vmatpush.bf16.msra.mxu0 %v3624
        %3647 = vmatmul.bf16.gmra.mxu0 %v3637
        %v3648 = vpop.f32.mrf.mxu0
        %v3649 = vadd.f32 0.0, %v3648
        %v3650 = vpop.f32.mrf.mxu0
        %v3651 = vadd.f32 0.0, %v3650
        %3652 = vdwg.mxu0
        %3653 = vmatpush.bf16.msra.mxu0 0
        %3654 = vmatpush.bf16.msra.mxu0 0
        %3655 = vmatpush.bf16.msra.mxu0 0
        %3656 = vmatpush.bf16.msra.mxu0 0
        %3657 = vmatpush.bf16.msra.mxu0 0
        %3658 = vmatpush.bf16.msra.mxu0 0
        %3659 = vmatpush.bf16.msra.mxu0 0
        %3660 = vmatpush.bf16.msra.mxu0 %v3625
        %3661 = vmatmul.bf16.gmra.mxu0 %v3637
        %v3662 = vpop.f32.mrf.mxu0
        %v3663 = vadd.f32 0.0, %v3662
        %v3664 = vpop.f32.mrf.mxu0
        %v3665 = vadd.f32 0.0, %v3664
        %3666 = vdwg.mxu0
        %3667 = vmatpush.bf16.msra.mxu0 0
        %3668 = vmatpush.bf16.msra.mxu0 0
        %3669 = vmatpush.bf16.msra.mxu0 0
        %3670 = vmatpush.bf16.msra.mxu0 0
        %3671 = vmatpush.bf16.msra.mxu0 0
        %3672 = vmatpush.bf16.msra.mxu0 0
        %3673 = vmatpush.bf16.msra.mxu0 0
        %3674 = vmatpush.bf16.msra.mxu0 %v3626
        %3675 = vmatmul.bf16.gmra.mxu0 %v3637
        %v3676 = vpop.f32.mrf.mxu0
        %v3677 = vadd.f32 0.0, %v3676
        %v3678 = vpop.f32.mrf.mxu0
        %v3679 = vadd.f32 0.0, %v3678
        %3680 = vdwg.mxu0
        %3681 = vmatpush.bf16.msra.mxu0 0
        %3682 = vmatpush.bf16.msra.mxu0 0
        %3683 = vmatpush.bf16.msra.mxu0 0
        %3684 = vmatpush.bf16.msra.mxu0 0
        %3685 = vmatpush.bf16.msra.mxu0 0
        %3686 = vmatpush.bf16.msra.mxu0 0
        %3687 = vmatpush.bf16.msra.mxu0 0
        %3688 = vmatpush.bf16.msra.mxu0 %v3627
        %3689 = vmatmul.bf16.gmra.mxu0 %v3637
        %v3690 = vpop.f32.mrf.mxu0
        %v3691 = vadd.f32 0.0, %v3690
        %v3692 = vpop.f32.mrf.mxu0
        %v3693 = vadd.f32 0.0, %v3692
        %3694 = vdwg.mxu0
        %3695 = vmatpush.bf16.msra.mxu0 0
        %3696 = vmatpush.bf16.msra.mxu0 0
        %3697 = vmatpush.bf16.msra.mxu0 0
        %3698 = vmatpush.bf16.msra.mxu0 0
        %3699 = vmatpush.bf16.msra.mxu0 0
        %3700 = vmatpush.bf16.msra.mxu0 0
        %3701 = vmatpush.bf16.msra.mxu0 0
        %3702 = vmatpush.bf16.msra.mxu0 %v3628
        %3703 = vmatmul.bf16.gmra.mxu0 %v3637
        %v3704 = vpop.f32.mrf.mxu0
        %v3705 = vadd.f32 0.0, %v3704
        %v3706 = vpop.f32.mrf.mxu0
        %v3707 = vadd.f32 0.0, %v3706
        %3708 = vdwg.mxu0
        %3709 = vmatpush.bf16.msra.mxu0 0
        %3710 = vmatpush.bf16.msra.mxu0 0
        %3711 = vmatpush.bf16.msra.mxu0 0
        %3712 = vmatpush.bf16.msra.mxu0 0
        %3713 = vmatpush.bf16.msra.mxu0 0
        %3714 = vmatpush.bf16.msra.mxu0 0
        %3715 = vmatpush.bf16.msra.mxu0 0
        %3716 = vmatpush.bf16.msra.mxu0 %v3629
        %3717 = vmatmul.bf16.gmra.mxu0 %v3637
        %v3718 = vpop.f32.mrf.mxu0
        %v3719 = vadd.f32 0.0, %v3718
        %v3720 = vpop.f32.mrf.mxu0
        %v3721 = vadd.f32 0.0, %v3720
        %3722 = vdwg.mxu0
        %v3723 = vadd.f32 %v3589, %v3649
        %v3724 = vadd.f32 %v3590, %v3663
        %v3725 = vadd.f32 %v3591, %v3677
        %v3726 = vadd.f32 %v3592, %v3691
        %v3727 = vadd.f32 %v3593, %v3705
        %v3728 = vadd.f32 %v3594, %v3719
        %v3729 = vadd.f32 %v3595, %v3651
        %v3730 = vadd.f32 %v3596, %v3665
        %v3731 = vadd.f32 %v3597, %v3679
        %v3732 = vadd.f32 %v3598, %v3693
        %v3733 = vadd.f32 %v3599, %v3707
        %v3734 = vadd.f32 %v3600, %v3721
        %s3735 = scalar_lea.vmem %s1, 208
        %v3736 = vld [vmem:[%s3735] sm:$0xf]
        %v3737 = vld [vmem:[%s3735 + $0x4] sm:$0xf]
        %v3740 = vunpack.c.l.b16 %v3736
        %v3741 = vunpack.c.l.b16 %v3737
        %v3742 = vpack.c.b16 %v3741, %v3740
        %3743 = vrot.lane.b32.xlu0 %v2664, 34
        %v3744 = vpop.permute.xlu0 %3743
        %3745 = vrot.lane.b32.xlu0 %v2665, 34
        %v3746 = vpop.permute.xlu0 %3745
        %3747 = vrot.lane.b32.xlu0 %v2666, 34
        %v3748 = vpop.permute.xlu0 %3747
        %3749 = vrot.lane.b32.xlu0 %v2667, 34
        %v3750 = vpop.permute.xlu0 %3749
        %3751 = vrot.lane.b32.xlu0 %v2668, 34
        %v3752 = vpop.permute.xlu0 %3751
        %3753 = vrot.lane.b32.xlu0 %v2669, 34
        %v3754 = vpop.permute.xlu0 %3753
        %3755 = vrot.lane.b32.xlu0 %v2670, 34
        %v3756 = vpop.permute.xlu0 %3755
        %vm3757 = vcmask 277504
        %v3758 = vsel %vm3757, %v3744, %v3746
        %v3759 = vsel %vm3757, %v3746, %v3748
        %v3760 = vsel %vm3757, %v3748, %v3750
        %v3761 = vsel %vm3757, %v3750, %v3752
        %v3762 = vsel %vm3757, %v3752, %v3754
        %v3763 = vsel %vm3757, %v3754, %v3756
        %v3771 = vsel %vm296, %v3742, 0
        %3773 = vmatpush.bf16.msra.mxu0 0
        %3774 = vmatpush.bf16.msra.mxu0 0
        %3775 = vmatpush.bf16.msra.mxu0 0
        %3776 = vmatpush.bf16.msra.mxu0 0
        %3777 = vmatpush.bf16.msra.mxu0 0
        %3778 = vmatpush.bf16.msra.mxu0 0
        %3779 = vmatpush.bf16.msra.mxu0 0
        %3780 = vmatpush.bf16.msra.mxu0 %v3758
        %3781 = vmatmul.bf16.gmra.mxu0 %v3771
        %v3782 = vpop.f32.mrf.mxu0
        %v3783 = vadd.f32 0.0, %v3782
        %v3784 = vpop.f32.mrf.mxu0
        %v3785 = vadd.f32 0.0, %v3784
        %3786 = vdwg.mxu0
        %3787 = vmatpush.bf16.msra.mxu0 0
        %3788 = vmatpush.bf16.msra.mxu0 0
        %3789 = vmatpush.bf16.msra.mxu0 0
        %3790 = vmatpush.bf16.msra.mxu0 0
        %3791 = vmatpush.bf16.msra.mxu0 0
        %3792 = vmatpush.bf16.msra.mxu0 0
        %3793 = vmatpush.bf16.msra.mxu0 0
        %3794 = vmatpush.bf16.msra.mxu0 %v3759
        %3795 = vmatmul.bf16.gmra.mxu0 %v3771
        %v3796 = vpop.f32.mrf.mxu0
        %v3797 = vadd.f32 0.0, %v3796
        %v3798 = vpop.f32.mrf.mxu0
        %v3799 = vadd.f32 0.0, %v3798
        %3800 = vdwg.mxu0
        %3801 = vmatpush.bf16.msra.mxu0 0
        %3802 = vmatpush.bf16.msra.mxu0 0
        %3803 = vmatpush.bf16.msra.mxu0 0
        %3804 = vmatpush.bf16.msra.mxu0 0
        %3805 = vmatpush.bf16.msra.mxu0 0
        %3806 = vmatpush.bf16.msra.mxu0 0
        %3807 = vmatpush.bf16.msra.mxu0 0
        %3808 = vmatpush.bf16.msra.mxu0 %v3760
        %3809 = vmatmul.bf16.gmra.mxu0 %v3771
        %v3810 = vpop.f32.mrf.mxu0
        %v3811 = vadd.f32 0.0, %v3810
        %v3812 = vpop.f32.mrf.mxu0
        %v3813 = vadd.f32 0.0, %v3812
        %3814 = vdwg.mxu0
        %3815 = vmatpush.bf16.msra.mxu0 0
        %3816 = vmatpush.bf16.msra.mxu0 0
        %3817 = vmatpush.bf16.msra.mxu0 0
        %3818 = vmatpush.bf16.msra.mxu0 0
        %3819 = vmatpush.bf16.msra.mxu0 0
        %3820 = vmatpush.bf16.msra.mxu0 0
        %3821 = vmatpush.bf16.msra.mxu0 0
        %3822 = vmatpush.bf16.msra.mxu0 %v3761
        %3823 = vmatmul.bf16.gmra.mxu0 %v3771
        %v3824 = vpop.f32.mrf.mxu0
        %v3825 = vadd.f32 0.0, %v3824
        %v3826 = vpop.f32.mrf.mxu0
        %v3827 = vadd.f32 0.0, %v3826
        %3828 = vdwg.mxu0
        %3829 = vmatpush.bf16.msra.mxu0 0
        %3830 = vmatpush.bf16.msra.mxu0 0
        %3831 = vmatpush.bf16.msra.mxu0 0
        %3832 = vmatpush.bf16.msra.mxu0 0
        %3833 = vmatpush.bf16.msra.mxu0 0
        %3834 = vmatpush.bf16.msra.mxu0 0
        %3835 = vmatpush.bf16.msra.mxu0 0
        %3836 = vmatpush.bf16.msra.mxu0 %v3762
        %3837 = vmatmul.bf16.gmra.mxu0 %v3771
        %v3838 = vpop.f32.mrf.mxu0
        %v3839 = vadd.f32 0.0, %v3838
        %v3840 = vpop.f32.mrf.mxu0
        %v3841 = vadd.f32 0.0, %v3840
        %3842 = vdwg.mxu0
        %3843 = vmatpush.bf16.msra.mxu0 0
        %3844 = vmatpush.bf16.msra.mxu0 0
        %3845 = vmatpush.bf16.msra.mxu0 0
        %3846 = vmatpush.bf16.msra.mxu0 0
        %3847 = vmatpush.bf16.msra.mxu0 0
        %3848 = vmatpush.bf16.msra.mxu0 0
        %3849 = vmatpush.bf16.msra.mxu0 0
        %3850 = vmatpush.bf16.msra.mxu0 %v3763
        %3851 = vmatmul.bf16.gmra.mxu0 %v3771
        %v3852 = vpop.f32.mrf.mxu0
        %v3853 = vadd.f32 0.0, %v3852
        %v3854 = vpop.f32.mrf.mxu0
        %v3855 = vadd.f32 0.0, %v3854
        %3856 = vdwg.mxu0
        %v3857 = vadd.f32 %v3723, %v3783
        %v3858 = vadd.f32 %v3724, %v3797
        %v3859 = vadd.f32 %v3725, %v3811
        %v3860 = vadd.f32 %v3726, %v3825
        %v3861 = vadd.f32 %v3727, %v3839
        %v3862 = vadd.f32 %v3728, %v3853
        %v3863 = vadd.f32 %v3729, %v3785
        %v3864 = vadd.f32 %v3730, %v3799
        %v3865 = vadd.f32 %v3731, %v3813
        %v3866 = vadd.f32 %v3732, %v3827
        %v3867 = vadd.f32 %v3733, %v3841
        %v3868 = vadd.f32 %v3734, %v3855
        %v3869 = vmul.f32 %v3857, %v3857
        %v3870 = vmul.f32 %v3858, %v3858
        %v3871 = vmul.f32 %v3859, %v3859
        %v3872 = vmul.f32 %v3860, %v3860
        %v3873 = vmul.f32 %v3861, %v3861
        %v3874 = vmul.f32 %v3862, %v3862
        %v3875 = vmul.f32 %v3863, %v3863
        %v3876 = vmul.f32 %v3864, %v3864
        %v3877 = vmul.f32 %v3865, %v3865
        %v3878 = vmul.f32 %v3866, %v3866
        %v3879 = vmul.f32 %v3867, %v3867
        %v3880 = vmul.f32 %v3868, %v3868
        %v3881 = vadd.f32 %v3869, %v3875
        %v3882 = vrot.slane %v3881, 4
        %v3883 = vadd.f32 %v3881, %v3882
        %v3884 = vrot.slane %v3883, 2
        %v3885 = vadd.f32 %v3883, %v3884
        %v3886 = vrot.slane %v3885, 1
        %v3887 = vadd.f32 %v3885, %v3886
        %v3888 = vadd.f32 %v3870, %v3876
        %v3889 = vrot.slane %v3888, 4
        %v3890 = vadd.f32 %v3888, %v3889
        %v3891 = vrot.slane %v3890, 2
        %v3892 = vadd.f32 %v3890, %v3891
        %v3893 = vrot.slane %v3892, 1
        %v3894 = vadd.f32 %v3892, %v3893
        %v3895 = vadd.f32 %v3871, %v3877
        %v3896 = vrot.slane %v3895, 4
        %v3897 = vadd.f32 %v3895, %v3896
        %v3898 = vrot.slane %v3897, 2
        %v3899 = vadd.f32 %v3897, %v3898
        %v3900 = vrot.slane %v3899, 1
        %v3901 = vadd.f32 %v3899, %v3900
        %v3902 = vadd.f32 %v3872, %v3878
        %v3903 = vrot.slane %v3902, 4
        %v3904 = vadd.f32 %v3902, %v3903
        %v3905 = vrot.slane %v3904, 2
        %v3906 = vadd.f32 %v3904, %v3905
        %v3907 = vrot.slane %v3906, 1
        %v3908 = vadd.f32 %v3906, %v3907
        %v3909 = vadd.f32 %v3873, %v3879
        %v3910 = vrot.slane %v3909, 4
        %v3911 = vadd.f32 %v3909, %v3910
        %v3912 = vrot.slane %v3911, 2
        %v3913 = vadd.f32 %v3911, %v3912
        %v3914 = vrot.slane %v3913, 1
        %v3915 = vadd.f32 %v3913, %v3914
        %v3916 = vadd.f32 %v3874, %v3880
        %v3917 = vrot.slane %v3916, 4
        %v3918 = vadd.f32 %v3916, %v3917
        %v3919 = vrot.slane %v3918, 2
        %v3920 = vadd.f32 %v3918, %v3919
        %v3921 = vrot.slane %v3920, 1
        %v3922 = vadd.f32 %v3920, %v3921
        %v3923 = vadd.f32 %v3887, 1e-05
        %v3924 = vadd.f32 %v3894, 1e-05
        %v3925 = vadd.f32 %v3901, 1e-05
        %v3926 = vadd.f32 %v3908, 1e-05
        %v3927 = vadd.f32 %v3915, 1e-05
        %v3928 = vadd.f32 %v3922, 1e-05
        %v3929 = vrsqrt.pop %v3923
        %v3930 = vmul.f32 %v3929, %v3923
        %v3931 = vmul.f32 %v3930, %v3929
        %v3932 = vmul.f32 0.5, %v3931
        %v3933 = vsub.f32 1.5, %v3932
        %v3934 = vmul.f32 %v3929, %v3933
        %vm3935 = vweird.f32 %v3923
        %vm3936 = vweird.f32 %v3929
        %vm3937 = vmor %vm3935, %vm3936
        %v3938 = vsel %vm3937, %v3929, %v3934
        %v3939 = vrsqrt.pop %v3924
        %v3940 = vmul.f32 %v3939, %v3924
        %v3941 = vmul.f32 %v3940, %v3939
        %v3942 = vmul.f32 0.5, %v3941
        %v3943 = vsub.f32 1.5, %v3942
        %v3944 = vmul.f32 %v3939, %v3943
        %vm3945 = vweird.f32 %v3924
        %vm3946 = vweird.f32 %v3939
        %vm3947 = vmor %vm3945, %vm3946
        %v3948 = vsel %vm3947, %v3939, %v3944
        %v3949 = vrsqrt.pop %v3925
        %v3950 = vmul.f32 %v3949, %v3925
        %v3951 = vmul.f32 %v3950, %v3949
        %v3952 = vmul.f32 0.5, %v3951
        %v3953 = vsub.f32 1.5, %v3952
        %v3954 = vmul.f32 %v3949, %v3953
        %vm3955 = vweird.f32 %v3925
        %vm3956 = vweird.f32 %v3949
        %vm3957 = vmor %vm3955, %vm3956
        %v3958 = vsel %vm3957, %v3949, %v3954
        %v3959 = vrsqrt.pop %v3926
        %v3960 = vmul.f32 %v3959, %v3926
        %v3961 = vmul.f32 %v3960, %v3959
        %v3962 = vmul.f32 0.5, %v3961
        %v3963 = vsub.f32 1.5, %v3962
        %v3964 = vmul.f32 %v3959, %v3963
        %vm3965 = vweird.f32 %v3926
        %vm3966 = vweird.f32 %v3959
        %vm3967 = vmor %vm3965, %vm3966
        %v3968 = vsel %vm3967, %v3959, %v3964
        %v3969 = vrsqrt.pop %v3927
        %v3970 = vmul.f32 %v3969, %v3927
        %v3971 = vmul.f32 %v3970, %v3969
        %v3972 = vmul.f32 0.5, %v3971
        %v3973 = vsub.f32 1.5, %v3972
        %v3974 = vmul.f32 %v3969, %v3973
        %vm3975 = vweird.f32 %v3927
        %vm3976 = vweird.f32 %v3969
        %vm3977 = vmor %vm3975, %vm3976
        %v3978 = vsel %vm3977, %v3969, %v3974
        %v3979 = vrsqrt.pop %v3928
        %v3980 = vmul.f32 %v3979, %v3928
        %v3981 = vmul.f32 %v3980, %v3979
        %v3982 = vmul.f32 0.5, %v3981
        %v3983 = vsub.f32 1.5, %v3982
        %v3984 = vmul.f32 %v3979, %v3983
        %vm3985 = vweird.f32 %v3928
        %vm3986 = vweird.f32 %v3979
        %vm3987 = vmor %vm3985, %vm3986
        %v3988 = vsel %vm3987, %v3979, %v3984
        %v3989 = vld [vmem:[%s176] sm:$0x3f]
        %v3991 = vperm.slane %v3989, 0
        %v3992 = vperm.slane %v3989, 1
        %v3993 = vperm.slane %v3989, 2
        %v3994 = vperm.slane %v3989, 3
        %v3995 = vperm.slane %v3989, 4
        %v3996 = vperm.slane %v3989, 5
        %v4003 = vmul.f32 %v3938, %v3991
        %v4004 = vmul.f32 %v3948, %v3992
        %v4005 = vmul.f32 %v3958, %v3993
        %v4006 = vmul.f32 %v3968, %v3994
        %v4007 = vmul.f32 %v3978, %v3995
        %v4008 = vmul.f32 %v3988, %v3996
        %v4009 = vperm.slane %v4003, 0
        %v4010 = vperm.slane %v4004, 0
        %v4011 = vperm.slane %v4005, 0
        %v4012 = vperm.slane %v4006, 0
        %v4013 = vperm.slane %v4007, 0
        %v4014 = vperm.slane %v4008, 0
        %v4015 = vmul.f32 %v3857, %v4009
        %v4016 = vmul.f32 %v3858, %v4010
        %v4017 = vmul.f32 %v3859, %v4011
        %v4018 = vmul.f32 %v3860, %v4012
        %v4019 = vmul.f32 %v3861, %v4013
        %v4020 = vmul.f32 %v3862, %v4014
        %v4021 = vmul.f32 %v3863, %v4009
        %v4022 = vmul.f32 %v3864, %v4010
        %v4023 = vmul.f32 %v3865, %v4011
        %v4024 = vmul.f32 %v3866, %v4012
        %v4025 = vmul.f32 %v3867, %v4013
        %v4026 = vmul.f32 %v3868, %v4014
        %v4027 = vmax.f32 %v4015, 0.0
        %v4028 = vmax.f32 %v4016, 0.0
        %v4029 = vmax.f32 %v4017, 0.0
        %v4030 = vmax.f32 %v4018, 0.0
        %v4031 = vmax.f32 %v4019, 0.0
        %v4032 = vmax.f32 %v4020, 0.0
        %v4033 = vmax.f32 %v4021, 0.0
        %v4034 = vmax.f32 %v4022, 0.0
        %v4035 = vmax.f32 %v4023, 0.0
        %v4036 = vmax.f32 %v4024, 0.0
        %v4037 = vmax.f32 %v4025, 0.0
        %v4038 = vmax.f32 %v4026, 0.0
        %v4039 = vpack.c.bf16 %v4028, %v4027
        %v4040 = vpack.c.bf16 %v4030, %v4029
        %v4041 = vpack.c.bf16 %v4032, %v4031
        %v4042 = vpack.c.bf16 %v4034, %v4033
        %v4043 = vpack.c.bf16 %v4036, %v4035
        %v4044 = vpack.c.bf16 %v4038, %v4037
        %4045 = vst [vmem:[#allocation3] sm:$0xff] %v4039
        %4046 = vst [vmem:[#allocation3 + $0x8] sm:$0xff] %v4040
        %4047 = vst [vmem:[#allocation3 + $0x10] sm:$0xff] %v4041
        %4048 = vst [vmem:[#allocation3 + $0x18] sm:$0xff] %v4042
        %4049 = vst [vmem:[#allocation3 + $0x20] sm:$0xff] %v4043
        %4050 = vst [vmem:[#allocation3 + $0x28] sm:$0xff] %v4044
        %v4051 = vld [vmem:[%s2] sm:$0xf]
        %v4052 = vld [vmem:[%s2 + $0x4] sm:$0xf]
        %v4053 = vld [vmem:[#allocation3] sm:$0xff]
        %v4054 = vld [vmem:[#allocation3 + $0x8] sm:$0xff]
        %v4055 = vld [vmem:[#allocation3 + $0x18] sm:$0xff]
        %v4056 = vld [vmem:[#allocation3 + $0x20] sm:$0xff]
        %s4057 = scalar_lea.vmem %s2, 8
        %v4058 = vld [vmem:[%s4057] sm:$0xf]
        %v4059 = vld [vmem:[%s4057 + $0x4] sm:$0xf]
        %v4060 = vld [vmem:[#allocation3 + $0x10] sm:$0xf]
        %v4061 = vld [vmem:[#allocation3 + $0x28] sm:$0xf]
        %v4064 = vunpack.c.l.b16 %v4058
        %v4065 = vunpack.c.l.b16 %v4059
        %v4066 = vpack.c.b16 %v4065, %v4064
        %v4073 = vunpack.c.l.b16 %v4053
        %v4074 = vunpack.c.h.b16 %v4053
        %v4075 = vunpack.c.l.b16 %v4054
        %v4076 = vunpack.c.h.b16 %v4054
        %v4077 = vunpack.c.l.b16 %v4060
        %v4078 = vunpack.c.l.b16 %v4055
        %v4079 = vunpack.c.h.b16 %v4055
        %v4080 = vunpack.c.l.b16 %v4056
        %v4081 = vunpack.c.h.b16 %v4056
        %v4082 = vunpack.c.l.b16 %v4061
        %v4083 = vpack.c.b16 %v4078, %v4073
        %v4084 = vpack.c.b16 %v4079, %v4074
        %v4085 = vpack.c.b16 %v4080, %v4075
        %v4086 = vpack.c.b16 %v4081, %v4076
        %v4087 = vpack.c.b16 %v4082, %v4077
        %4088 = vrot.lane.b32.xlu0 %v4083, 127
        %v4089 = vpop.permute.xlu0 %4088
        %4090 = vrot.lane.b32.xlu0 %v4084, 127
        %v4091 = vpop.permute.xlu0 %4090
        %4092 = vrot.lane.b32.xlu0 %v4085, 127
        %v4093 = vpop.permute.xlu0 %4092
        %4094 = vrot.lane.b32.xlu0 %v4086, 127
        %v4095 = vpop.permute.xlu0 %4094
        %4096 = vrot.lane.b32.xlu0 %v4087, 127
        %v4097 = vpop.permute.xlu0 %4096
        %v4098 = vsel %vm283, %v4089, %v4091
        %v4099 = vsel %vm283, %v4091, %v4093
        %v4100 = vsel %vm283, %v4093, %v4095
        %v4101 = vsel %vm283, %v4095, %v4097
        %v4107 = vsel %vm296, %v4066, 0
        %4109 = vmatpush.bf16.msra.mxu0 0
        %4110 = vmatpush.bf16.msra.mxu0 0
        %4111 = vmatpush.bf16.msra.mxu0 0
        %4112 = vmatpush.bf16.msra.mxu0 0
        %4113 = vmatpush.bf16.msra.mxu0 0
        %4114 = vmatpush.bf16.msra.mxu0 0
        %4115 = vmatpush.bf16.msra.mxu0 0
        %4116 = vmatpush.bf16.msra.mxu0 %v4098
        %4117 = vmatmul.bf16.gmra.mxu0 %v4107
        %v4118 = vpop.f32.mrf.mxu0
        %v4119 = vadd.f32 0.0, %v4118
        %v4120 = vpop.f32.mrf.mxu0
        %v4121 = vadd.f32 0.0, %v4120
        %4122 = vdwg.mxu0
        %4123 = vmatpush.bf16.msra.mxu0 0
        %4124 = vmatpush.bf16.msra.mxu0 0
        %4125 = vmatpush.bf16.msra.mxu0 0
        %4126 = vmatpush.bf16.msra.mxu0 0
        %4127 = vmatpush.bf16.msra.mxu0 0
        %4128 = vmatpush.bf16.msra.mxu0 0
        %4129 = vmatpush.bf16.msra.mxu0 0
        %4130 = vmatpush.bf16.msra.mxu0 %v4099
        %4131 = vmatmul.bf16.gmra.mxu0 %v4107
        %v4132 = vpop.f32.mrf.mxu0
        %v4133 = vadd.f32 0.0, %v4132
        %v4134 = vpop.f32.mrf.mxu0
        %v4135 = vadd.f32 0.0, %v4134
        %4136 = vdwg.mxu0
        %4137 = vmatpush.bf16.msra.mxu0 0
        %4138 = vmatpush.bf16.msra.mxu0 0
        %4139 = vmatpush.bf16.msra.mxu0 0
        %4140 = vmatpush.bf16.msra.mxu0 0
        %4141 = vmatpush.bf16.msra.mxu0 0
        %4142 = vmatpush.bf16.msra.mxu0 0
        %4143 = vmatpush.bf16.msra.mxu0 0
        %4144 = vmatpush.bf16.msra.mxu0 %v4100
        %4145 = vmatmul.bf16.gmra.mxu0 %v4107
        %v4146 = vpop.f32.mrf.mxu0
        %v4147 = vadd.f32 0.0, %v4146
        %v4148 = vpop.f32.mrf.mxu0
        %v4149 = vadd.f32 0.0, %v4148
        %4150 = vdwg.mxu0
        %4151 = vmatpush.bf16.msra.mxu0 0
        %4152 = vmatpush.bf16.msra.mxu0 0
        %4153 = vmatpush.bf16.msra.mxu0 0
        %4154 = vmatpush.bf16.msra.mxu0 0
        %4155 = vmatpush.bf16.msra.mxu0 0
        %4156 = vmatpush.bf16.msra.mxu0 0
        %4157 = vmatpush.bf16.msra.mxu0 0
        %4158 = vmatpush.bf16.msra.mxu0 %v4101
        %4159 = vmatmul.bf16.gmra.mxu0 %v4107
        %v4160 = vpop.f32.mrf.mxu0
        %v4161 = vadd.f32 0.0, %v4160
        %v4162 = vpop.f32.mrf.mxu0
        %v4163 = vadd.f32 0.0, %v4162
        %4164 = vdwg.mxu0
        %v4167 = vunpack.c.l.b16 %v4051
        %v4168 = vunpack.c.l.b16 %v4052
        %v4169 = vpack.c.b16 %v4168, %v4167
        %v4175 = vsel %vm296, %v4169, 0
        %4177 = vmatpush.bf16.msra.mxu0 0
        %4178 = vmatpush.bf16.msra.mxu0 0
        %4179 = vmatpush.bf16.msra.mxu0 0
        %4180 = vmatpush.bf16.msra.mxu0 0
        %4181 = vmatpush.bf16.msra.mxu0 0
        %4182 = vmatpush.bf16.msra.mxu0 0
        %4183 = vmatpush.bf16.msra.mxu0 0
        %4184 = vmatpush.bf16.msra.mxu0 %v4083
        %4185 = vmatmul.bf16.gmra.mxu0 %v4175
        %v4186 = vpop.f32.mrf.mxu0
        %v4187 = vadd.f32 %v4119, %v4186
        %v4188 = vpop.f32.mrf.mxu0
        %v4189 = vadd.f32 %v4121, %v4188
        %4190 = vdwg.mxu0
        %4191 = vmatpush.bf16.msra.mxu0 0
        %4192 = vmatpush.bf16.msra.mxu0 0
        %4193 = vmatpush.bf16.msra.mxu0 0
        %4194 = vmatpush.bf16.msra.mxu0 0
        %4195 = vmatpush.bf16.msra.mxu0 0
        %4196 = vmatpush.bf16.msra.mxu0 0
        %4197 = vmatpush.bf16.msra.mxu0 0
        %4198 = vmatpush.bf16.msra.mxu0 %v4084
        %4199 = vmatmul.bf16.gmra.mxu0 %v4175
        %v4200 = vpop.f32.mrf.mxu0
        %v4201 = vadd.f32 %v4133, %v4200
        %v4202 = vpop.f32.mrf.mxu0
        %v4203 = vadd.f32 %v4135, %v4202
        %4204 = vdwg.mxu0
        %4205 = vmatpush.bf16.msra.mxu0 0
        %4206 = vmatpush.bf16.msra.mxu0 0
        %4207 = vmatpush.bf16.msra.mxu0 0
        %4208 = vmatpush.bf16.msra.mxu0 0
        %4209 = vmatpush.bf16.msra.mxu0 0
        %4210 = vmatpush.bf16.msra.mxu0 0
        %4211 = vmatpush.bf16.msra.mxu0 0
        %4212 = vmatpush.bf16.msra.mxu0 %v4085
        %4213 = vmatmul.bf16.gmra.mxu0 %v4175
        %v4214 = vpop.f32.mrf.mxu0
        %v4215 = vadd.f32 %v4147, %v4214
        %v4216 = vpop.f32.mrf.mxu0
        %v4217 = vadd.f32 %v4149, %v4216
        %4218 = vdwg.mxu0
        %4219 = vmatpush.bf16.msra.mxu0 0
        %4220 = vmatpush.bf16.msra.mxu0 0
        %4221 = vmatpush.bf16.msra.mxu0 0
        %4222 = vmatpush.bf16.msra.mxu0 0
        %4223 = vmatpush.bf16.msra.mxu0 0
        %4224 = vmatpush.bf16.msra.mxu0 0
        %4225 = vmatpush.bf16.msra.mxu0 0
        %4226 = vmatpush.bf16.msra.mxu0 %v4086
        %4227 = vmatmul.bf16.gmra.mxu0 %v4175
        %v4228 = vpop.f32.mrf.mxu0
        %v4229 = vadd.f32 %v4161, %v4228
        %v4230 = vpop.f32.mrf.mxu0
        %v4231 = vadd.f32 %v4163, %v4230
        %4232 = vdwg.mxu0
        %s4233 = scalar_lea.vmem %s2, 16
        %v4234 = vld [vmem:[%s4233] sm:$0xf]
        %v4235 = vld [vmem:[%s4233 + $0x4] sm:$0xf]
        %v4238 = vunpack.c.l.b16 %v4234
        %v4239 = vunpack.c.l.b16 %v4235
        %v4240 = vpack.c.b16 %v4239, %v4238
        %4241 = vrot.lane.b32.xlu0 %v4083, 126
        %v4242 = vpop.permute.xlu0 %4241
        %4243 = vrot.lane.b32.xlu0 %v4084, 126
        %v4244 = vpop.permute.xlu0 %4243
        %4245 = vrot.lane.b32.xlu0 %v4085, 126
        %v4246 = vpop.permute.xlu0 %4245
        %4247 = vrot.lane.b32.xlu0 %v4086, 126
        %v4248 = vpop.permute.xlu0 %4247
        %4249 = vrot.lane.b32.xlu0 %v4087, 126
        %v4250 = vpop.permute.xlu0 %4249
        %v4251 = vsel %vm504, %v4242, %v4244
        %v4252 = vsel %vm504, %v4244, %v4246
        %v4253 = vsel %vm504, %v4246, %v4248
        %v4254 = vsel %vm504, %v4248, %v4250
        %v4260 = vsel %vm296, %v4240, 0
        %4262 = vmatpush.bf16.msra.mxu0 0
        %4263 = vmatpush.bf16.msra.mxu0 0
        %4264 = vmatpush.bf16.msra.mxu0 0
        %4265 = vmatpush.bf16.msra.mxu0 0
        %4266 = vmatpush.bf16.msra.mxu0 0
        %4267 = vmatpush.bf16.msra.mxu0 0
        %4268 = vmatpush.bf16.msra.mxu0 0
        %4269 = vmatpush.bf16.msra.mxu0 %v4251
        %4270 = vmatmul.bf16.gmra.mxu0 %v4260
        %v4271 = vpop.f32.mrf.mxu0
        %v4272 = vadd.f32 0.0, %v4271
        %v4273 = vpop.f32.mrf.mxu0
        %v4274 = vadd.f32 0.0, %v4273
        %4275 = vdwg.mxu0
        %4276 = vmatpush.bf16.msra.mxu0 0
        %4277 = vmatpush.bf16.msra.mxu0 0
        %4278 = vmatpush.bf16.msra.mxu0 0
        %4279 = vmatpush.bf16.msra.mxu0 0
        %4280 = vmatpush.bf16.msra.mxu0 0
        %4281 = vmatpush.bf16.msra.mxu0 0
        %4282 = vmatpush.bf16.msra.mxu0 0
        %4283 = vmatpush.bf16.msra.mxu0 %v4252
        %4284 = vmatmul.bf16.gmra.mxu0 %v4260
        %v4285 = vpop.f32.mrf.mxu0
        %v4286 = vadd.f32 0.0, %v4285
        %v4287 = vpop.f32.mrf.mxu0
        %v4288 = vadd.f32 0.0, %v4287
        %4289 = vdwg.mxu0
        %4290 = vmatpush.bf16.msra.mxu0 0
        %4291 = vmatpush.bf16.msra.mxu0 0
        %4292 = vmatpush.bf16.msra.mxu0 0
        %4293 = vmatpush.bf16.msra.mxu0 0
        %4294 = vmatpush.bf16.msra.mxu0 0
        %4295 = vmatpush.bf16.msra.mxu0 0
        %4296 = vmatpush.bf16.msra.mxu0 0
        %4297 = vmatpush.bf16.msra.mxu0 %v4253
        %4298 = vmatmul.bf16.gmra.mxu0 %v4260
        %v4299 = vpop.f32.mrf.mxu0
        %v4300 = vadd.f32 0.0, %v4299
        %v4301 = vpop.f32.mrf.mxu0
        %v4302 = vadd.f32 0.0, %v4301
        %4303 = vdwg.mxu0
        %4304 = vmatpush.bf16.msra.mxu0 0
        %4305 = vmatpush.bf16.msra.mxu0 0
        %4306 = vmatpush.bf16.msra.mxu0 0
        %4307 = vmatpush.bf16.msra.mxu0 0
        %4308 = vmatpush.bf16.msra.mxu0 0
        %4309 = vmatpush.bf16.msra.mxu0 0
        %4310 = vmatpush.bf16.msra.mxu0 0
        %4311 = vmatpush.bf16.msra.mxu0 %v4254
        %4312 = vmatmul.bf16.gmra.mxu0 %v4260
        %v4313 = vpop.f32.mrf.mxu0
        %v4314 = vadd.f32 0.0, %v4313
        %v4315 = vpop.f32.mrf.mxu0
        %v4316 = vadd.f32 0.0, %v4315
        %4317 = vdwg.mxu0
        %v4318 = vadd.f32 %v4187, %v4272
        %v4319 = vadd.f32 %v4201, %v4286
        %v4320 = vadd.f32 %v4215, %v4300
        %v4321 = vadd.f32 %v4229, %v4314
        %v4322 = vadd.f32 %v4189, %v4274
        %v4323 = vadd.f32 %v4203, %v4288
        %v4324 = vadd.f32 %v4217, %v4302
        %v4325 = vadd.f32 %v4231, %v4316
        %s4326 = scalar_lea.vmem %s2, 24
        %v4327 = vld [vmem:[%s4326] sm:$0xf]
        %v4328 = vld [vmem:[%s4326 + $0x4] sm:$0xf]
        %v4331 = vunpack.c.l.b16 %v4327
        %v4332 = vunpack.c.l.b16 %v4328
        %v4333 = vpack.c.b16 %v4332, %v4331
        %4334 = vrot.lane.b32.xlu0 %v4083, 118
        %v4335 = vpop.permute.xlu0 %4334
        %4336 = vrot.lane.b32.xlu0 %v4084, 118
        %v4337 = vpop.permute.xlu0 %4336
        %4338 = vrot.lane.b32.xlu0 %v4085, 118
        %v4339 = vpop.permute.xlu0 %4338
        %4340 = vrot.lane.b32.xlu0 %v4086, 118
        %v4341 = vpop.permute.xlu0 %4340
        %4342 = vrot.lane.b32.xlu0 %v4087, 118
        %v4343 = vpop.permute.xlu0 %4342
        %v4344 = vsel %vm638, %v4335, %v4337
        %v4345 = vsel %vm638, %v4337, %v4339
        %v4346 = vsel %vm638, %v4339, %v4341
        %v4347 = vsel %vm638, %v4341, %v4343
        %v4353 = vsel %vm296, %v4333, 0
        %4355 = vmatpush.bf16.msra.mxu0 0
        %4356 = vmatpush.bf16.msra.mxu0 0
        %4357 = vmatpush.bf16.msra.mxu0 0
        %4358 = vmatpush.bf16.msra.mxu0 0
        %4359 = vmatpush.bf16.msra.mxu0 0
        %4360 = vmatpush.bf16.msra.mxu0 0
        %4361 = vmatpush.bf16.msra.mxu0 0
        %4362 = vmatpush.bf16.msra.mxu0 %v4344
        %4363 = vmatmul.bf16.gmra.mxu0 %v4353
        %v4364 = vpop.f32.mrf.mxu0
        %v4365 = vadd.f32 0.0, %v4364
        %v4366 = vpop.f32.mrf.mxu0
        %v4367 = vadd.f32 0.0, %v4366
        %4368 = vdwg.mxu0
        %4369 = vmatpush.bf16.msra.mxu0 0
        %4370 = vmatpush.bf16.msra.mxu0 0
        %4371 = vmatpush.bf16.msra.mxu0 0
        %4372 = vmatpush.bf16.msra.mxu0 0
        %4373 = vmatpush.bf16.msra.mxu0 0
        %4374 = vmatpush.bf16.msra.mxu0 0
        %4375 = vmatpush.bf16.msra.mxu0 0
        %4376 = vmatpush.bf16.msra.mxu0 %v4345
        %4377 = vmatmul.bf16.gmra.mxu0 %v4353
        %v4378 = vpop.f32.mrf.mxu0
        %v4379 = vadd.f32 0.0, %v4378
        %v4380 = vpop.f32.mrf.mxu0
        %v4381 = vadd.f32 0.0, %v4380
        %4382 = vdwg.mxu0
        %4383 = vmatpush.bf16.msra.mxu0 0
        %4384 = vmatpush.bf16.msra.mxu0 0
        %4385 = vmatpush.bf16.msra.mxu0 0
        %4386 = vmatpush.bf16.msra.mxu0 0
        %4387 = vmatpush.bf16.msra.mxu0 0
        %4388 = vmatpush.bf16.msra.mxu0 0
        %4389 = vmatpush.bf16.msra.mxu0 0
        %4390 = vmatpush.bf16.msra.mxu0 %v4346
        %4391 = vmatmul.bf16.gmra.mxu0 %v4353
        %v4392 = vpop.f32.mrf.mxu0
        %v4393 = vadd.f32 0.0, %v4392
        %v4394 = vpop.f32.mrf.mxu0
        %v4395 = vadd.f32 0.0, %v4394
        %4396 = vdwg.mxu0
        %4397 = vmatpush.bf16.msra.mxu0 0
        %4398 = vmatpush.bf16.msra.mxu0 0
        %4399 = vmatpush.bf16.msra.mxu0 0
        %4400 = vmatpush.bf16.msra.mxu0 0
        %4401 = vmatpush.bf16.msra.mxu0 0
        %4402 = vmatpush.bf16.msra.mxu0 0
        %4403 = vmatpush.bf16.msra.mxu0 0
        %4404 = vmatpush.bf16.msra.mxu0 %v4347
        %4405 = vmatmul.bf16.gmra.mxu0 %v4353
        %v4406 = vpop.f32.mrf.mxu0
        %v4407 = vadd.f32 0.0, %v4406
        %v4408 = vpop.f32.mrf.mxu0
        %v4409 = vadd.f32 0.0, %v4408
        %4410 = vdwg.mxu0
        %v4411 = vadd.f32 %v4318, %v4365
        %v4412 = vadd.f32 %v4319, %v4379
        %v4413 = vadd.f32 %v4320, %v4393
        %v4414 = vadd.f32 %v4321, %v4407
        %v4415 = vadd.f32 %v4322, %v4367
        %v4416 = vadd.f32 %v4323, %v4381
        %v4417 = vadd.f32 %v4324, %v4395
        %v4418 = vadd.f32 %v4325, %v4409
        %s4419 = scalar_lea.vmem %s2, 32
        %v4420 = vld [vmem:[%s4419] sm:$0xf]
        %v4421 = vld [vmem:[%s4419 + $0x4] sm:$0xf]
        %v4424 = vunpack.c.l.b16 %v4420
        %v4425 = vunpack.c.l.b16 %v4421
        %v4426 = vpack.c.b16 %v4425, %v4424
        %4427 = vrot.lane.b32.xlu0 %v4083, 117
        %v4428 = vpop.permute.xlu0 %4427
        %4429 = vrot.lane.b32.xlu0 %v4084, 117
        %v4430 = vpop.permute.xlu0 %4429
        %4431 = vrot.lane.b32.xlu0 %v4085, 117
        %v4432 = vpop.permute.xlu0 %4431
        %4433 = vrot.lane.b32.xlu0 %v4086, 117
        %v4434 = vpop.permute.xlu0 %4433
        %4435 = vrot.lane.b32.xlu0 %v4087, 117
        %v4436 = vpop.permute.xlu0 %4435
        %v4437 = vsel %vm772, %v4428, %v4430
        %v4438 = vsel %vm772, %v4430, %v4432
        %v4439 = vsel %vm772, %v4432, %v4434
        %v4440 = vsel %vm772, %v4434, %v4436
        %v4446 = vsel %vm296, %v4426, 0
        %4448 = vmatpush.bf16.msra.mxu0 0
        %4449 = vmatpush.bf16.msra.mxu0 0
        %4450 = vmatpush.bf16.msra.mxu0 0
        %4451 = vmatpush.bf16.msra.mxu0 0
        %4452 = vmatpush.bf16.msra.mxu0 0
        %4453 = vmatpush.bf16.msra.mxu0 0
        %4454 = vmatpush.bf16.msra.mxu0 0
        %4455 = vmatpush.bf16.msra.mxu0 %v4437
        %4456 = vmatmul.bf16.gmra.mxu0 %v4446
        %v4457 = vpop.f32.mrf.mxu0
        %v4458 = vadd.f32 0.0, %v4457
        %v4459 = vpop.f32.mrf.mxu0
        %v4460 = vadd.f32 0.0, %v4459
        %4461 = vdwg.mxu0
        %4462 = vmatpush.bf16.msra.mxu0 0
        %4463 = vmatpush.bf16.msra.mxu0 0
        %4464 = vmatpush.bf16.msra.mxu0 0
        %4465 = vmatpush.bf16.msra.mxu0 0
        %4466 = vmatpush.bf16.msra.mxu0 0
        %4467 = vmatpush.bf16.msra.mxu0 0
        %4468 = vmatpush.bf16.msra.mxu0 0
        %4469 = vmatpush.bf16.msra.mxu0 %v4438
        %4470 = vmatmul.bf16.gmra.mxu0 %v4446
        %v4471 = vpop.f32.mrf.mxu0
        %v4472 = vadd.f32 0.0, %v4471
        %v4473 = vpop.f32.mrf.mxu0
        %v4474 = vadd.f32 0.0, %v4473
        %4475 = vdwg.mxu0
        %4476 = vmatpush.bf16.msra.mxu0 0
        %4477 = vmatpush.bf16.msra.mxu0 0
        %4478 = vmatpush.bf16.msra.mxu0 0
        %4479 = vmatpush.bf16.msra.mxu0 0
        %4480 = vmatpush.bf16.msra.mxu0 0
        %4481 = vmatpush.bf16.msra.mxu0 0
        %4482 = vmatpush.bf16.msra.mxu0 0
        %4483 = vmatpush.bf16.msra.mxu0 %v4439
        %4484 = vmatmul.bf16.gmra.mxu0 %v4446
        %v4485 = vpop.f32.mrf.mxu0
        %v4486 = vadd.f32 0.0, %v4485
        %v4487 = vpop.f32.mrf.mxu0
        %v4488 = vadd.f32 0.0, %v4487
        %4489 = vdwg.mxu0
        %4490 = vmatpush.bf16.msra.mxu0 0
        %4491 = vmatpush.bf16.msra.mxu0 0
        %4492 = vmatpush.bf16.msra.mxu0 0
        %4493 = vmatpush.bf16.msra.mxu0 0
        %4494 = vmatpush.bf16.msra.mxu0 0
        %4495 = vmatpush.bf16.msra.mxu0 0
        %4496 = vmatpush.bf16.msra.mxu0 0
        %4497 = vmatpush.bf16.msra.mxu0 %v4440
        %4498 = vmatmul.bf16.gmra.mxu0 %v4446
        %v4499 = vpop.f32.mrf.mxu0
        %v4500 = vadd.f32 0.0, %v4499
        %v4501 = vpop.f32.mrf.mxu0
        %v4502 = vadd.f32 0.0, %v4501
        %4503 = vdwg.mxu0
        %v4504 = vadd.f32 %v4411, %v4458
        %v4505 = vadd.f32 %v4412, %v4472
        %v4506 = vadd.f32 %v4413, %v4486
        %v4507 = vadd.f32 %v4414, %v4500
        %v4508 = vadd.f32 %v4415, %v4460
        %v4509 = vadd.f32 %v4416, %v4474
        %v4510 = vadd.f32 %v4417, %v4488
        %v4511 = vadd.f32 %v4418, %v4502
        %s4512 = scalar_lea.vmem %s2, 40
        %v4513 = vld [vmem:[%s4512] sm:$0xf]
        %v4514 = vld [vmem:[%s4512 + $0x4] sm:$0xf]
        %v4517 = vunpack.c.l.b16 %v4513
        %v4518 = vunpack.c.l.b16 %v4514
        %v4519 = vpack.c.b16 %v4518, %v4517
        %4520 = vrot.lane.b32.xlu0 %v4083, 116
        %v4521 = vpop.permute.xlu0 %4520
        %4522 = vrot.lane.b32.xlu0 %v4084, 116
        %v4523 = vpop.permute.xlu0 %4522
        %4524 = vrot.lane.b32.xlu0 %v4085, 116
        %v4525 = vpop.permute.xlu0 %4524
        %4526 = vrot.lane.b32.xlu0 %v4086, 116
        %v4527 = vpop.permute.xlu0 %4526
        %4528 = vrot.lane.b32.xlu0 %v4087, 116
        %v4529 = vpop.permute.xlu0 %4528
        %v4530 = vsel %vm906, %v4521, %v4523
        %v4531 = vsel %vm906, %v4523, %v4525
        %v4532 = vsel %vm906, %v4525, %v4527
        %v4533 = vsel %vm906, %v4527, %v4529
        %v4539 = vsel %vm296, %v4519, 0
        %4541 = vmatpush.bf16.msra.mxu0 0
        %4542 = vmatpush.bf16.msra.mxu0 0
        %4543 = vmatpush.bf16.msra.mxu0 0
        %4544 = vmatpush.bf16.msra.mxu0 0
        %4545 = vmatpush.bf16.msra.mxu0 0
        %4546 = vmatpush.bf16.msra.mxu0 0
        %4547 = vmatpush.bf16.msra.mxu0 0
        %4548 = vmatpush.bf16.msra.mxu0 %v4530
        %4549 = vmatmul.bf16.gmra.mxu0 %v4539
        %v4550 = vpop.f32.mrf.mxu0
        %v4551 = vadd.f32 0.0, %v4550
        %v4552 = vpop.f32.mrf.mxu0
        %v4553 = vadd.f32 0.0, %v4552
        %4554 = vdwg.mxu0
        %4555 = vmatpush.bf16.msra.mxu0 0
        %4556 = vmatpush.bf16.msra.mxu0 0
        %4557 = vmatpush.bf16.msra.mxu0 0
        %4558 = vmatpush.bf16.msra.mxu0 0
        %4559 = vmatpush.bf16.msra.mxu0 0
        %4560 = vmatpush.bf16.msra.mxu0 0
        %4561 = vmatpush.bf16.msra.mxu0 0
        %4562 = vmatpush.bf16.msra.mxu0 %v4531
        %4563 = vmatmul.bf16.gmra.mxu0 %v4539
        %v4564 = vpop.f32.mrf.mxu0
        %v4565 = vadd.f32 0.0, %v4564
        %v4566 = vpop.f32.mrf.mxu0
        %v4567 = vadd.f32 0.0, %v4566
        %4568 = vdwg.mxu0
        %4569 = vmatpush.bf16.msra.mxu0 0
        %4570 = vmatpush.bf16.msra.mxu0 0
        %4571 = vmatpush.bf16.msra.mxu0 0
        %4572 = vmatpush.bf16.msra.mxu0 0
        %4573 = vmatpush.bf16.msra.mxu0 0
        %4574 = vmatpush.bf16.msra.mxu0 0
        %4575 = vmatpush.bf16.msra.mxu0 0
        %4576 = vmatpush.bf16.msra.mxu0 %v4532
        %4577 = vmatmul.bf16.gmra.mxu0 %v4539
        %v4578 = vpop.f32.mrf.mxu0
        %v4579 = vadd.f32 0.0, %v4578
        %v4580 = vpop.f32.mrf.mxu0
        %v4581 = vadd.f32 0.0, %v4580
        %4582 = vdwg.mxu0
        %4583 = vmatpush.bf16.msra.mxu0 0
        %4584 = vmatpush.bf16.msra.mxu0 0
        %4585 = vmatpush.bf16.msra.mxu0 0
        %4586 = vmatpush.bf16.msra.mxu0 0
        %4587 = vmatpush.bf16.msra.mxu0 0
        %4588 = vmatpush.bf16.msra.mxu0 0
        %4589 = vmatpush.bf16.msra.mxu0 0
        %4590 = vmatpush.bf16.msra.mxu0 %v4533
        %4591 = vmatmul.bf16.gmra.mxu0 %v4539
        %v4592 = vpop.f32.mrf.mxu0
        %v4593 = vadd.f32 0.0, %v4592
        %v4594 = vpop.f32.mrf.mxu0
        %v4595 = vadd.f32 0.0, %v4594
        %4596 = vdwg.mxu0
        %v4597 = vadd.f32 %v4504, %v4551
        %v4598 = vadd.f32 %v4505, %v4565
        %v4599 = vadd.f32 %v4506, %v4579
        %v4600 = vadd.f32 %v4507, %v4593
        %v4601 = vadd.f32 %v4508, %v4553
        %v4602 = vadd.f32 %v4509, %v4567
        %v4603 = vadd.f32 %v4510, %v4581
        %v4604 = vadd.f32 %v4511, %v4595
        %s4605 = scalar_lea.vmem %s2, 48
        %v4606 = vld [vmem:[%s4605] sm:$0xf]
        %v4607 = vld [vmem:[%s4605 + $0x4] sm:$0xf]
        %v4610 = vunpack.c.l.b16 %v4606
        %v4611 = vunpack.c.l.b16 %v4607
        %v4612 = vpack.c.b16 %v4611, %v4610
        %4613 = vrot.lane.b32.xlu0 %v4083, 108
        %v4614 = vpop.permute.xlu0 %4613
        %4615 = vrot.lane.b32.xlu0 %v4084, 108
        %v4616 = vpop.permute.xlu0 %4615
        %4617 = vrot.lane.b32.xlu0 %v4085, 108
        %v4618 = vpop.permute.xlu0 %4617
        %4619 = vrot.lane.b32.xlu0 %v4086, 108
        %v4620 = vpop.permute.xlu0 %4619
        %4621 = vrot.lane.b32.xlu0 %v4087, 108
        %v4622 = vpop.permute.xlu0 %4621
        %v4623 = vsel %vm1040, %v4614, %v4616
        %v4624 = vsel %vm1040, %v4616, %v4618
        %v4625 = vsel %vm1040, %v4618, %v4620
        %v4626 = vsel %vm1040, %v4620, %v4622
        %v4632 = vsel %vm296, %v4612, 0
        %4634 = vmatpush.bf16.msra.mxu0 0
        %4635 = vmatpush.bf16.msra.mxu0 0
        %4636 = vmatpush.bf16.msra.mxu0 0
        %4637 = vmatpush.bf16.msra.mxu0 0
        %4638 = vmatpush.bf16.msra.mxu0 0
        %4639 = vmatpush.bf16.msra.mxu0 0
        %4640 = vmatpush.bf16.msra.mxu0 0
        %4641 = vmatpush.bf16.msra.mxu0 %v4623
        %4642 = vmatmul.bf16.gmra.mxu0 %v4632
        %v4643 = vpop.f32.mrf.mxu0
        %v4644 = vadd.f32 0.0, %v4643
        %v4645 = vpop.f32.mrf.mxu0
        %v4646 = vadd.f32 0.0, %v4645
        %4647 = vdwg.mxu0
        %4648 = vmatpush.bf16.msra.mxu0 0
        %4649 = vmatpush.bf16.msra.mxu0 0
        %4650 = vmatpush.bf16.msra.mxu0 0
        %4651 = vmatpush.bf16.msra.mxu0 0
        %4652 = vmatpush.bf16.msra.mxu0 0
        %4653 = vmatpush.bf16.msra.mxu0 0
        %4654 = vmatpush.bf16.msra.mxu0 0
        %4655 = vmatpush.bf16.msra.mxu0 %v4624
        %4656 = vmatmul.bf16.gmra.mxu0 %v4632
        %v4657 = vpop.f32.mrf.mxu0
        %v4658 = vadd.f32 0.0, %v4657
        %v4659 = vpop.f32.mrf.mxu0
        %v4660 = vadd.f32 0.0, %v4659
        %4661 = vdwg.mxu0
        %4662 = vmatpush.bf16.msra.mxu0 0
        %4663 = vmatpush.bf16.msra.mxu0 0
        %4664 = vmatpush.bf16.msra.mxu0 0
        %4665 = vmatpush.bf16.msra.mxu0 0
        %4666 = vmatpush.bf16.msra.mxu0 0
        %4667 = vmatpush.bf16.msra.mxu0 0
        %4668 = vmatpush.bf16.msra.mxu0 0
        %4669 = vmatpush.bf16.msra.mxu0 %v4625
        %4670 = vmatmul.bf16.gmra.mxu0 %v4632
        %v4671 = vpop.f32.mrf.mxu0
        %v4672 = vadd.f32 0.0, %v4671
        %v4673 = vpop.f32.mrf.mxu0
        %v4674 = vadd.f32 0.0, %v4673
        %4675 = vdwg.mxu0
        %4676 = vmatpush.bf16.msra.mxu0 0
        %4677 = vmatpush.bf16.msra.mxu0 0
        %4678 = vmatpush.bf16.msra.mxu0 0
        %4679 = vmatpush.bf16.msra.mxu0 0
        %4680 = vmatpush.bf16.msra.mxu0 0
        %4681 = vmatpush.bf16.msra.mxu0 0
        %4682 = vmatpush.bf16.msra.mxu0 0
        %4683 = vmatpush.bf16.msra.mxu0 %v4626
        %4684 = vmatmul.bf16.gmra.mxu0 %v4632
        %v4685 = vpop.f32.mrf.mxu0
        %v4686 = vadd.f32 0.0, %v4685
        %v4687 = vpop.f32.mrf.mxu0
        %v4688 = vadd.f32 0.0, %v4687
        %4689 = vdwg.mxu0
        %v4690 = vadd.f32 %v4597, %v4644
        %v4691 = vadd.f32 %v4598, %v4658
        %v4692 = vadd.f32 %v4599, %v4672
        %v4693 = vadd.f32 %v4600, %v4686
        %v4694 = vadd.f32 %v4601, %v4646
        %v4695 = vadd.f32 %v4602, %v4660
        %v4696 = vadd.f32 %v4603, %v4674
        %v4697 = vadd.f32 %v4604, %v4688
        %s4698 = scalar_lea.vmem %s2, 56
        %v4699 = vld [vmem:[%s4698] sm:$0xf]
        %v4700 = vld [vmem:[%s4698 + $0x4] sm:$0xf]
        %v4703 = vunpack.c.l.b16 %v4699
        %v4704 = vunpack.c.l.b16 %v4700
        %v4705 = vpack.c.b16 %v4704, %v4703
        %4706 = vrot.lane.b32.xlu0 %v4083, 107
        %v4707 = vpop.permute.xlu0 %4706
        %4708 = vrot.lane.b32.xlu0 %v4084, 107
        %v4709 = vpop.permute.xlu0 %4708
        %4710 = vrot.lane.b32.xlu0 %v4085, 107
        %v4711 = vpop.permute.xlu0 %4710
        %4712 = vrot.lane.b32.xlu0 %v4086, 107
        %v4713 = vpop.permute.xlu0 %4712
        %4714 = vrot.lane.b32.xlu0 %v4087, 107
        %v4715 = vpop.permute.xlu0 %4714
        %v4716 = vsel %vm1174, %v4707, %v4709
        %v4717 = vsel %vm1174, %v4709, %v4711
        %v4718 = vsel %vm1174, %v4711, %v4713
        %v4719 = vsel %vm1174, %v4713, %v4715
        %v4725 = vsel %vm296, %v4705, 0
        %4727 = vmatpush.bf16.msra.mxu0 0
        %4728 = vmatpush.bf16.msra.mxu0 0
        %4729 = vmatpush.bf16.msra.mxu0 0
        %4730 = vmatpush.bf16.msra.mxu0 0
        %4731 = vmatpush.bf16.msra.mxu0 0
        %4732 = vmatpush.bf16.msra.mxu0 0
        %4733 = vmatpush.bf16.msra.mxu0 0
        %4734 = vmatpush.bf16.msra.mxu0 %v4716
        %4735 = vmatmul.bf16.gmra.mxu0 %v4725
        %v4736 = vpop.f32.mrf.mxu0
        %v4737 = vadd.f32 0.0, %v4736
        %v4738 = vpop.f32.mrf.mxu0
        %v4739 = vadd.f32 0.0, %v4738
        %4740 = vdwg.mxu0
        %4741 = vmatpush.bf16.msra.mxu0 0
        %4742 = vmatpush.bf16.msra.mxu0 0
        %4743 = vmatpush.bf16.msra.mxu0 0
        %4744 = vmatpush.bf16.msra.mxu0 0
        %4745 = vmatpush.bf16.msra.mxu0 0
        %4746 = vmatpush.bf16.msra.mxu0 0
        %4747 = vmatpush.bf16.msra.mxu0 0
        %4748 = vmatpush.bf16.msra.mxu0 %v4717
        %4749 = vmatmul.bf16.gmra.mxu0 %v4725
        %v4750 = vpop.f32.mrf.mxu0
        %v4751 = vadd.f32 0.0, %v4750
        %v4752 = vpop.f32.mrf.mxu0
        %v4753 = vadd.f32 0.0, %v4752
        %4754 = vdwg.mxu0
        %4755 = vmatpush.bf16.msra.mxu0 0
        %4756 = vmatpush.bf16.msra.mxu0 0
        %4757 = vmatpush.bf16.msra.mxu0 0
        %4758 = vmatpush.bf16.msra.mxu0 0
        %4759 = vmatpush.bf16.msra.mxu0 0
        %4760 = vmatpush.bf16.msra.mxu0 0
        %4761 = vmatpush.bf16.msra.mxu0 0
        %4762 = vmatpush.bf16.msra.mxu0 %v4718
        %4763 = vmatmul.bf16.gmra.mxu0 %v4725
        %v4764 = vpop.f32.mrf.mxu0
        %v4765 = vadd.f32 0.0, %v4764
        %v4766 = vpop.f32.mrf.mxu0
        %v4767 = vadd.f32 0.0, %v4766
        %4768 = vdwg.mxu0
        %4769 = vmatpush.bf16.msra.mxu0 0
        %4770 = vmatpush.bf16.msra.mxu0 0
        %4771 = vmatpush.bf16.msra.mxu0 0
        %4772 = vmatpush.bf16.msra.mxu0 0
        %4773 = vmatpush.bf16.msra.mxu0 0
        %4774 = vmatpush.bf16.msra.mxu0 0
        %4775 = vmatpush.bf16.msra.mxu0 0
        %4776 = vmatpush.bf16.msra.mxu0 %v4719
        %4777 = vmatmul.bf16.gmra.mxu0 %v4725
        %v4778 = vpop.f32.mrf.mxu0
        %v4779 = vadd.f32 0.0, %v4778
        %v4780 = vpop.f32.mrf.mxu0
        %v4781 = vadd.f32 0.0, %v4780
        %4782 = vdwg.mxu0
        %v4783 = vadd.f32 %v4690, %v4737
        %v4784 = vadd.f32 %v4691, %v4751
        %v4785 = vadd.f32 %v4692, %v4765
        %v4786 = vadd.f32 %v4693, %v4779
        %v4787 = vadd.f32 %v4694, %v4739
        %v4788 = vadd.f32 %v4695, %v4753
        %v4789 = vadd.f32 %v4696, %v4767
        %v4790 = vadd.f32 %v4697, %v4781
        %s4791 = scalar_lea.vmem %s2, 64
        %v4792 = vld [vmem:[%s4791] sm:$0xf]
        %v4793 = vld [vmem:[%s4791 + $0x4] sm:$0xf]
        %v4796 = vunpack.c.l.b16 %v4792
        %v4797 = vunpack.c.l.b16 %v4793
        %v4798 = vpack.c.b16 %v4797, %v4796
        %4799 = vrot.lane.b32.xlu0 %v4083, 106
        %v4800 = vpop.permute.xlu0 %4799
        %4801 = vrot.lane.b32.xlu0 %v4084, 106
        %v4802 = vpop.permute.xlu0 %4801
        %4803 = vrot.lane.b32.xlu0 %v4085, 106
        %v4804 = vpop.permute.xlu0 %4803
        %4805 = vrot.lane.b32.xlu0 %v4086, 106
        %v4806 = vpop.permute.xlu0 %4805
        %4807 = vrot.lane.b32.xlu0 %v4087, 106
        %v4808 = vpop.permute.xlu0 %4807
        %v4809 = vsel %vm1308, %v4800, %v4802
        %v4810 = vsel %vm1308, %v4802, %v4804
        %v4811 = vsel %vm1308, %v4804, %v4806
        %v4812 = vsel %vm1308, %v4806, %v4808
        %v4818 = vsel %vm296, %v4798, 0
        %4820 = vmatpush.bf16.msra.mxu0 0
        %4821 = vmatpush.bf16.msra.mxu0 0
        %4822 = vmatpush.bf16.msra.mxu0 0
        %4823 = vmatpush.bf16.msra.mxu0 0
        %4824 = vmatpush.bf16.msra.mxu0 0
        %4825 = vmatpush.bf16.msra.mxu0 0
        %4826 = vmatpush.bf16.msra.mxu0 0
        %4827 = vmatpush.bf16.msra.mxu0 %v4809
        %4828 = vmatmul.bf16.gmra.mxu0 %v4818
        %v4829 = vpop.f32.mrf.mxu0
        %v4830 = vadd.f32 0.0, %v4829
        %v4831 = vpop.f32.mrf.mxu0
        %v4832 = vadd.f32 0.0, %v4831
        %4833 = vdwg.mxu0
        %4834 = vmatpush.bf16.msra.mxu0 0
        %4835 = vmatpush.bf16.msra.mxu0 0
        %4836 = vmatpush.bf16.msra.mxu0 0
        %4837 = vmatpush.bf16.msra.mxu0 0
        %4838 = vmatpush.bf16.msra.mxu0 0
        %4839 = vmatpush.bf16.msra.mxu0 0
        %4840 = vmatpush.bf16.msra.mxu0 0
        %4841 = vmatpush.bf16.msra.mxu0 %v4810
        %4842 = vmatmul.bf16.gmra.mxu0 %v4818
        %v4843 = vpop.f32.mrf.mxu0
        %v4844 = vadd.f32 0.0, %v4843
        %v4845 = vpop.f32.mrf.mxu0
        %v4846 = vadd.f32 0.0, %v4845
        %4847 = vdwg.mxu0
        %4848 = vmatpush.bf16.msra.mxu0 0
        %4849 = vmatpush.bf16.msra.mxu0 0
        %4850 = vmatpush.bf16.msra.mxu0 0
        %4851 = vmatpush.bf16.msra.mxu0 0
        %4852 = vmatpush.bf16.msra.mxu0 0
        %4853 = vmatpush.bf16.msra.mxu0 0
        %4854 = vmatpush.bf16.msra.mxu0 0
        %4855 = vmatpush.bf16.msra.mxu0 %v4811
        %4856 = vmatmul.bf16.gmra.mxu0 %v4818
        %v4857 = vpop.f32.mrf.mxu0
        %v4858 = vadd.f32 0.0, %v4857
        %v4859 = vpop.f32.mrf.mxu0
        %v4860 = vadd.f32 0.0, %v4859
        %4861 = vdwg.mxu0
        %4862 = vmatpush.bf16.msra.mxu0 0
        %4863 = vmatpush.bf16.msra.mxu0 0
        %4864 = vmatpush.bf16.msra.mxu0 0
        %4865 = vmatpush.bf16.msra.mxu0 0
        %4866 = vmatpush.bf16.msra.mxu0 0
        %4867 = vmatpush.bf16.msra.mxu0 0
        %4868 = vmatpush.bf16.msra.mxu0 0
        %4869 = vmatpush.bf16.msra.mxu0 %v4812
        %4870 = vmatmul.bf16.gmra.mxu0 %v4818
        %v4871 = vpop.f32.mrf.mxu0
        %v4872 = vadd.f32 0.0, %v4871
        %v4873 = vpop.f32.mrf.mxu0
        %v4874 = vadd.f32 0.0, %v4873
        %4875 = vdwg.mxu0
        %v4876 = vadd.f32 %v4783, %v4830
        %v4877 = vadd.f32 %v4784, %v4844
        %v4878 = vadd.f32 %v4785, %v4858
        %v4879 = vadd.f32 %v4786, %v4872
        %v4880 = vadd.f32 %v4787, %v4832
        %v4881 = vadd.f32 %v4788, %v4846
        %v4882 = vadd.f32 %v4789, %v4860
        %v4883 = vadd.f32 %v4790, %v4874
        %s4884 = scalar_lea.vmem %s2, 72
        %v4885 = vld [vmem:[%s4884] sm:$0xf]
        %v4886 = vld [vmem:[%s4884 + $0x4] sm:$0xf]
        %v4889 = vunpack.c.l.b16 %v4885
        %v4890 = vunpack.c.l.b16 %v4886
        %v4891 = vpack.c.b16 %v4890, %v4889
        %4892 = vrot.lane.b32.xlu0 %v4083, 28
        %v4893 = vpop.permute.xlu0 %4892
        %4894 = vrot.lane.b32.xlu0 %v4084, 28
        %v4895 = vpop.permute.xlu0 %4894
        %4896 = vrot.lane.b32.xlu0 %v4085, 28
        %v4897 = vpop.permute.xlu0 %4896
        %4898 = vrot.lane.b32.xlu0 %v4086, 28
        %v4899 = vpop.permute.xlu0 %4898
        %4900 = vrot.lane.b32.xlu0 %v4087, 28
        %v4901 = vpop.permute.xlu0 %4900
        %v4902 = vsel %vm1442, %v4893, %v4895
        %v4903 = vsel %vm1442, %v4895, %v4897
        %v4904 = vsel %vm1442, %v4897, %v4899
        %v4905 = vsel %vm1442, %v4899, %v4901
        %v4911 = vsel %vm296, %v4891, 0
        %4913 = vmatpush.bf16.msra.mxu0 0
        %4914 = vmatpush.bf16.msra.mxu0 0
        %4915 = vmatpush.bf16.msra.mxu0 0
        %4916 = vmatpush.bf16.msra.mxu0 0
        %4917 = vmatpush.bf16.msra.mxu0 0
        %4918 = vmatpush.bf16.msra.mxu0 0
        %4919 = vmatpush.bf16.msra.mxu0 0
        %4920 = vmatpush.bf16.msra.mxu0 %v4902
        %4921 = vmatmul.bf16.gmra.mxu0 %v4911
        %v4922 = vpop.f32.mrf.mxu0
        %v4923 = vadd.f32 0.0, %v4922
        %v4924 = vpop.f32.mrf.mxu0
        %v4925 = vadd.f32 0.0, %v4924
        %4926 = vdwg.mxu0
        %4927 = vmatpush.bf16.msra.mxu0 0
        %4928 = vmatpush.bf16.msra.mxu0 0
        %4929 = vmatpush.bf16.msra.mxu0 0
        %4930 = vmatpush.bf16.msra.mxu0 0
        %4931 = vmatpush.bf16.msra.mxu0 0
        %4932 = vmatpush.bf16.msra.mxu0 0
        %4933 = vmatpush.bf16.msra.mxu0 0
        %4934 = vmatpush.bf16.msra.mxu0 %v4903
        %4935 = vmatmul.bf16.gmra.mxu0 %v4911
        %v4936 = vpop.f32.mrf.mxu0
        %v4937 = vadd.f32 0.0, %v4936
        %v4938 = vpop.f32.mrf.mxu0
        %v4939 = vadd.f32 0.0, %v4938
        %4940 = vdwg.mxu0
        %4941 = vmatpush.bf16.msra.mxu0 0
        %4942 = vmatpush.bf16.msra.mxu0 0
        %4943 = vmatpush.bf16.msra.mxu0 0
        %4944 = vmatpush.bf16.msra.mxu0 0
        %4945 = vmatpush.bf16.msra.mxu0 0
        %4946 = vmatpush.bf16.msra.mxu0 0
        %4947 = vmatpush.bf16.msra.mxu0 0
        %4948 = vmatpush.bf16.msra.mxu0 %v4904
        %4949 = vmatmul.bf16.gmra.mxu0 %v4911
        %v4950 = vpop.f32.mrf.mxu0
        %v4951 = vadd.f32 0.0, %v4950
        %v4952 = vpop.f32.mrf.mxu0
        %v4953 = vadd.f32 0.0, %v4952
        %4954 = vdwg.mxu0
        %4955 = vmatpush.bf16.msra.mxu0 0
        %4956 = vmatpush.bf16.msra.mxu0 0
        %4957 = vmatpush.bf16.msra.mxu0 0
        %4958 = vmatpush.bf16.msra.mxu0 0
        %4959 = vmatpush.bf16.msra.mxu0 0
        %4960 = vmatpush.bf16.msra.mxu0 0
        %4961 = vmatpush.bf16.msra.mxu0 0
        %4962 = vmatpush.bf16.msra.mxu0 %v4905
        %4963 = vmatmul.bf16.gmra.mxu0 %v4911
        %v4964 = vpop.f32.mrf.mxu0
        %v4965 = vadd.f32 0.0, %v4964
        %v4966 = vpop.f32.mrf.mxu0
        %v4967 = vadd.f32 0.0, %v4966
        %4968 = vdwg.mxu0
        %v4969 = vadd.f32 %v4876, %v4923
        %v4970 = vadd.f32 %v4877, %v4937
        %v4971 = vadd.f32 %v4878, %v4951
        %v4972 = vadd.f32 %v4879, %v4965
        %v4973 = vadd.f32 %v4880, %v4925
        %v4974 = vadd.f32 %v4881, %v4939
        %v4975 = vadd.f32 %v4882, %v4953
        %v4976 = vadd.f32 %v4883, %v4967
        %s4977 = scalar_lea.vmem %s2, 80
        %v4978 = vld [vmem:[%s4977] sm:$0xf]
        %v4979 = vld [vmem:[%s4977 + $0x4] sm:$0xf]
        %v4982 = vunpack.c.l.b16 %v4978
        %v4983 = vunpack.c.l.b16 %v4979
        %v4984 = vpack.c.b16 %v4983, %v4982
        %4985 = vrot.lane.b32.xlu0 %v4083, 27
        %v4986 = vpop.permute.xlu0 %4985
        %4987 = vrot.lane.b32.xlu0 %v4084, 27
        %v4988 = vpop.permute.xlu0 %4987
        %4989 = vrot.lane.b32.xlu0 %v4085, 27
        %v4990 = vpop.permute.xlu0 %4989
        %4991 = vrot.lane.b32.xlu0 %v4086, 27
        %v4992 = vpop.permute.xlu0 %4991
        %4993 = vrot.lane.b32.xlu0 %v4087, 27
        %v4994 = vpop.permute.xlu0 %4993
        %v4995 = vsel %vm1576, %v4986, %v4988
        %v4996 = vsel %vm1576, %v4988, %v4990
        %v4997 = vsel %vm1576, %v4990, %v4992
        %v4998 = vsel %vm1576, %v4992, %v4994
        %v5004 = vsel %vm296, %v4984, 0
        %5006 = vmatpush.bf16.msra.mxu0 0
        %5007 = vmatpush.bf16.msra.mxu0 0
        %5008 = vmatpush.bf16.msra.mxu0 0
        %5009 = vmatpush.bf16.msra.mxu0 0
        %5010 = vmatpush.bf16.msra.mxu0 0
        %5011 = vmatpush.bf16.msra.mxu0 0
        %5012 = vmatpush.bf16.msra.mxu0 0
        %5013 = vmatpush.bf16.msra.mxu0 %v4995
        %5014 = vmatmul.bf16.gmra.mxu0 %v5004
        %v5015 = vpop.f32.mrf.mxu0
        %v5016 = vadd.f32 0.0, %v5015
        %v5017 = vpop.f32.mrf.mxu0
        %v5018 = vadd.f32 0.0, %v5017
        %5019 = vdwg.mxu0
        %5020 = vmatpush.bf16.msra.mxu0 0
        %5021 = vmatpush.bf16.msra.mxu0 0
        %5022 = vmatpush.bf16.msra.mxu0 0
        %5023 = vmatpush.bf16.msra.mxu0 0
        %5024 = vmatpush.bf16.msra.mxu0 0
        %5025 = vmatpush.bf16.msra.mxu0 0
        %5026 = vmatpush.bf16.msra.mxu0 0
        %5027 = vmatpush.bf16.msra.mxu0 %v4996
        %5028 = vmatmul.bf16.gmra.mxu0 %v5004
        %v5029 = vpop.f32.mrf.mxu0
        %v5030 = vadd.f32 0.0, %v5029
        %v5031 = vpop.f32.mrf.mxu0
        %v5032 = vadd.f32 0.0, %v5031
        %5033 = vdwg.mxu0
        %5034 = vmatpush.bf16.msra.mxu0 0
        %5035 = vmatpush.bf16.msra.mxu0 0
        %5036 = vmatpush.bf16.msra.mxu0 0
        %5037 = vmatpush.bf16.msra.mxu0 0
        %5038 = vmatpush.bf16.msra.mxu0 0
        %5039 = vmatpush.bf16.msra.mxu0 0
        %5040 = vmatpush.bf16.msra.mxu0 0
        %5041 = vmatpush.bf16.msra.mxu0 %v4997
        %5042 = vmatmul.bf16.gmra.mxu0 %v5004
        %v5043 = vpop.f32.mrf.mxu0
        %v5044 = vadd.f32 0.0, %v5043
        %v5045 = vpop.f32.mrf.mxu0
        %v5046 = vadd.f32 0.0, %v5045
        %5047 = vdwg.mxu0
        %5048 = vmatpush.bf16.msra.mxu0 0
        %5049 = vmatpush.bf16.msra.mxu0 0
        %5050 = vmatpush.bf16.msra.mxu0 0
        %5051 = vmatpush.bf16.msra.mxu0 0
        %5052 = vmatpush.bf16.msra.mxu0 0
        %5053 = vmatpush.bf16.msra.mxu0 0
        %5054 = vmatpush.bf16.msra.mxu0 0
        %5055 = vmatpush.bf16.msra.mxu0 %v4998
        %5056 = vmatmul.bf16.gmra.mxu0 %v5004
        %v5057 = vpop.f32.mrf.mxu0
        %v5058 = vadd.f32 0.0, %v5057
        %v5059 = vpop.f32.mrf.mxu0
        %v5060 = vadd.f32 0.0, %v5059
        %5061 = vdwg.mxu0
        %v5062 = vadd.f32 %v4969, %v5016
        %v5063 = vadd.f32 %v4970, %v5030
        %v5064 = vadd.f32 %v4971, %v5044
        %v5065 = vadd.f32 %v4972, %v5058
        %v5066 = vadd.f32 %v4973, %v5018
        %v5067 = vadd.f32 %v4974, %v5032
        %v5068 = vadd.f32 %v4975, %v5046
        %v5069 = vadd.f32 %v4976, %v5060
        %s5070 = scalar_lea.vmem %s2, 88
        %v5071 = vld [vmem:[%s5070] sm:$0xf]
        %v5072 = vld [vmem:[%s5070 + $0x4] sm:$0xf]
        %v5075 = vunpack.c.l.b16 %v5071
        %v5076 = vunpack.c.l.b16 %v5072
        %v5077 = vpack.c.b16 %v5076, %v5075
        %5078 = vrot.lane.b32.xlu0 %v4083, 26
        %v5079 = vpop.permute.xlu0 %5078
        %5080 = vrot.lane.b32.xlu0 %v4084, 26
        %v5081 = vpop.permute.xlu0 %5080
        %5082 = vrot.lane.b32.xlu0 %v4085, 26
        %v5083 = vpop.permute.xlu0 %5082
        %5084 = vrot.lane.b32.xlu0 %v4086, 26
        %v5085 = vpop.permute.xlu0 %5084
        %5086 = vrot.lane.b32.xlu0 %v4087, 26
        %v5087 = vpop.permute.xlu0 %5086
        %v5088 = vsel %vm1710, %v5079, %v5081
        %v5089 = vsel %vm1710, %v5081, %v5083
        %v5090 = vsel %vm1710, %v5083, %v5085
        %v5091 = vsel %vm1710, %v5085, %v5087
        %v5097 = vsel %vm296, %v5077, 0
        %5099 = vmatpush.bf16.msra.mxu0 0
        %5100 = vmatpush.bf16.msra.mxu0 0
        %5101 = vmatpush.bf16.msra.mxu0 0
        %5102 = vmatpush.bf16.msra.mxu0 0
        %5103 = vmatpush.bf16.msra.mxu0 0
        %5104 = vmatpush.bf16.msra.mxu0 0
        %5105 = vmatpush.bf16.msra.mxu0 0
        %5106 = vmatpush.bf16.msra.mxu0 %v5088
        %5107 = vmatmul.bf16.gmra.mxu0 %v5097
        %v5108 = vpop.f32.mrf.mxu0
        %v5109 = vadd.f32 0.0, %v5108
        %v5110 = vpop.f32.mrf.mxu0
        %v5111 = vadd.f32 0.0, %v5110
        %5112 = vdwg.mxu0
        %5113 = vmatpush.bf16.msra.mxu0 0
        %5114 = vmatpush.bf16.msra.mxu0 0
        %5115 = vmatpush.bf16.msra.mxu0 0
        %5116 = vmatpush.bf16.msra.mxu0 0
        %5117 = vmatpush.bf16.msra.mxu0 0
        %5118 = vmatpush.bf16.msra.mxu0 0
        %5119 = vmatpush.bf16.msra.mxu0 0
        %5120 = vmatpush.bf16.msra.mxu0 %v5089
        %5121 = vmatmul.bf16.gmra.mxu0 %v5097
        %v5122 = vpop.f32.mrf.mxu0
        %v5123 = vadd.f32 0.0, %v5122
        %v5124 = vpop.f32.mrf.mxu0
        %v5125 = vadd.f32 0.0, %v5124
        %5126 = vdwg.mxu0
        %5127 = vmatpush.bf16.msra.mxu0 0
        %5128 = vmatpush.bf16.msra.mxu0 0
        %5129 = vmatpush.bf16.msra.mxu0 0
        %5130 = vmatpush.bf16.msra.mxu0 0
        %5131 = vmatpush.bf16.msra.mxu0 0
        %5132 = vmatpush.bf16.msra.mxu0 0
        %5133 = vmatpush.bf16.msra.mxu0 0
        %5134 = vmatpush.bf16.msra.mxu0 %v5090
        %5135 = vmatmul.bf16.gmra.mxu0 %v5097
        %v5136 = vpop.f32.mrf.mxu0
        %v5137 = vadd.f32 0.0, %v5136
        %v5138 = vpop.f32.mrf.mxu0
        %v5139 = vadd.f32 0.0, %v5138
        %5140 = vdwg.mxu0
        %5141 = vmatpush.bf16.msra.mxu0 0
        %5142 = vmatpush.bf16.msra.mxu0 0
        %5143 = vmatpush.bf16.msra.mxu0 0
        %5144 = vmatpush.bf16.msra.mxu0 0
        %5145 = vmatpush.bf16.msra.mxu0 0
        %5146 = vmatpush.bf16.msra.mxu0 0
        %5147 = vmatpush.bf16.msra.mxu0 0
        %5148 = vmatpush.bf16.msra.mxu0 %v5091
        %5149 = vmatmul.bf16.gmra.mxu0 %v5097
        %v5150 = vpop.f32.mrf.mxu0
        %v5151 = vadd.f32 0.0, %v5150
        %v5152 = vpop.f32.mrf.mxu0
        %v5153 = vadd.f32 0.0, %v5152
        %5154 = vdwg.mxu0
        %v5155 = vadd.f32 %v5062, %v5109
        %v5156 = vadd.f32 %v5063, %v5123
        %v5157 = vadd.f32 %v5064, %v5137
        %v5158 = vadd.f32 %v5065, %v5151
        %v5159 = vadd.f32 %v5066, %v5111
        %v5160 = vadd.f32 %v5067, %v5125
        %v5161 = vadd.f32 %v5068, %v5139
        %v5162 = vadd.f32 %v5069, %v5153
        %s5163 = scalar_lea.vmem %s2, 96
        %v5164 = vld [vmem:[%s5163] sm:$0xf]
        %v5165 = vld [vmem:[%s5163 + $0x4] sm:$0xf]
        %v5168 = vunpack.c.l.b16 %v5164
        %v5169 = vunpack.c.l.b16 %v5165
        %v5170 = vpack.c.b16 %v5169, %v5168
        %5171 = vrot.lane.b32.xlu0 %v4083, 18
        %v5172 = vpop.permute.xlu0 %5171
        %5173 = vrot.lane.b32.xlu0 %v4084, 18
        %v5174 = vpop.permute.xlu0 %5173
        %5175 = vrot.lane.b32.xlu0 %v4085, 18
        %v5176 = vpop.permute.xlu0 %5175
        %5177 = vrot.lane.b32.xlu0 %v4086, 18
        %v5178 = vpop.permute.xlu0 %5177
        %5179 = vrot.lane.b32.xlu0 %v4087, 18
        %v5180 = vpop.permute.xlu0 %5179
        %v5181 = vsel %vm1844, %v5172, %v5174
        %v5182 = vsel %vm1844, %v5174, %v5176
        %v5183 = vsel %vm1844, %v5176, %v5178
        %v5184 = vsel %vm1844, %v5178, %v5180
        %v5190 = vsel %vm296, %v5170, 0
        %5192 = vmatpush.bf16.msra.mxu0 0
        %5193 = vmatpush.bf16.msra.mxu0 0
        %5194 = vmatpush.bf16.msra.mxu0 0
        %5195 = vmatpush.bf16.msra.mxu0 0
        %5196 = vmatpush.bf16.msra.mxu0 0
        %5197 = vmatpush.bf16.msra.mxu0 0
        %5198 = vmatpush.bf16.msra.mxu0 0
        %5199 = vmatpush.bf16.msra.mxu0 %v5181
        %5200 = vmatmul.bf16.gmra.mxu0 %v5190
        %v5201 = vpop.f32.mrf.mxu0
        %v5202 = vadd.f32 0.0, %v5201
        %v5203 = vpop.f32.mrf.mxu0
        %v5204 = vadd.f32 0.0, %v5203
        %5205 = vdwg.mxu0
        %5206 = vmatpush.bf16.msra.mxu0 0
        %5207 = vmatpush.bf16.msra.mxu0 0
        %5208 = vmatpush.bf16.msra.mxu0 0
        %5209 = vmatpush.bf16.msra.mxu0 0
        %5210 = vmatpush.bf16.msra.mxu0 0
        %5211 = vmatpush.bf16.msra.mxu0 0
        %5212 = vmatpush.bf16.msra.mxu0 0
        %5213 = vmatpush.bf16.msra.mxu0 %v5182
        %5214 = vmatmul.bf16.gmra.mxu0 %v5190
        %v5215 = vpop.f32.mrf.mxu0
        %v5216 = vadd.f32 0.0, %v5215
        %v5217 = vpop.f32.mrf.mxu0
        %v5218 = vadd.f32 0.0, %v5217
        %5219 = vdwg.mxu0
        %5220 = vmatpush.bf16.msra.mxu0 0
        %5221 = vmatpush.bf16.msra.mxu0 0
        %5222 = vmatpush.bf16.msra.mxu0 0
        %5223 = vmatpush.bf16.msra.mxu0 0
        %5224 = vmatpush.bf16.msra.mxu0 0
        %5225 = vmatpush.bf16.msra.mxu0 0
        %5226 = vmatpush.bf16.msra.mxu0 0
        %5227 = vmatpush.bf16.msra.mxu0 %v5183
        %5228 = vmatmul.bf16.gmra.mxu0 %v5190
        %v5229 = vpop.f32.mrf.mxu0
        %v5230 = vadd.f32 0.0, %v5229
        %v5231 = vpop.f32.mrf.mxu0
        %v5232 = vadd.f32 0.0, %v5231
        %5233 = vdwg.mxu0
        %5234 = vmatpush.bf16.msra.mxu0 0
        %5235 = vmatpush.bf16.msra.mxu0 0
        %5236 = vmatpush.bf16.msra.mxu0 0
        %5237 = vmatpush.bf16.msra.mxu0 0
        %5238 = vmatpush.bf16.msra.mxu0 0
        %5239 = vmatpush.bf16.msra.mxu0 0
        %5240 = vmatpush.bf16.msra.mxu0 0
        %5241 = vmatpush.bf16.msra.mxu0 %v5184
        %5242 = vmatmul.bf16.gmra.mxu0 %v5190
        %v5243 = vpop.f32.mrf.mxu0
        %v5244 = vadd.f32 0.0, %v5243
        %v5245 = vpop.f32.mrf.mxu0
        %v5246 = vadd.f32 0.0, %v5245
        %5247 = vdwg.mxu0
        %v5248 = vadd.f32 %v5155, %v5202
        %v5249 = vadd.f32 %v5156, %v5216
        %v5250 = vadd.f32 %v5157, %v5230
        %v5251 = vadd.f32 %v5158, %v5244
        %v5252 = vadd.f32 %v5159, %v5204
        %v5253 = vadd.f32 %v5160, %v5218
        %v5254 = vadd.f32 %v5161, %v5232
        %v5255 = vadd.f32 %v5162, %v5246
        %s5256 = scalar_lea.vmem %s2, 104
        %v5257 = vld [vmem:[%s5256] sm:$0xf]
        %v5258 = vld [vmem:[%s5256 + $0x4] sm:$0xf]
        %v5261 = vunpack.c.l.b16 %v5257
        %v5262 = vunpack.c.l.b16 %v5258
        %v5263 = vpack.c.b16 %v5262, %v5261
        %5264 = vrot.lane.b32.xlu0 %v4083, 17
        %v5265 = vpop.permute.xlu0 %5264
        %5266 = vrot.lane.b32.xlu0 %v4084, 17
        %v5267 = vpop.permute.xlu0 %5266
        %5268 = vrot.lane.b32.xlu0 %v4085, 17
        %v5269 = vpop.permute.xlu0 %5268
        %5270 = vrot.lane.b32.xlu0 %v4086, 17
        %v5271 = vpop.permute.xlu0 %5270
        %5272 = vrot.lane.b32.xlu0 %v4087, 17
        %v5273 = vpop.permute.xlu0 %5272
        %v5274 = vsel %vm1978, %v5265, %v5267
        %v5275 = vsel %vm1978, %v5267, %v5269
        %v5276 = vsel %vm1978, %v5269, %v5271
        %v5277 = vsel %vm1978, %v5271, %v5273
        %v5283 = vsel %vm296, %v5263, 0
        %5285 = vmatpush.bf16.msra.mxu0 0
        %5286 = vmatpush.bf16.msra.mxu0 0
        %5287 = vmatpush.bf16.msra.mxu0 0
        %5288 = vmatpush.bf16.msra.mxu0 0
        %5289 = vmatpush.bf16.msra.mxu0 0
        %5290 = vmatpush.bf16.msra.mxu0 0
        %5291 = vmatpush.bf16.msra.mxu0 0
        %5292 = vmatpush.bf16.msra.mxu0 %v5274
        %5293 = vmatmul.bf16.gmra.mxu0 %v5283
        %v5294 = vpop.f32.mrf.mxu0
        %v5295 = vadd.f32 0.0, %v5294
        %v5296 = vpop.f32.mrf.mxu0
        %v5297 = vadd.f32 0.0, %v5296
        %5298 = vdwg.mxu0
        %5299 = vmatpush.bf16.msra.mxu0 0
        %5300 = vmatpush.bf16.msra.mxu0 0
        %5301 = vmatpush.bf16.msra.mxu0 0
        %5302 = vmatpush.bf16.msra.mxu0 0
        %5303 = vmatpush.bf16.msra.mxu0 0
        %5304 = vmatpush.bf16.msra.mxu0 0
        %5305 = vmatpush.bf16.msra.mxu0 0
        %5306 = vmatpush.bf16.msra.mxu0 %v5275
        %5307 = vmatmul.bf16.gmra.mxu0 %v5283
        %v5308 = vpop.f32.mrf.mxu0
        %v5309 = vadd.f32 0.0, %v5308
        %v5310 = vpop.f32.mrf.mxu0
        %v5311 = vadd.f32 0.0, %v5310
        %5312 = vdwg.mxu0
        %5313 = vmatpush.bf16.msra.mxu0 0
        %5314 = vmatpush.bf16.msra.mxu0 0
        %5315 = vmatpush.bf16.msra.mxu0 0
        %5316 = vmatpush.bf16.msra.mxu0 0
        %5317 = vmatpush.bf16.msra.mxu0 0
        %5318 = vmatpush.bf16.msra.mxu0 0
        %5319 = vmatpush.bf16.msra.mxu0 0
        %5320 = vmatpush.bf16.msra.mxu0 %v5276
        %5321 = vmatmul.bf16.gmra.mxu0 %v5283
        %v5322 = vpop.f32.mrf.mxu0
        %v5323 = vadd.f32 0.0, %v5322
        %v5324 = vpop.f32.mrf.mxu0
        %v5325 = vadd.f32 0.0, %v5324
        %5326 = vdwg.mxu0
        %5327 = vmatpush.bf16.msra.mxu0 0
        %5328 = vmatpush.bf16.msra.mxu0 0
        %5329 = vmatpush.bf16.msra.mxu0 0
        %5330 = vmatpush.bf16.msra.mxu0 0
        %5331 = vmatpush.bf16.msra.mxu0 0
        %5332 = vmatpush.bf16.msra.mxu0 0
        %5333 = vmatpush.bf16.msra.mxu0 0
        %5334 = vmatpush.bf16.msra.mxu0 %v5277
        %5335 = vmatmul.bf16.gmra.mxu0 %v5283
        %v5336 = vpop.f32.mrf.mxu0
        %v5337 = vadd.f32 0.0, %v5336
        %v5338 = vpop.f32.mrf.mxu0
        %v5339 = vadd.f32 0.0, %v5338
        %5340 = vdwg.mxu0
        %v5341 = vadd.f32 %v5248, %v5295
        %v5342 = vadd.f32 %v5249, %v5309
        %v5343 = vadd.f32 %v5250, %v5323
        %v5344 = vadd.f32 %v5251, %v5337
        %v5345 = vadd.f32 %v5252, %v5297
        %v5346 = vadd.f32 %v5253, %v5311
        %v5347 = vadd.f32 %v5254, %v5325
        %v5348 = vadd.f32 %v5255, %v5339
        %s5349 = scalar_lea.vmem %s2, 112
        %v5350 = vld [vmem:[%s5349] sm:$0xf]
        %v5351 = vld [vmem:[%s5349 + $0x4] sm:$0xf]
        %v5354 = vunpack.c.l.b16 %v5350
        %v5355 = vunpack.c.l.b16 %v5351
        %v5356 = vpack.c.b16 %v5355, %v5354
        %5357 = vrot.lane.b32.xlu0 %v4083, 16
        %v5358 = vpop.permute.xlu0 %5357
        %5359 = vrot.lane.b32.xlu0 %v4084, 16
        %v5360 = vpop.permute.xlu0 %5359
        %5361 = vrot.lane.b32.xlu0 %v4085, 16
        %v5362 = vpop.permute.xlu0 %5361
        %5363 = vrot.lane.b32.xlu0 %v4086, 16
        %v5364 = vpop.permute.xlu0 %5363
        %5365 = vrot.lane.b32.xlu0 %v4087, 16
        %v5366 = vpop.permute.xlu0 %5365
        %v5367 = vsel %vm2112, %v5358, %v5360
        %v5368 = vsel %vm2112, %v5360, %v5362
        %v5369 = vsel %vm2112, %v5362, %v5364
        %v5370 = vsel %vm2112, %v5364, %v5366
        %v5376 = vsel %vm296, %v5356, 0
        %5378 = vmatpush.bf16.msra.mxu0 0
        %5379 = vmatpush.bf16.msra.mxu0 0
        %5380 = vmatpush.bf16.msra.mxu0 0
        %5381 = vmatpush.bf16.msra.mxu0 0
        %5382 = vmatpush.bf16.msra.mxu0 0
        %5383 = vmatpush.bf16.msra.mxu0 0
        %5384 = vmatpush.bf16.msra.mxu0 0
        %5385 = vmatpush.bf16.msra.mxu0 %v5367
        %5386 = vmatmul.bf16.gmra.mxu0 %v5376
        %v5387 = vpop.f32.mrf.mxu0
        %v5388 = vadd.f32 0.0, %v5387
        %v5389 = vpop.f32.mrf.mxu0
        %v5390 = vadd.f32 0.0, %v5389
        %5391 = vdwg.mxu0
        %5392 = vmatpush.bf16.msra.mxu0 0
        %5393 = vmatpush.bf16.msra.mxu0 0
        %5394 = vmatpush.bf16.msra.mxu0 0
        %5395 = vmatpush.bf16.msra.mxu0 0
        %5396 = vmatpush.bf16.msra.mxu0 0
        %5397 = vmatpush.bf16.msra.mxu0 0
        %5398 = vmatpush.bf16.msra.mxu0 0
        %5399 = vmatpush.bf16.msra.mxu0 %v5368
        %5400 = vmatmul.bf16.gmra.mxu0 %v5376
        %v5401 = vpop.f32.mrf.mxu0
        %v5402 = vadd.f32 0.0, %v5401
        %v5403 = vpop.f32.mrf.mxu0
        %v5404 = vadd.f32 0.0, %v5403
        %5405 = vdwg.mxu0
        %5406 = vmatpush.bf16.msra.mxu0 0
        %5407 = vmatpush.bf16.msra.mxu0 0
        %5408 = vmatpush.bf16.msra.mxu0 0
        %5409 = vmatpush.bf16.msra.mxu0 0
        %5410 = vmatpush.bf16.msra.mxu0 0
        %5411 = vmatpush.bf16.msra.mxu0 0
        %5412 = vmatpush.bf16.msra.mxu0 0
        %5413 = vmatpush.bf16.msra.mxu0 %v5369
        %5414 = vmatmul.bf16.gmra.mxu0 %v5376
        %v5415 = vpop.f32.mrf.mxu0
        %v5416 = vadd.f32 0.0, %v5415
        %v5417 = vpop.f32.mrf.mxu0
        %v5418 = vadd.f32 0.0, %v5417
        %5419 = vdwg.mxu0
        %5420 = vmatpush.bf16.msra.mxu0 0
        %5421 = vmatpush.bf16.msra.mxu0 0
        %5422 = vmatpush.bf16.msra.mxu0 0
        %5423 = vmatpush.bf16.msra.mxu0 0
        %5424 = vmatpush.bf16.msra.mxu0 0
        %5425 = vmatpush.bf16.msra.mxu0 0
        %5426 = vmatpush.bf16.msra.mxu0 0
        %5427 = vmatpush.bf16.msra.mxu0 %v5370
        %5428 = vmatmul.bf16.gmra.mxu0 %v5376
        %v5429 = vpop.f32.mrf.mxu0
        %v5430 = vadd.f32 0.0, %v5429
        %v5431 = vpop.f32.mrf.mxu0
        %v5432 = vadd.f32 0.0, %v5431
        %5433 = vdwg.mxu0
        %v5434 = vadd.f32 %v5341, %v5388
        %v5435 = vadd.f32 %v5342, %v5402
        %v5436 = vadd.f32 %v5343, %v5416
        %v5437 = vadd.f32 %v5344, %v5430
        %v5438 = vadd.f32 %v5345, %v5390
        %v5439 = vadd.f32 %v5346, %v5404
        %v5440 = vadd.f32 %v5347, %v5418
        %v5441 = vadd.f32 %v5348, %v5432
        %s5442 = scalar_lea.vmem %s2, 120
        %v5443 = vld [vmem:[%s5442] sm:$0xf]
        %v5444 = vld [vmem:[%s5442 + $0x4] sm:$0xf]
        %v5447 = vunpack.c.l.b16 %v5443
        %v5448 = vunpack.c.l.b16 %v5444
        %v5449 = vpack.c.b16 %v5448, %v5447
        %5450 = vrot.lane.b32.xlu0 %v4083, 8
        %v5451 = vpop.permute.xlu0 %5450
        %5452 = vrot.lane.b32.xlu0 %v4084, 8
        %v5453 = vpop.permute.xlu0 %5452
        %5454 = vrot.lane.b32.xlu0 %v4085, 8
        %v5455 = vpop.permute.xlu0 %5454
        %5456 = vrot.lane.b32.xlu0 %v4086, 8
        %v5457 = vpop.permute.xlu0 %5456
        %5458 = vrot.lane.b32.xlu0 %v4087, 8
        %v5459 = vpop.permute.xlu0 %5458
        %v5460 = vsel %vm2246, %v5451, %v5453
        %v5461 = vsel %vm2246, %v5453, %v5455
        %v5462 = vsel %vm2246, %v5455, %v5457
        %v5463 = vsel %vm2246, %v5457, %v5459
        %v5469 = vsel %vm296, %v5449, 0
        %5471 = vmatpush.bf16.msra.mxu0 0
        %5472 = vmatpush.bf16.msra.mxu0 0
        %5473 = vmatpush.bf16.msra.mxu0 0
        %5474 = vmatpush.bf16.msra.mxu0 0
        %5475 = vmatpush.bf16.msra.mxu0 0
        %5476 = vmatpush.bf16.msra.mxu0 0
        %5477 = vmatpush.bf16.msra.mxu0 0
        %5478 = vmatpush.bf16.msra.mxu0 %v5460
        %5479 = vmatmul.bf16.gmra.mxu0 %v5469
        %v5480 = vpop.f32.mrf.mxu0
        %v5481 = vadd.f32 0.0, %v5480
        %v5482 = vpop.f32.mrf.mxu0
        %v5483 = vadd.f32 0.0, %v5482
        %5484 = vdwg.mxu0
        %5485 = vmatpush.bf16.msra.mxu0 0
        %5486 = vmatpush.bf16.msra.mxu0 0
        %5487 = vmatpush.bf16.msra.mxu0 0
        %5488 = vmatpush.bf16.msra.mxu0 0
        %5489 = vmatpush.bf16.msra.mxu0 0
        %5490 = vmatpush.bf16.msra.mxu0 0
        %5491 = vmatpush.bf16.msra.mxu0 0
        %5492 = vmatpush.bf16.msra.mxu0 %v5461
        %5493 = vmatmul.bf16.gmra.mxu0 %v5469
        %v5494 = vpop.f32.mrf.mxu0
        %v5495 = vadd.f32 0.0, %v5494
        %v5496 = vpop.f32.mrf.mxu0
        %v5497 = vadd.f32 0.0, %v5496
        %5498 = vdwg.mxu0
        %5499 = vmatpush.bf16.msra.mxu0 0
        %5500 = vmatpush.bf16.msra.mxu0 0
        %5501 = vmatpush.bf16.msra.mxu0 0
        %5502 = vmatpush.bf16.msra.mxu0 0
        %5503 = vmatpush.bf16.msra.mxu0 0
        %5504 = vmatpush.bf16.msra.mxu0 0
        %5505 = vmatpush.bf16.msra.mxu0 0
        %5506 = vmatpush.bf16.msra.mxu0 %v5462
        %5507 = vmatmul.bf16.gmra.mxu0 %v5469
        %v5508 = vpop.f32.mrf.mxu0
        %v5509 = vadd.f32 0.0, %v5508
        %v5510 = vpop.f32.mrf.mxu0
        %v5511 = vadd.f32 0.0, %v5510
        %5512 = vdwg.mxu0
        %5513 = vmatpush.bf16.msra.mxu0 0
        %5514 = vmatpush.bf16.msra.mxu0 0
        %5515 = vmatpush.bf16.msra.mxu0 0
        %5516 = vmatpush.bf16.msra.mxu0 0
        %5517 = vmatpush.bf16.msra.mxu0 0
        %5518 = vmatpush.bf16.msra.mxu0 0
        %5519 = vmatpush.bf16.msra.mxu0 0
        %5520 = vmatpush.bf16.msra.mxu0 %v5463
        %5521 = vmatmul.bf16.gmra.mxu0 %v5469
        %v5522 = vpop.f32.mrf.mxu0
        %v5523 = vadd.f32 0.0, %v5522
        %v5524 = vpop.f32.mrf.mxu0
        %v5525 = vadd.f32 0.0, %v5524
        %5526 = vdwg.mxu0
        %v5527 = vadd.f32 %v5434, %v5481
        %v5528 = vadd.f32 %v5435, %v5495
        %v5529 = vadd.f32 %v5436, %v5509
        %v5530 = vadd.f32 %v5437, %v5523
        %v5531 = vadd.f32 %v5438, %v5483
        %v5532 = vadd.f32 %v5439, %v5497
        %v5533 = vadd.f32 %v5440, %v5511
        %v5534 = vadd.f32 %v5441, %v5525
        %s5535 = scalar_lea.vmem %s2, 128
        %v5536 = vld [vmem:[%s5535] sm:$0xf]
        %v5537 = vld [vmem:[%s5535 + $0x4] sm:$0xf]
        %v5540 = vunpack.c.l.b16 %v5536
        %v5541 = vunpack.c.l.b16 %v5537
        %v5542 = vpack.c.b16 %v5541, %v5540
        %5543 = vrot.lane.b32.xlu0 %v4083, 7
        %v5544 = vpop.permute.xlu0 %5543
        %5545 = vrot.lane.b32.xlu0 %v4084, 7
        %v5546 = vpop.permute.xlu0 %5545
        %5547 = vrot.lane.b32.xlu0 %v4085, 7
        %v5548 = vpop.permute.xlu0 %5547
        %5549 = vrot.lane.b32.xlu0 %v4086, 7
        %v5550 = vpop.permute.xlu0 %5549
        %5551 = vrot.lane.b32.xlu0 %v4087, 7
        %v5552 = vpop.permute.xlu0 %5551
        %v5553 = vsel %vm2380, %v5544, %v5546
        %v5554 = vsel %vm2380, %v5546, %v5548
        %v5555 = vsel %vm2380, %v5548, %v5550
        %v5556 = vsel %vm2380, %v5550, %v5552
        %v5562 = vsel %vm296, %v5542, 0
        %5564 = vmatpush.bf16.msra.mxu0 0
        %5565 = vmatpush.bf16.msra.mxu0 0
        %5566 = vmatpush.bf16.msra.mxu0 0
        %5567 = vmatpush.bf16.msra.mxu0 0
        %5568 = vmatpush.bf16.msra.mxu0 0
        %5569 = vmatpush.bf16.msra.mxu0 0
        %5570 = vmatpush.bf16.msra.mxu0 0
        %5571 = vmatpush.bf16.msra.mxu0 %v5553
        %5572 = vmatmul.bf16.gmra.mxu0 %v5562
        %v5573 = vpop.f32.mrf.mxu0
        %v5574 = vadd.f32 0.0, %v5573
        %v5575 = vpop.f32.mrf.mxu0
        %v5576 = vadd.f32 0.0, %v5575
        %5577 = vdwg.mxu0
        %5578 = vmatpush.bf16.msra.mxu0 0
        %5579 = vmatpush.bf16.msra.mxu0 0
        %5580 = vmatpush.bf16.msra.mxu0 0
        %5581 = vmatpush.bf16.msra.mxu0 0
        %5582 = vmatpush.bf16.msra.mxu0 0
        %5583 = vmatpush.bf16.msra.mxu0 0
        %5584 = vmatpush.bf16.msra.mxu0 0
        %5585 = vmatpush.bf16.msra.mxu0 %v5554
        %5586 = vmatmul.bf16.gmra.mxu0 %v5562
        %v5587 = vpop.f32.mrf.mxu0
        %v5588 = vadd.f32 0.0, %v5587
        %v5589 = vpop.f32.mrf.mxu0
        %v5590 = vadd.f32 0.0, %v5589
        %5591 = vdwg.mxu0
        %5592 = vmatpush.bf16.msra.mxu0 0
        %5593 = vmatpush.bf16.msra.mxu0 0
        %5594 = vmatpush.bf16.msra.mxu0 0
        %5595 = vmatpush.bf16.msra.mxu0 0
        %5596 = vmatpush.bf16.msra.mxu0 0
        %5597 = vmatpush.bf16.msra.mxu0 0
        %5598 = vmatpush.bf16.msra.mxu0 0
        %5599 = vmatpush.bf16.msra.mxu0 %v5555
        %5600 = vmatmul.bf16.gmra.mxu0 %v5562
        %v5601 = vpop.f32.mrf.mxu0
        %v5602 = vadd.f32 0.0, %v5601
        %v5603 = vpop.f32.mrf.mxu0
        %v5604 = vadd.f32 0.0, %v5603
        %5605 = vdwg.mxu0
        %5606 = vmatpush.bf16.msra.mxu0 0
        %5607 = vmatpush.bf16.msra.mxu0 0
        %5608 = vmatpush.bf16.msra.mxu0 0
        %5609 = vmatpush.bf16.msra.mxu0 0
        %5610 = vmatpush.bf16.msra.mxu0 0
        %5611 = vmatpush.bf16.msra.mxu0 0
        %5612 = vmatpush.bf16.msra.mxu0 0
        %5613 = vmatpush.bf16.msra.mxu0 %v5556
        %5614 = vmatmul.bf16.gmra.mxu0 %v5562
        %v5615 = vpop.f32.mrf.mxu0
        %v5616 = vadd.f32 0.0, %v5615
        %v5617 = vpop.f32.mrf.mxu0
        %v5618 = vadd.f32 0.0, %v5617
        %5619 = vdwg.mxu0
        %v5620 = vadd.f32 %v5527, %v5574
        %v5621 = vadd.f32 %v5528, %v5588
        %v5622 = vadd.f32 %v5529, %v5602
        %v5623 = vadd.f32 %v5530, %v5616
        %v5624 = vadd.f32 %v5531, %v5576
        %v5625 = vadd.f32 %v5532, %v5590
        %v5626 = vadd.f32 %v5533, %v5604
        %v5627 = vadd.f32 %v5534, %v5618
        %s5628 = scalar_lea.vmem %s2, 136
        %v5629 = vld [vmem:[%s5628] sm:$0xf]
        %v5630 = vld [vmem:[%s5628 + $0x4] sm:$0xf]
        %v5633 = vunpack.c.l.b16 %v5629
        %v5634 = vunpack.c.l.b16 %v5630
        %v5635 = vpack.c.b16 %v5634, %v5633
        %5636 = vrot.lane.b32.xlu0 %v4083, 6
        %v5637 = vpop.permute.xlu0 %5636
        %5638 = vrot.lane.b32.xlu0 %v4084, 6
        %v5639 = vpop.permute.xlu0 %5638
        %5640 = vrot.lane.b32.xlu0 %v4085, 6
        %v5641 = vpop.permute.xlu0 %5640
        %5642 = vrot.lane.b32.xlu0 %v4086, 6
        %v5643 = vpop.permute.xlu0 %5642
        %5644 = vrot.lane.b32.xlu0 %v4087, 6
        %v5645 = vpop.permute.xlu0 %5644
        %v5646 = vsel %vm2514, %v5637, %v5639
        %v5647 = vsel %vm2514, %v5639, %v5641
        %v5648 = vsel %vm2514, %v5641, %v5643
        %v5649 = vsel %vm2514, %v5643, %v5645
        %v5655 = vsel %vm296, %v5635, 0
        %5657 = vmatpush.bf16.msra.mxu0 0
        %5658 = vmatpush.bf16.msra.mxu0 0
        %5659 = vmatpush.bf16.msra.mxu0 0
        %5660 = vmatpush.bf16.msra.mxu0 0
        %5661 = vmatpush.bf16.msra.mxu0 0
        %5662 = vmatpush.bf16.msra.mxu0 0
        %5663 = vmatpush.bf16.msra.mxu0 0
        %5664 = vmatpush.bf16.msra.mxu0 %v5646
        %5665 = vmatmul.bf16.gmra.mxu0 %v5655
        %v5666 = vpop.f32.mrf.mxu0
        %v5667 = vadd.f32 0.0, %v5666
        %v5668 = vpop.f32.mrf.mxu0
        %v5669 = vadd.f32 0.0, %v5668
        %5670 = vdwg.mxu0
        %5671 = vmatpush.bf16.msra.mxu0 0
        %5672 = vmatpush.bf16.msra.mxu0 0
        %5673 = vmatpush.bf16.msra.mxu0 0
        %5674 = vmatpush.bf16.msra.mxu0 0
        %5675 = vmatpush.bf16.msra.mxu0 0
        %5676 = vmatpush.bf16.msra.mxu0 0
        %5677 = vmatpush.bf16.msra.mxu0 0
        %5678 = vmatpush.bf16.msra.mxu0 %v5647
        %5679 = vmatmul.bf16.gmra.mxu0 %v5655
        %v5680 = vpop.f32.mrf.mxu0
        %v5681 = vadd.f32 0.0, %v5680
        %v5682 = vpop.f32.mrf.mxu0
        %v5683 = vadd.f32 0.0, %v5682
        %5684 = vdwg.mxu0
        %5685 = vmatpush.bf16.msra.mxu0 0
        %5686 = vmatpush.bf16.msra.mxu0 0
        %5687 = vmatpush.bf16.msra.mxu0 0
        %5688 = vmatpush.bf16.msra.mxu0 0
        %5689 = vmatpush.bf16.msra.mxu0 0
        %5690 = vmatpush.bf16.msra.mxu0 0
        %5691 = vmatpush.bf16.msra.mxu0 0
        %5692 = vmatpush.bf16.msra.mxu0 %v5648
        %5693 = vmatmul.bf16.gmra.mxu0 %v5655
        %v5694 = vpop.f32.mrf.mxu0
        %v5695 = vadd.f32 0.0, %v5694
        %v5696 = vpop.f32.mrf.mxu0
        %v5697 = vadd.f32 0.0, %v5696
        %5698 = vdwg.mxu0
        %5699 = vmatpush.bf16.msra.mxu0 0
        %5700 = vmatpush.bf16.msra.mxu0 0
        %5701 = vmatpush.bf16.msra.mxu0 0
        %5702 = vmatpush.bf16.msra.mxu0 0
        %5703 = vmatpush.bf16.msra.mxu0 0
        %5704 = vmatpush.bf16.msra.mxu0 0
        %5705 = vmatpush.bf16.msra.mxu0 0
        %5706 = vmatpush.bf16.msra.mxu0 %v5649
        %5707 = vmatmul.bf16.gmra.mxu0 %v5655
        %v5708 = vpop.f32.mrf.mxu0
        %v5709 = vadd.f32 0.0, %v5708
        %v5710 = vpop.f32.mrf.mxu0
        %v5711 = vadd.f32 0.0, %v5710
        %5712 = vdwg.mxu0
        %v5713 = vadd.f32 %v5620, %v5667
        %v5714 = vadd.f32 %v5621, %v5681
        %v5715 = vadd.f32 %v5622, %v5695
        %v5716 = vadd.f32 %v5623, %v5709
        %v5717 = vadd.f32 %v5624, %v5669
        %v5718 = vadd.f32 %v5625, %v5683
        %v5719 = vadd.f32 %v5626, %v5697
        %v5720 = vadd.f32 %v5627, %v5711
        %s5721 = scalar_lea.vmem %s2, 144
        %v5722 = vld [vmem:[%s5721] sm:$0xf]
        %v5723 = vld [vmem:[%s5721 + $0x4] sm:$0xf]
        %v5724 = vld [vmem:[#allocation3 + $0x4] sm:$0xff]
        %v5725 = vld [vmem:[#allocation3 + $0xc] sm:$0xff]
        %v5726 = vld [vmem:[#allocation3 + $0x14] sm:$0xf]
        %v5727 = vld [vmem:[#allocation3 + $0x1c] sm:$0xff]
        %v5728 = vld [vmem:[#allocation3 + $0x24] sm:$0xff]
        %v5729 = vld [vmem:[#allocation3 + $0x2c] sm:$0xf]
        %v5732 = vunpack.c.l.b16 %v5722
        %v5733 = vunpack.c.l.b16 %v5723
        %v5734 = vpack.c.b16 %v5733, %v5732
        %v5741 = vunpack.c.l.b16 %v5724
        %v5742 = vunpack.c.h.b16 %v5724
        %v5743 = vunpack.c.l.b16 %v5725
        %v5744 = vunpack.c.h.b16 %v5725
        %v5745 = vunpack.c.l.b16 %v5726
        %v5746 = vunpack.c.l.b16 %v5727
        %v5747 = vunpack.c.h.b16 %v5727
        %v5748 = vunpack.c.l.b16 %v5728
        %v5749 = vunpack.c.h.b16 %v5728
        %v5750 = vunpack.c.l.b16 %v5729
        %v5751 = vpack.c.b16 %v5746, %v5741
        %v5752 = vpack.c.b16 %v5747, %v5742
        %v5753 = vpack.c.b16 %v5748, %v5743
        %v5754 = vpack.c.b16 %v5749, %v5744
        %v5755 = vpack.c.b16 %v5750, %v5745
        %5756 = vrot.lane.b32.xlu0 %v5751, 56
        %v5757 = vpop.permute.xlu0 %5756
        %5758 = vrot.lane.b32.xlu0 %v5752, 56
        %v5759 = vpop.permute.xlu0 %5758
        %5760 = vrot.lane.b32.xlu0 %v5753, 56
        %v5761 = vpop.permute.xlu0 %5760
        %5762 = vrot.lane.b32.xlu0 %v5754, 56
        %v5763 = vpop.permute.xlu0 %5762
        %5764 = vrot.lane.b32.xlu0 %v5755, 56
        %v5765 = vpop.permute.xlu0 %5764
        %v5766 = vsel %vm2685, %v5757, %v5759
        %v5767 = vsel %vm2685, %v5759, %v5761
        %v5768 = vsel %vm2685, %v5761, %v5763
        %v5769 = vsel %vm2685, %v5763, %v5765
        %v5775 = vsel %vm296, %v5734, 0
        %5777 = vmatpush.bf16.msra.mxu0 0
        %5778 = vmatpush.bf16.msra.mxu0 0
        %5779 = vmatpush.bf16.msra.mxu0 0
        %5780 = vmatpush.bf16.msra.mxu0 0
        %5781 = vmatpush.bf16.msra.mxu0 0
        %5782 = vmatpush.bf16.msra.mxu0 0
        %5783 = vmatpush.bf16.msra.mxu0 0
        %5784 = vmatpush.bf16.msra.mxu0 %v5766
        %5785 = vmatmul.bf16.gmra.mxu0 %v5775
        %v5786 = vpop.f32.mrf.mxu0
        %v5787 = vadd.f32 0.0, %v5786
        %v5788 = vpop.f32.mrf.mxu0
        %v5789 = vadd.f32 0.0, %v5788
        %5790 = vdwg.mxu0
        %5791 = vmatpush.bf16.msra.mxu0 0
        %5792 = vmatpush.bf16.msra.mxu0 0
        %5793 = vmatpush.bf16.msra.mxu0 0
        %5794 = vmatpush.bf16.msra.mxu0 0
        %5795 = vmatpush.bf16.msra.mxu0 0
        %5796 = vmatpush.bf16.msra.mxu0 0
        %5797 = vmatpush.bf16.msra.mxu0 0
        %5798 = vmatpush.bf16.msra.mxu0 %v5767
        %5799 = vmatmul.bf16.gmra.mxu0 %v5775
        %v5800 = vpop.f32.mrf.mxu0
        %v5801 = vadd.f32 0.0, %v5800
        %v5802 = vpop.f32.mrf.mxu0
        %v5803 = vadd.f32 0.0, %v5802
        %5804 = vdwg.mxu0
        %5805 = vmatpush.bf16.msra.mxu0 0
        %5806 = vmatpush.bf16.msra.mxu0 0
        %5807 = vmatpush.bf16.msra.mxu0 0
        %5808 = vmatpush.bf16.msra.mxu0 0
        %5809 = vmatpush.bf16.msra.mxu0 0
        %5810 = vmatpush.bf16.msra.mxu0 0
        %5811 = vmatpush.bf16.msra.mxu0 0
        %5812 = vmatpush.bf16.msra.mxu0 %v5768
        %5813 = vmatmul.bf16.gmra.mxu0 %v5775
        %v5814 = vpop.f32.mrf.mxu0
        %v5815 = vadd.f32 0.0, %v5814
        %v5816 = vpop.f32.mrf.mxu0
        %v5817 = vadd.f32 0.0, %v5816
        %5818 = vdwg.mxu0
        %5819 = vmatpush.bf16.msra.mxu0 0
        %5820 = vmatpush.bf16.msra.mxu0 0
        %5821 = vmatpush.bf16.msra.mxu0 0
        %5822 = vmatpush.bf16.msra.mxu0 0
        %5823 = vmatpush.bf16.msra.mxu0 0
        %5824 = vmatpush.bf16.msra.mxu0 0
        %5825 = vmatpush.bf16.msra.mxu0 0
        %5826 = vmatpush.bf16.msra.mxu0 %v5769
        %5827 = vmatmul.bf16.gmra.mxu0 %v5775
        %v5828 = vpop.f32.mrf.mxu0
        %v5829 = vadd.f32 0.0, %v5828
        %v5830 = vpop.f32.mrf.mxu0
        %v5831 = vadd.f32 0.0, %v5830
        %5832 = vdwg.mxu0
        %v5833 = vadd.f32 %v5713, %v5787
        %v5834 = vadd.f32 %v5714, %v5801
        %v5835 = vadd.f32 %v5715, %v5815
        %v5836 = vadd.f32 %v5716, %v5829
        %v5837 = vadd.f32 %v5717, %v5789
        %v5838 = vadd.f32 %v5718, %v5803
        %v5839 = vadd.f32 %v5719, %v5817
        %v5840 = vadd.f32 %v5720, %v5831
        %s5841 = scalar_lea.vmem %s2, 152
        %v5842 = vld [vmem:[%s5841] sm:$0xf]
        %v5843 = vld [vmem:[%s5841 + $0x4] sm:$0xf]
        %v5846 = vunpack.c.l.b16 %v5842
        %v5847 = vunpack.c.l.b16 %v5843
        %v5848 = vpack.c.b16 %v5847, %v5846
        %5849 = vrot.lane.b32.xlu0 %v5751, 55
        %v5850 = vpop.permute.xlu0 %5849
        %5851 = vrot.lane.b32.xlu0 %v5752, 55
        %v5852 = vpop.permute.xlu0 %5851
        %5853 = vrot.lane.b32.xlu0 %v5753, 55
        %v5854 = vpop.permute.xlu0 %5853
        %5855 = vrot.lane.b32.xlu0 %v5754, 55
        %v5856 = vpop.permute.xlu0 %5855
        %5857 = vrot.lane.b32.xlu0 %v5755, 55
        %v5858 = vpop.permute.xlu0 %5857
        %v5859 = vsel %vm2819, %v5850, %v5852
        %v5860 = vsel %vm2819, %v5852, %v5854
        %v5861 = vsel %vm2819, %v5854, %v5856
        %v5862 = vsel %vm2819, %v5856, %v5858
        %v5868 = vsel %vm296, %v5848, 0
        %5870 = vmatpush.bf16.msra.mxu0 0
        %5871 = vmatpush.bf16.msra.mxu0 0
        %5872 = vmatpush.bf16.msra.mxu0 0
        %5873 = vmatpush.bf16.msra.mxu0 0
        %5874 = vmatpush.bf16.msra.mxu0 0
        %5875 = vmatpush.bf16.msra.mxu0 0
        %5876 = vmatpush.bf16.msra.mxu0 0
        %5877 = vmatpush.bf16.msra.mxu0 %v5859
        %5878 = vmatmul.bf16.gmra.mxu0 %v5868
        %v5879 = vpop.f32.mrf.mxu0
        %v5880 = vadd.f32 0.0, %v5879
        %v5881 = vpop.f32.mrf.mxu0
        %v5882 = vadd.f32 0.0, %v5881
        %5883 = vdwg.mxu0
        %5884 = vmatpush.bf16.msra.mxu0 0
        %5885 = vmatpush.bf16.msra.mxu0 0
        %5886 = vmatpush.bf16.msra.mxu0 0
        %5887 = vmatpush.bf16.msra.mxu0 0
        %5888 = vmatpush.bf16.msra.mxu0 0
        %5889 = vmatpush.bf16.msra.mxu0 0
        %5890 = vmatpush.bf16.msra.mxu0 0
        %5891 = vmatpush.bf16.msra.mxu0 %v5860
        %5892 = vmatmul.bf16.gmra.mxu0 %v5868
        %v5893 = vpop.f32.mrf.mxu0
        %v5894 = vadd.f32 0.0, %v5893
        %v5895 = vpop.f32.mrf.mxu0
        %v5896 = vadd.f32 0.0, %v5895
        %5897 = vdwg.mxu0
        %5898 = vmatpush.bf16.msra.mxu0 0
        %5899 = vmatpush.bf16.msra.mxu0 0
        %5900 = vmatpush.bf16.msra.mxu0 0
        %5901 = vmatpush.bf16.msra.mxu0 0
        %5902 = vmatpush.bf16.msra.mxu0 0
        %5903 = vmatpush.bf16.msra.mxu0 0
        %5904 = vmatpush.bf16.msra.mxu0 0
        %5905 = vmatpush.bf16.msra.mxu0 %v5861
        %5906 = vmatmul.bf16.gmra.mxu0 %v5868
        %v5907 = vpop.f32.mrf.mxu0
        %v5908 = vadd.f32 0.0, %v5907
        %v5909 = vpop.f32.mrf.mxu0
        %v5910 = vadd.f32 0.0, %v5909
        %5911 = vdwg.mxu0
        %5912 = vmatpush.bf16.msra.mxu0 0
        %5913 = vmatpush.bf16.msra.mxu0 0
        %5914 = vmatpush.bf16.msra.mxu0 0
        %5915 = vmatpush.bf16.msra.mxu0 0
        %5916 = vmatpush.bf16.msra.mxu0 0
        %5917 = vmatpush.bf16.msra.mxu0 0
        %5918 = vmatpush.bf16.msra.mxu0 0
        %5919 = vmatpush.bf16.msra.mxu0 %v5862
        %5920 = vmatmul.bf16.gmra.mxu0 %v5868
        %v5921 = vpop.f32.mrf.mxu0
        %v5922 = vadd.f32 0.0, %v5921
        %v5923 = vpop.f32.mrf.mxu0
        %v5924 = vadd.f32 0.0, %v5923
        %5925 = vdwg.mxu0
        %v5926 = vadd.f32 %v5833, %v5880
        %v5927 = vadd.f32 %v5834, %v5894
        %v5928 = vadd.f32 %v5835, %v5908
        %v5929 = vadd.f32 %v5836, %v5922
        %v5930 = vadd.f32 %v5837, %v5882
        %v5931 = vadd.f32 %v5838, %v5896
        %v5932 = vadd.f32 %v5839, %v5910
        %v5933 = vadd.f32 %v5840, %v5924
        %s5934 = scalar_lea.vmem %s2, 160
        %v5935 = vld [vmem:[%s5934] sm:$0xf]
        %v5936 = vld [vmem:[%s5934 + $0x4] sm:$0xf]
        %v5939 = vunpack.c.l.b16 %v5935
        %v5940 = vunpack.c.l.b16 %v5936
        %v5941 = vpack.c.b16 %v5940, %v5939
        %5942 = vrot.lane.b32.xlu0 %v5751, 54
        %v5943 = vpop.permute.xlu0 %5942
        %5944 = vrot.lane.b32.xlu0 %v5752, 54
        %v5945 = vpop.permute.xlu0 %5944
        %5946 = vrot.lane.b32.xlu0 %v5753, 54
        %v5947 = vpop.permute.xlu0 %5946
        %5948 = vrot.lane.b32.xlu0 %v5754, 54
        %v5949 = vpop.permute.xlu0 %5948
        %5950 = vrot.lane.b32.xlu0 %v5755, 54
        %v5951 = vpop.permute.xlu0 %5950
        %v5952 = vsel %vm2953, %v5943, %v5945
        %v5953 = vsel %vm2953, %v5945, %v5947
        %v5954 = vsel %vm2953, %v5947, %v5949
        %v5955 = vsel %vm2953, %v5949, %v5951
        %v5961 = vsel %vm296, %v5941, 0
        %5963 = vmatpush.bf16.msra.mxu0 0
        %5964 = vmatpush.bf16.msra.mxu0 0
        %5965 = vmatpush.bf16.msra.mxu0 0
        %5966 = vmatpush.bf16.msra.mxu0 0
        %5967 = vmatpush.bf16.msra.mxu0 0
        %5968 = vmatpush.bf16.msra.mxu0 0
        %5969 = vmatpush.bf16.msra.mxu0 0
        %5970 = vmatpush.bf16.msra.mxu0 %v5952
        %5971 = vmatmul.bf16.gmra.mxu0 %v5961
        %v5972 = vpop.f32.mrf.mxu0
        %v5973 = vadd.f32 0.0, %v5972
        %v5974 = vpop.f32.mrf.mxu0
        %v5975 = vadd.f32 0.0, %v5974
        %5976 = vdwg.mxu0
        %5977 = vmatpush.bf16.msra.mxu0 0
        %5978 = vmatpush.bf16.msra.mxu0 0
        %5979 = vmatpush.bf16.msra.mxu0 0
        %5980 = vmatpush.bf16.msra.mxu0 0
        %5981 = vmatpush.bf16.msra.mxu0 0
        %5982 = vmatpush.bf16.msra.mxu0 0
        %5983 = vmatpush.bf16.msra.mxu0 0
        %5984 = vmatpush.bf16.msra.mxu0 %v5953
        %5985 = vmatmul.bf16.gmra.mxu0 %v5961
        %v5986 = vpop.f32.mrf.mxu0
        %v5987 = vadd.f32 0.0, %v5986
        %v5988 = vpop.f32.mrf.mxu0
        %v5989 = vadd.f32 0.0, %v5988
        %5990 = vdwg.mxu0
        %5991 = vmatpush.bf16.msra.mxu0 0
        %5992 = vmatpush.bf16.msra.mxu0 0
        %5993 = vmatpush.bf16.msra.mxu0 0
        %5994 = vmatpush.bf16.msra.mxu0 0
        %5995 = vmatpush.bf16.msra.mxu0 0
        %5996 = vmatpush.bf16.msra.mxu0 0
        %5997 = vmatpush.bf16.msra.mxu0 0
        %5998 = vmatpush.bf16.msra.mxu0 %v5954
        %5999 = vmatmul.bf16.gmra.mxu0 %v5961
        %v6000 = vpop.f32.mrf.mxu0
        %v6001 = vadd.f32 0.0, %v6000
        %v6002 = vpop.f32.mrf.mxu0
        %v6003 = vadd.f32 0.0, %v6002
        %6004 = vdwg.mxu0
        %6005 = vmatpush.bf16.msra.mxu0 0
        %6006 = vmatpush.bf16.msra.mxu0 0
        %6007 = vmatpush.bf16.msra.mxu0 0
        %6008 = vmatpush.bf16.msra.mxu0 0
        %6009 = vmatpush.bf16.msra.mxu0 0
        %6010 = vmatpush.bf16.msra.mxu0 0
        %6011 = vmatpush.bf16.msra.mxu0 0
        %6012 = vmatpush.bf16.msra.mxu0 %v5955
        %6013 = vmatmul.bf16.gmra.mxu0 %v5961
        %v6014 = vpop.f32.mrf.mxu0
        %v6015 = vadd.f32 0.0, %v6014
        %v6016 = vpop.f32.mrf.mxu0
        %v6017 = vadd.f32 0.0, %v6016
        %6018 = vdwg.mxu0
        %v6019 = vadd.f32 %v5926, %v5973
        %v6020 = vadd.f32 %v5927, %v5987
        %v6021 = vadd.f32 %v5928, %v6001
        %v6022 = vadd.f32 %v5929, %v6015
        %v6023 = vadd.f32 %v5930, %v5975
        %v6024 = vadd.f32 %v5931, %v5989
        %v6025 = vadd.f32 %v5932, %v6003
        %v6026 = vadd.f32 %v5933, %v6017
        %s6027 = scalar_lea.vmem %s2, 168
        %v6028 = vld [vmem:[%s6027] sm:$0xf]
        %v6029 = vld [vmem:[%s6027 + $0x4] sm:$0xf]
        %v6032 = vunpack.c.l.b16 %v6028
        %v6033 = vunpack.c.l.b16 %v6029
        %v6034 = vpack.c.b16 %v6033, %v6032
        %6035 = vrot.lane.b32.xlu0 %v5751, 46
        %v6036 = vpop.permute.xlu0 %6035
        %6037 = vrot.lane.b32.xlu0 %v5752, 46
        %v6038 = vpop.permute.xlu0 %6037
        %6039 = vrot.lane.b32.xlu0 %v5753, 46
        %v6040 = vpop.permute.xlu0 %6039
        %6041 = vrot.lane.b32.xlu0 %v5754, 46
        %v6042 = vpop.permute.xlu0 %6041
        %6043 = vrot.lane.b32.xlu0 %v5755, 46
        %v6044 = vpop.permute.xlu0 %6043
        %v6045 = vsel %vm3087, %v6036, %v6038
        %v6046 = vsel %vm3087, %v6038, %v6040
        %v6047 = vsel %vm3087, %v6040, %v6042
        %v6048 = vsel %vm3087, %v6042, %v6044
        %v6054 = vsel %vm296, %v6034, 0
        %6056 = vmatpush.bf16.msra.mxu0 0
        %6057 = vmatpush.bf16.msra.mxu0 0
        %6058 = vmatpush.bf16.msra.mxu0 0
        %6059 = vmatpush.bf16.msra.mxu0 0
        %6060 = vmatpush.bf16.msra.mxu0 0
        %6061 = vmatpush.bf16.msra.mxu0 0
        %6062 = vmatpush.bf16.msra.mxu0 0
        %6063 = vmatpush.bf16.msra.mxu0 %v6045
        %6064 = vmatmul.bf16.gmra.mxu0 %v6054
        %v6065 = vpop.f32.mrf.mxu0
        %v6066 = vadd.f32 0.0, %v6065
        %v6067 = vpop.f32.mrf.mxu0
        %v6068 = vadd.f32 0.0, %v6067
        %6069 = vdwg.mxu0
        %6070 = vmatpush.bf16.msra.mxu0 0
        %6071 = vmatpush.bf16.msra.mxu0 0
        %6072 = vmatpush.bf16.msra.mxu0 0
        %6073 = vmatpush.bf16.msra.mxu0 0
        %6074 = vmatpush.bf16.msra.mxu0 0
        %6075 = vmatpush.bf16.msra.mxu0 0
        %6076 = vmatpush.bf16.msra.mxu0 0
        %6077 = vmatpush.bf16.msra.mxu0 %v6046
        %6078 = vmatmul.bf16.gmra.mxu0 %v6054
        %v6079 = vpop.f32.mrf.mxu0
        %v6080 = vadd.f32 0.0, %v6079
        %v6081 = vpop.f32.mrf.mxu0
        %v6082 = vadd.f32 0.0, %v6081
        %6083 = vdwg.mxu0
        %6084 = vmatpush.bf16.msra.mxu0 0
        %6085 = vmatpush.bf16.msra.mxu0 0
        %6086 = vmatpush.bf16.msra.mxu0 0
        %6087 = vmatpush.bf16.msra.mxu0 0
        %6088 = vmatpush.bf16.msra.mxu0 0
        %6089 = vmatpush.bf16.msra.mxu0 0
        %6090 = vmatpush.bf16.msra.mxu0 0
        %6091 = vmatpush.bf16.msra.mxu0 %v6047
        %6092 = vmatmul.bf16.gmra.mxu0 %v6054
        %v6093 = vpop.f32.mrf.mxu0
        %v6094 = vadd.f32 0.0, %v6093
        %v6095 = vpop.f32.mrf.mxu0
        %v6096 = vadd.f32 0.0, %v6095
        %6097 = vdwg.mxu0
        %6098 = vmatpush.bf16.msra.mxu0 0
        %6099 = vmatpush.bf16.msra.mxu0 0
        %6100 = vmatpush.bf16.msra.mxu0 0
        %6101 = vmatpush.bf16.msra.mxu0 0
        %6102 = vmatpush.bf16.msra.mxu0 0
        %6103 = vmatpush.bf16.msra.mxu0 0
        %6104 = vmatpush.bf16.msra.mxu0 0
        %6105 = vmatpush.bf16.msra.mxu0 %v6048
        %6106 = vmatmul.bf16.gmra.mxu0 %v6054
        %v6107 = vpop.f32.mrf.mxu0
        %v6108 = vadd.f32 0.0, %v6107
        %v6109 = vpop.f32.mrf.mxu0
        %v6110 = vadd.f32 0.0, %v6109
        %6111 = vdwg.mxu0
        %v6112 = vadd.f32 %v6019, %v6066
        %v6113 = vadd.f32 %v6020, %v6080
        %v6114 = vadd.f32 %v6021, %v6094
        %v6115 = vadd.f32 %v6022, %v6108
        %v6116 = vadd.f32 %v6023, %v6068
        %v6117 = vadd.f32 %v6024, %v6082
        %v6118 = vadd.f32 %v6025, %v6096
        %v6119 = vadd.f32 %v6026, %v6110
        %s6120 = scalar_lea.vmem %s2, 176
        %v6121 = vld [vmem:[%s6120] sm:$0xf]
        %v6122 = vld [vmem:[%s6120 + $0x4] sm:$0xf]
        %v6125 = vunpack.c.l.b16 %v6121
        %v6126 = vunpack.c.l.b16 %v6122
        %v6127 = vpack.c.b16 %v6126, %v6125
        %6128 = vrot.lane.b32.xlu0 %v5751, 45
        %v6129 = vpop.permute.xlu0 %6128
        %6130 = vrot.lane.b32.xlu0 %v5752, 45
        %v6131 = vpop.permute.xlu0 %6130
        %6132 = vrot.lane.b32.xlu0 %v5753, 45
        %v6133 = vpop.permute.xlu0 %6132
        %6134 = vrot.lane.b32.xlu0 %v5754, 45
        %v6135 = vpop.permute.xlu0 %6134
        %6136 = vrot.lane.b32.xlu0 %v5755, 45
        %v6137 = vpop.permute.xlu0 %6136
        %v6138 = vsel %vm3221, %v6129, %v6131
        %v6139 = vsel %vm3221, %v6131, %v6133
        %v6140 = vsel %vm3221, %v6133, %v6135
        %v6141 = vsel %vm3221, %v6135, %v6137
        %v6147 = vsel %vm296, %v6127, 0
        %6149 = vmatpush.bf16.msra.mxu0 0
        %6150 = vmatpush.bf16.msra.mxu0 0
        %6151 = vmatpush.bf16.msra.mxu0 0
        %6152 = vmatpush.bf16.msra.mxu0 0
        %6153 = vmatpush.bf16.msra.mxu0 0
        %6154 = vmatpush.bf16.msra.mxu0 0
        %6155 = vmatpush.bf16.msra.mxu0 0
        %6156 = vmatpush.bf16.msra.mxu0 %v6138
        %6157 = vmatmul.bf16.gmra.mxu0 %v6147
        %v6158 = vpop.f32.mrf.mxu0
        %v6159 = vadd.f32 0.0, %v6158
        %v6160 = vpop.f32.mrf.mxu0
        %v6161 = vadd.f32 0.0, %v6160
        %6162 = vdwg.mxu0
        %6163 = vmatpush.bf16.msra.mxu0 0
        %6164 = vmatpush.bf16.msra.mxu0 0
        %6165 = vmatpush.bf16.msra.mxu0 0
        %6166 = vmatpush.bf16.msra.mxu0 0
        %6167 = vmatpush.bf16.msra.mxu0 0
        %6168 = vmatpush.bf16.msra.mxu0 0
        %6169 = vmatpush.bf16.msra.mxu0 0
        %6170 = vmatpush.bf16.msra.mxu0 %v6139
        %6171 = vmatmul.bf16.gmra.mxu0 %v6147
        %v6172 = vpop.f32.mrf.mxu0
        %v6173 = vadd.f32 0.0, %v6172
        %v6174 = vpop.f32.mrf.mxu0
        %v6175 = vadd.f32 0.0, %v6174
        %6176 = vdwg.mxu0
        %6177 = vmatpush.bf16.msra.mxu0 0
        %6178 = vmatpush.bf16.msra.mxu0 0
        %6179 = vmatpush.bf16.msra.mxu0 0
        %6180 = vmatpush.bf16.msra.mxu0 0
        %6181 = vmatpush.bf16.msra.mxu0 0
        %6182 = vmatpush.bf16.msra.mxu0 0
        %6183 = vmatpush.bf16.msra.mxu0 0
        %6184 = vmatpush.bf16.msra.mxu0 %v6140
        %6185 = vmatmul.bf16.gmra.mxu0 %v6147
        %v6186 = vpop.f32.mrf.mxu0
        %v6187 = vadd.f32 0.0, %v6186
        %v6188 = vpop.f32.mrf.mxu0
        %v6189 = vadd.f32 0.0, %v6188
        %6190 = vdwg.mxu0
        %6191 = vmatpush.bf16.msra.mxu0 0
        %6192 = vmatpush.bf16.msra.mxu0 0
        %6193 = vmatpush.bf16.msra.mxu0 0
        %6194 = vmatpush.bf16.msra.mxu0 0
        %6195 = vmatpush.bf16.msra.mxu0 0
        %6196 = vmatpush.bf16.msra.mxu0 0
        %6197 = vmatpush.bf16.msra.mxu0 0
        %6198 = vmatpush.bf16.msra.mxu0 %v6141
        %6199 = vmatmul.bf16.gmra.mxu0 %v6147
        %v6200 = vpop.f32.mrf.mxu0
        %v6201 = vadd.f32 0.0, %v6200
        %v6202 = vpop.f32.mrf.mxu0
        %v6203 = vadd.f32 0.0, %v6202
        %6204 = vdwg.mxu0
        %v6205 = vadd.f32 %v6112, %v6159
        %v6206 = vadd.f32 %v6113, %v6173
        %v6207 = vadd.f32 %v6114, %v6187
        %v6208 = vadd.f32 %v6115, %v6201
        %v6209 = vadd.f32 %v6116, %v6161
        %v6210 = vadd.f32 %v6117, %v6175
        %v6211 = vadd.f32 %v6118, %v6189
        %v6212 = vadd.f32 %v6119, %v6203
        %s6213 = scalar_lea.vmem %s2, 184
        %v6214 = vld [vmem:[%s6213] sm:$0xf]
        %v6215 = vld [vmem:[%s6213 + $0x4] sm:$0xf]
        %v6218 = vunpack.c.l.b16 %v6214
        %v6219 = vunpack.c.l.b16 %v6215
        %v6220 = vpack.c.b16 %v6219, %v6218
        %6221 = vrot.lane.b32.xlu0 %v5751, 44
        %v6222 = vpop.permute.xlu0 %6221
        %6223 = vrot.lane.b32.xlu0 %v5752, 44
        %v6224 = vpop.permute.xlu0 %6223
        %6225 = vrot.lane.b32.xlu0 %v5753, 44
        %v6226 = vpop.permute.xlu0 %6225
        %6227 = vrot.lane.b32.xlu0 %v5754, 44
        %v6228 = vpop.permute.xlu0 %6227
        %6229 = vrot.lane.b32.xlu0 %v5755, 44
        %v6230 = vpop.permute.xlu0 %6229
        %v6231 = vsel %vm3355, %v6222, %v6224
        %v6232 = vsel %vm3355, %v6224, %v6226
        %v6233 = vsel %vm3355, %v6226, %v6228
        %v6234 = vsel %vm3355, %v6228, %v6230
        %v6240 = vsel %vm296, %v6220, 0
        %6242 = vmatpush.bf16.msra.mxu0 0
        %6243 = vmatpush.bf16.msra.mxu0 0
        %6244 = vmatpush.bf16.msra.mxu0 0
        %6245 = vmatpush.bf16.msra.mxu0 0
        %6246 = vmatpush.bf16.msra.mxu0 0
        %6247 = vmatpush.bf16.msra.mxu0 0
        %6248 = vmatpush.bf16.msra.mxu0 0
        %6249 = vmatpush.bf16.msra.mxu0 %v6231
        %6250 = vmatmul.bf16.gmra.mxu0 %v6240
        %v6251 = vpop.f32.mrf.mxu0
        %v6252 = vadd.f32 0.0, %v6251
        %v6253 = vpop.f32.mrf.mxu0
        %v6254 = vadd.f32 0.0, %v6253
        %6255 = vdwg.mxu0
        %6256 = vmatpush.bf16.msra.mxu0 0
        %6257 = vmatpush.bf16.msra.mxu0 0
        %6258 = vmatpush.bf16.msra.mxu0 0
        %6259 = vmatpush.bf16.msra.mxu0 0
        %6260 = vmatpush.bf16.msra.mxu0 0
        %6261 = vmatpush.bf16.msra.mxu0 0
        %6262 = vmatpush.bf16.msra.mxu0 0
        %6263 = vmatpush.bf16.msra.mxu0 %v6232
        %6264 = vmatmul.bf16.gmra.mxu0 %v6240
        %v6265 = vpop.f32.mrf.mxu0
        %v6266 = vadd.f32 0.0, %v6265
        %v6267 = vpop.f32.mrf.mxu0
        %v6268 = vadd.f32 0.0, %v6267
        %6269 = vdwg.mxu0
        %6270 = vmatpush.bf16.msra.mxu0 0
        %6271 = vmatpush.bf16.msra.mxu0 0
        %6272 = vmatpush.bf16.msra.mxu0 0
        %6273 = vmatpush.bf16.msra.mxu0 0
        %6274 = vmatpush.bf16.msra.mxu0 0
        %6275 = vmatpush.bf16.msra.mxu0 0
        %6276 = vmatpush.bf16.msra.mxu0 0
        %6277 = vmatpush.bf16.msra.mxu0 %v6233
        %6278 = vmatmul.bf16.gmra.mxu0 %v6240
        %v6279 = vpop.f32.mrf.mxu0
        %v6280 = vadd.f32 0.0, %v6279
        %v6281 = vpop.f32.mrf.mxu0
        %v6282 = vadd.f32 0.0, %v6281
        %6283 = vdwg.mxu0
        %6284 = vmatpush.bf16.msra.mxu0 0
        %6285 = vmatpush.bf16.msra.mxu0 0
        %6286 = vmatpush.bf16.msra.mxu0 0
        %6287 = vmatpush.bf16.msra.mxu0 0
        %6288 = vmatpush.bf16.msra.mxu0 0
        %6289 = vmatpush.bf16.msra.mxu0 0
        %6290 = vmatpush.bf16.msra.mxu0 0
        %6291 = vmatpush.bf16.msra.mxu0 %v6234
        %6292 = vmatmul.bf16.gmra.mxu0 %v6240
        %v6293 = vpop.f32.mrf.mxu0
        %v6294 = vadd.f32 0.0, %v6293
        %v6295 = vpop.f32.mrf.mxu0
        %v6296 = vadd.f32 0.0, %v6295
        %6297 = vdwg.mxu0
        %v6298 = vadd.f32 %v6205, %v6252
        %v6299 = vadd.f32 %v6206, %v6266
        %v6300 = vadd.f32 %v6207, %v6280
        %v6301 = vadd.f32 %v6208, %v6294
        %v6302 = vadd.f32 %v6209, %v6254
        %v6303 = vadd.f32 %v6210, %v6268
        %v6304 = vadd.f32 %v6211, %v6282
        %v6305 = vadd.f32 %v6212, %v6296
        %s6306 = scalar_lea.vmem %s2, 192
        %v6307 = vld [vmem:[%s6306] sm:$0xf]
        %v6308 = vld [vmem:[%s6306 + $0x4] sm:$0xf]
        %v6311 = vunpack.c.l.b16 %v6307
        %v6312 = vunpack.c.l.b16 %v6308
        %v6313 = vpack.c.b16 %v6312, %v6311
        %6314 = vrot.lane.b32.xlu0 %v5751, 36
        %v6315 = vpop.permute.xlu0 %6314
        %6316 = vrot.lane.b32.xlu0 %v5752, 36
        %v6317 = vpop.permute.xlu0 %6316
        %6318 = vrot.lane.b32.xlu0 %v5753, 36
        %v6319 = vpop.permute.xlu0 %6318
        %6320 = vrot.lane.b32.xlu0 %v5754, 36
        %v6321 = vpop.permute.xlu0 %6320
        %6322 = vrot.lane.b32.xlu0 %v5755, 36
        %v6323 = vpop.permute.xlu0 %6322
        %v6324 = vsel %vm3489, %v6315, %v6317
        %v6325 = vsel %vm3489, %v6317, %v6319
        %v6326 = vsel %vm3489, %v6319, %v6321
        %v6327 = vsel %vm3489, %v6321, %v6323
        %v6333 = vsel %vm296, %v6313, 0
        %6335 = vmatpush.bf16.msra.mxu0 0
        %6336 = vmatpush.bf16.msra.mxu0 0
        %6337 = vmatpush.bf16.msra.mxu0 0
        %6338 = vmatpush.bf16.msra.mxu0 0
        %6339 = vmatpush.bf16.msra.mxu0 0
        %6340 = vmatpush.bf16.msra.mxu0 0
        %6341 = vmatpush.bf16.msra.mxu0 0
        %6342 = vmatpush.bf16.msra.mxu0 %v6324
        %6343 = vmatmul.bf16.gmra.mxu0 %v6333
        %v6344 = vpop.f32.mrf.mxu0
        %v6345 = vadd.f32 0.0, %v6344
        %v6346 = vpop.f32.mrf.mxu0
        %v6347 = vadd.f32 0.0, %v6346
        %6348 = vdwg.mxu0
        %6349 = vmatpush.bf16.msra.mxu0 0
        %6350 = vmatpush.bf16.msra.mxu0 0
        %6351 = vmatpush.bf16.msra.mxu0 0
        %6352 = vmatpush.bf16.msra.mxu0 0
        %6353 = vmatpush.bf16.msra.mxu0 0
        %6354 = vmatpush.bf16.msra.mxu0 0
        %6355 = vmatpush.bf16.msra.mxu0 0
        %6356 = vmatpush.bf16.msra.mxu0 %v6325
        %6357 = vmatmul.bf16.gmra.mxu0 %v6333
        %v6358 = vpop.f32.mrf.mxu0
        %v6359 = vadd.f32 0.0, %v6358
        %v6360 = vpop.f32.mrf.mxu0
        %v6361 = vadd.f32 0.0, %v6360
        %6362 = vdwg.mxu0
        %6363 = vmatpush.bf16.msra.mxu0 0
        %6364 = vmatpush.bf16.msra.mxu0 0
        %6365 = vmatpush.bf16.msra.mxu0 0
        %6366 = vmatpush.bf16.msra.mxu0 0
        %6367 = vmatpush.bf16.msra.mxu0 0
        %6368 = vmatpush.bf16.msra.mxu0 0
        %6369 = vmatpush.bf16.msra.mxu0 0
        %6370 = vmatpush.bf16.msra.mxu0 %v6326
        %6371 = vmatmul.bf16.gmra.mxu0 %v6333
        %v6372 = vpop.f32.mrf.mxu0
        %v6373 = vadd.f32 0.0, %v6372
        %v6374 = vpop.f32.mrf.mxu0
        %v6375 = vadd.f32 0.0, %v6374
        %6376 = vdwg.mxu0
        %6377 = vmatpush.bf16.msra.mxu0 0
        %6378 = vmatpush.bf16.msra.mxu0 0
        %6379 = vmatpush.bf16.msra.mxu0 0
        %6380 = vmatpush.bf16.msra.mxu0 0
        %6381 = vmatpush.bf16.msra.mxu0 0
        %6382 = vmatpush.bf16.msra.mxu0 0
        %6383 = vmatpush.bf16.msra.mxu0 0
        %6384 = vmatpush.bf16.msra.mxu0 %v6327
        %6385 = vmatmul.bf16.gmra.mxu0 %v6333
        %v6386 = vpop.f32.mrf.mxu0
        %v6387 = vadd.f32 0.0, %v6386
        %v6388 = vpop.f32.mrf.mxu0
        %v6389 = vadd.f32 0.0, %v6388
        %6390 = vdwg.mxu0
        %v6391 = vadd.f32 %v6298, %v6345
        %v6392 = vadd.f32 %v6299, %v6359
        %v6393 = vadd.f32 %v6300, %v6373
        %v6394 = vadd.f32 %v6301, %v6387
        %v6395 = vadd.f32 %v6302, %v6347
        %v6396 = vadd.f32 %v6303, %v6361
        %v6397 = vadd.f32 %v6304, %v6375
        %v6398 = vadd.f32 %v6305, %v6389
        %s6399 = scalar_lea.vmem %s2, 200
        %v6400 = vld [vmem:[%s6399] sm:$0xf]
        %v6401 = vld [vmem:[%s6399 + $0x4] sm:$0xf]
        %v6404 = vunpack.c.l.b16 %v6400
        %v6405 = vunpack.c.l.b16 %v6401
        %v6406 = vpack.c.b16 %v6405, %v6404
        %6407 = vrot.lane.b32.xlu0 %v5751, 35
        %v6408 = vpop.permute.xlu0 %6407
        %6409 = vrot.lane.b32.xlu0 %v5752, 35
        %v6410 = vpop.permute.xlu0 %6409
        %6411 = vrot.lane.b32.xlu0 %v5753, 35
        %v6412 = vpop.permute.xlu0 %6411
        %6413 = vrot.lane.b32.xlu0 %v5754, 35
        %v6414 = vpop.permute.xlu0 %6413
        %6415 = vrot.lane.b32.xlu0 %v5755, 35
        %v6416 = vpop.permute.xlu0 %6415
        %v6417 = vsel %vm3623, %v6408, %v6410
        %v6418 = vsel %vm3623, %v6410, %v6412
        %v6419 = vsel %vm3623, %v6412, %v6414
        %v6420 = vsel %vm3623, %v6414, %v6416
        %v6426 = vsel %vm296, %v6406, 0
        %6428 = vmatpush.bf16.msra.mxu0 0
        %6429 = vmatpush.bf16.msra.mxu0 0
        %6430 = vmatpush.bf16.msra.mxu0 0
        %6431 = vmatpush.bf16.msra.mxu0 0
        %6432 = vmatpush.bf16.msra.mxu0 0
        %6433 = vmatpush.bf16.msra.mxu0 0
        %6434 = vmatpush.bf16.msra.mxu0 0
        %6435 = vmatpush.bf16.msra.mxu0 %v6417
        %6436 = vmatmul.bf16.gmra.mxu0 %v6426
        %v6437 = vpop.f32.mrf.mxu0
        %v6438 = vadd.f32 0.0, %v6437
        %v6439 = vpop.f32.mrf.mxu0
        %v6440 = vadd.f32 0.0, %v6439
        %6441 = vdwg.mxu0
        %6442 = vmatpush.bf16.msra.mxu0 0
        %6443 = vmatpush.bf16.msra.mxu0 0
        %6444 = vmatpush.bf16.msra.mxu0 0
        %6445 = vmatpush.bf16.msra.mxu0 0
        %6446 = vmatpush.bf16.msra.mxu0 0
        %6447 = vmatpush.bf16.msra.mxu0 0
        %6448 = vmatpush.bf16.msra.mxu0 0
        %6449 = vmatpush.bf16.msra.mxu0 %v6418
        %6450 = vmatmul.bf16.gmra.mxu0 %v6426
        %v6451 = vpop.f32.mrf.mxu0
        %v6452 = vadd.f32 0.0, %v6451
        %v6453 = vpop.f32.mrf.mxu0
        %v6454 = vadd.f32 0.0, %v6453
        %6455 = vdwg.mxu0
        %6456 = vmatpush.bf16.msra.mxu0 0
        %6457 = vmatpush.bf16.msra.mxu0 0
        %6458 = vmatpush.bf16.msra.mxu0 0
        %6459 = vmatpush.bf16.msra.mxu0 0
        %6460 = vmatpush.bf16.msra.mxu0 0
        %6461 = vmatpush.bf16.msra.mxu0 0
        %6462 = vmatpush.bf16.msra.mxu0 0
        %6463 = vmatpush.bf16.msra.mxu0 %v6419
        %6464 = vmatmul.bf16.gmra.mxu0 %v6426
        %v6465 = vpop.f32.mrf.mxu0
        %v6466 = vadd.f32 0.0, %v6465
        %v6467 = vpop.f32.mrf.mxu0
        %v6468 = vadd.f32 0.0, %v6467
        %6469 = vdwg.mxu0
        %6470 = vmatpush.bf16.msra.mxu0 0
        %6471 = vmatpush.bf16.msra.mxu0 0
        %6472 = vmatpush.bf16.msra.mxu0 0
        %6473 = vmatpush.bf16.msra.mxu0 0
        %6474 = vmatpush.bf16.msra.mxu0 0
        %6475 = vmatpush.bf16.msra.mxu0 0
        %6476 = vmatpush.bf16.msra.mxu0 0
        %6477 = vmatpush.bf16.msra.mxu0 %v6420
        %6478 = vmatmul.bf16.gmra.mxu0 %v6426
        %v6479 = vpop.f32.mrf.mxu0
        %v6480 = vadd.f32 0.0, %v6479
        %v6481 = vpop.f32.mrf.mxu0
        %v6482 = vadd.f32 0.0, %v6481
        %6483 = vdwg.mxu0
        %v6484 = vadd.f32 %v6391, %v6438
        %v6485 = vadd.f32 %v6392, %v6452
        %v6486 = vadd.f32 %v6393, %v6466
        %v6487 = vadd.f32 %v6394, %v6480
        %v6488 = vadd.f32 %v6395, %v6440
        %v6489 = vadd.f32 %v6396, %v6454
        %v6490 = vadd.f32 %v6397, %v6468
        %v6491 = vadd.f32 %v6398, %v6482
        %s6492 = scalar_lea.vmem %s2, 208
        %v6493 = vld [vmem:[%s6492] sm:$0xf]
        %v6494 = vld [vmem:[%s6492 + $0x4] sm:$0xf]
        %v6497 = vunpack.c.l.b16 %v6493
        %v6498 = vunpack.c.l.b16 %v6494
        %v6499 = vpack.c.b16 %v6498, %v6497
        %6500 = vrot.lane.b32.xlu0 %v5751, 34
        %v6501 = vpop.permute.xlu0 %6500
        %6502 = vrot.lane.b32.xlu0 %v5752, 34
        %v6503 = vpop.permute.xlu0 %6502
        %6504 = vrot.lane.b32.xlu0 %v5753, 34
        %v6505 = vpop.permute.xlu0 %6504
        %6506 = vrot.lane.b32.xlu0 %v5754, 34
        %v6507 = vpop.permute.xlu0 %6506
        %6508 = vrot.lane.b32.xlu0 %v5755, 34
        %v6509 = vpop.permute.xlu0 %6508
        %v6510 = vsel %vm3757, %v6501, %v6503
        %v6511 = vsel %vm3757, %v6503, %v6505
        %v6512 = vsel %vm3757, %v6505, %v6507
        %v6513 = vsel %vm3757, %v6507, %v6509
        %v6519 = vsel %vm296, %v6499, 0
        %6521 = vmatpush.bf16.msra.mxu0 0
        %6522 = vmatpush.bf16.msra.mxu0 0
        %6523 = vmatpush.bf16.msra.mxu0 0
        %6524 = vmatpush.bf16.msra.mxu0 0
        %6525 = vmatpush.bf16.msra.mxu0 0
        %6526 = vmatpush.bf16.msra.mxu0 0
        %6527 = vmatpush.bf16.msra.mxu0 0
        %6528 = vmatpush.bf16.msra.mxu0 %v6510
        %6529 = vmatmul.bf16.gmra.mxu0 %v6519
        %v6530 = vpop.f32.mrf.mxu0
        %v6531 = vadd.f32 0.0, %v6530
        %v6532 = vpop.f32.mrf.mxu0
        %v6533 = vadd.f32 0.0, %v6532
        %6534 = vdwg.mxu0
        %6535 = vmatpush.bf16.msra.mxu0 0
        %6536 = vmatpush.bf16.msra.mxu0 0
        %6537 = vmatpush.bf16.msra.mxu0 0
        %6538 = vmatpush.bf16.msra.mxu0 0
        %6539 = vmatpush.bf16.msra.mxu0 0
        %6540 = vmatpush.bf16.msra.mxu0 0
        %6541 = vmatpush.bf16.msra.mxu0 0
        %6542 = vmatpush.bf16.msra.mxu0 %v6511
        %6543 = vmatmul.bf16.gmra.mxu0 %v6519
        %v6544 = vpop.f32.mrf.mxu0
        %v6545 = vadd.f32 0.0, %v6544
        %v6546 = vpop.f32.mrf.mxu0
        %v6547 = vadd.f32 0.0, %v6546
        %6548 = vdwg.mxu0
        %6549 = vmatpush.bf16.msra.mxu0 0
        %6550 = vmatpush.bf16.msra.mxu0 0
        %6551 = vmatpush.bf16.msra.mxu0 0
        %6552 = vmatpush.bf16.msra.mxu0 0
        %6553 = vmatpush.bf16.msra.mxu0 0
        %6554 = vmatpush.bf16.msra.mxu0 0
        %6555 = vmatpush.bf16.msra.mxu0 0
        %6556 = vmatpush.bf16.msra.mxu0 %v6512
        %6557 = vmatmul.bf16.gmra.mxu0 %v6519
        %v6558 = vpop.f32.mrf.mxu0
        %v6559 = vadd.f32 0.0, %v6558
        %v6560 = vpop.f32.mrf.mxu0
        %v6561 = vadd.f32 0.0, %v6560
        %6562 = vdwg.mxu0
        %6563 = vmatpush.bf16.msra.mxu0 0
        %6564 = vmatpush.bf16.msra.mxu0 0
        %6565 = vmatpush.bf16.msra.mxu0 0
        %6566 = vmatpush.bf16.msra.mxu0 0
        %6567 = vmatpush.bf16.msra.mxu0 0
        %6568 = vmatpush.bf16.msra.mxu0 0
        %6569 = vmatpush.bf16.msra.mxu0 0
        %6570 = vmatpush.bf16.msra.mxu0 %v6513
        %6571 = vmatmul.bf16.gmra.mxu0 %v6519
        %v6572 = vpop.f32.mrf.mxu0
        %v6573 = vadd.f32 0.0, %v6572
        %v6574 = vpop.f32.mrf.mxu0
        %v6575 = vadd.f32 0.0, %v6574
        %6576 = vdwg.mxu0
        %v6577 = vadd.f32 %v6484, %v6531
        %v6578 = vadd.f32 %v6485, %v6545
        %v6579 = vadd.f32 %v6486, %v6559
        %v6580 = vadd.f32 %v6487, %v6573
        %v6581 = vadd.f32 %v6488, %v6533
        %v6582 = vadd.f32 %v6489, %v6547
        %v6583 = vadd.f32 %v6490, %v6561
        %v6584 = vadd.f32 %v6491, %v6575
        %6585 = vst [vmem:[%s172] sm:$0xff] %v6577
        %6586 = vst [vmem:[%s172 + $0x8] sm:$0xff] %v6578
        %6587 = vst [vmem:[%s172 + $0x10] sm:$0xff] %v6579
        %6588 = vst [vmem:[%s172 + $0x18] sm:$0xff] %v6580
        %6589 = vst [vmem:[%s172 + $0x20] sm:$0xff] %v6581
        %6590 = vst [vmem:[%s172 + $0x28] sm:$0xff] %v6582
        %6591 = vst [vmem:[%s172 + $0x30] sm:$0xff] %v6583
        %6592 = vst [vmem:[%s172 + $0x38] sm:$0xff] %v6584
        %s6593 = sand.u32 %s105, 1
        %s6594 = sand.u32 %s105, 1
        %s6595 = smul.addr %s6594, 64
        %s6596 = scalar_lea.vmem [#allocation5], %s6595
        // Predicated region
        $region52: #{double_sym_layer_3d.1} parent=31 // pred_check
          %p6597 = pneg %p115
        $region53: #{double_sym_layer_3d.1} parent=31 // pred_check_branch
          %6599 = sbr.rel (%p6597) target = $region55
        $region54: #{double_sym_layer_3d.1} parent=31 // pred_region
          %s6600 = smul.u32 4, %s20
          %s6601 = smul.addr %s19, 16
          %s6602 = sadd.s32 %s6600, %s6601
          %s6603 = smul.addr %s6602, 8
          %s6604 = scalar_lea.vmem %s4, %s6603
          // Predicated region
          $region56: #{double_sym_layer_3d.1} parent=54 // pred_check
            _
          $region57: #{double_sym_layer_3d.1} parent=54 // pred_check_branch
            %6606 = sbr.rel (0) target = $region59
          $region58: #{double_sym_layer_3d.1} parent=54 // pred_region
            // Predicated region
            $region60: #{double_sym_layer_3d.1} parent=58 // pred_check
              _
            $region61: #{double_sym_layer_3d.1} parent=58 // pred_check_branch
              %6608 = sbr.rel (0) target = $region63
            $region62: #{double_sym_layer_3d.1} parent=58 // pred_region
              loop: start=0, step=1, limit=1
              $region64: #{double_sym_layer_3d.1} parent=62 // loop_pre_header
                _
              $region65: #{double_sym_layer_3d.1} parent=62 // loop_header
                %s6610 = sphi 0, %s6614
                %p6611 = scmp.ge.s32.totalorder %s6610, 1
                %s6615 = sphi %s6596, %s6596
                %s6616 = sphi %s6604, %s6604
              $region66: #{double_sym_layer_3d.1} parent=62 // loop_header_branch
                %6613 = sbr.rel (%p6611) target = $region70
              $region67: #{double_sym_layer_3d.1} parent=62 // loop_body
                %v6617 = vld [vmem:[%s6615] sm:$0xff]
                %6618 = vst [vmem:[%s6616] sm:$0xff] %v6617
                %v6619 = vld [vmem:[%s6615 + $0x8] sm:$0xff]
                %6620 = vst [vmem:[%s6616 + $0x8] sm:$0xff] %v6619
                %v6621 = vld [vmem:[%s6615 + $0x10] sm:$0xff]
                %6622 = vst [vmem:[%s6616 + $0x10] sm:$0xff] %v6621
                %v6623 = vld [vmem:[%s6615 + $0x18] sm:$0xff]
                %6624 = vst [vmem:[%s6616 + $0x18] sm:$0xff] %v6623
                %v6625 = vld [vmem:[%s6615 + $0x20] sm:$0xff]
                %6626 = vst [vmem:[%s6616 + $0x40] sm:$0xff] %v6625
                %v6627 = vld [vmem:[%s6615 + $0x28] sm:$0xff]
                %6628 = vst [vmem:[%s6616 + $0x48] sm:$0xff] %v6627
                %v6629 = vld [vmem:[%s6615 + $0x30] sm:$0xff]
                %6630 = vst [vmem:[%s6616 + $0x50] sm:$0xff] %v6629
                %v6631 = vld [vmem:[%s6615 + $0x38] sm:$0xff]
                %6632 = vst [vmem:[%s6616 + $0x58] sm:$0xff] %v6631
              $region68: #{double_sym_layer_3d.1} parent=62 // loop_footer
                %s6614 = sadd.s32 1, %s6610
              $region69: #{double_sym_layer_3d.1} parent=62 // loop_footer_branch
                %6609 = sbr.rel target = $region65
              $region70: #{double_sym_layer_3d.1} parent=62 // loop_exit
                _
            $region63: #{double_sym_layer_3d.1} parent=58 // pred_fallthru
              _
            // Predicated region
            $region71: #{double_sym_layer_3d.1} parent=58 // pred_check
              _
            $region72: #{double_sym_layer_3d.1} parent=58 // pred_check_branch
              %6634 = sbr.rel target = $region74
            $region73: #{double_sym_layer_3d.1} parent=58 // pred_region
              _
            $region74: #{double_sym_layer_3d.1} parent=58 // pred_fallthru
              _
          $region59: #{double_sym_layer_3d.1} parent=54 // pred_fallthru
            _
          %6635 = vnop
        $region55: #{double_sym_layer_3d.1} parent=31 // pred_fallthru
          _
      $region32: #{double_sym_layer_3d.1} parent=5 // pred_fallthru
        _
      %p6636 = scmp.le.s32.totalorder 2, %s10
      // Predicated region
      $region75: #{double_sym_layer_3d.1} parent=5 // pred_check
        %p6637 = pneg %p6636
      $region76: #{double_sym_layer_3d.1} parent=5 // pred_check_branch
        %6639 = sbr.rel (%p6637) target = $region78
      $region77: #{double_sym_layer_3d.1} parent=5 // pred_region
        %s6640 = ssub.s32 %s10, 2
        // Predicated region
        $region79: #{double_sym_layer_3d.1} parent=77 // pred_check
          %p6641 = pneg %p121
        $region80: #{double_sym_layer_3d.1} parent=77 // pred_check_branch
          %6643 = sbr.rel (%p6641) target = $region82
        $region81: #{double_sym_layer_3d.1} parent=77 // pred_region
          %s6644 = sand.u32 %s106, 1
          %s6645 = sand.u32 %s106, 1
          %s6646 = smul.addr %s6645, 64
          %s6647 = scalar_lea.vmem [#allocation5], %s6646
        $region82: #{double_sym_layer_3d.1} parent=77 // pred_fallthru
          _
      $region78: #{double_sym_layer_3d.1} parent=5 // pred_fallthru
        _
    $region6: #{double_sym_layer_3d.1} parent=1 // loop_footer
      %s14 = sadd.s32 1, %s10
    $region7: #{double_sym_layer_3d.1} parent=1 // loop_footer_branch
      %9 = sbr.rel target = $region3
    $region8: #{double_sym_layer_3d.1} parent=1 // loop_exit
      _
  %6648 = vsyncmov [#allocation4]
  %s6649 = vpop.sfrf %6648
  %p6650 = scmp.eq.s32.totalorder %s6649, 0
  %p6651 = pneg %p6650
  %6653 = shalt.err (%p6651)

</llo_original>
